<compile_context>
chip_gen: v7x
topology: tpu7x:2x2x1
jax: 0.10.0
libtpu: 0.0.40
codegen_flags: <defaults>
</compile_context>

<pallas_src>
import functools

import numpy as np
import jax
import jax.numpy as jnp
from jax.experimental import pallas as pl
from jax.experimental.pallas import tpu as pltpu


def _hardswish(x):
    # torch.nn.Hardswish: x * relu6(x + 3) / 6
    return x * jnp.clip(x + 3.0, 0.0, 6.0) * (1.0 / 6.0)


# ----------------------------------------------------------------------------
# Fused RRDB kernel (one invocation = one image, whole RRDB, 15 convs)
# ----------------------------------------------------------------------------
def _make_rrdb_kernel(nf, gc, H, W):
    Hp, Wp = H + 2, W + 2
    P = Hp * Wp                          # padded-flattened spatial size
    PPAD = ((P + 127) // 128) * 128      # lane-dense (multiple of 128)
    LEFT = 128                           # lane-aligned start of the image in buf
    MW = LEFT + PPAD + 128               # 128-wide right margin covers max +shift
    c_total = nf + 4 * gc
    cins = [nf + i * gc for i in range(5)]
    couts = [gc, gc, gc, gc, nf]
    # tap (ky, kx) reads input pixel (h+ky-1, w+kx-1)  ->  flattened lane shift:
    shifts = [(dy - 1) * Wp + (dx - 1) for dy in range(3) for dx in range(3)]

    def kernel(x_ref, mask_ref, w1, w2, w3, w4, w5, b1, b2, b3, b4, b5,
               out_ref, buf_ref, state_ref):
        # x_ref:   (1, nf, PPAD) f32      mask_ref: (1, PPAD) f32 (1=real pixel)
        # w{i}:    (3, cout_i, 9*cin_i) bf16   b{i}: (3, cout_i, 1) f32
        # out_ref: (1, nf, PPAD) f32
        # buf_ref: (c_total, MW) bf16 channel stack (dense-block "concat" target)
        # state_ref: (nf, PPAD) f32  — exact RDB residual carry (out_k)
        w_refs = (w1, w2, w3, w4, w5)
        b_refs = (b1, b2, b3, b4, b5)
        mask = mask_ref[...]                                  # (1, PPAD) f32

        # Zero ONLY the halo margin columns (everything inside [LEFT, LEFT+PPAD)
        # is fully overwritten each step; halo/pad lanes are handled by `mask`).
        buf_ref[:, 0:LEFT] = jnp.zeros((c_total, LEFT), buf_ref.dtype)
        buf_ref[:, LEFT + PPAD:MW] = jnp.zeros((c_total, MW - LEFT - PPAD),
                                               buf_ref.dtype)

        x = x_ref[0]                                          # (nf, PPAD) f32
        state_ref[...] = x
        buf_ref[0:nf, LEFT:LEFT + PPAD] = x.astype(buf_ref.dtype)

        def rdb_body(rdb, carry):
            for ci in range(5):
                cin, cout = cins[ci], couts[ci]
                w = w_refs[ci][rdb]                           # (cout, 9*cin) bf16
                b = b_refs[ci][rdb]                           # (cout, 1)     f32
                # 9 tap matmuls reading the channel stack directly (no im2col).
                acc = None
                for t, s in enumerate(shifts):
                    d = jax.lax.dot_general(
                        w[:, t * cin:(t + 1) * cin],
                        buf_ref[0:cin, LEFT + s:LEFT + s + PPAD],
                        dimension_numbers=(((1,), (0,)), ((), ())),
                        preferred_element_type=jnp.float32)   # (cout, PPAD) f32
                    acc = d if acc is None else acc + d
                y = acc + b
                if ci < 4:
                    # Hardswish, zero halo/pad lanes, "concatenate" by writing
                    # the next gc channel rows of the resident stack (bf16).
                    buf_ref[nf + ci * gc:nf + (ci + 1) * gc, LEFT:LEFT + PPAD] = (
                        (_hardswish(y) * mask).astype(buf_ref.dtype))
                else:
                    v = state_ref[...]                        # RDB input, exact f32
                    rdb_out = (y * mask) * 0.2 + v            # x5*0.2 + v
                    new_state = rdb_out * 0.2 + v             # RDB(v)*0.2 + v
                    state_ref[...] = new_state
                    buf_ref[0:nf, LEFT:LEFT + PPAD] = new_state.astype(buf_ref.dtype)
            return carry

        jax.lax.fori_loop(0, 3, rdb_body, 0)

        # final residual of the RRDB:  out3*0.2 + x   (lane-dense store)
        out_ref[0] = (state_ref[...] * 0.2 + x_ref[0]).astype(out_ref.dtype)

    return kernel


# ----------------------------------------------------------------------------
# Host wrapper: one pad/flatten per forward, one pallas_call for the whole RRDB
# ----------------------------------------------------------------------------
def rrdb_forward(x, params):
    """x: (N, nf, H, W) NCHW float32.  Returns (N, nf, H, W)."""
    N, nf, H, W = x.shape
    gc = params["rdb1"]["c1"][0].shape[-1]
    Hp, Wp = H + 2, W + 2
    P = Hp * Wp
    PPAD = ((P + 127) // 128) * 128
    LEFT = 128
    MW = LEFT + PPAD + 128
    c_total = nf + 4 * gc

    # Pad + flatten ONCE per forward; pad the lane axis to a multiple of 128.
    xp = jnp.pad(x, ((0, 0), (0, 0), (1, 1), (1, 1))).reshape(N, nf, P)
    xpf = jnp.pad(xp, ((0, 0), (0, 0), (0, PPAD - P)))

    m = np.zeros((Hp, Wp), np.float32)
    m[1:H + 1, 1:W + 1] = 1.0
    mask = jnp.asarray(np.pad(m.reshape(P), (0, PPAD - P)).reshape(1, PPAD))

    # Pack the 30 tiny weights/biases into 5 stacked bf16 weight arrays and
    # 5 stacked f32 bias arrays (the RDB axis is indexed inside the kernel).
    w_stk, b_stk = [], []
    for ci in range(1, 6):
        ws, bs = [], []
        for rdb in ("rdb1", "rdb2", "rdb3"):
            w, b = params[rdb][f"c{ci}"]           # w: (3,3,Cin,Cout) HWIO
            kh, kw, cin, cout = w.shape
            ws.append(w.reshape(kh * kw * cin, cout).T)    # (Cout, 9*Cin)
            bs.append(b.reshape(cout, 1))
        w_stk.append(jnp.stack(ws).astype(jnp.bfloat16))   # (3, Cout, 9*Cin)
        b_stk.append(jnp.stack(bs).astype(jnp.float32))    # (3, Cout, 1)

    kernel = _make_rrdb_kernel(nf, gc, H, W)

    def const_spec2(a):
        return pl.BlockSpec(a.shape, lambda n: (0, 0))

    def const_spec3(a):
        return pl.BlockSpec(a.shape, lambda n: (0, 0, 0))

    in_specs = ([pl.BlockSpec((1, nf, PPAD), lambda n: (n, 0, 0)),
                 const_spec2(mask)]
                + [const_spec3(w) for w in w_stk]
                + [const_spec3(b) for b in b_stk])

    out_flat = pl.pallas_call(
        kernel,
        out_shape=jax.ShapeDtypeStruct((N, nf, PPAD), x.dtype),
        grid=(N,),
        in_specs=in_specs,
        out_specs=pl.BlockSpec((1, nf, PPAD), lambda n: (n, 0, 0)),
        scratch_shapes=[
            pltpu.VMEM((c_total, MW), jnp.bfloat16),   # channel stack (bf16)
            pltpu.VMEM((nf, PPAD), jnp.float32),       # exact RDB residual carry
        ],
        compiler_params=pltpu.CompilerParams(
            dimension_semantics=("parallel",)),
    )(xpf, mask, *w_stk, *b_stk)

    # drop pad lanes, un-flatten and drop the halo (cheap XLA slices)
    return out_flat[:, :, :P].reshape(N, nf, Hp, Wp)[:, :, 1:H + 1, 1:W + 1]


# ----------------------------------------------------------------------------
# Pure-JAX reference (XLA convs) for correctness checking
# ----------------------------------------------------------------------------
def _rrdb_reference(x, params):
    def conv(h, wb):
        w, b = wb
        y = jax.lax.conv_general_dilated(
            h, w, window_strides=(1, 1), padding="SAME",
            dimension_numbers=("NCHW", "HWIO", "NCHW"),
            precision=jax.lax.Precision.HIGHEST)
        return y + b.reshape(1, -1, 1, 1)

    def rdb(h, p):
        x1 = _hardswish(conv(h, p["c1"]))
        x2 = _hardswish(conv(jnp.concatenate([h, x1], 1), p["c2"]))
        x3 = _hardswish(conv(jnp.concatenate([h, x1, x2], 1), p["c3"]))
        x4 = _hardswish(conv(jnp.concatenate([h, x1, x2, x3], 1), p["c4"]))
        x5 = conv(jnp.concatenate([h, x1, x2, x3, x4], 1), p["c5"])
        return x5 * 0.2 + h

    out1 = rdb(x, params["rdb1"]) * 0.2 + x
    out2 = rdb(out1, params["rdb2"]) * 0.2 + out1
    out3 = rdb(out2, params["rdb3"]) * 0.2 + out2
    return out3 * 0.2 + x


# ----------------------------------------------------------------------------
# Deterministic synthetic parameters (no checkpoint)
# ----------------------------------------------------------------------------
def init_rdb_params(key, nf, gc):
    cins = [nf, nf + gc, nf + 2 * gc, nf + 3 * gc, nf + 4 * gc]
    couts = [gc, gc, gc, gc, nf]
    params = {}
    for i, (cin, cout) in enumerate(zip(cins, couts), start=1):
        key, kw, kb = jax.random.split(key, 3)
        w = 0.05 * jax.random.normal(kw, (3, 3, cin, cout), dtype=jnp.float32)
        b = 0.01 * jax.random.normal(kb, (cout,), dtype=jnp.float32)
        params[f"c{i}"] = (w, b)
    return params, key


def init_rrdb_params(key, nf, gc):
    params = {}
    for name in ("rdb1", "rdb2", "rdb3"):
        params[name], key = init_rdb_params(key, nf, gc)
    return params


# ----------------------------------------------------------------------------
if __name__ == "__main__":
    nf, gc = 16, 8
    N, H, W = 2, 16, 16

    key = jax.random.PRNGKey(0)
    key, kx = jax.random.split(key)
    x = jax.random.normal(kx, (N, nf, H, W), dtype=jnp.float32)   # NCHW like torch
    params = init_rrdb_params(key, nf, gc)

    fwd = jax.jit(functools.partial(rrdb_forward, params=params))
    out = fwd(x)
    jax.block_until_ready(out)

    assert out.shape == (N, nf, H, W)
    assert bool(jnp.all(jnp.isfinite(out)))

    ref = _rrdb_reference(x, params)
    err = float(jnp.max(jnp.abs(out - ref)))
    assert err < 5e-2, f"max abs error vs XLA reference: {err}"

    print("KERNEL_OK")
</pallas_src>

<mosaic_0001>
module attributes {stable_mosaic.version = 11 : i64} {
  func.func @kernel(%arg0: i32, %arg1: memref<1x16x384xf32, #tpu.memory_space<vmem>>, %arg2: memref<1x384xf32, #tpu.memory_space<vmem>>, %arg3: memref<3x8x144xbf16, #tpu.memory_space<vmem>>, %arg4: memref<3x8x216xbf16, #tpu.memory_space<vmem>>, %arg5: memref<3x8x288xbf16, #tpu.memory_space<vmem>>, %arg6: memref<3x8x360xbf16, #tpu.memory_space<vmem>>, %arg7: memref<3x16x432xbf16, #tpu.memory_space<vmem>>, %arg8: memref<3x8x1xf32, #tpu.memory_space<vmem>>, %arg9: memref<3x8x1xf32, #tpu.memory_space<vmem>>, %arg10: memref<3x8x1xf32, #tpu.memory_space<vmem>>, %arg11: memref<3x8x1xf32, #tpu.memory_space<vmem>>, %arg12: memref<3x16x1xf32, #tpu.memory_space<vmem>>, %arg13: memref<1x16x384xf32, #tpu.memory_space<vmem>>, %arg14: memref<48x640xbf16, #tpu.memory_space<vmem>>, %arg15: memref<16x384xf32, #tpu.memory_space<vmem>>) attributes {dimension_semantics = [#tpu.dimension_semantics<parallel>], iteration_bounds = array<i64: 2>, scalar_prefetch = 0 : i64, scratch_operands = 2 : i64, tpu.core_type = #tpu.core_type<tc>, window_params = [{transform_indices = @transform_0, window_bounds = array<i64: 1, 16, 384>}, {pipeline_mode = #tpu.pipeline_mode<synchronous>, transform_indices = @transform_1, window_bounds = array<i64: 1, 384>}, {pipeline_mode = #tpu.pipeline_mode<synchronous>, transform_indices = @transform_2, window_bounds = array<i64: 3, 8, 144>}, {pipeline_mode = #tpu.pipeline_mode<synchronous>, transform_indices = @transform_3, window_bounds = array<i64: 3, 8, 216>}, {pipeline_mode = #tpu.pipeline_mode<synchronous>, transform_indices = @transform_4, window_bounds = array<i64: 3, 8, 288>}, {pipeline_mode = #tpu.pipeline_mode<synchronous>, transform_indices = @transform_5, window_bounds = array<i64: 3, 8, 360>}, {pipeline_mode = #tpu.pipeline_mode<synchronous>, transform_indices = @transform_6, window_bounds = array<i64: 3, 16, 432>}, {pipeline_mode = #tpu.pipeline_mode<synchronous>, transform_indices = @transform_7, window_bounds = array<i64: 3, 8, 1>}, {pipeline_mode = #tpu.pipeline_mode<synchronous>, transform_indices = @transform_8, window_bounds = array<i64: 3, 8, 1>}, {pipeline_mode = #tpu.pipeline_mode<synchronous>, transform_indices = @transform_9, window_bounds = array<i64: 3, 8, 1>}, {pipeline_mode = #tpu.pipeline_mode<synchronous>, transform_indices = @transform_10, window_bounds = array<i64: 3, 8, 1>}, {pipeline_mode = #tpu.pipeline_mode<synchronous>, transform_indices = @transform_11, window_bounds = array<i64: 3, 16, 1>}, {transform_indices = @transform_12, window_bounds = array<i64: 1, 16, 384>}]} {
    %c0 = arith.constant 0 : index
    %c0_0 = arith.constant 0 : index
    %0 = vector.load %arg2[%c0, %c0_0] : memref<1x384xf32, #tpu.memory_space<vmem>>, vector<1x384xf32>
    %cst = arith.constant 0.000000e+00 : bf16
    %1 = vector.broadcast %cst : bf16 to vector<48x128xbf16>
    %c0_1 = arith.constant 0 : index
    %c0_2 = arith.constant 0 : index
    %2 = vector.load %arg14[%c0_1, %c0_2] : memref<48x640xbf16, #tpu.memory_space<vmem>>, vector<48x128xbf16>
    tpu.vector_store %arg14[%c0_1, %c0_2], %1 {strides = array<i32>} : memref<48x640xbf16, #tpu.memory_space<vmem>>, vector<48x128xbf16>,
    %cst_3 = arith.constant 0.000000e+00 : bf16
    %3 = vector.broadcast %cst_3 : bf16 to vector<48x128xbf16>
    %c0_4 = arith.constant 0 : index
    %c512 = arith.constant 512 : index
    %4 = vector.load %arg14[%c0_4, %c512] : memref<48x640xbf16, #tpu.memory_space<vmem>>, vector<48x128xbf16>
    tpu.vector_store %arg14[%c0_4, %c512], %3 {strides = array<i32>} : memref<48x640xbf16, #tpu.memory_space<vmem>>, vector<48x128xbf16>,
    %c0_5 = arith.constant 0 : index
    %c0_6 = arith.constant 0 : index
    %c0_7 = arith.constant 0 : index
    %5 = vector.load %arg1[%c0_5, %c0_6, %c0_7] : memref<1x16x384xf32, #tpu.memory_space<vmem>>, vector<1x16x384xf32>
    %6 = vector.shape_cast %5 : vector<1x16x384xf32> to vector<16x384xf32>
    %c0_8 = arith.constant 0 : index
    %c0_9 = arith.constant 0 : index
    %7 = vector.load %arg15[%c0_8, %c0_9] : memref<16x384xf32, #tpu.memory_space<vmem>>, vector<16x384xf32>
    tpu.vector_store %arg15[%c0_8, %c0_9], %6 {strides = array<i32>} : memref<16x384xf32, #tpu.memory_space<vmem>>, vector<16x384xf32>,
    %8 = arith.truncf %6 : vector<16x384xf32> to vector<16x384xbf16>
    %c0_10 = arith.constant 0 : index
    %c128 = arith.constant 128 : index
    %9 = vector.load %arg14[%c0_10, %c128] : memref<48x640xbf16, #tpu.memory_space<vmem>>, vector<16x384xbf16>
    tpu.vector_store %arg14[%c0_10, %c128], %8 {strides = array<i32>} : memref<48x640xbf16, #tpu.memory_space<vmem>>, vector<16x384xbf16>,
    %c0_i32 = arith.constant 0 : i32
    %c3_i32 = arith.constant 3 : i32
    %10 = arith.addi %c0_i32, %c3_i32 : i32
    %c1_i32 = arith.constant 1 : i32
    scf.for %arg16 = %c0_i32 to %10 step %c1_i32  : i32 {
      %20 = arith.index_cast %arg16 : i32 to index
      %c0_21 = arith.constant 0 : index
      %c0_22 = arith.constant 0 : index
      %21 = vector.load %arg3[%20, %c0_21, %c0_22] : memref<3x8x144xbf16, #tpu.memory_space<vmem>>, vector<1x8x144xbf16>
      %22 = vector.shape_cast %21 : vector<1x8x144xbf16> to vector<8x144xbf16>
      %23 = arith.index_cast %arg16 : i32 to index
      %c0_23 = arith.constant 0 : index
      %c0_24 = arith.constant 0 : index
      %24 = vector.load %arg8[%23, %c0_23, %c0_24] : memref<3x8x1xf32, #tpu.memory_space<vmem>>, vector<1x8x1xf32>
      %25 = vector.shape_cast %24 : vector<1x8x1xf32> to vector<8x1xf32>
      %26 = vector.extract_strided_slice %22 {offsets = [0, 0], sizes = [8, 16], strides = [1, 1]} : vector<8x144xbf16> to vector<8x16xbf16>
      %c0_25 = arith.constant 0 : index
      %c109 = arith.constant 109 : index
      %27 = vector.load %arg14[%c0_25, %c109] : memref<48x640xbf16, #tpu.memory_space<vmem>>, vector<16x384xbf16>
      %cst_26 = arith.constant dense<0.000000e+00> : vector<8x384xf32>
      %28 = tpu.matmul %26, %27, %cst_26 {dimension_numbers = #tpu.dot_dimension_numbers<[1], [0], [0], [1], [0, 0, 1, 1], [], []>} : vector<8x16xbf16>, vector<16x384xbf16>, vector<8x384xf32> -> vector<8x384xf32>
      %29 = vector.extract_strided_slice %22 {offsets = [0, 16], sizes = [8, 16], strides = [1, 1]} : vector<8x144xbf16> to vector<8x16xbf16>
      %c0_27 = arith.constant 0 : index
      %c110 = arith.constant 110 : index
      %30 = vector.load %arg14[%c0_27, %c110] : memref<48x640xbf16, #tpu.memory_space<vmem>>, vector<16x384xbf16>
      %cst_28 = arith.constant dense<0.000000e+00> : vector<8x384xf32>
      %31 = tpu.matmul %29, %30, %cst_28 {dimension_numbers = #tpu.dot_dimension_numbers<[1], [0], [0], [1], [0, 0, 1, 1], [], []>} : vector<8x16xbf16>, vector<16x384xbf16>, vector<8x384xf32> -> vector<8x384xf32>
      %32 = arith.addf %28, %31 : vector<8x384xf32>
      %33 = vector.extract_strided_slice %22 {offsets = [0, 32], sizes = [8, 16], strides = [1, 1]} : vector<8x144xbf16> to vector<8x16xbf16>
      %c0_29 = arith.constant 0 : index
      %c111 = arith.constant 111 : index
      %34 = vector.load %arg14[%c0_29, %c111] : memref<48x640xbf16, #tpu.memory_space<vmem>>, vector<16x384xbf16>
      %cst_30 = arith.constant dense<0.000000e+00> : vector<8x384xf32>
      %35 = tpu.matmul %33, %34, %cst_30 {dimension_numbers = #tpu.dot_dimension_numbers<[1], [0], [0], [1], [0, 0, 1, 1], [], []>} : vector<8x16xbf16>, vector<16x384xbf16>, vector<8x384xf32> -> vector<8x384xf32>
      %36 = arith.addf %32, %35 : vector<8x384xf32>
      %37 = vector.extract_strided_slice %22 {offsets = [0, 48], sizes = [8, 16], strides = [1, 1]} : vector<8x144xbf16> to vector<8x16xbf16>
      %c0_31 = arith.constant 0 : index
      %c127 = arith.constant 127 : index
      %38 = vector.load %arg14[%c0_31, %c127] : memref<48x640xbf16, #tpu.memory_space<vmem>>, vector<16x384xbf16>
      %cst_32 = arith.constant dense<0.000000e+00> : vector<8x384xf32>
      %39 = tpu.matmul %37, %38, %cst_32 {dimension_numbers = #tpu.dot_dimension_numbers<[1], [0], [0], [1], [0, 0, 1, 1], [], []>} : vector<8x16xbf16>, vector<16x384xbf16>, vector<8x384xf32> -> vector<8x384xf32>
      %40 = arith.addf %36, %39 : vector<8x384xf32>
      %41 = vector.extract_strided_slice %22 {offsets = [0, 64], sizes = [8, 16], strides = [1, 1]} : vector<8x144xbf16> to vector<8x16xbf16>
      %c0_33 = arith.constant 0 : index
      %c128_34 = arith.constant 128 : index
      %42 = vector.load %arg14[%c0_33, %c128_34] : memref<48x640xbf16, #tpu.memory_space<vmem>>, vector<16x384xbf16>
      %cst_35 = arith.constant dense<0.000000e+00> : vector<8x384xf32>
      %43 = tpu.matmul %41, %42, %cst_35 {dimension_numbers = #tpu.dot_dimension_numbers<[1], [0], [0], [1], [0, 0, 1, 1], [], []>} : vector<8x16xbf16>, vector<16x384xbf16>, vector<8x384xf32> -> vector<8x384xf32>
      %44 = arith.addf %40, %43 : vector<8x384xf32>
      %45 = vector.extract_strided_slice %22 {offsets = [0, 80], sizes = [8, 16], strides = [1, 1]} : vector<8x144xbf16> to vector<8x16xbf16>
      %c0_36 = arith.constant 0 : index
      %c129 = arith.constant 129 : index
      %46 = vector.load %arg14[%c0_36, %c129] : memref<48x640xbf16, #tpu.memory_space<vmem>>, vector<16x384xbf16>
      %cst_37 = arith.constant dense<0.000000e+00> : vector<8x384xf32>
      %47 = tpu.matmul %45, %46, %cst_37 {dimension_numbers = #tpu.dot_dimension_numbers<[1], [0], [0], [1], [0, 0, 1, 1], [], []>} : vector<8x16xbf16>, vector<16x384xbf16>, vector<8x384xf32> -> vector<8x384xf32>
      %48 = arith.addf %44, %47 : vector<8x384xf32>
      %49 = vector.extract_strided_slice %22 {offsets = [0, 96], sizes = [8, 16], strides = [1, 1]} : vector<8x144xbf16> to vector<8x16xbf16>
      %c0_38 = arith.constant 0 : index
      %c145 = arith.constant 145 : index
      %50 = vector.load %arg14[%c0_38, %c145] : memref<48x640xbf16, #tpu.memory_space<vmem>>, vector<16x384xbf16>
      %cst_39 = arith.constant dense<0.000000e+00> : vector<8x384xf32>
      %51 = tpu.matmul %49, %50, %cst_39 {dimension_numbers = #tpu.dot_dimension_numbers<[1], [0], [0], [1], [0, 0, 1, 1], [], []>} : vector<8x16xbf16>, vector<16x384xbf16>, vector<8x384xf32> -> vector<8x384xf32>
      %52 = arith.addf %48, %51 : vector<8x384xf32>
      %53 = vector.extract_strided_slice %22 {offsets = [0, 112], sizes = [8, 16], strides = [1, 1]} : vector<8x144xbf16> to vector<8x16xbf16>
      %c0_40 = arith.constant 0 : index
      %c146 = arith.constant 146 : index
      %54 = vector.load %arg14[%c0_40, %c146] : memref<48x640xbf16, #tpu.memory_space<vmem>>, vector<16x384xbf16>
      %cst_41 = arith.constant dense<0.000000e+00> : vector<8x384xf32>
      %55 = tpu.matmul %53, %54, %cst_41 {dimension_numbers = #tpu.dot_dimension_numbers<[1], [0], [0], [1], [0, 0, 1, 1], [], []>} : vector<8x16xbf16>, vector<16x384xbf16>, vector<8x384xf32> -> vector<8x384xf32>
      %56 = arith.addf %52, %55 : vector<8x384xf32>
      %57 = vector.extract_strided_slice %22 {offsets = [0, 128], sizes = [8, 16], strides = [1, 1]} : vector<8x144xbf16> to vector<8x16xbf16>
      %c0_42 = arith.constant 0 : index
      %c147 = arith.constant 147 : index
      %58 = vector.load %arg14[%c0_42, %c147] : memref<48x640xbf16, #tpu.memory_space<vmem>>, vector<16x384xbf16>
      %cst_43 = arith.constant dense<0.000000e+00> : vector<8x384xf32>
      %59 = tpu.matmul %57, %58, %cst_43 {dimension_numbers = #tpu.dot_dimension_numbers<[1], [0], [0], [1], [0, 0, 1, 1], [], []>} : vector<8x16xbf16>, vector<16x384xbf16>, vector<8x384xf32> -> vector<8x384xf32>
      %60 = arith.addf %56, %59 : vector<8x384xf32>
      %61 = vector.broadcast %25 : vector<8x1xf32> to vector<8x384xf32>
      %62 = arith.addf %60, %61 : vector<8x384xf32>
      %cst_44 = arith.constant 3.000000e+00 : f32
      %63 = vector.broadcast %cst_44 : f32 to vector<8x384xf32>
      %64 = arith.addf %62, %63 : vector<8x384xf32>
      %cst_45 = arith.constant 0.000000e+00 : f32
      %cst_46 = arith.constant 6.000000e+00 : f32
      %65 = vector.broadcast %cst_45 : f32 to vector<8x384xf32>
      %66 = arith.maximumf %65, %64 : vector<8x384xf32>
      %67 = vector.broadcast %cst_46 : f32 to vector<8x384xf32>
      %68 = arith.minimumf %67, %66 : vector<8x384xf32>
      %69 = arith.mulf %62, %68 : vector<8x384xf32>
      %cst_47 = arith.constant 0.166666672 : f32
      %70 = vector.broadcast %cst_47 : f32 to vector<8x384xf32>
      %71 = arith.mulf %69, %70 : vector<8x384xf32>
      %72 = vector.broadcast %0 : vector<1x384xf32> to vector<8x384xf32>
      %73 = arith.mulf %71, %72 : vector<8x384xf32>
      %74 = arith.truncf %73 : vector<8x384xf32> to vector<8x384xbf16>
      %c16 = arith.constant 16 : index
      %c128_48 = arith.constant 128 : index
      %75 = vector.load %arg14[%c16, %c128_48] : memref<48x640xbf16, #tpu.memory_space<vmem>>, vector<8x384xbf16>
      tpu.vector_store %arg14[%c16, %c128_48], %74 {strides = array<i32>} : memref<48x640xbf16, #tpu.memory_space<vmem>>, vector<8x384xbf16>,
      %76 = arith.index_cast %arg16 : i32 to index
      %c0_49 = arith.constant 0 : index
      %c0_50 = arith.constant 0 : index
      %77 = vector.load %arg4[%76, %c0_49, %c0_50] : memref<3x8x216xbf16, #tpu.memory_space<vmem>>, vector<1x8x216xbf16>
      %78 = vector.shape_cast %77 : vector<1x8x216xbf16> to vector<8x216xbf16>
      %79 = arith.index_cast %arg16 : i32 to index
      %c0_51 = arith.constant 0 : index
      %c0_52 = arith.constant 0 : index
      %80 = vector.load %arg9[%79, %c0_51, %c0_52] : memref<3x8x1xf32, #tpu.memory_space<vmem>>, vector<1x8x1xf32>
      %81 = vector.shape_cast %80 : vector<1x8x1xf32> to vector<8x1xf32>
      %82 = vector.extract_strided_slice %78 {offsets = [0, 0], sizes = [8, 24], strides = [1, 1]} : vector<8x216xbf16> to vector<8x24xbf16>
      %c0_53 = arith.constant 0 : index
      %c109_54 = arith.constant 109 : index
      %83 = vector.load %arg14[%c0_53, %c109_54] : memref<48x640xbf16, #tpu.memory_space<vmem>>, vector<24x384xbf16>
      %cst_55 = arith.constant dense<0.000000e+00> : vector<8x384xf32>
      %84 = tpu.matmul %82, %83, %cst_55 {dimension_numbers = #tpu.dot_dimension_numbers<[1], [0], [0], [1], [0, 0, 1, 1], [], []>} : vector<8x24xbf16>, vector<24x384xbf16>, vector<8x384xf32> -> vector<8x384xf32>
      %85 = vector.extract_strided_slice %78 {offsets = [0, 24], sizes = [8, 24], strides = [1, 1]} : vector<8x216xbf16> to vector<8x24xbf16>
      %c0_56 = arith.constant 0 : index
      %c110_57 = arith.constant 110 : index
      %86 = vector.load %arg14[%c0_56, %c110_57] : memref<48x640xbf16, #tpu.memory_space<vmem>>, vector<24x384xbf16>
      %cst_58 = arith.constant dense<0.000000e+00> : vector<8x384xf32>
      %87 = tpu.matmul %85, %86, %cst_58 {dimension_numbers = #tpu.dot_dimension_numbers<[1], [0], [0], [1], [0, 0, 1, 1], [], []>} : vector<8x24xbf16>, vector<24x384xbf16>, vector<8x384xf32> -> vector<8x384xf32>
      %88 = arith.addf %84, %87 : vector<8x384xf32>
      %89 = vector.extract_strided_slice %78 {offsets = [0, 48], sizes = [8, 24], strides = [1, 1]} : vector<8x216xbf16> to vector<8x24xbf16>
      %c0_59 = arith.constant 0 : index
      %c111_60 = arith.constant 111 : index
      %90 = vector.load %arg14[%c0_59, %c111_60] : memref<48x640xbf16, #tpu.memory_space<vmem>>, vector<24x384xbf16>
      %cst_61 = arith.constant dense<0.000000e+00> : vector<8x384xf32>
      %91 = tpu.matmul %89, %90, %cst_61 {dimension_numbers = #tpu.dot_dimension_numbers<[1], [0], [0], [1], [0, 0, 1, 1], [], []>} : vector<8x24xbf16>, vector<24x384xbf16>, vector<8x384xf32> -> vector<8x384xf32>
      %92 = arith.addf %88, %91 : vector<8x384xf32>
      %93 = vector.extract_strided_slice %78 {offsets = [0, 72], sizes = [8, 24], strides = [1, 1]} : vector<8x216xbf16> to vector<8x24xbf16>
      %c0_62 = arith.constant 0 : index
      %c127_63 = arith.constant 127 : index
      %94 = vector.load %arg14[%c0_62, %c127_63] : memref<48x640xbf16, #tpu.memory_space<vmem>>, vector<24x384xbf16>
      %cst_64 = arith.constant dense<0.000000e+00> : vector<8x384xf32>
      %95 = tpu.matmul %93, %94, %cst_64 {dimension_numbers = #tpu.dot_dimension_numbers<[1], [0], [0], [1], [0, 0, 1, 1], [], []>} : vector<8x24xbf16>, vector<24x384xbf16>, vector<8x384xf32> -> vector<8x384xf32>
      %96 = arith.addf %92, %95 : vector<8x384xf32>
      %97 = vector.extract_strided_slice %78 {offsets = [0, 96], sizes = [8, 24], strides = [1, 1]} : vector<8x216xbf16> to vector<8x24xbf16>
      %c0_65 = arith.constant 0 : index
      %c128_66 = arith.constant 128 : index
      %98 = vector.load %arg14[%c0_65, %c128_66] : memref<48x640xbf16, #tpu.memory_space<vmem>>, vector<24x384xbf16>
      %cst_67 = arith.constant dense<0.000000e+00> : vector<8x384xf32>
      %99 = tpu.matmul %97, %98, %cst_67 {dimension_numbers = #tpu.dot_dimension_numbers<[1], [0], [0], [1], [0, 0, 1, 1], [], []>} : vector<8x24xbf16>, vector<24x384xbf16>, vector<8x384xf32> -> vector<8x384xf32>
      %100 = arith.addf %96, %99 : vector<8x384xf32>
      %101 = vector.extract_strided_slice %78 {offsets = [0, 120], sizes = [8, 24], strides = [1, 1]} : vector<8x216xbf16> to vector<8x24xbf16>
      %c0_68 = arith.constant 0 : index
      %c129_69 = arith.constant 129 : index
      %102 = vector.load %arg14[%c0_68, %c129_69] : memref<48x640xbf16, #tpu.memory_space<vmem>>, vector<24x384xbf16>
      %cst_70 = arith.constant dense<0.000000e+00> : vector<8x384xf32>
      %103 = tpu.matmul %101, %102, %cst_70 {dimension_numbers = #tpu.dot_dimension_numbers<[1], [0], [0], [1], [0, 0, 1, 1], [], []>} : vector<8x24xbf16>, vector<24x384xbf16>, vector<8x384xf32> -> vector<8x384xf32>
      %104 = arith.addf %100, %103 : vector<8x384xf32>
      %105 = vector.extract_strided_slice %78 {offsets = [0, 144], sizes = [8, 24], strides = [1, 1]} : vector<8x216xbf16> to vector<8x24xbf16>
      %c0_71 = arith.constant 0 : index
      %c145_72 = arith.constant 145 : index
      %106 = vector.load %arg14[%c0_71, %c145_72] : memref<48x640xbf16, #tpu.memory_space<vmem>>, vector<24x384xbf16>
      %cst_73 = arith.constant dense<0.000000e+00> : vector<8x384xf32>
      %107 = tpu.matmul %105, %106, %cst_73 {dimension_numbers = #tpu.dot_dimension_numbers<[1], [0], [0], [1], [0, 0, 1, 1], [], []>} : vector<8x24xbf16>, vector<24x384xbf16>, vector<8x384xf32> -> vector<8x384xf32>
      %108 = arith.addf %104, %107 : vector<8x384xf32>
      %109 = vector.extract_strided_slice %78 {offsets = [0, 168], sizes = [8, 24], strides = [1, 1]} : vector<8x216xbf16> to vector<8x24xbf16>
      %c0_74 = arith.constant 0 : index
      %c146_75 = arith.constant 146 : index
      %110 = vector.load %arg14[%c0_74, %c146_75] : memref<48x640xbf16, #tpu.memory_space<vmem>>, vector<24x384xbf16>
      %cst_76 = arith.constant dense<0.000000e+00> : vector<8x384xf32>
      %111 = tpu.matmul %109, %110, %cst_76 {dimension_numbers = #tpu.dot_dimension_numbers<[1], [0], [0], [1], [0, 0, 1, 1], [], []>} : vector<8x24xbf16>, vector<24x384xbf16>, vector<8x384xf32> -> vector<8x384xf32>
      %112 = arith.addf %108, %111 : vector<8x384xf32>
      %113 = vector.extract_strided_slice %78 {offsets = [0, 192], sizes = [8, 24], strides = [1, 1]} : vector<8x216xbf16> to vector<8x24xbf16>
      %c0_77 = arith.constant 0 : index
      %c147_78 = arith.constant 147 : index
      %114 = vector.load %arg14[%c0_77, %c147_78] : memref<48x640xbf16, #tpu.memory_space<vmem>>, vector<24x384xbf16>
      %cst_79 = arith.constant dense<0.000000e+00> : vector<8x384xf32>
      %115 = tpu.matmul %113, %114, %cst_79 {dimension_numbers = #tpu.dot_dimension_numbers<[1], [0], [0], [1], [0, 0, 1, 1], [], []>} : vector<8x24xbf16>, vector<24x384xbf16>, vector<8x384xf32> -> vector<8x384xf32>
      %116 = arith.addf %112, %115 : vector<8x384xf32>
      %117 = vector.broadcast %81 : vector<8x1xf32> to vector<8x384xf32>
      %118 = arith.addf %116, %117 : vector<8x384xf32>
      %cst_80 = arith.constant 3.000000e+00 : f32
      %119 = vector.broadcast %cst_80 : f32 to vector<8x384xf32>
      %120 = arith.addf %118, %119 : vector<8x384xf32>
      %cst_81 = arith.constant 0.000000e+00 : f32
      %cst_82 = arith.constant 6.000000e+00 : f32
      %121 = vector.broadcast %cst_81 : f32 to vector<8x384xf32>
      %122 = arith.maximumf %121, %120 : vector<8x384xf32>
      %123 = vector.broadcast %cst_82 : f32 to vector<8x384xf32>
      %124 = arith.minimumf %123, %122 : vector<8x384xf32>
      %125 = arith.mulf %118, %124 : vector<8x384xf32>
      %cst_83 = arith.constant 0.166666672 : f32
      %126 = vector.broadcast %cst_83 : f32 to vector<8x384xf32>
      %127 = arith.mulf %125, %126 : vector<8x384xf32>
      %128 = vector.broadcast %0 : vector<1x384xf32> to vector<8x384xf32>
      %129 = arith.mulf %127, %128 : vector<8x384xf32>
      %130 = arith.truncf %129 : vector<8x384xf32> to vector<8x384xbf16>
      %c24 = arith.constant 24 : index
      %c128_84 = arith.constant 128 : index
      %131 = vector.load %arg14[%c24, %c128_84] : memref<48x640xbf16, #tpu.memory_space<vmem>>, vector<8x384xbf16>
      tpu.vector_store %arg14[%c24, %c128_84], %130 {strides = array<i32>} : memref<48x640xbf16, #tpu.memory_space<vmem>>, vector<8x384xbf16>,
      %132 = arith.index_cast %arg16 : i32 to index
      %c0_85 = arith.constant 0 : index
      %c0_86 = arith.constant 0 : index
      %133 = vector.load %arg5[%132, %c0_85, %c0_86] : memref<3x8x288xbf16, #tpu.memory_space<vmem>>, vector<1x8x288xbf16>
      %134 = vector.shape_cast %133 : vector<1x8x288xbf16> to vector<8x288xbf16>
      %135 = arith.index_cast %arg16 : i32 to index
      %c0_87 = arith.constant 0 : index
      %c0_88 = arith.constant 0 : index
      %136 = vector.load %arg10[%135, %c0_87, %c0_88] : memref<3x8x1xf32, #tpu.memory_space<vmem>>, vector<1x8x1xf32>
      %137 = vector.shape_cast %136 : vector<1x8x1xf32> to vector<8x1xf32>
      %138 = vector.extract_strided_slice %134 {offsets = [0, 0], sizes = [8, 32], strides = [1, 1]} : vector<8x288xbf16> to vector<8x32xbf16>
      %c0_89 = arith.constant 0 : index
      %c109_90 = arith.constant 109 : index
      %139 = vector.load %arg14[%c0_89, %c109_90] : memref<48x640xbf16, #tpu.memory_space<vmem>>, vector<32x384xbf16>
      %cst_91 = arith.constant dense<0.000000e+00> : vector<8x384xf32>
      %140 = tpu.matmul %138, %139, %cst_91 {dimension_numbers = #tpu.dot_dimension_numbers<[1], [0], [0], [1], [0, 0, 1, 1], [], []>} : vector<8x32xbf16>, vector<32x384xbf16>, vector<8x384xf32> -> vector<8x384xf32>
      %141 = vector.extract_strided_slice %134 {offsets = [0, 32], sizes = [8, 32], strides = [1, 1]} : vector<8x288xbf16> to vector<8x32xbf16>
      %c0_92 = arith.constant 0 : index
      %c110_93 = arith.constant 110 : index
      %142 = vector.load %arg14[%c0_92, %c110_93] : memref<48x640xbf16, #tpu.memory_space<vmem>>, vector<32x384xbf16>
      %cst_94 = arith.constant dense<0.000000e+00> : vector<8x384xf32>
      %143 = tpu.matmul %141, %142, %cst_94 {dimension_numbers = #tpu.dot_dimension_numbers<[1], [0], [0], [1], [0, 0, 1, 1], [], []>} : vector<8x32xbf16>, vector<32x384xbf16>, vector<8x384xf32> -> vector<8x384xf32>
      %144 = arith.addf %140, %143 : vector<8x384xf32>
      %145 = vector.extract_strided_slice %134 {offsets = [0, 64], sizes = [8, 32], strides = [1, 1]} : vector<8x288xbf16> to vector<8x32xbf16>
      %c0_95 = arith.constant 0 : index
      %c111_96 = arith.constant 111 : index
      %146 = vector.load %arg14[%c0_95, %c111_96] : memref<48x640xbf16, #tpu.memory_space<vmem>>, vector<32x384xbf16>
      %cst_97 = arith.constant dense<0.000000e+00> : vector<8x384xf32>
      %147 = tpu.matmul %145, %146, %cst_97 {dimension_numbers = #tpu.dot_dimension_numbers<[1], [0], [0], [1], [0, 0, 1, 1], [], []>} : vector<8x32xbf16>, vector<32x384xbf16>, vector<8x384xf32> -> vector<8x384xf32>
      %148 = arith.addf %144, %147 : vector<8x384xf32>
      %149 = vector.extract_strided_slice %134 {offsets = [0, 96], sizes = [8, 32], strides = [1, 1]} : vector<8x288xbf16> to vector<8x32xbf16>
      %c0_98 = arith.constant 0 : index
      %c127_99 = arith.constant 127 : index
      %150 = vector.load %arg14[%c0_98, %c127_99] : memref<48x640xbf16, #tpu.memory_space<vmem>>, vector<32x384xbf16>
      %cst_100 = arith.constant dense<0.000000e+00> : vector<8x384xf32>
      %151 = tpu.matmul %149, %150, %cst_100 {dimension_numbers = #tpu.dot_dimension_numbers<[1], [0], [0], [1], [0, 0, 1, 1], [], []>} : vector<8x32xbf16>, vector<32x384xbf16>, vector<8x384xf32> -> vector<8x384xf32>
      %152 = arith.addf %148, %151 : vector<8x384xf32>
      %153 = vector.extract_strided_slice %134 {offsets = [0, 128], sizes = [8, 32], strides = [1, 1]} : vector<8x288xbf16> to vector<8x32xbf16>
      %c0_101 = arith.constant 0 : index
      %c128_102 = arith.constant 128 : index
      %154 = vector.load %arg14[%c0_101, %c128_102] : memref<48x640xbf16, #tpu.memory_space<vmem>>, vector<32x384xbf16>
      %cst_103 = arith.constant dense<0.000000e+00> : vector<8x384xf32>
      %155 = tpu.matmul %153, %154, %cst_103 {dimension_numbers = #tpu.dot_dimension_numbers<[1], [0], [0], [1], [0, 0, 1, 1], [], []>} : vector<8x32xbf16>, vector<32x384xbf16>, vector<8x384xf32> -> vector<8x384xf32>
      %156 = arith.addf %152, %155 : vector<8x384xf32>
      %157 = vector.extract_strided_slice %134 {offsets = [0, 160], sizes = [8, 32], strides = [1, 1]} : vector<8x288xbf16> to vector<8x32xbf16>
      %c0_104 = arith.constant 0 : index
      %c129_105 = arith.constant 129 : index
      %158 = vector.load %arg14[%c0_104, %c129_105] : memref<48x640xbf16, #tpu.memory_space<vmem>>, vector<32x384xbf16>
      %cst_106 = arith.constant dense<0.000000e+00> : vector<8x384xf32>
      %159 = tpu.matmul %157, %158, %cst_106 {dimension_numbers = #tpu.dot_dimension_numbers<[1], [0], [0], [1], [0, 0, 1, 1], [], []>} : vector<8x32xbf16>, vector<32x384xbf16>, vector<8x384xf32> -> vector<8x384xf32>
      %160 = arith.addf %156, %159 : vector<8x384xf32>
      %161 = vector.extract_strided_slice %134 {offsets = [0, 192], sizes = [8, 32], strides = [1, 1]} : vector<8x288xbf16> to vector<8x32xbf16>
      %c0_107 = arith.constant 0 : index
      %c145_108 = arith.constant 145 : index
      %162 = vector.load %arg14[%c0_107, %c145_108] : memref<48x640xbf16, #tpu.memory_space<vmem>>, vector<32x384xbf16>
      %cst_109 = arith.constant dense<0.000000e+00> : vector<8x384xf32>
      %163 = tpu.matmul %161, %162, %cst_109 {dimension_numbers = #tpu.dot_dimension_numbers<[1], [0], [0], [1], [0, 0, 1, 1], [], []>} : vector<8x32xbf16>, vector<32x384xbf16>, vector<8x384xf32> -> vector<8x384xf32>
      %164 = arith.addf %160, %163 : vector<8x384xf32>
      %165 = vector.extract_strided_slice %134 {offsets = [0, 224], sizes = [8, 32], strides = [1, 1]} : vector<8x288xbf16> to vector<8x32xbf16>
      %c0_110 = arith.constant 0 : index
      %c146_111 = arith.constant 146 : index
      %166 = vector.load %arg14[%c0_110, %c146_111] : memref<48x640xbf16, #tpu.memory_space<vmem>>, vector<32x384xbf16>
      %cst_112 = arith.constant dense<0.000000e+00> : vector<8x384xf32>
      %167 = tpu.matmul %165, %166, %cst_112 {dimension_numbers = #tpu.dot_dimension_numbers<[1], [0], [0], [1], [0, 0, 1, 1], [], []>} : vector<8x32xbf16>, vector<32x384xbf16>, vector<8x384xf32> -> vector<8x384xf32>
      %168 = arith.addf %164, %167 : vector<8x384xf32>
      %169 = vector.extract_strided_slice %134 {offsets = [0, 256], sizes = [8, 32], strides = [1, 1]} : vector<8x288xbf16> to vector<8x32xbf16>
      %c0_113 = arith.constant 0 : index
      %c147_114 = arith.constant 147 : index
      %170 = vector.load %arg14[%c0_113, %c147_114] : memref<48x640xbf16, #tpu.memory_space<vmem>>, vector<32x384xbf16>
      %cst_115 = arith.constant dense<0.000000e+00> : vector<8x384xf32>
      %171 = tpu.matmul %169, %170, %cst_115 {dimension_numbers = #tpu.dot_dimension_numbers<[1], [0], [0], [1], [0, 0, 1, 1], [], []>} : vector<8x32xbf16>, vector<32x384xbf16>, vector<8x384xf32> -> vector<8x384xf32>
      %172 = arith.addf %168, %171 : vector<8x384xf32>
      %173 = vector.broadcast %137 : vector<8x1xf32> to vector<8x384xf32>
      %174 = arith.addf %172, %173 : vector<8x384xf32>
      %cst_116 = arith.constant 3.000000e+00 : f32
      %175 = vector.broadcast %cst_116 : f32 to vector<8x384xf32>
      %176 = arith.addf %174, %175 : vector<8x384xf32>
      %cst_117 = arith.constant 0.000000e+00 : f32
      %cst_118 = arith.constant 6.000000e+00 : f32
      %177 = vector.broadcast %cst_117 : f32 to vector<8x384xf32>
      %178 = arith.maximumf %177, %176 : vector<8x384xf32>
      %179 = vector.broadcast %cst_118 : f32 to vector<8x384xf32>
      %180 = arith.minimumf %179, %178 : vector<8x384xf32>
      %181 = arith.mulf %174, %180 : vector<8x384xf32>
      %cst_119 = arith.constant 0.166666672 : f32
      %182 = vector.broadcast %cst_119 : f32 to vector<8x384xf32>
      %183 = arith.mulf %181, %182 : vector<8x384xf32>
      %184 = vector.broadcast %0 : vector<1x384xf32> to vector<8x384xf32>
      %185 = arith.mulf %183, %184 : vector<8x384xf32>
      %186 = arith.truncf %185 : vector<8x384xf32> to vector<8x384xbf16>
      %c32 = arith.constant 32 : index
      %c128_120 = arith.constant 128 : index
      %187 = vector.load %arg14[%c32, %c128_120] : memref<48x640xbf16, #tpu.memory_space<vmem>>, vector<8x384xbf16>
      tpu.vector_store %arg14[%c32, %c128_120], %186 {strides = array<i32>} : memref<48x640xbf16, #tpu.memory_space<vmem>>, vector<8x384xbf16>,
      %188 = arith.index_cast %arg16 : i32 to index
      %c0_121 = arith.constant 0 : index
      %c0_122 = arith.constant 0 : index
      %189 = vector.load %arg6[%188, %c0_121, %c0_122] : memref<3x8x360xbf16, #tpu.memory_space<vmem>>, vector<1x8x360xbf16>
      %190 = vector.shape_cast %189 : vector<1x8x360xbf16> to vector<8x360xbf16>
      %191 = arith.index_cast %arg16 : i32 to index
      %c0_123 = arith.constant 0 : index
      %c0_124 = arith.constant 0 : index
      %192 = vector.load %arg11[%191, %c0_123, %c0_124] : memref<3x8x1xf32, #tpu.memory_space<vmem>>, vector<1x8x1xf32>
      %193 = vector.shape_cast %192 : vector<1x8x1xf32> to vector<8x1xf32>
      %194 = vector.extract_strided_slice %190 {offsets = [0, 0], sizes = [8, 40], strides = [1, 1]} : vector<8x360xbf16> to vector<8x40xbf16>
      %c0_125 = arith.constant 0 : index
      %c109_126 = arith.constant 109 : index
      %195 = vector.load %arg14[%c0_125, %c109_126] : memref<48x640xbf16, #tpu.memory_space<vmem>>, vector<40x384xbf16>
      %cst_127 = arith.constant dense<0.000000e+00> : vector<8x384xf32>
      %196 = tpu.matmul %194, %195, %cst_127 {dimension_numbers = #tpu.dot_dimension_numbers<[1], [0], [0], [1], [0, 0, 1, 1], [], []>} : vector<8x40xbf16>, vector<40x384xbf16>, vector<8x384xf32> -> vector<8x384xf32>
      %197 = vector.extract_strided_slice %190 {offsets = [0, 40], sizes = [8, 40], strides = [1, 1]} : vector<8x360xbf16> to vector<8x40xbf16>
      %c0_128 = arith.constant 0 : index
      %c110_129 = arith.constant 110 : index
      %198 = vector.load %arg14[%c0_128, %c110_129] : memref<48x640xbf16, #tpu.memory_space<vmem>>, vector<40x384xbf16>
      %cst_130 = arith.constant dense<0.000000e+00> : vector<8x384xf32>
      %199 = tpu.matmul %197, %198, %cst_130 {dimension_numbers = #tpu.dot_dimension_numbers<[1], [0], [0], [1], [0, 0, 1, 1], [], []>} : vector<8x40xbf16>, vector<40x384xbf16>, vector<8x384xf32> -> vector<8x384xf32>
      %200 = arith.addf %196, %199 : vector<8x384xf32>
      %201 = vector.extract_strided_slice %190 {offsets = [0, 80], sizes = [8, 40], strides = [1, 1]} : vector<8x360xbf16> to vector<8x40xbf16>
      %c0_131 = arith.constant 0 : index
      %c111_132 = arith.constant 111 : index
      %202 = vector.load %arg14[%c0_131, %c111_132] : memref<48x640xbf16, #tpu.memory_space<vmem>>, vector<40x384xbf16>
      %cst_133 = arith.constant dense<0.000000e+00> : vector<8x384xf32>
      %203 = tpu.matmul %201, %202, %cst_133 {dimension_numbers = #tpu.dot_dimension_numbers<[1], [0], [0], [1], [0, 0, 1, 1], [], []>} : vector<8x40xbf16>, vector<40x384xbf16>, vector<8x384xf32> -> vector<8x384xf32>
      %204 = arith.addf %200, %203 : vector<8x384xf32>
      %205 = vector.extract_strided_slice %190 {offsets = [0, 120], sizes = [8, 40], strides = [1, 1]} : vector<8x360xbf16> to vector<8x40xbf16>
      %c0_134 = arith.constant 0 : index
      %c127_135 = arith.constant 127 : index
      %206 = vector.load %arg14[%c0_134, %c127_135] : memref<48x640xbf16, #tpu.memory_space<vmem>>, vector<40x384xbf16>
      %cst_136 = arith.constant dense<0.000000e+00> : vector<8x384xf32>
      %207 = tpu.matmul %205, %206, %cst_136 {dimension_numbers = #tpu.dot_dimension_numbers<[1], [0], [0], [1], [0, 0, 1, 1], [], []>} : vector<8x40xbf16>, vector<40x384xbf16>, vector<8x384xf32> -> vector<8x384xf32>
      %208 = arith.addf %204, %207 : vector<8x384xf32>
      %209 = vector.extract_strided_slice %190 {offsets = [0, 160], sizes = [8, 40], strides = [1, 1]} : vector<8x360xbf16> to vector<8x40xbf16>
      %c0_137 = arith.constant 0 : index
      %c128_138 = arith.constant 128 : index
      %210 = vector.load %arg14[%c0_137, %c128_138] : memref<48x640xbf16, #tpu.memory_space<vmem>>, vector<40x384xbf16>
      %cst_139 = arith.constant dense<0.000000e+00> : vector<8x384xf32>
      %211 = tpu.matmul %209, %210, %cst_139 {dimension_numbers = #tpu.dot_dimension_numbers<[1], [0], [0], [1], [0, 0, 1, 1], [], []>} : vector<8x40xbf16>, vector<40x384xbf16>, vector<8x384xf32> -> vector<8x384xf32>
      %212 = arith.addf %208, %211 : vector<8x384xf32>
      %213 = vector.extract_strided_slice %190 {offsets = [0, 200], sizes = [8, 40], strides = [1, 1]} : vector<8x360xbf16> to vector<8x40xbf16>
      %c0_140 = arith.constant 0 : index
      %c129_141 = arith.constant 129 : index
      %214 = vector.load %arg14[%c0_140, %c129_141] : memref<48x640xbf16, #tpu.memory_space<vmem>>, vector<40x384xbf16>
      %cst_142 = arith.constant dense<0.000000e+00> : vector<8x384xf32>
      %215 = tpu.matmul %213, %214, %cst_142 {dimension_numbers = #tpu.dot_dimension_numbers<[1], [0], [0], [1], [0, 0, 1, 1], [], []>} : vector<8x40xbf16>, vector<40x384xbf16>, vector<8x384xf32> -> vector<8x384xf32>
      %216 = arith.addf %212, %215 : vector<8x384xf32>
      %217 = vector.extract_strided_slice %190 {offsets = [0, 240], sizes = [8, 40], strides = [1, 1]} : vector<8x360xbf16> to vector<8x40xbf16>
      %c0_143 = arith.constant 0 : index
      %c145_144 = arith.constant 145 : index
      %218 = vector.load %arg14[%c0_143, %c145_144] : memref<48x640xbf16, #tpu.memory_space<vmem>>, vector<40x384xbf16>
      %cst_145 = arith.constant dense<0.000000e+00> : vector<8x384xf32>
      %219 = tpu.matmul %217, %218, %cst_145 {dimension_numbers = #tpu.dot_dimension_numbers<[1], [0], [0], [1], [0, 0, 1, 1], [], []>} : vector<8x40xbf16>, vector<40x384xbf16>, vector<8x384xf32> -> vector<8x384xf32>
      %220 = arith.addf %216, %219 : vector<8x384xf32>
      %221 = vector.extract_strided_slice %190 {offsets = [0, 280], sizes = [8, 40], strides = [1, 1]} : vector<8x360xbf16> to vector<8x40xbf16>
      %c0_146 = arith.constant 0 : index
      %c146_147 = arith.constant 146 : index
      %222 = vector.load %arg14[%c0_146, %c146_147] : memref<48x640xbf16, #tpu.memory_space<vmem>>, vector<40x384xbf16>
      %cst_148 = arith.constant dense<0.000000e+00> : vector<8x384xf32>
      %223 = tpu.matmul %221, %222, %cst_148 {dimension_numbers = #tpu.dot_dimension_numbers<[1], [0], [0], [1], [0, 0, 1, 1], [], []>} : vector<8x40xbf16>, vector<40x384xbf16>, vector<8x384xf32> -> vector<8x384xf32>
      %224 = arith.addf %220, %223 : vector<8x384xf32>
      %225 = vector.extract_strided_slice %190 {offsets = [0, 320], sizes = [8, 40], strides = [1, 1]} : vector<8x360xbf16> to vector<8x40xbf16>
      %c0_149 = arith.constant 0 : index
      %c147_150 = arith.constant 147 : index
      %226 = vector.load %arg14[%c0_149, %c147_150] : memref<48x640xbf16, #tpu.memory_space<vmem>>, vector<40x384xbf16>
      %cst_151 = arith.constant dense<0.000000e+00> : vector<8x384xf32>
      %227 = tpu.matmul %225, %226, %cst_151 {dimension_numbers = #tpu.dot_dimension_numbers<[1], [0], [0], [1], [0, 0, 1, 1], [], []>} : vector<8x40xbf16>, vector<40x384xbf16>, vector<8x384xf32> -> vector<8x384xf32>
      %228 = arith.addf %224, %227 : vector<8x384xf32>
      %229 = vector.broadcast %193 : vector<8x1xf32> to vector<8x384xf32>
      %230 = arith.addf %228, %229 : vector<8x384xf32>
      %cst_152 = arith.constant 3.000000e+00 : f32
      %231 = vector.broadcast %cst_152 : f32 to vector<8x384xf32>
      %232 = arith.addf %230, %231 : vector<8x384xf32>
      %cst_153 = arith.constant 0.000000e+00 : f32
      %cst_154 = arith.constant 6.000000e+00 : f32
      %233 = vector.broadcast %cst_153 : f32 to vector<8x384xf32>
      %234 = arith.maximumf %233, %232 : vector<8x384xf32>
      %235 = vector.broadcast %cst_154 : f32 to vector<8x384xf32>
      %236 = arith.minimumf %235, %234 : vector<8x384xf32>
      %237 = arith.mulf %230, %236 : vector<8x384xf32>
      %cst_155 = arith.constant 0.166666672 : f32
      %238 = vector.broadcast %cst_155 : f32 to vector<8x384xf32>
      %239 = arith.mulf %237, %238 : vector<8x384xf32>
      %240 = vector.broadcast %0 : vector<1x384xf32> to vector<8x384xf32>
      %241 = arith.mulf %239, %240 : vector<8x384xf32>
      %242 = arith.truncf %241 : vector<8x384xf32> to vector<8x384xbf16>
      %c40 = arith.constant 40 : index
      %c128_156 = arith.constant 128 : index
      %243 = vector.load %arg14[%c40, %c128_156] : memref<48x640xbf16, #tpu.memory_space<vmem>>, vector<8x384xbf16>
      tpu.vector_store %arg14[%c40, %c128_156], %242 {strides = array<i32>} : memref<48x640xbf16, #tpu.memory_space<vmem>>, vector<8x384xbf16>,
      %244 = arith.index_cast %arg16 : i32 to index
      %c0_157 = arith.constant 0 : index
      %c0_158 = arith.constant 0 : index
      %245 = vector.load %arg7[%244, %c0_157, %c0_158] : memref<3x16x432xbf16, #tpu.memory_space<vmem>>, vector<1x16x432xbf16>
      %246 = vector.shape_cast %245 : vector<1x16x432xbf16> to vector<16x432xbf16>
      %247 = arith.index_cast %arg16 : i32 to index
      %c0_159 = arith.constant 0 : index
      %c0_160 = arith.constant 0 : index
      %248 = vector.load %arg12[%247, %c0_159, %c0_160] : memref<3x16x1xf32, #tpu.memory_space<vmem>>, vector<1x16x1xf32>
      %249 = vector.shape_cast %248 : vector<1x16x1xf32> to vector<16x1xf32>
      %250 = vector.extract_strided_slice %246 {offsets = [0, 0], sizes = [16, 48], strides = [1, 1]} : vector<16x432xbf16> to vector<16x48xbf16>
      %c0_161 = arith.constant 0 : index
      %c109_162 = arith.constant 109 : index
      %251 = vector.load %arg14[%c0_161, %c109_162] : memref<48x640xbf16, #tpu.memory_space<vmem>>, vector<48x384xbf16>
      %cst_163 = arith.constant dense<0.000000e+00> : vector<16x384xf32>
      %252 = tpu.matmul %250, %251, %cst_163 {dimension_numbers = #tpu.dot_dimension_numbers<[1], [0], [0], [1], [0, 0, 1, 1], [], []>} : vector<16x48xbf16>, vector<48x384xbf16>, vector<16x384xf32> -> vector<16x384xf32>
      %253 = vector.extract_strided_slice %246 {offsets = [0, 48], sizes = [16, 48], strides = [1, 1]} : vector<16x432xbf16> to vector<16x48xbf16>
      %c0_164 = arith.constant 0 : index
      %c110_165 = arith.constant 110 : index
      %254 = vector.load %arg14[%c0_164, %c110_165] : memref<48x640xbf16, #tpu.memory_space<vmem>>, vector<48x384xbf16>
      %cst_166 = arith.constant dense<0.000000e+00> : vector<16x384xf32>
      %255 = tpu.matmul %253, %254, %cst_166 {dimension_numbers = #tpu.dot_dimension_numbers<[1], [0], [0], [1], [0, 0, 1, 1], [], []>} : vector<16x48xbf16>, vector<48x384xbf16>, vector<16x384xf32> -> vector<16x384xf32>
      %256 = arith.addf %252, %255 : vector<16x384xf32>
      %257 = vector.extract_strided_slice %246 {offsets = [0, 96], sizes = [16, 48], strides = [1, 1]} : vector<16x432xbf16> to vector<16x48xbf16>
      %c0_167 = arith.constant 0 : index
      %c111_168 = arith.constant 111 : index
      %258 = vector.load %arg14[%c0_167, %c111_168] : memref<48x640xbf16, #tpu.memory_space<vmem>>, vector<48x384xbf16>
      %cst_169 = arith.constant dense<0.000000e+00> : vector<16x384xf32>
      %259 = tpu.matmul %257, %258, %cst_169 {dimension_numbers = #tpu.dot_dimension_numbers<[1], [0], [0], [1], [0, 0, 1, 1], [], []>} : vector<16x48xbf16>, vector<48x384xbf16>, vector<16x384xf32> -> vector<16x384xf32>
      %260 = arith.addf %256, %259 : vector<16x384xf32>
      %261 = vector.extract_strided_slice %246 {offsets = [0, 144], sizes = [16, 48], strides = [1, 1]} : vector<16x432xbf16> to vector<16x48xbf16>
      %c0_170 = arith.constant 0 : index
      %c127_171 = arith.constant 127 : index
      %262 = vector.load %arg14[%c0_170, %c127_171] : memref<48x640xbf16, #tpu.memory_space<vmem>>, vector<48x384xbf16>
      %cst_172 = arith.constant dense<0.000000e+00> : vector<16x384xf32>
      %263 = tpu.matmul %261, %262, %cst_172 {dimension_numbers = #tpu.dot_dimension_numbers<[1], [0], [0], [1], [0, 0, 1, 1], [], []>} : vector<16x48xbf16>, vector<48x384xbf16>, vector<16x384xf32> -> vector<16x384xf32>
      %264 = arith.addf %260, %263 : vector<16x384xf32>
      %265 = vector.extract_strided_slice %246 {offsets = [0, 192], sizes = [16, 48], strides = [1, 1]} : vector<16x432xbf16> to vector<16x48xbf16>
      %c0_173 = arith.constant 0 : index
      %c128_174 = arith.constant 128 : index
      %266 = vector.load %arg14[%c0_173, %c128_174] : memref<48x640xbf16, #tpu.memory_space<vmem>>, vector<48x384xbf16>
      %cst_175 = arith.constant dense<0.000000e+00> : vector<16x384xf32>
      %267 = tpu.matmul %265, %266, %cst_175 {dimension_numbers = #tpu.dot_dimension_numbers<[1], [0], [0], [1], [0, 0, 1, 1], [], []>} : vector<16x48xbf16>, vector<48x384xbf16>, vector<16x384xf32> -> vector<16x384xf32>
      %268 = arith.addf %264, %267 : vector<16x384xf32>
      %269 = vector.extract_strided_slice %246 {offsets = [0, 240], sizes = [16, 48], strides = [1, 1]} : vector<16x432xbf16> to vector<16x48xbf16>
      %c0_176 = arith.constant 0 : index
      %c129_177 = arith.constant 129 : index
      %270 = vector.load %arg14[%c0_176, %c129_177] : memref<48x640xbf16, #tpu.memory_space<vmem>>, vector<48x384xbf16>
      %cst_178 = arith.constant dense<0.000000e+00> : vector<16x384xf32>
      %271 = tpu.matmul %269, %270, %cst_178 {dimension_numbers = #tpu.dot_dimension_numbers<[1], [0], [0], [1], [0, 0, 1, 1], [], []>} : vector<16x48xbf16>, vector<48x384xbf16>, vector<16x384xf32> -> vector<16x384xf32>
      %272 = arith.addf %268, %271 : vector<16x384xf32>
      %273 = vector.extract_strided_slice %246 {offsets = [0, 288], sizes = [16, 48], strides = [1, 1]} : vector<16x432xbf16> to vector<16x48xbf16>
      %c0_179 = arith.constant 0 : index
      %c145_180 = arith.constant 145 : index
      %274 = vector.load %arg14[%c0_179, %c145_180] : memref<48x640xbf16, #tpu.memory_space<vmem>>, vector<48x384xbf16>
      %cst_181 = arith.constant dense<0.000000e+00> : vector<16x384xf32>
      %275 = tpu.matmul %273, %274, %cst_181 {dimension_numbers = #tpu.dot_dimension_numbers<[1], [0], [0], [1], [0, 0, 1, 1], [], []>} : vector<16x48xbf16>, vector<48x384xbf16>, vector<16x384xf32> -> vector<16x384xf32>
      %276 = arith.addf %272, %275 : vector<16x384xf32>
      %277 = vector.extract_strided_slice %246 {offsets = [0, 336], sizes = [16, 48], strides = [1, 1]} : vector<16x432xbf16> to vector<16x48xbf16>
      %c0_182 = arith.constant 0 : index
      %c146_183 = arith.constant 146 : index
      %278 = vector.load %arg14[%c0_182, %c146_183] : memref<48x640xbf16, #tpu.memory_space<vmem>>, vector<48x384xbf16>
      %cst_184 = arith.constant dense<0.000000e+00> : vector<16x384xf32>
      %279 = tpu.matmul %277, %278, %cst_184 {dimension_numbers = #tpu.dot_dimension_numbers<[1], [0], [0], [1], [0, 0, 1, 1], [], []>} : vector<16x48xbf16>, vector<48x384xbf16>, vector<16x384xf32> -> vector<16x384xf32>
      %280 = arith.addf %276, %279 : vector<16x384xf32>
      %281 = vector.extract_strided_slice %246 {offsets = [0, 384], sizes = [16, 48], strides = [1, 1]} : vector<16x432xbf16> to vector<16x48xbf16>
      %c0_185 = arith.constant 0 : index
      %c147_186 = arith.constant 147 : index
      %282 = vector.load %arg14[%c0_185, %c147_186] : memref<48x640xbf16, #tpu.memory_space<vmem>>, vector<48x384xbf16>
      %cst_187 = arith.constant dense<0.000000e+00> : vector<16x384xf32>
      %283 = tpu.matmul %281, %282, %cst_187 {dimension_numbers = #tpu.dot_dimension_numbers<[1], [0], [0], [1], [0, 0, 1, 1], [], []>} : vector<16x48xbf16>, vector<48x384xbf16>, vector<16x384xf32> -> vector<16x384xf32>
      %284 = arith.addf %280, %283 : vector<16x384xf32>
      %285 = vector.broadcast %249 : vector<16x1xf32> to vector<16x384xf32>
      %286 = arith.addf %284, %285 : vector<16x384xf32>
      %c0_188 = arith.constant 0 : index
      %c0_189 = arith.constant 0 : index
      %287 = vector.load %arg15[%c0_188, %c0_189] : memref<16x384xf32, #tpu.memory_space<vmem>>, vector<16x384xf32>
      %288 = vector.broadcast %0 : vector<1x384xf32> to vector<16x384xf32>
      %289 = arith.mulf %286, %288 : vector<16x384xf32>
      %cst_190 = arith.constant 2.000000e-01 : f32
      %290 = vector.broadcast %cst_190 : f32 to vector<16x384xf32>
      %291 = arith.mulf %289, %290 : vector<16x384xf32>
      %292 = arith.addf %291, %287 : vector<16x384xf32>
      %cst_191 = arith.constant 2.000000e-01 : f32
      %293 = vector.broadcast %cst_191 : f32 to vector<16x384xf32>
      %294 = arith.mulf %292, %293 : vector<16x384xf32>
      %295 = arith.addf %294, %287 : vector<16x384xf32>
      %c0_192 = arith.constant 0 : index
      %c0_193 = arith.constant 0 : index
      %296 = vector.load %arg15[%c0_192, %c0_193] : memref<16x384xf32, #tpu.memory_space<vmem>>, vector<16x384xf32>
      tpu.vector_store %arg15[%c0_192, %c0_193], %295 {strides = array<i32>} : memref<16x384xf32, #tpu.memory_space<vmem>>, vector<16x384xf32>,
      %297 = arith.truncf %295 : vector<16x384xf32> to vector<16x384xbf16>
      %c0_194 = arith.constant 0 : index
      %c128_195 = arith.constant 128 : index
      %298 = vector.load %arg14[%c0_194, %c128_195] : memref<48x640xbf16, #tpu.memory_space<vmem>>, vector<16x384xbf16>
      tpu.vector_store %arg14[%c0_194, %c128_195], %297 {strides = array<i32>} : memref<48x640xbf16, #tpu.memory_space<vmem>>, vector<16x384xbf16>,
    }
    %c3_i32_11 = arith.constant 3 : i32
    %c0_12 = arith.constant 0 : index
    %c0_13 = arith.constant 0 : index
    %11 = vector.load %arg15[%c0_12, %c0_13] : memref<16x384xf32, #tpu.memory_space<vmem>>, vector<16x384xf32>
    %cst_14 = arith.constant 2.000000e-01 : f32
    %12 = vector.broadcast %cst_14 : f32 to vector<16x384xf32>
    %13 = arith.mulf %11, %12 : vector<16x384xf32>
    %c0_15 = arith.constant 0 : index
    %c0_16 = arith.constant 0 : index
    %c0_17 = arith.constant 0 : index
    %14 = vector.load %arg1[%c0_15, %c0_16, %c0_17] : memref<1x16x384xf32, #tpu.memory_space<vmem>>, vector<1x16x384xf32>
    %15 = vector.shape_cast %14 : vector<1x16x384xf32> to vector<16x384xf32>
    %16 = arith.addf %13, %15 : vector<16x384xf32>
    %c0_18 = arith.constant 0 : index
    %c0_19 = arith.constant 0 : index
    %c0_20 = arith.constant 0 : index
    %17 = vector.load %arg13[%c0_18, %c0_19, %c0_20] : memref<1x16x384xf32, #tpu.memory_space<vmem>>, vector<1x16x384xf32>
    %18 = vector.shape_cast %17 : vector<1x16x384xf32> to vector<16x384xf32>
    %19 = vector.shape_cast %16 : vector<16x384xf32> to vector<1x16x384xf32>
    tpu.vector_store %arg13[%c0_18, %c0_19, %c0_20], %19 {strides = array<i32>} : memref<1x16x384xf32, #tpu.memory_space<vmem>>, vector<1x16x384xf32>,
    return
  }
  func.func @transform_0(%arg0: i32) -> (i32, i32, i32) {
    %c0_i32 = arith.constant 0 : i32
    %c0_i32_0 = arith.constant 0 : i32
    %c0_i32_1 = arith.constant 0 : i32
    return %arg0, %c0_i32, %c0_i32_0 : i32, i32, i32
  }
  func.func @transform_1(%arg0: i32) -> (i32, i32) {
    %c0_i32 = arith.constant 0 : i32
    %c0_i32_0 = arith.constant 0 : i32
    %c0_i32_1 = arith.constant 0 : i32
    return %c0_i32, %c0_i32_0 : i32, i32
  }
  func.func @transform_2(%arg0: i32) -> (i32, i32, i32) {
    %c0_i32 = arith.constant 0 : i32
    %c0_i32_0 = arith.constant 0 : i32
    %c0_i32_1 = arith.constant 0 : i32
    %c0_i32_2 = arith.constant 0 : i32
    return %c0_i32, %c0_i32_0, %c0_i32_1 : i32, i32, i32
  }
  func.func @transform_3(%arg0: i32) -> (i32, i32, i32) {
    %c0_i32 = arith.constant 0 : i32
    %c0_i32_0 = arith.constant 0 : i32
    %c0_i32_1 = arith.constant 0 : i32
    %c0_i32_2 = arith.constant 0 : i32
    return %c0_i32, %c0_i32_0, %c0_i32_1 : i32, i32, i32
  }
  func.func @transform_4(%arg0: i32) -> (i32, i32, i32) {
    %c0_i32 = arith.constant 0 : i32
    %c0_i32_0 = arith.constant 0 : i32
    %c0_i32_1 = arith.constant 0 : i32
    %c0_i32_2 = arith.constant 0 : i32
    return %c0_i32, %c0_i32_0, %c0_i32_1 : i32, i32, i32
  }
  func.func @transform_5(%arg0: i32) -> (i32, i32, i32) {
    %c0_i32 = arith.constant 0 : i32
    %c0_i32_0 = arith.constant 0 : i32
    %c0_i32_1 = arith.constant 0 : i32
    %c0_i32_2 = arith.constant 0 : i32
    return %c0_i32, %c0_i32_0, %c0_i32_1 : i32, i32, i32
  }
  func.func @transform_6(%arg0: i32) -> (i32, i32, i32) {
    %c0_i32 = arith.constant 0 : i32
    %c0_i32_0 = arith.constant 0 : i32
    %c0_i32_1 = arith.constant 0 : i32
    %c0_i32_2 = arith.constant 0 : i32
    return %c0_i32, %c0_i32_0, %c0_i32_1 : i32, i32, i32
  }
  func.func @transform_7(%arg0: i32) -> (i32, i32, i32) {
    %c0_i32 = arith.constant 0 : i32
    %c0_i32_0 = arith.constant 0 : i32
    %c0_i32_1 = arith.constant 0 : i32
    %c0_i32_2 = arith.constant 0 : i32
    return %c0_i32, %c0_i32_0, %c0_i32_1 : i32, i32, i32
  }
  func.func @transform_8(%arg0: i32) -> (i32, i32, i32) {
    %c0_i32 = arith.constant 0 : i32
    %c0_i32_0 = arith.constant 0 : i32
    %c0_i32_1 = arith.constant 0 : i32
    %c0_i32_2 = arith.constant 0 : i32
    return %c0_i32, %c0_i32_0, %c0_i32_1 : i32, i32, i32
  }
  func.func @transform_9(%arg0: i32) -> (i32, i32, i32) {
    %c0_i32 = arith.constant 0 : i32
    %c0_i32_0 = arith.constant 0 : i32
    %c0_i32_1 = arith.constant 0 : i32
    %c0_i32_2 = arith.constant 0 : i32
    return %c0_i32, %c0_i32_0, %c0_i32_1 : i32, i32, i32
  }
  func.func @transform_10(%arg0: i32) -> (i32, i32, i32) {
    %c0_i32 = arith.constant 0 : i32
    %c0_i32_0 = arith.constant 0 : i32
    %c0_i32_1 = arith.constant 0 : i32
    %c0_i32_2 = arith.constant 0 : i32
    return %c0_i32, %c0_i32_0, %c0_i32_1 : i32, i32, i32
  }
  func.func @transform_11(%arg0: i32) -> (i32, i32, i32) {
    %c0_i32 = arith.constant 0 : i32
    %c0_i32_0 = arith.constant 0 : i32
    %c0_i32_1 = arith.constant 0 : i32
    %c0_i32_2 = arith.constant 0 : i32
    return %c0_i32, %c0_i32_0, %c0_i32_1 : i32, i32, i32
  }
  func.func @transform_12(%arg0: i32) -> (i32, i32, i32) {
    %c0_i32 = arith.constant 0 : i32
    %c0_i32_0 = arith.constant 0 : i32
    %c0_i32_1 = arith.constant 0 : i32
    return %arg0, %c0_i32, %c0_i32_0 : i32, i32, i32
  }
}

</mosaic_0001>

<llo_original>
// kernel: rrdb_forward.1
$region0: #{rrdb_forward.1}
  #allocation0 [shape = 'u32[]', space=smem, size = 0x4, offset = 0x4, fixed_abs, tag = 'smem constant byte address 0x4 - core index']
  #allocation1 [shape = 'u32[144,128]{1,0:T(1,128)}', space=vmem, size = 0x12000, scoped, tag = 'internal scratch']
  #allocation2 [shape = 'bf16[48,640]{1,0:T(16,128)(2,1)}', space=vmem, size = 0xf000, scoped, tag = 'scratch operand']
  #allocation3 [shape = 'f32[16,384]{1,0:T(8,128)}', space=vmem, size = 0x6000, scoped, tag = 'scratch operand']
  %s0 = inlined_call_operand.vmem [shape: f32[2,16,384], index: 0, kind: input, shape index: {}]
  %s1 = inlined_call_operand.vmem [shape: f32[1,384], index: 1, kind: input, shape index: {}]
  %s2 = inlined_call_operand.vmem [shape: bf16[3,8,144], index: 2, kind: input, shape index: {}]
  %s3 = inlined_call_operand.vmem [shape: bf16[3,8,216], index: 3, kind: input, shape index: {}]
  %s4 = inlined_call_operand.vmem [shape: bf16[3,8,288], index: 4, kind: input, shape index: {}]
  %s5 = inlined_call_operand.vmem [shape: bf16[3,8,360], index: 5, kind: input, shape index: {}]
  %s6 = inlined_call_operand.vmem [shape: bf16[3,16,432], index: 6, kind: input, shape index: {}]
  %s7 = inlined_call_operand.vmem [shape: f32[3,8,1], index: 7, kind: input, shape index: {}]
  %s8 = inlined_call_operand.vmem [shape: f32[3,8,1], index: 8, kind: input, shape index: {}]
  %s9 = inlined_call_operand.vmem [shape: f32[3,8,1], index: 9, kind: input, shape index: {}]
  %s10 = inlined_call_operand.vmem [shape: f32[3,8,1], index: 10, kind: input, shape index: {}]
  %s11 = inlined_call_operand.vmem [shape: f32[3,16,1], index: 11, kind: input, shape index: {}]
  %s12 = inlined_call_operand.vmem [shape: f32[2,16,384], index: 12, kind: output, shape index: {}]
  %s13 = sld [smem:[#allocation0]]
  $region88: #{rrdb_forward.1} parent=0
    _
  %s15 = ssub.s32 1, %s13
  %s16 = scalar_select 0, %s15, %s13
  loop: start=0, step=1, limit=4
  $region2: #{rrdb_forward.1} parent=0 // loop_pre_header
    _
  $region3: #{rrdb_forward.1} parent=0 // loop_header
    %s18 = sphi 0, %s22
    %p19 = scmp.ge.s32.totalorder %s18, 4
    %s28 = sphi 0, %s30
    %s31 = sphi 0, %s28
    %s32 = sphi 0, %s31
    %s48 = sphi 0, %s32
    %s52 = sphi 0, %s52
    %s54 = sphi 0, %s52
    %s55 = sphi 0, %s54
    %s69 = sphi 0, %s55
    %s73 = sphi 0, %s73
    %s75 = sphi 0, %s73
    %s76 = sphi 0, %s75
    %s90 = sphi 0, %s76
    %s94 = sphi 0, %s94
    %s96 = sphi 0, %s94
    %s97 = sphi 0, %s96
    %s111 = sphi 0, %s97
    %s115 = sphi 0, %s115
    %s117 = sphi 0, %s115
    %s118 = sphi 0, %s117
    %s132 = sphi 0, %s118
    %s136 = sphi 0, %s136
    %s138 = sphi 0, %s136
    %s139 = sphi 0, %s138
    %s153 = sphi 0, %s139
    %s157 = sphi 0, %s157
    %s159 = sphi 0, %s157
    %s160 = sphi 0, %s159
    %s174 = sphi 0, %s160
    %s178 = sphi 0, %s178
    %s180 = sphi 0, %s178
    %s181 = sphi 0, %s180
    %s195 = sphi 0, %s181
    %s199 = sphi 0, %s199
    %s201 = sphi 0, %s199
    %s202 = sphi 0, %s201
    %s216 = sphi 0, %s202
    %s220 = sphi 0, %s220
    %s222 = sphi 0, %s220
    %s223 = sphi 0, %s222
    %s237 = sphi 0, %s223
    %s241 = sphi 0, %s241
    %s243 = sphi 0, %s241
    %s244 = sphi 0, %s243
    %s258 = sphi 0, %s244
    %s262 = sphi 0, %s262
    %s264 = sphi 0, %s262
    %s265 = sphi 0, %s264
    %s279 = sphi 0, %s265
    %s285 = sphi 0, %s287
    %s288 = sphi 0, %s285
    %s289 = sphi 0, %s288
    %s305 = sphi 0, %s289
  $region4: #{rrdb_forward.1} parent=0 // loop_header_branch
    %21 = sbr.rel (%p19) target = $region8
  $region5: #{rrdb_forward.1} parent=0 // loop_body
    %s23 = ssub.s32 %s18, 1
    %s24 = ssub.s32 %s18, 2
    %s25 = sadd.s32 %s18, 1
    %s26 = ssub.s32 %s18, %s25
    %p27 = scmp.eq.s32.totalorder %s26, 0
    %s29 = sadd.s32 %s28, 1
    %s30 = scalar_select %p27, %s28, %s29
    %p33 = pneg %p27
    %p34 = scmp.eq.s32.totalorder %s18, 1
    %p35 = por %p33, %p34
    %p36 = scmp.ne.s32.totalorder %s28, %s31
    %p37 = scmp.eq.s32.totalorder %s18, 0
    %p38 = por %p36, %p37
    %p39 = scmp.ne.s32.totalorder %s28, %s31
    %p40 = scmp.eq.s32.totalorder %s23, 1
    %p41 = por %p39, %p40
    %p42 = scmp.ne.s32.totalorder %s31, %s32
    %p43 = scmp.eq.s32.totalorder %s23, 0
    %p44 = por %p42, %p43
    %p45 = scmp.ne.s32.totalorder %s31, %s32
    %p46 = scmp.eq.s32.totalorder %s24, 1
    %p47 = por %p45, %p46
    %p49 = scmp.ne.s32.totalorder %s32, %s48
    %p50 = scmp.eq.s32.totalorder %s24, 0
    %p51 = por %p49, %p50
    %s53 = sadd.s32 %s52, 1
    %p56 = scmp.eq.s32.totalorder %s18, 1
    %p57 = scmp.ne.s32.totalorder %s52, %s54
    %p58 = scmp.eq.s32.totalorder %s18, 0
    %p59 = por %p57, %p58
    %p60 = scmp.ne.s32.totalorder %s52, %s54
    %p61 = scmp.eq.s32.totalorder %s23, 1
    %p62 = por %p60, %p61
    %p63 = scmp.ne.s32.totalorder %s54, %s55
    %p64 = scmp.eq.s32.totalorder %s23, 0
    %p65 = por %p63, %p64
    %p66 = scmp.ne.s32.totalorder %s54, %s55
    %p67 = scmp.eq.s32.totalorder %s24, 1
    %p68 = por %p66, %p67
    %p70 = scmp.ne.s32.totalorder %s55, %s69
    %p71 = scmp.eq.s32.totalorder %s24, 0
    %p72 = por %p70, %p71
    %s74 = sadd.s32 %s73, 1
    %p77 = scmp.eq.s32.totalorder %s18, 1
    %p78 = scmp.ne.s32.totalorder %s73, %s75
    %p79 = scmp.eq.s32.totalorder %s18, 0
    %p80 = por %p78, %p79
    %p81 = scmp.ne.s32.totalorder %s73, %s75
    %p82 = scmp.eq.s32.totalorder %s23, 1
    %p83 = por %p81, %p82
    %p84 = scmp.ne.s32.totalorder %s75, %s76
    %p85 = scmp.eq.s32.totalorder %s23, 0
    %p86 = por %p84, %p85
    %p87 = scmp.ne.s32.totalorder %s75, %s76
    %p88 = scmp.eq.s32.totalorder %s24, 1
    %p89 = por %p87, %p88
    %p91 = scmp.ne.s32.totalorder %s76, %s90
    %p92 = scmp.eq.s32.totalorder %s24, 0
    %p93 = por %p91, %p92
    %s95 = sadd.s32 %s94, 1
    %p98 = scmp.eq.s32.totalorder %s18, 1
    %p99 = scmp.ne.s32.totalorder %s94, %s96
    %p100 = scmp.eq.s32.totalorder %s18, 0
    %p101 = por %p99, %p100
    %p102 = scmp.ne.s32.totalorder %s94, %s96
    %p103 = scmp.eq.s32.totalorder %s23, 1
    %p104 = por %p102, %p103
    %p105 = scmp.ne.s32.totalorder %s96, %s97
    %p106 = scmp.eq.s32.totalorder %s23, 0
    %p107 = por %p105, %p106
    %p108 = scmp.ne.s32.totalorder %s96, %s97
    %p109 = scmp.eq.s32.totalorder %s24, 1
    %p110 = por %p108, %p109
    %p112 = scmp.ne.s32.totalorder %s97, %s111
    %p113 = scmp.eq.s32.totalorder %s24, 0
    %p114 = por %p112, %p113
    %s116 = sadd.s32 %s115, 1
    %p119 = scmp.eq.s32.totalorder %s18, 1
    %p120 = scmp.ne.s32.totalorder %s115, %s117
    %p121 = scmp.eq.s32.totalorder %s18, 0
    %p122 = por %p120, %p121
    %p123 = scmp.ne.s32.totalorder %s115, %s117
    %p124 = scmp.eq.s32.totalorder %s23, 1
    %p125 = por %p123, %p124
    %p126 = scmp.ne.s32.totalorder %s117, %s118
    %p127 = scmp.eq.s32.totalorder %s23, 0
    %p128 = por %p126, %p127
    %p129 = scmp.ne.s32.totalorder %s117, %s118
    %p130 = scmp.eq.s32.totalorder %s24, 1
    %p131 = por %p129, %p130
    %p133 = scmp.ne.s32.totalorder %s118, %s132
    %p134 = scmp.eq.s32.totalorder %s24, 0
    %p135 = por %p133, %p134
    %s137 = sadd.s32 %s136, 1
    %p140 = scmp.eq.s32.totalorder %s18, 1
    %p141 = scmp.ne.s32.totalorder %s136, %s138
    %p142 = scmp.eq.s32.totalorder %s18, 0
    %p143 = por %p141, %p142
    %p144 = scmp.ne.s32.totalorder %s136, %s138
    %p145 = scmp.eq.s32.totalorder %s23, 1
    %p146 = por %p144, %p145
    %p147 = scmp.ne.s32.totalorder %s138, %s139
    %p148 = scmp.eq.s32.totalorder %s23, 0
    %p149 = por %p147, %p148
    %p150 = scmp.ne.s32.totalorder %s138, %s139
    %p151 = scmp.eq.s32.totalorder %s24, 1
    %p152 = por %p150, %p151
    %p154 = scmp.ne.s32.totalorder %s139, %s153
    %p155 = scmp.eq.s32.totalorder %s24, 0
    %p156 = por %p154, %p155
    %s158 = sadd.s32 %s157, 1
    %p161 = scmp.eq.s32.totalorder %s18, 1
    %p162 = scmp.ne.s32.totalorder %s157, %s159
    %p163 = scmp.eq.s32.totalorder %s18, 0
    %p164 = por %p162, %p163
    %p165 = scmp.ne.s32.totalorder %s157, %s159
    %p166 = scmp.eq.s32.totalorder %s23, 1
    %p167 = por %p165, %p166
    %p168 = scmp.ne.s32.totalorder %s159, %s160
    %p169 = scmp.eq.s32.totalorder %s23, 0
    %p170 = por %p168, %p169
    %p171 = scmp.ne.s32.totalorder %s159, %s160
    %p172 = scmp.eq.s32.totalorder %s24, 1
    %p173 = por %p171, %p172
    %p175 = scmp.ne.s32.totalorder %s160, %s174
    %p176 = scmp.eq.s32.totalorder %s24, 0
    %p177 = por %p175, %p176
    %s179 = sadd.s32 %s178, 1
    %p182 = scmp.eq.s32.totalorder %s18, 1
    %p183 = scmp.ne.s32.totalorder %s178, %s180
    %p184 = scmp.eq.s32.totalorder %s18, 0
    %p185 = por %p183, %p184
    %p186 = scmp.ne.s32.totalorder %s178, %s180
    %p187 = scmp.eq.s32.totalorder %s23, 1
    %p188 = por %p186, %p187
    %p189 = scmp.ne.s32.totalorder %s180, %s181
    %p190 = scmp.eq.s32.totalorder %s23, 0
    %p191 = por %p189, %p190
    %p192 = scmp.ne.s32.totalorder %s180, %s181
    %p193 = scmp.eq.s32.totalorder %s24, 1
    %p194 = por %p192, %p193
    %p196 = scmp.ne.s32.totalorder %s181, %s195
    %p197 = scmp.eq.s32.totalorder %s24, 0
    %p198 = por %p196, %p197
    %s200 = sadd.s32 %s199, 1
    %p203 = scmp.eq.s32.totalorder %s18, 1
    %p204 = scmp.ne.s32.totalorder %s199, %s201
    %p205 = scmp.eq.s32.totalorder %s18, 0
    %p206 = por %p204, %p205
    %p207 = scmp.ne.s32.totalorder %s199, %s201
    %p208 = scmp.eq.s32.totalorder %s23, 1
    %p209 = por %p207, %p208
    %p210 = scmp.ne.s32.totalorder %s201, %s202
    %p211 = scmp.eq.s32.totalorder %s23, 0
    %p212 = por %p210, %p211
    %p213 = scmp.ne.s32.totalorder %s201, %s202
    %p214 = scmp.eq.s32.totalorder %s24, 1
    %p215 = por %p213, %p214
    %p217 = scmp.ne.s32.totalorder %s202, %s216
    %p218 = scmp.eq.s32.totalorder %s24, 0
    %p219 = por %p217, %p218
    %s221 = sadd.s32 %s220, 1
    %p224 = scmp.eq.s32.totalorder %s18, 1
    %p225 = scmp.ne.s32.totalorder %s220, %s222
    %p226 = scmp.eq.s32.totalorder %s18, 0
    %p227 = por %p225, %p226
    %p228 = scmp.ne.s32.totalorder %s220, %s222
    %p229 = scmp.eq.s32.totalorder %s23, 1
    %p230 = por %p228, %p229
    %p231 = scmp.ne.s32.totalorder %s222, %s223
    %p232 = scmp.eq.s32.totalorder %s23, 0
    %p233 = por %p231, %p232
    %p234 = scmp.ne.s32.totalorder %s222, %s223
    %p235 = scmp.eq.s32.totalorder %s24, 1
    %p236 = por %p234, %p235
    %p238 = scmp.ne.s32.totalorder %s223, %s237
    %p239 = scmp.eq.s32.totalorder %s24, 0
    %p240 = por %p238, %p239
    %s242 = sadd.s32 %s241, 1
    %p245 = scmp.eq.s32.totalorder %s18, 1
    %p246 = scmp.ne.s32.totalorder %s241, %s243
    %p247 = scmp.eq.s32.totalorder %s18, 0
    %p248 = por %p246, %p247
    %p249 = scmp.ne.s32.totalorder %s241, %s243
    %p250 = scmp.eq.s32.totalorder %s23, 1
    %p251 = por %p249, %p250
    %p252 = scmp.ne.s32.totalorder %s243, %s244
    %p253 = scmp.eq.s32.totalorder %s23, 0
    %p254 = por %p252, %p253
    %p255 = scmp.ne.s32.totalorder %s243, %s244
    %p256 = scmp.eq.s32.totalorder %s24, 1
    %p257 = por %p255, %p256
    %p259 = scmp.ne.s32.totalorder %s244, %s258
    %p260 = scmp.eq.s32.totalorder %s24, 0
    %p261 = por %p259, %p260
    %s263 = sadd.s32 %s262, 1
    %p266 = scmp.eq.s32.totalorder %s18, 1
    %p267 = scmp.ne.s32.totalorder %s262, %s264
    %p268 = scmp.eq.s32.totalorder %s18, 0
    %p269 = por %p267, %p268
    %p270 = scmp.ne.s32.totalorder %s262, %s264
    %p271 = scmp.eq.s32.totalorder %s23, 1
    %p272 = por %p270, %p271
    %p273 = scmp.ne.s32.totalorder %s264, %s265
    %p274 = scmp.eq.s32.totalorder %s23, 0
    %p275 = por %p273, %p274
    %p276 = scmp.ne.s32.totalorder %s264, %s265
    %p277 = scmp.eq.s32.totalorder %s24, 1
    %p278 = por %p276, %p277
    %p280 = scmp.ne.s32.totalorder %s265, %s279
    %p281 = scmp.eq.s32.totalorder %s24, 0
    %p282 = por %p280, %p281
    %s283 = ssub.s32 %s18, %s25
    %p284 = scmp.eq.s32.totalorder %s283, 0
    %s286 = sadd.s32 %s285, 1
    %s287 = scalar_select %p284, %s285, %s286
    %p290 = pneg %p284
    %p291 = scmp.eq.s32.totalorder %s18, 1
    %p292 = por %p290, %p291
    %p293 = scmp.ne.s32.totalorder %s285, %s288
    %p294 = scmp.eq.s32.totalorder %s18, 0
    %p295 = por %p293, %p294
    %p296 = scmp.ne.s32.totalorder %s285, %s288
    %p297 = scmp.eq.s32.totalorder %s23, 1
    %p298 = por %p296, %p297
    %p299 = scmp.ne.s32.totalorder %s288, %s289
    %p300 = scmp.eq.s32.totalorder %s23, 0
    %p301 = por %p299, %p300
    %p302 = scmp.ne.s32.totalorder %s288, %s289
    %p303 = scmp.eq.s32.totalorder %s24, 1
    %p304 = por %p302, %p303
    %p306 = scmp.ne.s32.totalorder %s289, %s305
    %p307 = scmp.eq.s32.totalorder %s24, 0
    %p308 = por %p306, %p307
    %p309 = scmp.le.s32.totalorder 1, %s18
    %p310 = scmp.lt.s32.totalorder %s18, 3
    %p311 = pnand %p309, %p310
    %p312 = pneg %p311
    // Predicated region
    $region9: #{rrdb_forward.1} parent=5 // pred_check
      _
    $region10: #{rrdb_forward.1} parent=5 // pred_check_branch
      %314 = sbr.rel (%p311) target = $region12
    $region11: #{rrdb_forward.1} parent=5 // pred_region
      %s315 = ssub.s32 %s18, 1
      // Predicated region
      $region13: #{rrdb_forward.1} parent=11 // pred_check
        %p316 = pneg %p65
      $region14: #{rrdb_forward.1} parent=11 // pred_check_branch
        %318 = sbr.rel (%p316) target = $region16
      $region15: #{rrdb_forward.1} parent=11 // pred_region
        _
      $region16: #{rrdb_forward.1} parent=11 // pred_fallthru
        _
      // Predicated region
      $region17: #{rrdb_forward.1} parent=11 // pred_check
        %p319 = pneg %p86
      $region18: #{rrdb_forward.1} parent=11 // pred_check_branch
        %321 = sbr.rel (%p319) target = $region20
      $region19: #{rrdb_forward.1} parent=11 // pred_region
        _
      $region20: #{rrdb_forward.1} parent=11 // pred_fallthru
        _
      // Predicated region
      $region21: #{rrdb_forward.1} parent=11 // pred_check
        %p322 = pneg %p107
      $region22: #{rrdb_forward.1} parent=11 // pred_check_branch
        %324 = sbr.rel (%p322) target = $region24
      $region23: #{rrdb_forward.1} parent=11 // pred_region
        _
      $region24: #{rrdb_forward.1} parent=11 // pred_fallthru
        _
      // Predicated region
      $region25: #{rrdb_forward.1} parent=11 // pred_check
        %p325 = pneg %p128
      $region26: #{rrdb_forward.1} parent=11 // pred_check_branch
        %327 = sbr.rel (%p325) target = $region28
      $region27: #{rrdb_forward.1} parent=11 // pred_region
        _
      $region28: #{rrdb_forward.1} parent=11 // pred_fallthru
        _
      // Predicated region
      $region29: #{rrdb_forward.1} parent=11 // pred_check
        %p328 = pneg %p149
      $region30: #{rrdb_forward.1} parent=11 // pred_check_branch
        %330 = sbr.rel (%p328) target = $region32
      $region31: #{rrdb_forward.1} parent=11 // pred_region
        _
      $region32: #{rrdb_forward.1} parent=11 // pred_fallthru
        _
      // Predicated region
      $region33: #{rrdb_forward.1} parent=11 // pred_check
        %p331 = pneg %p170
      $region34: #{rrdb_forward.1} parent=11 // pred_check_branch
        %333 = sbr.rel (%p331) target = $region36
      $region35: #{rrdb_forward.1} parent=11 // pred_region
        _
      $region36: #{rrdb_forward.1} parent=11 // pred_fallthru
        _
      // Predicated region
      $region37: #{rrdb_forward.1} parent=11 // pred_check
        %p334 = pneg %p191
      $region38: #{rrdb_forward.1} parent=11 // pred_check_branch
        %336 = sbr.rel (%p334) target = $region40
      $region39: #{rrdb_forward.1} parent=11 // pred_region
        _
      $region40: #{rrdb_forward.1} parent=11 // pred_fallthru
        _
      // Predicated region
      $region41: #{rrdb_forward.1} parent=11 // pred_check
        %p337 = pneg %p212
      $region42: #{rrdb_forward.1} parent=11 // pred_check_branch
        %339 = sbr.rel (%p337) target = $region44
      $region43: #{rrdb_forward.1} parent=11 // pred_region
        _
      $region44: #{rrdb_forward.1} parent=11 // pred_fallthru
        _
      // Predicated region
      $region45: #{rrdb_forward.1} parent=11 // pred_check
        %p340 = pneg %p233
      $region46: #{rrdb_forward.1} parent=11 // pred_check_branch
        %342 = sbr.rel (%p340) target = $region48
      $region47: #{rrdb_forward.1} parent=11 // pred_region
        _
      $region48: #{rrdb_forward.1} parent=11 // pred_fallthru
        _
      // Predicated region
      $region49: #{rrdb_forward.1} parent=11 // pred_check
        %p343 = pneg %p254
      $region50: #{rrdb_forward.1} parent=11 // pred_check_branch
        %345 = sbr.rel (%p343) target = $region52
      $region51: #{rrdb_forward.1} parent=11 // pred_region
        _
      $region52: #{rrdb_forward.1} parent=11 // pred_fallthru
        _
      // Predicated region
      $region53: #{rrdb_forward.1} parent=11 // pred_check
        %p346 = pneg %p275
      $region54: #{rrdb_forward.1} parent=11 // pred_check_branch
        %348 = sbr.rel (%p346) target = $region56
      $region55: #{rrdb_forward.1} parent=11 // pred_region
        _
      $region56: #{rrdb_forward.1} parent=11 // pred_fallthru
        _
    $region12: #{rrdb_forward.1} parent=5 // pred_fallthru
      _
    %p349 = scmp.lt.s32.totalorder %s18, 2
    // Predicated region
    $region57: #{rrdb_forward.1} parent=5 // pred_check
      %p350 = pneg %p349
    $region58: #{rrdb_forward.1} parent=5 // pred_check_branch
      %352 = sbr.rel (%p350) target = $region60
    $region59: #{rrdb_forward.1} parent=5 // pred_region
      // Predicated region
      $region61: #{rrdb_forward.1} parent=59 // pred_check
        %p353 = pneg %p38
      $region62: #{rrdb_forward.1} parent=59 // pred_check_branch
        %355 = sbr.rel (%p353) target = $region64
      $region63: #{rrdb_forward.1} parent=59 // pred_region
        %p356 = scmp.lt.s32.totalorder %s18, 1
        %s357 = scalar_select %p356, %s18, 1
        %s358 = smul.addr %s357, 6
        %s359 = smul.addr %s358, 8
        %s360 = scalar_lea.vmem %s0, %s359
      $region64: #{rrdb_forward.1} parent=59 // pred_fallthru
        _
    $region60: #{rrdb_forward.1} parent=5 // pred_fallthru
      _
    %p361 = scmp.le.s32.totalorder 1, %s18
    %p362 = scmp.lt.s32.totalorder %s18, 3
    %p363 = pnand %p361, %p362
    %p364 = pneg %p363
    // Predicated region
    $region65: #{rrdb_forward.1} parent=5 // pred_check
      _
    $region66: #{rrdb_forward.1} parent=5 // pred_check_branch
      %366 = sbr.rel (%p363) target = $region68
    $region67: #{rrdb_forward.1} parent=5 // pred_region
      %s367 = ssub.s32 %s18, 1
      %p368 = scmp.lt.s32.totalorder %s23, 1
      %s369 = scalar_select %p368, %s23, 1
      %s370 = smul.addr %s369, 6
      %s371 = smul.addr %s370, 8
      %s372 = scalar_lea.vmem %s0, %s371
      %p373 = pneg %p44
      %p374 = pneg %p41
      %p375 = pneg %p65
      %p376 = pneg %p62
      %p377 = pneg %p86
      %p378 = pneg %p83
      %p379 = pneg %p107
      %p380 = pneg %p104
      %p381 = pneg %p128
      %p382 = pneg %p125
      %p383 = pneg %p149
      %p384 = pneg %p146
      %p385 = pneg %p170
      %p386 = pneg %p167
      %p387 = pneg %p191
      %p388 = pneg %p188
      %p389 = pneg %p212
      %p390 = pneg %p209
      %p391 = pneg %p233
      %p392 = pneg %p230
      %p393 = pneg %p254
      %p394 = pneg %p251
      %p395 = pneg %p275
      %p396 = pneg %p272
      %p397 = pneg %p301
      %p398 = pneg %p298
      %p399 = scmp.lt.s32.totalorder %s23, 1
      %s400 = scalar_select %p399, %s23, 1
      %s401 = smul.addr %s400, 6
      %s402 = smul.addr %s401, 8
      %s403 = scalar_lea.vmem %s12, %s402
      %p404 = scmp.lt.s32.totalorder %s23, 1
      %s405 = scalar_select %p404, %s23, 1
      %s406 = smul.addr %s405, 6
      %s407 = smul.addr %s406, 8
      %s408 = scalar_lea.vmem %s0, %s407
      %p409 = scmp.lt.s32.totalorder %s23, 1
      %s410 = scalar_select %p409, %s23, 1
      %s411 = smul.addr %s410, 6
      %s412 = smul.addr %s411, 8
      %s413 = scalar_lea.vmem %s12, %s412
      %v415 = vld [vmem:[%s1] sm:$0x7]
      %416 = vst [vmem:[#allocation2] sm:$0xff] 0
      %417 = vst [vmem:[#allocation2 + $0x28] sm:$0xff] 0
      %418 = vst [vmem:[#allocation2 + $0x50] sm:$0xff] 0
      %419 = vst [vmem:[#allocation2 + $0x20] sm:$0xff] 0
      %420 = vst [vmem:[#allocation2 + $0x48] sm:$0xff] 0
      %421 = vst [vmem:[#allocation2 + $0x70] sm:$0xff] 0
      %v422 = vld [vmem:[%s408] sm:$0xff]
      %v423 = vld [vmem:[%s408 + $0x8] sm:$0xff]
      %v424 = vld [vmem:[%s408 + $0x10] sm:$0xff]
      %v425 = vld [vmem:[%s408 + $0x18] sm:$0xff]
      %v426 = vld [vmem:[%s408 + $0x20] sm:$0xff]
      %v427 = vld [vmem:[%s408 + $0x28] sm:$0xff]
      %428 = vst [vmem:[#allocation3] sm:$0xff] %v422
      %429 = vst [vmem:[#allocation3 + $0x8] sm:$0xff] %v423
      %430 = vst [vmem:[#allocation3 + $0x10] sm:$0xff] %v424
      %431 = vst [vmem:[#allocation3 + $0x18] sm:$0xff] %v425
      %432 = vst [vmem:[#allocation3 + $0x20] sm:$0xff] %v426
      %433 = vst [vmem:[#allocation3 + $0x28] sm:$0xff] %v427
      %v434 = vpack.c.bf16 %v425, %v422
      %v435 = vpack.c.bf16 %v426, %v423
      %v436 = vpack.c.bf16 %v427, %v424
      %437 = vst [vmem:[#allocation2 + $0x8] sm:$0xff] %v434
      %438 = vst [vmem:[#allocation2 + $0x10] sm:$0xff] %v435
      %439 = vst [vmem:[#allocation2 + $0x18] sm:$0xff] %v436
      loop: start=0, step=1, limit=3
      $region69: #{rrdb_forward.1} parent=67 // loop_pre_header
        _
      $region70: #{rrdb_forward.1} parent=67 // loop_header
        %s441 = sphi 0, %s445
        %p442 = scmp.ge.s32.totalorder %s441, 3
      $region71: #{rrdb_forward.1} parent=67 // loop_header_branch
        %444 = sbr.rel (%p442) target = $region75
      $region72: #{rrdb_forward.1} parent=67 // loop_body
        %s446 = smul.u32 %s441, 2
        %s447 = smul.addr %s446, 4
        %s448 = scalar_lea.vmem %s2, %s447
        %v449 = vld [vmem:[%s448] sm:$0xff]
        %s450 = smul.u32 %s441, 8
        %s451 = scalar_lea.vmem %s7, %s450
        %v452 = vld [vmem:[%s451] sm:$0xff]
        %v453 = vld [vmem:[#allocation2] sm:$0xff]
        %v454 = vld [vmem:[#allocation2 + $0x8] sm:$0xff]
        %v455 = vld [vmem:[#allocation2 + $0x10] sm:$0xff]
        %v456 = vld [vmem:[#allocation2 + $0x18] sm:$0xff]
        %v458 = vunpack.c.l.b16 %v449
        %v459 = vpack.c.b16 %v458, %v458
        %460 = vrot.lane.b32.xlu0 %v459, 112
        %v461 = vpop.permute.xlu0 %460
        %466 = vrot.lane.b32.xlu0 %v453, 18
        %v467 = vpop.permute.xlu0 %466
        %468 = vrot.lane.b32.xlu0 %v454, 18
        %v469 = vpop.permute.xlu0 %468
        %470 = vrot.lane.b32.xlu0 %v455, 18
        %v471 = vpop.permute.xlu0 %470
        %472 = vrot.lane.b32.xlu0 %v456, 18
        %v473 = vpop.permute.xlu0 %472
        %vm474 = vcmask 146432
        %v475 = vsel %vm474, %v467, %v469
        %v476 = vsel %vm474, %v469, %v471
        %v477 = vsel %vm474, %v471, %v473
        %vm481 = vcmask 130048
        %v483 = vsel %vm481, %v461, 0
        %485 = vmatprep.subr.bf16.mxu0 %v476
        %486 = vmatpush1.bf16.msra.mxu0 %v475
        %487 = vmatprep.subr.bf16.mxu0 0
        %488 = vmatpush1.bf16.msra.mxu0 0
        %489 = vmatprep.subr.bf16.mxu0 0
        %490 = vmatpush1.bf16.msra.mxu0 0
        %491 = vmatprep.subr.bf16.mxu0 0
        %492 = vmatpush1.bf16.msra.mxu0 0
        %493 = vmatprep.subr.bf16.mxu0 0
        %494 = vmatpush1.bf16.msra.mxu0 0
        %495 = vmatprep.subr.bf16.mxu0 0
        %496 = vmatpush1.bf16.msra.mxu0 0
        %497 = vmatprep.subr.bf16.mxu0 0
        %498 = vmatpush1.bf16.msra.mxu0 0
        %499 = vmatprep.subr.bf16.mxu0 0
        %500 = vmatpush1.bf16.msra.mxu0 0
        %501 = vmatprep.subr.bf16.mxu0 0
        %502 = vmatpush1.bf16.msra.mxu0 0
        %503 = vmatprep.subr.bf16.mxu0 0
        %504 = vmatpush1.bf16.msra.mxu0 0
        %505 = vmatprep.subr.bf16.mxu0 0
        %506 = vmatpush1.bf16.msra.mxu0 0
        %507 = vmatprep.subr.bf16.mxu0 0
        %508 = vmatpush1.bf16.msra.mxu0 0
        %509 = vmatprep.subr.bf16.mxu0 0
        %510 = vmatpush1.bf16.msra.mxu0 0
        %511 = vmatprep.subr.bf16.mxu0 0
        %512 = vmatpush1.bf16.msra.mxu0 0
        %513 = vmatprep.subr.bf16.mxu0 0
        %514 = vmatpush1.bf16.msra.mxu0 0
        %515 = vmatprep.subr.bf16.mxu0 0
        %516 = vmatpush1.bf16.msra.mxu0 0
        %517 = vmatprep.mubr.bf16.mxu0 0
        %518 = vmatmul.mubr.bf16.gmra.mrb[0].mxu0 %v483
        %v519 = vpop.f32.mrb[0].mxu0
        %v520 = vadd.f32 0.0, %v519
        %v521 = vpop.f32.mrb[0].mxu0
        %v522 = vadd.f32 0.0, %v521
        %v523 = vpop.f32.mrb[0].mxu0
        %v524 = vpop.f32.mrb[0].mxu0
        %525 = vdwg.mxu0
        %526 = vmatprep.subr.bf16.mxu0 0
        %527 = vmatpush1.bf16.msra.mxu0 %v477
        %528 = vmatprep.subr.bf16.mxu0 0
        %529 = vmatpush1.bf16.msra.mxu0 0
        %530 = vmatprep.subr.bf16.mxu0 0
        %531 = vmatpush1.bf16.msra.mxu0 0
        %532 = vmatprep.subr.bf16.mxu0 0
        %533 = vmatpush1.bf16.msra.mxu0 0
        %534 = vmatprep.subr.bf16.mxu0 0
        %535 = vmatpush1.bf16.msra.mxu0 0
        %536 = vmatprep.subr.bf16.mxu0 0
        %537 = vmatpush1.bf16.msra.mxu0 0
        %538 = vmatprep.subr.bf16.mxu0 0
        %539 = vmatpush1.bf16.msra.mxu0 0
        %540 = vmatprep.subr.bf16.mxu0 0
        %541 = vmatpush1.bf16.msra.mxu0 0
        %542 = vmatprep.subr.bf16.mxu0 0
        %543 = vmatpush1.bf16.msra.mxu0 0
        %544 = vmatprep.subr.bf16.mxu0 0
        %545 = vmatpush1.bf16.msra.mxu0 0
        %546 = vmatprep.subr.bf16.mxu0 0
        %547 = vmatpush1.bf16.msra.mxu0 0
        %548 = vmatprep.subr.bf16.mxu0 0
        %549 = vmatpush1.bf16.msra.mxu0 0
        %550 = vmatprep.subr.bf16.mxu0 0
        %551 = vmatpush1.bf16.msra.mxu0 0
        %552 = vmatprep.subr.bf16.mxu0 0
        %553 = vmatpush1.bf16.msra.mxu0 0
        %554 = vmatprep.subr.bf16.mxu0 0
        %555 = vmatpush1.bf16.msra.mxu0 0
        %556 = vmatprep.subr.bf16.mxu0 0
        %557 = vmatpush1.bf16.msra.mxu0 0
        %558 = vmatprep.mubr.bf16.mxu0 0
        %559 = vmatmul.mubr.bf16.gmra.mrb[0].mxu0 %v483
        %v560 = vpop.f32.mrb[0].mxu0
        %v561 = vadd.f32 0.0, %v560
        %v562 = vpop.f32.mrb[0].mxu0
        %v563 = vpop.f32.mrb[0].mxu0
        %v564 = vpop.f32.mrb[0].mxu0
        %565 = vdwg.mxu0
        %566 = vrot.lane.b32.xlu0 %v453, 19
        %v567 = vpop.permute.xlu0 %566
        %568 = vrot.lane.b32.xlu0 %v454, 19
        %v569 = vpop.permute.xlu0 %568
        %570 = vrot.lane.b32.xlu0 %v455, 19
        %v571 = vpop.permute.xlu0 %570
        %572 = vrot.lane.b32.xlu0 %v456, 19
        %v573 = vpop.permute.xlu0 %572
        %vm574 = vcmask 154624
        %v575 = vsel %vm574, %v567, %v569
        %v576 = vsel %vm574, %v569, %v571
        %v577 = vsel %vm574, %v571, %v573
        %v582 = vsel %vm481, %v449, 0
        %584 = vmatprep.subr.bf16.mxu0 %v576
        %585 = vmatpush1.bf16.msra.mxu0 %v575
        %586 = vmatprep.subr.bf16.mxu0 0
        %587 = vmatpush1.bf16.msra.mxu0 0
        %588 = vmatprep.subr.bf16.mxu0 0
        %589 = vmatpush1.bf16.msra.mxu0 0
        %590 = vmatprep.subr.bf16.mxu0 0
        %591 = vmatpush1.bf16.msra.mxu0 0
        %592 = vmatprep.subr.bf16.mxu0 0
        %593 = vmatpush1.bf16.msra.mxu0 0
        %594 = vmatprep.subr.bf16.mxu0 0
        %595 = vmatpush1.bf16.msra.mxu0 0
        %596 = vmatprep.subr.bf16.mxu0 0
        %597 = vmatpush1.bf16.msra.mxu0 0
        %598 = vmatprep.subr.bf16.mxu0 0
        %599 = vmatpush1.bf16.msra.mxu0 0
        %600 = vmatprep.subr.bf16.mxu0 0
        %601 = vmatpush1.bf16.msra.mxu0 0
        %602 = vmatprep.subr.bf16.mxu0 0
        %603 = vmatpush1.bf16.msra.mxu0 0
        %604 = vmatprep.subr.bf16.mxu0 0
        %605 = vmatpush1.bf16.msra.mxu0 0
        %606 = vmatprep.subr.bf16.mxu0 0
        %607 = vmatpush1.bf16.msra.mxu0 0
        %608 = vmatprep.subr.bf16.mxu0 0
        %609 = vmatpush1.bf16.msra.mxu0 0
        %610 = vmatprep.subr.bf16.mxu0 0
        %611 = vmatpush1.bf16.msra.mxu0 0
        %612 = vmatprep.subr.bf16.mxu0 0
        %613 = vmatpush1.bf16.msra.mxu0 0
        %614 = vmatprep.subr.bf16.mxu0 0
        %615 = vmatpush1.bf16.msra.mxu0 0
        %616 = vmatprep.mubr.bf16.mxu0 0
        %617 = vmatmul.mubr.bf16.gmra.mrb[0].mxu0 %v582
        %v618 = vpop.f32.mrb[0].mxu0
        %v619 = vadd.f32 %v520, %v618
        %v620 = vpop.f32.mrb[0].mxu0
        %v621 = vadd.f32 %v522, %v620
        %v622 = vpop.f32.mrb[0].mxu0
        %v623 = vpop.f32.mrb[0].mxu0
        %624 = vdwg.mxu0
        %625 = vmatprep.subr.bf16.mxu0 0
        %626 = vmatpush1.bf16.msra.mxu0 %v577
        %627 = vmatprep.subr.bf16.mxu0 0
        %628 = vmatpush1.bf16.msra.mxu0 0
        %629 = vmatprep.subr.bf16.mxu0 0
        %630 = vmatpush1.bf16.msra.mxu0 0
        %631 = vmatprep.subr.bf16.mxu0 0
        %632 = vmatpush1.bf16.msra.mxu0 0
        %633 = vmatprep.subr.bf16.mxu0 0
        %634 = vmatpush1.bf16.msra.mxu0 0
        %635 = vmatprep.subr.bf16.mxu0 0
        %636 = vmatpush1.bf16.msra.mxu0 0
        %637 = vmatprep.subr.bf16.mxu0 0
        %638 = vmatpush1.bf16.msra.mxu0 0
        %639 = vmatprep.subr.bf16.mxu0 0
        %640 = vmatpush1.bf16.msra.mxu0 0
        %641 = vmatprep.subr.bf16.mxu0 0
        %642 = vmatpush1.bf16.msra.mxu0 0
        %643 = vmatprep.subr.bf16.mxu0 0
        %644 = vmatpush1.bf16.msra.mxu0 0
        %645 = vmatprep.subr.bf16.mxu0 0
        %646 = vmatpush1.bf16.msra.mxu0 0
        %647 = vmatprep.subr.bf16.mxu0 0
        %648 = vmatpush1.bf16.msra.mxu0 0
        %649 = vmatprep.subr.bf16.mxu0 0
        %650 = vmatpush1.bf16.msra.mxu0 0
        %651 = vmatprep.subr.bf16.mxu0 0
        %652 = vmatpush1.bf16.msra.mxu0 0
        %653 = vmatprep.subr.bf16.mxu0 0
        %654 = vmatpush1.bf16.msra.mxu0 0
        %655 = vmatprep.subr.bf16.mxu0 0
        %656 = vmatpush1.bf16.msra.mxu0 0
        %657 = vmatprep.mubr.bf16.mxu0 0
        %658 = vmatmul.mubr.bf16.gmra.mrb[0].mxu0 %v582
        %v659 = vpop.f32.mrb[0].mxu0
        %v660 = vadd.f32 %v561, %v659
        %v661 = vpop.f32.mrb[0].mxu0
        %v662 = vpop.f32.mrb[0].mxu0
        %v663 = vpop.f32.mrb[0].mxu0
        %664 = vdwg.mxu0
        %665 = vrot.lane.b32.xlu0 %v459, 96
        %v666 = vpop.permute.xlu0 %665
        %667 = vrot.lane.b32.xlu0 %v453, 17
        %v668 = vpop.permute.xlu0 %667
        %669 = vrot.lane.b32.xlu0 %v454, 17
        %v670 = vpop.permute.xlu0 %669
        %671 = vrot.lane.b32.xlu0 %v455, 17
        %v672 = vpop.permute.xlu0 %671
        %673 = vrot.lane.b32.xlu0 %v456, 17
        %v674 = vpop.permute.xlu0 %673
        %vm675 = vcmask 138240
        %v676 = vsel %vm675, %v668, %v670
        %v677 = vsel %vm675, %v670, %v672
        %v678 = vsel %vm675, %v672, %v674
        %v683 = vsel %vm481, %v666, 0
        %685 = vmatprep.subr.bf16.mxu0 %v677
        %686 = vmatpush1.bf16.msra.mxu0 %v676
        %687 = vmatprep.subr.bf16.mxu0 0
        %688 = vmatpush1.bf16.msra.mxu0 0
        %689 = vmatprep.subr.bf16.mxu0 0
        %690 = vmatpush1.bf16.msra.mxu0 0
        %691 = vmatprep.subr.bf16.mxu0 0
        %692 = vmatpush1.bf16.msra.mxu0 0
        %693 = vmatprep.subr.bf16.mxu0 0
        %694 = vmatpush1.bf16.msra.mxu0 0
        %695 = vmatprep.subr.bf16.mxu0 0
        %696 = vmatpush1.bf16.msra.mxu0 0
        %697 = vmatprep.subr.bf16.mxu0 0
        %698 = vmatpush1.bf16.msra.mxu0 0
        %699 = vmatprep.subr.bf16.mxu0 0
        %700 = vmatpush1.bf16.msra.mxu0 0
        %701 = vmatprep.subr.bf16.mxu0 0
        %702 = vmatpush1.bf16.msra.mxu0 0
        %703 = vmatprep.subr.bf16.mxu0 0
        %704 = vmatpush1.bf16.msra.mxu0 0
        %705 = vmatprep.subr.bf16.mxu0 0
        %706 = vmatpush1.bf16.msra.mxu0 0
        %707 = vmatprep.subr.bf16.mxu0 0
        %708 = vmatpush1.bf16.msra.mxu0 0
        %709 = vmatprep.subr.bf16.mxu0 0
        %710 = vmatpush1.bf16.msra.mxu0 0
        %711 = vmatprep.subr.bf16.mxu0 0
        %712 = vmatpush1.bf16.msra.mxu0 0
        %713 = vmatprep.subr.bf16.mxu0 0
        %714 = vmatpush1.bf16.msra.mxu0 0
        %715 = vmatprep.subr.bf16.mxu0 0
        %716 = vmatpush1.bf16.msra.mxu0 0
        %717 = vmatprep.mubr.bf16.mxu0 0
        %718 = vmatmul.mubr.bf16.gmra.mrb[0].mxu0 %v683
        %v719 = vpop.f32.mrb[0].mxu0
        %v720 = vadd.f32 0.0, %v719
        %v721 = vpop.f32.mrb[0].mxu0
        %v722 = vadd.f32 0.0, %v721
        %v723 = vpop.f32.mrb[0].mxu0
        %v724 = vpop.f32.mrb[0].mxu0
        %725 = vdwg.mxu0
        %726 = vmatprep.subr.bf16.mxu0 0
        %727 = vmatpush1.bf16.msra.mxu0 %v678
        %728 = vmatprep.subr.bf16.mxu0 0
        %729 = vmatpush1.bf16.msra.mxu0 0
        %730 = vmatprep.subr.bf16.mxu0 0
        %731 = vmatpush1.bf16.msra.mxu0 0
        %732 = vmatprep.subr.bf16.mxu0 0
        %733 = vmatpush1.bf16.msra.mxu0 0
        %734 = vmatprep.subr.bf16.mxu0 0
        %735 = vmatpush1.bf16.msra.mxu0 0
        %736 = vmatprep.subr.bf16.mxu0 0
        %737 = vmatpush1.bf16.msra.mxu0 0
        %738 = vmatprep.subr.bf16.mxu0 0
        %739 = vmatpush1.bf16.msra.mxu0 0
        %740 = vmatprep.subr.bf16.mxu0 0
        %741 = vmatpush1.bf16.msra.mxu0 0
        %742 = vmatprep.subr.bf16.mxu0 0
        %743 = vmatpush1.bf16.msra.mxu0 0
        %744 = vmatprep.subr.bf16.mxu0 0
        %745 = vmatpush1.bf16.msra.mxu0 0
        %746 = vmatprep.subr.bf16.mxu0 0
        %747 = vmatpush1.bf16.msra.mxu0 0
        %748 = vmatprep.subr.bf16.mxu0 0
        %749 = vmatpush1.bf16.msra.mxu0 0
        %750 = vmatprep.subr.bf16.mxu0 0
        %751 = vmatpush1.bf16.msra.mxu0 0
        %752 = vmatprep.subr.bf16.mxu0 0
        %753 = vmatpush1.bf16.msra.mxu0 0
        %754 = vmatprep.subr.bf16.mxu0 0
        %755 = vmatpush1.bf16.msra.mxu0 0
        %756 = vmatprep.subr.bf16.mxu0 0
        %757 = vmatpush1.bf16.msra.mxu0 0
        %758 = vmatprep.mubr.bf16.mxu0 0
        %759 = vmatmul.mubr.bf16.gmra.mrb[0].mxu0 %v683
        %v760 = vpop.f32.mrb[0].mxu0
        %v761 = vadd.f32 0.0, %v760
        %v762 = vpop.f32.mrb[0].mxu0
        %v763 = vpop.f32.mrb[0].mxu0
        %v764 = vpop.f32.mrb[0].mxu0
        %765 = vdwg.mxu0
        %v766 = vadd.f32 %v619, %v720
        %v767 = vadd.f32 %v621, %v722
        %v768 = vadd.f32 %v660, %v761
        %769 = vrot.lane.b32.xlu0 %v459, 80
        %v770 = vpop.permute.xlu0 %769
        %771 = vrot.lane.b32.xlu0 %v453, 1
        %v772 = vpop.permute.xlu0 %771
        %773 = vrot.lane.b32.xlu0 %v454, 1
        %v774 = vpop.permute.xlu0 %773
        %775 = vrot.lane.b32.xlu0 %v455, 1
        %v776 = vpop.permute.xlu0 %775
        %777 = vrot.lane.b32.xlu0 %v456, 1
        %v778 = vpop.permute.xlu0 %777
        %vm779 = vcmask 7168
        %v780 = vsel %vm779, %v772, %v774
        %v781 = vsel %vm779, %v774, %v776
        %v782 = vsel %vm779, %v776, %v778
        %v787 = vsel %vm481, %v770, 0
        %789 = vmatprep.subr.bf16.mxu0 %v781
        %790 = vmatpush1.bf16.msra.mxu0 %v780
        %791 = vmatprep.subr.bf16.mxu0 0
        %792 = vmatpush1.bf16.msra.mxu0 0
        %793 = vmatprep.subr.bf16.mxu0 0
        %794 = vmatpush1.bf16.msra.mxu0 0
        %795 = vmatprep.subr.bf16.mxu0 0
        %796 = vmatpush1.bf16.msra.mxu0 0
        %797 = vmatprep.subr.bf16.mxu0 0
        %798 = vmatpush1.bf16.msra.mxu0 0
        %799 = vmatprep.subr.bf16.mxu0 0
        %800 = vmatpush1.bf16.msra.mxu0 0
        %801 = vmatprep.subr.bf16.mxu0 0
        %802 = vmatpush1.bf16.msra.mxu0 0
        %803 = vmatprep.subr.bf16.mxu0 0
        %804 = vmatpush1.bf16.msra.mxu0 0
        %805 = vmatprep.subr.bf16.mxu0 0
        %806 = vmatpush1.bf16.msra.mxu0 0
        %807 = vmatprep.subr.bf16.mxu0 0
        %808 = vmatpush1.bf16.msra.mxu0 0
        %809 = vmatprep.subr.bf16.mxu0 0
        %810 = vmatpush1.bf16.msra.mxu0 0
        %811 = vmatprep.subr.bf16.mxu0 0
        %812 = vmatpush1.bf16.msra.mxu0 0
        %813 = vmatprep.subr.bf16.mxu0 0
        %814 = vmatpush1.bf16.msra.mxu0 0
        %815 = vmatprep.subr.bf16.mxu0 0
        %816 = vmatpush1.bf16.msra.mxu0 0
        %817 = vmatprep.subr.bf16.mxu0 0
        %818 = vmatpush1.bf16.msra.mxu0 0
        %819 = vmatprep.subr.bf16.mxu0 0
        %820 = vmatpush1.bf16.msra.mxu0 0
        %821 = vmatprep.mubr.bf16.mxu0 0
        %822 = vmatmul.mubr.bf16.gmra.mrb[0].mxu0 %v787
        %v823 = vpop.f32.mrb[0].mxu0
        %v824 = vadd.f32 0.0, %v823
        %v825 = vpop.f32.mrb[0].mxu0
        %v826 = vadd.f32 0.0, %v825
        %v827 = vpop.f32.mrb[0].mxu0
        %v828 = vpop.f32.mrb[0].mxu0
        %829 = vdwg.mxu0
        %830 = vmatprep.subr.bf16.mxu0 0
        %831 = vmatpush1.bf16.msra.mxu0 %v782
        %832 = vmatprep.subr.bf16.mxu0 0
        %833 = vmatpush1.bf16.msra.mxu0 0
        %834 = vmatprep.subr.bf16.mxu0 0
        %835 = vmatpush1.bf16.msra.mxu0 0
        %836 = vmatprep.subr.bf16.mxu0 0
        %837 = vmatpush1.bf16.msra.mxu0 0
        %838 = vmatprep.subr.bf16.mxu0 0
        %839 = vmatpush1.bf16.msra.mxu0 0
        %840 = vmatprep.subr.bf16.mxu0 0
        %841 = vmatpush1.bf16.msra.mxu0 0
        %842 = vmatprep.subr.bf16.mxu0 0
        %843 = vmatpush1.bf16.msra.mxu0 0
        %844 = vmatprep.subr.bf16.mxu0 0
        %845 = vmatpush1.bf16.msra.mxu0 0
        %846 = vmatprep.subr.bf16.mxu0 0
        %847 = vmatpush1.bf16.msra.mxu0 0
        %848 = vmatprep.subr.bf16.mxu0 0
        %849 = vmatpush1.bf16.msra.mxu0 0
        %850 = vmatprep.subr.bf16.mxu0 0
        %851 = vmatpush1.bf16.msra.mxu0 0
        %852 = vmatprep.subr.bf16.mxu0 0
        %853 = vmatpush1.bf16.msra.mxu0 0
        %854 = vmatprep.subr.bf16.mxu0 0
        %855 = vmatpush1.bf16.msra.mxu0 0
        %856 = vmatprep.subr.bf16.mxu0 0
        %857 = vmatpush1.bf16.msra.mxu0 0
        %858 = vmatprep.subr.bf16.mxu0 0
        %859 = vmatpush1.bf16.msra.mxu0 0
        %860 = vmatprep.subr.bf16.mxu0 0
        %861 = vmatpush1.bf16.msra.mxu0 0
        %862 = vmatprep.mubr.bf16.mxu0 0
        %863 = vmatmul.mubr.bf16.gmra.mrb[0].mxu0 %v787
        %v864 = vpop.f32.mrb[0].mxu0
        %v865 = vadd.f32 0.0, %v864
        %v866 = vpop.f32.mrb[0].mxu0
        %v867 = vpop.f32.mrb[0].mxu0
        %v868 = vpop.f32.mrb[0].mxu0
        %869 = vdwg.mxu0
        %v870 = vadd.f32 %v766, %v824
        %v871 = vadd.f32 %v767, %v826
        %v872 = vadd.f32 %v768, %v865
        %873 = vrot.lane.b32.xlu0 %v459, 64
        %v874 = vpop.permute.xlu0 %873
        %v876 = vsel %vm481, %v874, 0
        %878 = vmatprep.subr.bf16.mxu0 %v455
        %879 = vmatpush1.bf16.msra.mxu0 %v454
        %880 = vmatprep.subr.bf16.mxu0 0
        %881 = vmatpush1.bf16.msra.mxu0 0
        %882 = vmatprep.subr.bf16.mxu0 0
        %883 = vmatpush1.bf16.msra.mxu0 0
        %884 = vmatprep.subr.bf16.mxu0 0
        %885 = vmatpush1.bf16.msra.mxu0 0
        %886 = vmatprep.subr.bf16.mxu0 0
        %887 = vmatpush1.bf16.msra.mxu0 0
        %888 = vmatprep.subr.bf16.mxu0 0
        %889 = vmatpush1.bf16.msra.mxu0 0
        %890 = vmatprep.subr.bf16.mxu0 0
        %891 = vmatpush1.bf16.msra.mxu0 0
        %892 = vmatprep.subr.bf16.mxu0 0
        %893 = vmatpush1.bf16.msra.mxu0 0
        %894 = vmatprep.subr.bf16.mxu0 0
        %895 = vmatpush1.bf16.msra.mxu0 0
        %896 = vmatprep.subr.bf16.mxu0 0
        %897 = vmatpush1.bf16.msra.mxu0 0
        %898 = vmatprep.subr.bf16.mxu0 0
        %899 = vmatpush1.bf16.msra.mxu0 0
        %900 = vmatprep.subr.bf16.mxu0 0
        %901 = vmatpush1.bf16.msra.mxu0 0
        %902 = vmatprep.subr.bf16.mxu0 0
        %903 = vmatpush1.bf16.msra.mxu0 0
        %904 = vmatprep.subr.bf16.mxu0 0
        %905 = vmatpush1.bf16.msra.mxu0 0
        %906 = vmatprep.subr.bf16.mxu0 0
        %907 = vmatpush1.bf16.msra.mxu0 0
        %908 = vmatprep.subr.bf16.mxu0 0
        %909 = vmatpush1.bf16.msra.mxu0 0
        %910 = vmatprep.mubr.bf16.mxu0 0
        %911 = vmatmul.mubr.bf16.gmra.mrb[0].mxu0 %v876
        %v912 = vpop.f32.mrb[0].mxu0
        %v913 = vadd.f32 0.0, %v912
        %v914 = vpop.f32.mrb[0].mxu0
        %v915 = vadd.f32 0.0, %v914
        %v916 = vpop.f32.mrb[0].mxu0
        %v917 = vpop.f32.mrb[0].mxu0
        %918 = vdwg.mxu0
        %919 = vmatprep.subr.bf16.mxu0 0
        %920 = vmatpush1.bf16.msra.mxu0 %v456
        %921 = vmatprep.subr.bf16.mxu0 0
        %922 = vmatpush1.bf16.msra.mxu0 0
        %923 = vmatprep.subr.bf16.mxu0 0
        %924 = vmatpush1.bf16.msra.mxu0 0
        %925 = vmatprep.subr.bf16.mxu0 0
        %926 = vmatpush1.bf16.msra.mxu0 0
        %927 = vmatprep.subr.bf16.mxu0 0
        %928 = vmatpush1.bf16.msra.mxu0 0
        %929 = vmatprep.subr.bf16.mxu0 0
        %930 = vmatpush1.bf16.msra.mxu0 0
        %931 = vmatprep.subr.bf16.mxu0 0
        %932 = vmatpush1.bf16.msra.mxu0 0
        %933 = vmatprep.subr.bf16.mxu0 0
        %934 = vmatpush1.bf16.msra.mxu0 0
        %935 = vmatprep.subr.bf16.mxu0 0
        %936 = vmatpush1.bf16.msra.mxu0 0
        %937 = vmatprep.subr.bf16.mxu0 0
        %938 = vmatpush1.bf16.msra.mxu0 0
        %939 = vmatprep.subr.bf16.mxu0 0
        %940 = vmatpush1.bf16.msra.mxu0 0
        %941 = vmatprep.subr.bf16.mxu0 0
        %942 = vmatpush1.bf16.msra.mxu0 0
        %943 = vmatprep.subr.bf16.mxu0 0
        %944 = vmatpush1.bf16.msra.mxu0 0
        %945 = vmatprep.subr.bf16.mxu0 0
        %946 = vmatpush1.bf16.msra.mxu0 0
        %947 = vmatprep.subr.bf16.mxu0 0
        %948 = vmatpush1.bf16.msra.mxu0 0
        %949 = vmatprep.subr.bf16.mxu0 0
        %950 = vmatpush1.bf16.msra.mxu0 0
        %951 = vmatprep.mubr.bf16.mxu0 0
        %952 = vmatmul.mubr.bf16.gmra.mrb[0].mxu0 %v876
        %v953 = vpop.f32.mrb[0].mxu0
        %v954 = vadd.f32 0.0, %v953
        %v955 = vpop.f32.mrb[0].mxu0
        %v956 = vpop.f32.mrb[0].mxu0
        %v957 = vpop.f32.mrb[0].mxu0
        %958 = vdwg.mxu0
        %v959 = vadd.f32 %v870, %v913
        %v960 = vadd.f32 %v871, %v915
        %v961 = vadd.f32 %v872, %v954
        %v962 = vld [vmem:[#allocation2 + $0x8] sm:$0xff]
        %v963 = vld [vmem:[#allocation2 + $0x10] sm:$0xff]
        %v964 = vld [vmem:[#allocation2 + $0x18] sm:$0xff]
        %v965 = vld [vmem:[#allocation2 + $0x20] sm:$0xff]
        %966 = vrot.lane.b32.xlu0 %v459, 48
        %v967 = vpop.permute.xlu0 %966
        %972 = vrot.lane.b32.xlu0 %v962, 127
        %v973 = vpop.permute.xlu0 %972
        %974 = vrot.lane.b32.xlu0 %v963, 127
        %v975 = vpop.permute.xlu0 %974
        %976 = vrot.lane.b32.xlu0 %v964, 127
        %v977 = vpop.permute.xlu0 %976
        %978 = vrot.lane.b32.xlu0 %v965, 127
        %v979 = vpop.permute.xlu0 %978
        %vm980 = vcmask 1039360
        %v981 = vsel %vm980, %v973, %v975
        %v982 = vsel %vm980, %v975, %v977
        %v983 = vsel %vm980, %v977, %v979
        %v988 = vsel %vm481, %v967, 0
        %990 = vmatprep.subr.bf16.mxu0 %v982
        %991 = vmatpush1.bf16.msra.mxu0 %v981
        %992 = vmatprep.subr.bf16.mxu0 0
        %993 = vmatpush1.bf16.msra.mxu0 0
        %994 = vmatprep.subr.bf16.mxu0 0
        %995 = vmatpush1.bf16.msra.mxu0 0
        %996 = vmatprep.subr.bf16.mxu0 0
        %997 = vmatpush1.bf16.msra.mxu0 0
        %998 = vmatprep.subr.bf16.mxu0 0
        %999 = vmatpush1.bf16.msra.mxu0 0
        %1000 = vmatprep.subr.bf16.mxu0 0
        %1001 = vmatpush1.bf16.msra.mxu0 0
        %1002 = vmatprep.subr.bf16.mxu0 0
        %1003 = vmatpush1.bf16.msra.mxu0 0
        %1004 = vmatprep.subr.bf16.mxu0 0
        %1005 = vmatpush1.bf16.msra.mxu0 0
        %1006 = vmatprep.subr.bf16.mxu0 0
        %1007 = vmatpush1.bf16.msra.mxu0 0
        %1008 = vmatprep.subr.bf16.mxu0 0
        %1009 = vmatpush1.bf16.msra.mxu0 0
        %1010 = vmatprep.subr.bf16.mxu0 0
        %1011 = vmatpush1.bf16.msra.mxu0 0
        %1012 = vmatprep.subr.bf16.mxu0 0
        %1013 = vmatpush1.bf16.msra.mxu0 0
        %1014 = vmatprep.subr.bf16.mxu0 0
        %1015 = vmatpush1.bf16.msra.mxu0 0
        %1016 = vmatprep.subr.bf16.mxu0 0
        %1017 = vmatpush1.bf16.msra.mxu0 0
        %1018 = vmatprep.subr.bf16.mxu0 0
        %1019 = vmatpush1.bf16.msra.mxu0 0
        %1020 = vmatprep.subr.bf16.mxu0 0
        %1021 = vmatpush1.bf16.msra.mxu0 0
        %1022 = vmatprep.mubr.bf16.mxu0 0
        %1023 = vmatmul.mubr.bf16.gmra.mrb[0].mxu0 %v988
        %v1024 = vpop.f32.mrb[0].mxu0
        %v1025 = vadd.f32 0.0, %v1024
        %v1026 = vpop.f32.mrb[0].mxu0
        %v1027 = vadd.f32 0.0, %v1026
        %v1028 = vpop.f32.mrb[0].mxu0
        %v1029 = vpop.f32.mrb[0].mxu0
        %1030 = vdwg.mxu0
        %1031 = vmatprep.subr.bf16.mxu0 0
        %1032 = vmatpush1.bf16.msra.mxu0 %v983
        %1033 = vmatprep.subr.bf16.mxu0 0
        %1034 = vmatpush1.bf16.msra.mxu0 0
        %1035 = vmatprep.subr.bf16.mxu0 0
        %1036 = vmatpush1.bf16.msra.mxu0 0
        %1037 = vmatprep.subr.bf16.mxu0 0
        %1038 = vmatpush1.bf16.msra.mxu0 0
        %1039 = vmatprep.subr.bf16.mxu0 0
        %1040 = vmatpush1.bf16.msra.mxu0 0
        %1041 = vmatprep.subr.bf16.mxu0 0
        %1042 = vmatpush1.bf16.msra.mxu0 0
        %1043 = vmatprep.subr.bf16.mxu0 0
        %1044 = vmatpush1.bf16.msra.mxu0 0
        %1045 = vmatprep.subr.bf16.mxu0 0
        %1046 = vmatpush1.bf16.msra.mxu0 0
        %1047 = vmatprep.subr.bf16.mxu0 0
        %1048 = vmatpush1.bf16.msra.mxu0 0
        %1049 = vmatprep.subr.bf16.mxu0 0
        %1050 = vmatpush1.bf16.msra.mxu0 0
        %1051 = vmatprep.subr.bf16.mxu0 0
        %1052 = vmatpush1.bf16.msra.mxu0 0
        %1053 = vmatprep.subr.bf16.mxu0 0
        %1054 = vmatpush1.bf16.msra.mxu0 0
        %1055 = vmatprep.subr.bf16.mxu0 0
        %1056 = vmatpush1.bf16.msra.mxu0 0
        %1057 = vmatprep.subr.bf16.mxu0 0
        %1058 = vmatpush1.bf16.msra.mxu0 0
        %1059 = vmatprep.subr.bf16.mxu0 0
        %1060 = vmatpush1.bf16.msra.mxu0 0
        %1061 = vmatprep.subr.bf16.mxu0 0
        %1062 = vmatpush1.bf16.msra.mxu0 0
        %1063 = vmatprep.mubr.bf16.mxu0 0
        %1064 = vmatmul.mubr.bf16.gmra.mrb[0].mxu0 %v988
        %v1065 = vpop.f32.mrb[0].mxu0
        %v1066 = vadd.f32 0.0, %v1065
        %v1067 = vpop.f32.mrb[0].mxu0
        %v1068 = vpop.f32.mrb[0].mxu0
        %v1069 = vpop.f32.mrb[0].mxu0
        %1070 = vdwg.mxu0
        %v1071 = vadd.f32 %v959, %v1025
        %v1072 = vadd.f32 %v960, %v1027
        %v1073 = vadd.f32 %v961, %v1066
        %1074 = vrot.lane.b32.xlu0 %v459, 32
        %v1075 = vpop.permute.xlu0 %1074
        %1076 = vrot.lane.b32.xlu0 %v962, 111
        %v1077 = vpop.permute.xlu0 %1076
        %1078 = vrot.lane.b32.xlu0 %v963, 111
        %v1079 = vpop.permute.xlu0 %1078
        %1080 = vrot.lane.b32.xlu0 %v964, 111
        %v1081 = vpop.permute.xlu0 %1080
        %1082 = vrot.lane.b32.xlu0 %v965, 111
        %v1083 = vpop.permute.xlu0 %1082
        %vm1084 = vcmask 908288
        %v1085 = vsel %vm1084, %v1077, %v1079
        %v1086 = vsel %vm1084, %v1079, %v1081
        %v1087 = vsel %vm1084, %v1081, %v1083
        %v1092 = vsel %vm481, %v1075, 0
        %1094 = vmatprep.subr.bf16.mxu0 %v1086
        %1095 = vmatpush1.bf16.msra.mxu0 %v1085
        %1096 = vmatprep.subr.bf16.mxu0 0
        %1097 = vmatpush1.bf16.msra.mxu0 0
        %1098 = vmatprep.subr.bf16.mxu0 0
        %1099 = vmatpush1.bf16.msra.mxu0 0
        %1100 = vmatprep.subr.bf16.mxu0 0
        %1101 = vmatpush1.bf16.msra.mxu0 0
        %1102 = vmatprep.subr.bf16.mxu0 0
        %1103 = vmatpush1.bf16.msra.mxu0 0
        %1104 = vmatprep.subr.bf16.mxu0 0
        %1105 = vmatpush1.bf16.msra.mxu0 0
        %1106 = vmatprep.subr.bf16.mxu0 0
        %1107 = vmatpush1.bf16.msra.mxu0 0
        %1108 = vmatprep.subr.bf16.mxu0 0
        %1109 = vmatpush1.bf16.msra.mxu0 0
        %1110 = vmatprep.subr.bf16.mxu0 0
        %1111 = vmatpush1.bf16.msra.mxu0 0
        %1112 = vmatprep.subr.bf16.mxu0 0
        %1113 = vmatpush1.bf16.msra.mxu0 0
        %1114 = vmatprep.subr.bf16.mxu0 0
        %1115 = vmatpush1.bf16.msra.mxu0 0
        %1116 = vmatprep.subr.bf16.mxu0 0
        %1117 = vmatpush1.bf16.msra.mxu0 0
        %1118 = vmatprep.subr.bf16.mxu0 0
        %1119 = vmatpush1.bf16.msra.mxu0 0
        %1120 = vmatprep.subr.bf16.mxu0 0
        %1121 = vmatpush1.bf16.msra.mxu0 0
        %1122 = vmatprep.subr.bf16.mxu0 0
        %1123 = vmatpush1.bf16.msra.mxu0 0
        %1124 = vmatprep.subr.bf16.mxu0 0
        %1125 = vmatpush1.bf16.msra.mxu0 0
        %1126 = vmatprep.mubr.bf16.mxu0 0
        %1127 = vmatmul.mubr.bf16.gmra.mrb[0].mxu0 %v1092
        %v1128 = vpop.f32.mrb[0].mxu0
        %v1129 = vadd.f32 0.0, %v1128
        %v1130 = vpop.f32.mrb[0].mxu0
        %v1131 = vadd.f32 0.0, %v1130
        %v1132 = vpop.f32.mrb[0].mxu0
        %v1133 = vpop.f32.mrb[0].mxu0
        %1134 = vdwg.mxu0
        %1135 = vmatprep.subr.bf16.mxu0 0
        %1136 = vmatpush1.bf16.msra.mxu0 %v1087
        %1137 = vmatprep.subr.bf16.mxu0 0
        %1138 = vmatpush1.bf16.msra.mxu0 0
        %1139 = vmatprep.subr.bf16.mxu0 0
        %1140 = vmatpush1.bf16.msra.mxu0 0
        %1141 = vmatprep.subr.bf16.mxu0 0
        %1142 = vmatpush1.bf16.msra.mxu0 0
        %1143 = vmatprep.subr.bf16.mxu0 0
        %1144 = vmatpush1.bf16.msra.mxu0 0
        %1145 = vmatprep.subr.bf16.mxu0 0
        %1146 = vmatpush1.bf16.msra.mxu0 0
        %1147 = vmatprep.subr.bf16.mxu0 0
        %1148 = vmatpush1.bf16.msra.mxu0 0
        %1149 = vmatprep.subr.bf16.mxu0 0
        %1150 = vmatpush1.bf16.msra.mxu0 0
        %1151 = vmatprep.subr.bf16.mxu0 0
        %1152 = vmatpush1.bf16.msra.mxu0 0
        %1153 = vmatprep.subr.bf16.mxu0 0
        %1154 = vmatpush1.bf16.msra.mxu0 0
        %1155 = vmatprep.subr.bf16.mxu0 0
        %1156 = vmatpush1.bf16.msra.mxu0 0
        %1157 = vmatprep.subr.bf16.mxu0 0
        %1158 = vmatpush1.bf16.msra.mxu0 0
        %1159 = vmatprep.subr.bf16.mxu0 0
        %1160 = vmatpush1.bf16.msra.mxu0 0
        %1161 = vmatprep.subr.bf16.mxu0 0
        %1162 = vmatpush1.bf16.msra.mxu0 0
        %1163 = vmatprep.subr.bf16.mxu0 0
        %1164 = vmatpush1.bf16.msra.mxu0 0
        %1165 = vmatprep.subr.bf16.mxu0 0
        %1166 = vmatpush1.bf16.msra.mxu0 0
        %1167 = vmatprep.mubr.bf16.mxu0 0
        %1168 = vmatmul.mubr.bf16.gmra.mrb[0].mxu0 %v1092
        %v1169 = vpop.f32.mrb[0].mxu0
        %v1170 = vadd.f32 0.0, %v1169
        %v1171 = vpop.f32.mrb[0].mxu0
        %v1172 = vpop.f32.mrb[0].mxu0
        %v1173 = vpop.f32.mrb[0].mxu0
        %1174 = vdwg.mxu0
        %v1175 = vadd.f32 %v1071, %v1129
        %v1176 = vadd.f32 %v1072, %v1131
        %v1177 = vadd.f32 %v1073, %v1170
        %1178 = vrot.lane.b32.xlu0 %v459, 16
        %v1179 = vpop.permute.xlu0 %1178
        %1180 = vrot.lane.b32.xlu0 %v962, 110
        %v1181 = vpop.permute.xlu0 %1180
        %1182 = vrot.lane.b32.xlu0 %v963, 110
        %v1183 = vpop.permute.xlu0 %1182
        %1184 = vrot.lane.b32.xlu0 %v964, 110
        %v1185 = vpop.permute.xlu0 %1184
        %1186 = vrot.lane.b32.xlu0 %v965, 110
        %v1187 = vpop.permute.xlu0 %1186
        %vm1188 = vcmask 900096
        %v1189 = vsel %vm1188, %v1181, %v1183
        %v1190 = vsel %vm1188, %v1183, %v1185
        %v1191 = vsel %vm1188, %v1185, %v1187
        %v1196 = vsel %vm481, %v1179, 0
        %1198 = vmatprep.subr.bf16.mxu0 %v1190
        %1199 = vmatpush1.bf16.msra.mxu0 %v1189
        %1200 = vmatprep.subr.bf16.mxu0 0
        %1201 = vmatpush1.bf16.msra.mxu0 0
        %1202 = vmatprep.subr.bf16.mxu0 0
        %1203 = vmatpush1.bf16.msra.mxu0 0
        %1204 = vmatprep.subr.bf16.mxu0 0
        %1205 = vmatpush1.bf16.msra.mxu0 0
        %1206 = vmatprep.subr.bf16.mxu0 0
        %1207 = vmatpush1.bf16.msra.mxu0 0
        %1208 = vmatprep.subr.bf16.mxu0 0
        %1209 = vmatpush1.bf16.msra.mxu0 0
        %1210 = vmatprep.subr.bf16.mxu0 0
        %1211 = vmatpush1.bf16.msra.mxu0 0
        %1212 = vmatprep.subr.bf16.mxu0 0
        %1213 = vmatpush1.bf16.msra.mxu0 0
        %1214 = vmatprep.subr.bf16.mxu0 0
        %1215 = vmatpush1.bf16.msra.mxu0 0
        %1216 = vmatprep.subr.bf16.mxu0 0
        %1217 = vmatpush1.bf16.msra.mxu0 0
        %1218 = vmatprep.subr.bf16.mxu0 0
        %1219 = vmatpush1.bf16.msra.mxu0 0
        %1220 = vmatprep.subr.bf16.mxu0 0
        %1221 = vmatpush1.bf16.msra.mxu0 0
        %1222 = vmatprep.subr.bf16.mxu0 0
        %1223 = vmatpush1.bf16.msra.mxu0 0
        %1224 = vmatprep.subr.bf16.mxu0 0
        %1225 = vmatpush1.bf16.msra.mxu0 0
        %1226 = vmatprep.subr.bf16.mxu0 0
        %1227 = vmatpush1.bf16.msra.mxu0 0
        %1228 = vmatprep.subr.bf16.mxu0 0
        %1229 = vmatpush1.bf16.msra.mxu0 0
        %1230 = vmatprep.mubr.bf16.mxu0 0
        %1231 = vmatmul.mubr.bf16.gmra.mrb[0].mxu0 %v1196
        %v1232 = vpop.f32.mrb[0].mxu0
        %v1233 = vadd.f32 0.0, %v1232
        %v1234 = vpop.f32.mrb[0].mxu0
        %v1235 = vadd.f32 0.0, %v1234
        %v1236 = vpop.f32.mrb[0].mxu0
        %v1237 = vpop.f32.mrb[0].mxu0
        %1238 = vdwg.mxu0
        %1239 = vmatprep.subr.bf16.mxu0 0
        %1240 = vmatpush1.bf16.msra.mxu0 %v1191
        %1241 = vmatprep.subr.bf16.mxu0 0
        %1242 = vmatpush1.bf16.msra.mxu0 0
        %1243 = vmatprep.subr.bf16.mxu0 0
        %1244 = vmatpush1.bf16.msra.mxu0 0
        %1245 = vmatprep.subr.bf16.mxu0 0
        %1246 = vmatpush1.bf16.msra.mxu0 0
        %1247 = vmatprep.subr.bf16.mxu0 0
        %1248 = vmatpush1.bf16.msra.mxu0 0
        %1249 = vmatprep.subr.bf16.mxu0 0
        %1250 = vmatpush1.bf16.msra.mxu0 0
        %1251 = vmatprep.subr.bf16.mxu0 0
        %1252 = vmatpush1.bf16.msra.mxu0 0
        %1253 = vmatprep.subr.bf16.mxu0 0
        %1254 = vmatpush1.bf16.msra.mxu0 0
        %1255 = vmatprep.subr.bf16.mxu0 0
        %1256 = vmatpush1.bf16.msra.mxu0 0
        %1257 = vmatprep.subr.bf16.mxu0 0
        %1258 = vmatpush1.bf16.msra.mxu0 0
        %1259 = vmatprep.subr.bf16.mxu0 0
        %1260 = vmatpush1.bf16.msra.mxu0 0
        %1261 = vmatprep.subr.bf16.mxu0 0
        %1262 = vmatpush1.bf16.msra.mxu0 0
        %1263 = vmatprep.subr.bf16.mxu0 0
        %1264 = vmatpush1.bf16.msra.mxu0 0
        %1265 = vmatprep.subr.bf16.mxu0 0
        %1266 = vmatpush1.bf16.msra.mxu0 0
        %1267 = vmatprep.subr.bf16.mxu0 0
        %1268 = vmatpush1.bf16.msra.mxu0 0
        %1269 = vmatprep.subr.bf16.mxu0 0
        %1270 = vmatpush1.bf16.msra.mxu0 0
        %1271 = vmatprep.mubr.bf16.mxu0 0
        %1272 = vmatmul.mubr.bf16.gmra.mrb[0].mxu0 %v1196
        %v1273 = vpop.f32.mrb[0].mxu0
        %v1274 = vadd.f32 0.0, %v1273
        %v1275 = vpop.f32.mrb[0].mxu0
        %v1276 = vpop.f32.mrb[0].mxu0
        %v1277 = vpop.f32.mrb[0].mxu0
        %1278 = vdwg.mxu0
        %v1279 = vadd.f32 %v1175, %v1233
        %v1280 = vadd.f32 %v1176, %v1235
        %v1281 = vadd.f32 %v1177, %v1274
        %v1282 = vunpack.c.h.b16 %v449
        %v1283 = vpack.c.b16 %v1282, %v1282
        %1284 = vrot.lane.b32.xlu0 %v962, 109
        %v1285 = vpop.permute.xlu0 %1284
        %1286 = vrot.lane.b32.xlu0 %v963, 109
        %v1287 = vpop.permute.xlu0 %1286
        %1288 = vrot.lane.b32.xlu0 %v964, 109
        %v1289 = vpop.permute.xlu0 %1288
        %1290 = vrot.lane.b32.xlu0 %v965, 109
        %v1291 = vpop.permute.xlu0 %1290
        %vm1292 = vcmask 891904
        %v1293 = vsel %vm1292, %v1285, %v1287
        %v1294 = vsel %vm1292, %v1287, %v1289
        %v1295 = vsel %vm1292, %v1289, %v1291
        %v1300 = vsel %vm481, %v1283, 0
        %1302 = vmatprep.subr.bf16.mxu0 %v1294
        %1303 = vmatpush1.bf16.msra.mxu0 %v1293
        %1304 = vmatprep.subr.bf16.mxu0 0
        %1305 = vmatpush1.bf16.msra.mxu0 0
        %1306 = vmatprep.subr.bf16.mxu0 0
        %1307 = vmatpush1.bf16.msra.mxu0 0
        %1308 = vmatprep.subr.bf16.mxu0 0
        %1309 = vmatpush1.bf16.msra.mxu0 0
        %1310 = vmatprep.subr.bf16.mxu0 0
        %1311 = vmatpush1.bf16.msra.mxu0 0
        %1312 = vmatprep.subr.bf16.mxu0 0
        %1313 = vmatpush1.bf16.msra.mxu0 0
        %1314 = vmatprep.subr.bf16.mxu0 0
        %1315 = vmatpush1.bf16.msra.mxu0 0
        %1316 = vmatprep.subr.bf16.mxu0 0
        %1317 = vmatpush1.bf16.msra.mxu0 0
        %1318 = vmatprep.subr.bf16.mxu0 0
        %1319 = vmatpush1.bf16.msra.mxu0 0
        %1320 = vmatprep.subr.bf16.mxu0 0
        %1321 = vmatpush1.bf16.msra.mxu0 0
        %1322 = vmatprep.subr.bf16.mxu0 0
        %1323 = vmatpush1.bf16.msra.mxu0 0
        %1324 = vmatprep.subr.bf16.mxu0 0
        %1325 = vmatpush1.bf16.msra.mxu0 0
        %1326 = vmatprep.subr.bf16.mxu0 0
        %1327 = vmatpush1.bf16.msra.mxu0 0
        %1328 = vmatprep.subr.bf16.mxu0 0
        %1329 = vmatpush1.bf16.msra.mxu0 0
        %1330 = vmatprep.subr.bf16.mxu0 0
        %1331 = vmatpush1.bf16.msra.mxu0 0
        %1332 = vmatprep.subr.bf16.mxu0 0
        %1333 = vmatpush1.bf16.msra.mxu0 0
        %1334 = vmatprep.mubr.bf16.mxu0 0
        %1335 = vmatmul.mubr.bf16.gmra.mrb[0].mxu0 %v1300
        %v1336 = vpop.f32.mrb[0].mxu0
        %v1337 = vadd.f32 0.0, %v1336
        %v1338 = vpop.f32.mrb[0].mxu0
        %v1339 = vadd.f32 0.0, %v1338
        %v1340 = vpop.f32.mrb[0].mxu0
        %v1341 = vpop.f32.mrb[0].mxu0
        %1342 = vdwg.mxu0
        %1343 = vmatprep.subr.bf16.mxu0 0
        %1344 = vmatpush1.bf16.msra.mxu0 %v1295
        %1345 = vmatprep.subr.bf16.mxu0 0
        %1346 = vmatpush1.bf16.msra.mxu0 0
        %1347 = vmatprep.subr.bf16.mxu0 0
        %1348 = vmatpush1.bf16.msra.mxu0 0
        %1349 = vmatprep.subr.bf16.mxu0 0
        %1350 = vmatpush1.bf16.msra.mxu0 0
        %1351 = vmatprep.subr.bf16.mxu0 0
        %1352 = vmatpush1.bf16.msra.mxu0 0
        %1353 = vmatprep.subr.bf16.mxu0 0
        %1354 = vmatpush1.bf16.msra.mxu0 0
        %1355 = vmatprep.subr.bf16.mxu0 0
        %1356 = vmatpush1.bf16.msra.mxu0 0
        %1357 = vmatprep.subr.bf16.mxu0 0
        %1358 = vmatpush1.bf16.msra.mxu0 0
        %1359 = vmatprep.subr.bf16.mxu0 0
        %1360 = vmatpush1.bf16.msra.mxu0 0
        %1361 = vmatprep.subr.bf16.mxu0 0
        %1362 = vmatpush1.bf16.msra.mxu0 0
        %1363 = vmatprep.subr.bf16.mxu0 0
        %1364 = vmatpush1.bf16.msra.mxu0 0
        %1365 = vmatprep.subr.bf16.mxu0 0
        %1366 = vmatpush1.bf16.msra.mxu0 0
        %1367 = vmatprep.subr.bf16.mxu0 0
        %1368 = vmatpush1.bf16.msra.mxu0 0
        %1369 = vmatprep.subr.bf16.mxu0 0
        %1370 = vmatpush1.bf16.msra.mxu0 0
        %1371 = vmatprep.subr.bf16.mxu0 0
        %1372 = vmatpush1.bf16.msra.mxu0 0
        %1373 = vmatprep.subr.bf16.mxu0 0
        %1374 = vmatpush1.bf16.msra.mxu0 0
        %1375 = vmatprep.mubr.bf16.mxu0 0
        %1376 = vmatmul.mubr.bf16.gmra.mrb[0].mxu0 %v1300
        %v1377 = vpop.f32.mrb[0].mxu0
        %v1378 = vadd.f32 0.0, %v1377
        %v1379 = vpop.f32.mrb[0].mxu0
        %v1380 = vpop.f32.mrb[0].mxu0
        %v1381 = vpop.f32.mrb[0].mxu0
        %1382 = vdwg.mxu0
        %v1383 = vadd.f32 %v1279, %v1337
        %v1384 = vadd.f32 %v1280, %v1339
        %v1385 = vadd.f32 %v1281, %v1378
        %1387 = vset.pattern.permute.xlu0 0
        %1388 = vperm.xlu0 %1387, %v452
        %v1389 = vpop.permute.xlu0 %1388
        %v1391 = vadd.f32 %v1383, %v1389
        %v1392 = vadd.f32 %v1384, %v1389
        %v1393 = vadd.f32 %v1385, %v1389
        %v1394 = vadd.f32 %v1391, 3.0
        %v1395 = vadd.f32 %v1392, 3.0
        %v1396 = vadd.f32 %v1393, 3.0
        %v1397 = vmax.f32 %v1394, 0.0
        %v1398 = vmax.f32 %v1395, 0.0
        %v1399 = vmax.f32 %v1396, 0.0
        %v1400 = vmin.f32 %v1397, 6.0
        %v1401 = vmin.f32 %v1398, 6.0
        %v1402 = vmin.f32 %v1399, 6.0
        %v1403 = vmul.f32 %v1391, %v1400
        %v1404 = vmul.f32 %v1392, %v1401
        %v1405 = vmul.f32 %v1393, %v1402
        %v1406 = vmul.f32 %v1403, 0.16666667
        %v1407 = vmul.f32 %v1404, 0.16666667
        %v1408 = vmul.f32 %v1405, 0.16666667
        %v1410 = vlaneseq
        %v1411 = vshrl.u32 %v1410, 7
        %v1412 = vsub.s32 0, %v1411
        %v1413 = vrot.slane %v415, %v1412
        %v1414 = vlaneseq
        %v1415 = vshrl.u32 %v1414, 7
        %v1416 = vsub.s32 1, %v1415
        %v1417 = vrot.slane %v415, %v1416
        %v1418 = vlaneseq
        %v1419 = vshrl.u32 %v1418, 7
        %v1420 = vsub.s32 2, %v1419
        %v1421 = vrot.slane %v415, %v1420
        %v1425 = vmul.f32 %v1406, %v1413
        %v1426 = vmul.f32 %v1407, %v1417
        %v1427 = vmul.f32 %v1408, %v1421
        %v1428 = vpack.c.bf16 %v1425, %v1425
        %v1429 = vpack.c.bf16 %v1426, %v1426
        %v1430 = vpack.c.bf16 %v1427, %v1427
        %1431 = vst [vmem:[#allocation2 + $0x30] sm:$0xf] %v1428
        %1432 = vst [vmem:[#allocation2 + $0x38] sm:$0xf] %v1429
        %1433 = vst [vmem:[#allocation2 + $0x40] sm:$0xf] %v1430
        %s1434 = smul.addr %s446, 4
        %s1435 = scalar_lea.vmem %s3, %s1434
        %v1436 = vld [vmem:[%s1435] sm:$0xff]
        %s1437 = scalar_lea.vmem %s8, %s450
        %v1438 = vld [vmem:[%s1437] sm:$0xff]
        %v1439 = vld [vmem:[#allocation2] sm:$0xff]
        %v1440 = vld [vmem:[#allocation2 + $0x8] sm:$0xff]
        %v1441 = vld [vmem:[#allocation2 + $0x10] sm:$0xff]
        %v1442 = vld [vmem:[#allocation2 + $0x18] sm:$0xff]
        %v1443 = vld [vmem:[#allocation2 + $0x28] sm:$0xf]
        %v1444 = vld [vmem:[#allocation2 + $0x30] sm:$0xf]
        %v1445 = vld [vmem:[#allocation2 + $0x38] sm:$0xf]
        %v1446 = vld [vmem:[#allocation2 + $0x40] sm:$0xf]
        %v1448 = vunpack.c.l.b16 %v1436
        %v1449 = vpack.c.b16 %v1448, %v1448
        %1450 = vrot.lane.b32.xlu0 %v1449, 104
        %v1451 = vpop.permute.xlu0 %1450
        %1460 = vrot.lane.b32.xlu0 %v1439, 18
        %v1461 = vpop.permute.xlu0 %1460
        %1462 = vrot.lane.b32.xlu0 %v1440, 18
        %v1463 = vpop.permute.xlu0 %1462
        %1464 = vrot.lane.b32.xlu0 %v1441, 18
        %v1465 = vpop.permute.xlu0 %1464
        %1466 = vrot.lane.b32.xlu0 %v1442, 18
        %v1467 = vpop.permute.xlu0 %1466
        %1468 = vrot.lane.b32.xlu0 %v1443, 18
        %v1469 = vpop.permute.xlu0 %1468
        %1470 = vrot.lane.b32.xlu0 %v1444, 18
        %v1471 = vpop.permute.xlu0 %1470
        %1472 = vrot.lane.b32.xlu0 %v1445, 18
        %v1473 = vpop.permute.xlu0 %1472
        %1474 = vrot.lane.b32.xlu0 %v1446, 18
        %v1475 = vpop.permute.xlu0 %1474
        %v1476 = vsel %vm474, %v1461, %v1463
        %v1477 = vsel %vm474, %v1463, %v1465
        %v1478 = vsel %vm474, %v1465, %v1467
        %v1479 = vsel %vm474, %v1469, %v1471
        %v1480 = vsel %vm474, %v1471, %v1473
        %v1481 = vsel %vm474, %v1473, %v1475
        %vm1485 = vcmask 195584
        %v1487 = vsel %vm1485, %v1451, 0
        %vm1489 = vcmask 1043456
        %v1491 = vsel %vm1489, %v1479, 0
        %v1494 = vsel %vm1489, %v1480, 0
        %v1497 = vsel %vm1489, %v1481, 0
        %1499 = vmatprep.subr.bf16.mxu0 %v1477
        %1500 = vmatpush1.bf16.msra.mxu0 %v1476
        %1501 = vmatprep.subr.bf16.mxu0 %v1494
        %1502 = vmatpush1.bf16.msra.mxu0 %v1491
        %1503 = vmatprep.subr.bf16.mxu0 0
        %1504 = vmatpush1.bf16.msra.mxu0 0
        %1505 = vmatprep.subr.bf16.mxu0 0
        %1506 = vmatpush1.bf16.msra.mxu0 0
        %1507 = vmatprep.subr.bf16.mxu0 0
        %1508 = vmatpush1.bf16.msra.mxu0 0
        %1509 = vmatprep.subr.bf16.mxu0 0
        %1510 = vmatpush1.bf16.msra.mxu0 0
        %1511 = vmatprep.subr.bf16.mxu0 0
        %1512 = vmatpush1.bf16.msra.mxu0 0
        %1513 = vmatprep.subr.bf16.mxu0 0
        %1514 = vmatpush1.bf16.msra.mxu0 0
        %1515 = vmatprep.subr.bf16.mxu0 0
        %1516 = vmatpush1.bf16.msra.mxu0 0
        %1517 = vmatprep.subr.bf16.mxu0 0
        %1518 = vmatpush1.bf16.msra.mxu0 0
        %1519 = vmatprep.subr.bf16.mxu0 0
        %1520 = vmatpush1.bf16.msra.mxu0 0
        %1521 = vmatprep.subr.bf16.mxu0 0
        %1522 = vmatpush1.bf16.msra.mxu0 0
        %1523 = vmatprep.subr.bf16.mxu0 0
        %1524 = vmatpush1.bf16.msra.mxu0 0
        %1525 = vmatprep.subr.bf16.mxu0 0
        %1526 = vmatpush1.bf16.msra.mxu0 0
        %1527 = vmatprep.subr.bf16.mxu0 0
        %1528 = vmatpush1.bf16.msra.mxu0 0
        %1529 = vmatprep.subr.bf16.mxu0 0
        %1530 = vmatpush1.bf16.msra.mxu0 0
        %1531 = vmatprep.mubr.bf16.mxu0 0
        %1532 = vmatmul.mubr.bf16.gmra.mrb[0].mxu0 %v1487
        %v1533 = vpop.f32.mrb[0].mxu0
        %v1534 = vadd.f32 0.0, %v1533
        %v1535 = vpop.f32.mrb[0].mxu0
        %v1536 = vadd.f32 0.0, %v1535
        %v1537 = vpop.f32.mrb[0].mxu0
        %v1538 = vpop.f32.mrb[0].mxu0
        %1539 = vdwg.mxu0
        %1540 = vmatprep.subr.bf16.mxu0 0
        %1541 = vmatpush1.bf16.msra.mxu0 %v1478
        %1542 = vmatprep.subr.bf16.mxu0 0
        %1543 = vmatpush1.bf16.msra.mxu0 %v1497
        %1544 = vmatprep.subr.bf16.mxu0 0
        %1545 = vmatpush1.bf16.msra.mxu0 0
        %1546 = vmatprep.subr.bf16.mxu0 0
        %1547 = vmatpush1.bf16.msra.mxu0 0
        %1548 = vmatprep.subr.bf16.mxu0 0
        %1549 = vmatpush1.bf16.msra.mxu0 0
        %1550 = vmatprep.subr.bf16.mxu0 0
        %1551 = vmatpush1.bf16.msra.mxu0 0
        %1552 = vmatprep.subr.bf16.mxu0 0
        %1553 = vmatpush1.bf16.msra.mxu0 0
        %1554 = vmatprep.subr.bf16.mxu0 0
        %1555 = vmatpush1.bf16.msra.mxu0 0
        %1556 = vmatprep.subr.bf16.mxu0 0
        %1557 = vmatpush1.bf16.msra.mxu0 0
        %1558 = vmatprep.subr.bf16.mxu0 0
        %1559 = vmatpush1.bf16.msra.mxu0 0
        %1560 = vmatprep.subr.bf16.mxu0 0
        %1561 = vmatpush1.bf16.msra.mxu0 0
        %1562 = vmatprep.subr.bf16.mxu0 0
        %1563 = vmatpush1.bf16.msra.mxu0 0
        %1564 = vmatprep.subr.bf16.mxu0 0
        %1565 = vmatpush1.bf16.msra.mxu0 0
        %1566 = vmatprep.subr.bf16.mxu0 0
        %1567 = vmatpush1.bf16.msra.mxu0 0
        %1568 = vmatprep.subr.bf16.mxu0 0
        %1569 = vmatpush1.bf16.msra.mxu0 0
        %1570 = vmatprep.subr.bf16.mxu0 0
        %1571 = vmatpush1.bf16.msra.mxu0 0
        %1572 = vmatprep.mubr.bf16.mxu0 0
        %1573 = vmatmul.mubr.bf16.gmra.mrb[0].mxu0 %v1487
        %v1574 = vpop.f32.mrb[0].mxu0
        %v1575 = vadd.f32 0.0, %v1574
        %v1576 = vpop.f32.mrb[0].mxu0
        %v1577 = vpop.f32.mrb[0].mxu0
        %v1578 = vpop.f32.mrb[0].mxu0
        %1579 = vdwg.mxu0
        %1580 = vrot.lane.b32.xlu0 %v1439, 19
        %v1581 = vpop.permute.xlu0 %1580
        %1582 = vrot.lane.b32.xlu0 %v1440, 19
        %v1583 = vpop.permute.xlu0 %1582
        %1584 = vrot.lane.b32.xlu0 %v1441, 19
        %v1585 = vpop.permute.xlu0 %1584
        %1586 = vrot.lane.b32.xlu0 %v1442, 19
        %v1587 = vpop.permute.xlu0 %1586
        %1588 = vrot.lane.b32.xlu0 %v1443, 19
        %v1589 = vpop.permute.xlu0 %1588
        %1590 = vrot.lane.b32.xlu0 %v1444, 19
        %v1591 = vpop.permute.xlu0 %1590
        %1592 = vrot.lane.b32.xlu0 %v1445, 19
        %v1593 = vpop.permute.xlu0 %1592
        %1594 = vrot.lane.b32.xlu0 %v1446, 19
        %v1595 = vpop.permute.xlu0 %1594
        %v1596 = vsel %vm574, %v1581, %v1583
        %v1597 = vsel %vm574, %v1583, %v1585
        %v1598 = vsel %vm574, %v1585, %v1587
        %v1599 = vsel %vm574, %v1589, %v1591
        %v1600 = vsel %vm574, %v1591, %v1593
        %v1601 = vsel %vm574, %v1593, %v1595
        %v1606 = vsel %vm1485, %v1436, 0
        %v1609 = vsel %vm1489, %v1599, 0
        %v1612 = vsel %vm1489, %v1600, 0
        %v1615 = vsel %vm1489, %v1601, 0
        %1617 = vmatprep.subr.bf16.mxu0 %v1597
        %1618 = vmatpush1.bf16.msra.mxu0 %v1596
        %1619 = vmatprep.subr.bf16.mxu0 %v1612
        %1620 = vmatpush1.bf16.msra.mxu0 %v1609
        %1621 = vmatprep.subr.bf16.mxu0 0
        %1622 = vmatpush1.bf16.msra.mxu0 0
        %1623 = vmatprep.subr.bf16.mxu0 0
        %1624 = vmatpush1.bf16.msra.mxu0 0
        %1625 = vmatprep.subr.bf16.mxu0 0
        %1626 = vmatpush1.bf16.msra.mxu0 0
        %1627 = vmatprep.subr.bf16.mxu0 0
        %1628 = vmatpush1.bf16.msra.mxu0 0
        %1629 = vmatprep.subr.bf16.mxu0 0
        %1630 = vmatpush1.bf16.msra.mxu0 0
        %1631 = vmatprep.subr.bf16.mxu0 0
        %1632 = vmatpush1.bf16.msra.mxu0 0
        %1633 = vmatprep.subr.bf16.mxu0 0
        %1634 = vmatpush1.bf16.msra.mxu0 0
        %1635 = vmatprep.subr.bf16.mxu0 0
        %1636 = vmatpush1.bf16.msra.mxu0 0
        %1637 = vmatprep.subr.bf16.mxu0 0
        %1638 = vmatpush1.bf16.msra.mxu0 0
        %1639 = vmatprep.subr.bf16.mxu0 0
        %1640 = vmatpush1.bf16.msra.mxu0 0
        %1641 = vmatprep.subr.bf16.mxu0 0
        %1642 = vmatpush1.bf16.msra.mxu0 0
        %1643 = vmatprep.subr.bf16.mxu0 0
        %1644 = vmatpush1.bf16.msra.mxu0 0
        %1645 = vmatprep.subr.bf16.mxu0 0
        %1646 = vmatpush1.bf16.msra.mxu0 0
        %1647 = vmatprep.subr.bf16.mxu0 0
        %1648 = vmatpush1.bf16.msra.mxu0 0
        %1649 = vmatprep.mubr.bf16.mxu0 0
        %1650 = vmatmul.mubr.bf16.gmra.mrb[0].mxu0 %v1606
        %v1651 = vpop.f32.mrb[0].mxu0
        %v1652 = vadd.f32 %v1534, %v1651
        %v1653 = vpop.f32.mrb[0].mxu0
        %v1654 = vadd.f32 %v1536, %v1653
        %v1655 = vpop.f32.mrb[0].mxu0
        %v1656 = vpop.f32.mrb[0].mxu0
        %1657 = vdwg.mxu0
        %1658 = vmatprep.subr.bf16.mxu0 0
        %1659 = vmatpush1.bf16.msra.mxu0 %v1598
        %1660 = vmatprep.subr.bf16.mxu0 0
        %1661 = vmatpush1.bf16.msra.mxu0 %v1615
        %1662 = vmatprep.subr.bf16.mxu0 0
        %1663 = vmatpush1.bf16.msra.mxu0 0
        %1664 = vmatprep.subr.bf16.mxu0 0
        %1665 = vmatpush1.bf16.msra.mxu0 0
        %1666 = vmatprep.subr.bf16.mxu0 0
        %1667 = vmatpush1.bf16.msra.mxu0 0
        %1668 = vmatprep.subr.bf16.mxu0 0
        %1669 = vmatpush1.bf16.msra.mxu0 0
        %1670 = vmatprep.subr.bf16.mxu0 0
        %1671 = vmatpush1.bf16.msra.mxu0 0
        %1672 = vmatprep.subr.bf16.mxu0 0
        %1673 = vmatpush1.bf16.msra.mxu0 0
        %1674 = vmatprep.subr.bf16.mxu0 0
        %1675 = vmatpush1.bf16.msra.mxu0 0
        %1676 = vmatprep.subr.bf16.mxu0 0
        %1677 = vmatpush1.bf16.msra.mxu0 0
        %1678 = vmatprep.subr.bf16.mxu0 0
        %1679 = vmatpush1.bf16.msra.mxu0 0
        %1680 = vmatprep.subr.bf16.mxu0 0
        %1681 = vmatpush1.bf16.msra.mxu0 0
        %1682 = vmatprep.subr.bf16.mxu0 0
        %1683 = vmatpush1.bf16.msra.mxu0 0
        %1684 = vmatprep.subr.bf16.mxu0 0
        %1685 = vmatpush1.bf16.msra.mxu0 0
        %1686 = vmatprep.subr.bf16.mxu0 0
        %1687 = vmatpush1.bf16.msra.mxu0 0
        %1688 = vmatprep.subr.bf16.mxu0 0
        %1689 = vmatpush1.bf16.msra.mxu0 0
        %1690 = vmatprep.mubr.bf16.mxu0 0
        %1691 = vmatmul.mubr.bf16.gmra.mrb[0].mxu0 %v1606
        %v1692 = vpop.f32.mrb[0].mxu0
        %v1693 = vadd.f32 %v1575, %v1692
        %v1694 = vpop.f32.mrb[0].mxu0
        %v1695 = vpop.f32.mrb[0].mxu0
        %v1696 = vpop.f32.mrb[0].mxu0
        %1697 = vdwg.mxu0
        %1698 = vrot.lane.b32.xlu0 %v1449, 80
        %v1699 = vpop.permute.xlu0 %1698
        %1700 = vrot.lane.b32.xlu0 %v1439, 17
        %v1701 = vpop.permute.xlu0 %1700
        %1702 = vrot.lane.b32.xlu0 %v1440, 17
        %v1703 = vpop.permute.xlu0 %1702
        %1704 = vrot.lane.b32.xlu0 %v1441, 17
        %v1705 = vpop.permute.xlu0 %1704
        %1706 = vrot.lane.b32.xlu0 %v1442, 17
        %v1707 = vpop.permute.xlu0 %1706
        %1708 = vrot.lane.b32.xlu0 %v1443, 17
        %v1709 = vpop.permute.xlu0 %1708
        %1710 = vrot.lane.b32.xlu0 %v1444, 17
        %v1711 = vpop.permute.xlu0 %1710
        %1712 = vrot.lane.b32.xlu0 %v1445, 17
        %v1713 = vpop.permute.xlu0 %1712
        %1714 = vrot.lane.b32.xlu0 %v1446, 17
        %v1715 = vpop.permute.xlu0 %1714
        %v1716 = vsel %vm675, %v1701, %v1703
        %v1717 = vsel %vm675, %v1703, %v1705
        %v1718 = vsel %vm675, %v1705, %v1707
        %v1719 = vsel %vm675, %v1709, %v1711
        %v1720 = vsel %vm675, %v1711, %v1713
        %v1721 = vsel %vm675, %v1713, %v1715
        %v1726 = vsel %vm1485, %v1699, 0
        %v1729 = vsel %vm1489, %v1719, 0
        %v1732 = vsel %vm1489, %v1720, 0
        %v1735 = vsel %vm1489, %v1721, 0
        %1737 = vmatprep.subr.bf16.mxu0 %v1717
        %1738 = vmatpush1.bf16.msra.mxu0 %v1716
        %1739 = vmatprep.subr.bf16.mxu0 %v1732
        %1740 = vmatpush1.bf16.msra.mxu0 %v1729
        %1741 = vmatprep.subr.bf16.mxu0 0
        %1742 = vmatpush1.bf16.msra.mxu0 0
        %1743 = vmatprep.subr.bf16.mxu0 0
        %1744 = vmatpush1.bf16.msra.mxu0 0
        %1745 = vmatprep.subr.bf16.mxu0 0
        %1746 = vmatpush1.bf16.msra.mxu0 0
        %1747 = vmatprep.subr.bf16.mxu0 0
        %1748 = vmatpush1.bf16.msra.mxu0 0
        %1749 = vmatprep.subr.bf16.mxu0 0
        %1750 = vmatpush1.bf16.msra.mxu0 0
        %1751 = vmatprep.subr.bf16.mxu0 0
        %1752 = vmatpush1.bf16.msra.mxu0 0
        %1753 = vmatprep.subr.bf16.mxu0 0
        %1754 = vmatpush1.bf16.msra.mxu0 0
        %1755 = vmatprep.subr.bf16.mxu0 0
        %1756 = vmatpush1.bf16.msra.mxu0 0
        %1757 = vmatprep.subr.bf16.mxu0 0
        %1758 = vmatpush1.bf16.msra.mxu0 0
        %1759 = vmatprep.subr.bf16.mxu0 0
        %1760 = vmatpush1.bf16.msra.mxu0 0
        %1761 = vmatprep.subr.bf16.mxu0 0
        %1762 = vmatpush1.bf16.msra.mxu0 0
        %1763 = vmatprep.subr.bf16.mxu0 0
        %1764 = vmatpush1.bf16.msra.mxu0 0
        %1765 = vmatprep.subr.bf16.mxu0 0
        %1766 = vmatpush1.bf16.msra.mxu0 0
        %1767 = vmatprep.subr.bf16.mxu0 0
        %1768 = vmatpush1.bf16.msra.mxu0 0
        %1769 = vmatprep.mubr.bf16.mxu0 0
        %1770 = vmatmul.mubr.bf16.gmra.mrb[0].mxu0 %v1726
        %v1771 = vpop.f32.mrb[0].mxu0
        %v1772 = vadd.f32 0.0, %v1771
        %v1773 = vpop.f32.mrb[0].mxu0
        %v1774 = vadd.f32 0.0, %v1773
        %v1775 = vpop.f32.mrb[0].mxu0
        %v1776 = vpop.f32.mrb[0].mxu0
        %1777 = vdwg.mxu0
        %1778 = vmatprep.subr.bf16.mxu0 0
        %1779 = vmatpush1.bf16.msra.mxu0 %v1718
        %1780 = vmatprep.subr.bf16.mxu0 0
        %1781 = vmatpush1.bf16.msra.mxu0 %v1735
        %1782 = vmatprep.subr.bf16.mxu0 0
        %1783 = vmatpush1.bf16.msra.mxu0 0
        %1784 = vmatprep.subr.bf16.mxu0 0
        %1785 = vmatpush1.bf16.msra.mxu0 0
        %1786 = vmatprep.subr.bf16.mxu0 0
        %1787 = vmatpush1.bf16.msra.mxu0 0
        %1788 = vmatprep.subr.bf16.mxu0 0
        %1789 = vmatpush1.bf16.msra.mxu0 0
        %1790 = vmatprep.subr.bf16.mxu0 0
        %1791 = vmatpush1.bf16.msra.mxu0 0
        %1792 = vmatprep.subr.bf16.mxu0 0
        %1793 = vmatpush1.bf16.msra.mxu0 0
        %1794 = vmatprep.subr.bf16.mxu0 0
        %1795 = vmatpush1.bf16.msra.mxu0 0
        %1796 = vmatprep.subr.bf16.mxu0 0
        %1797 = vmatpush1.bf16.msra.mxu0 0
        %1798 = vmatprep.subr.bf16.mxu0 0
        %1799 = vmatpush1.bf16.msra.mxu0 0
        %1800 = vmatprep.subr.bf16.mxu0 0
        %1801 = vmatpush1.bf16.msra.mxu0 0
        %1802 = vmatprep.subr.bf16.mxu0 0
        %1803 = vmatpush1.bf16.msra.mxu0 0
        %1804 = vmatprep.subr.bf16.mxu0 0
        %1805 = vmatpush1.bf16.msra.mxu0 0
        %1806 = vmatprep.subr.bf16.mxu0 0
        %1807 = vmatpush1.bf16.msra.mxu0 0
        %1808 = vmatprep.subr.bf16.mxu0 0
        %1809 = vmatpush1.bf16.msra.mxu0 0
        %1810 = vmatprep.mubr.bf16.mxu0 0
        %1811 = vmatmul.mubr.bf16.gmra.mrb[0].mxu0 %v1726
        %v1812 = vpop.f32.mrb[0].mxu0
        %v1813 = vadd.f32 0.0, %v1812
        %v1814 = vpop.f32.mrb[0].mxu0
        %v1815 = vpop.f32.mrb[0].mxu0
        %v1816 = vpop.f32.mrb[0].mxu0
        %1817 = vdwg.mxu0
        %v1818 = vadd.f32 %v1652, %v1772
        %v1819 = vadd.f32 %v1654, %v1774
        %v1820 = vadd.f32 %v1693, %v1813
        %1821 = vrot.lane.b32.xlu0 %v1449, 56
        %v1822 = vpop.permute.xlu0 %1821
        %1823 = vrot.lane.b32.xlu0 %v1439, 1
        %v1824 = vpop.permute.xlu0 %1823
        %1825 = vrot.lane.b32.xlu0 %v1440, 1
        %v1826 = vpop.permute.xlu0 %1825
        %1827 = vrot.lane.b32.xlu0 %v1441, 1
        %v1828 = vpop.permute.xlu0 %1827
        %1829 = vrot.lane.b32.xlu0 %v1442, 1
        %v1830 = vpop.permute.xlu0 %1829
        %1831 = vrot.lane.b32.xlu0 %v1443, 1
        %v1832 = vpop.permute.xlu0 %1831
        %1833 = vrot.lane.b32.xlu0 %v1444, 1
        %v1834 = vpop.permute.xlu0 %1833
        %1835 = vrot.lane.b32.xlu0 %v1445, 1
        %v1836 = vpop.permute.xlu0 %1835
        %1837 = vrot.lane.b32.xlu0 %v1446, 1
        %v1838 = vpop.permute.xlu0 %1837
        %v1839 = vsel %vm779, %v1824, %v1826
        %v1840 = vsel %vm779, %v1826, %v1828
        %v1841 = vsel %vm779, %v1828, %v1830
        %v1842 = vsel %vm779, %v1832, %v1834
        %v1843 = vsel %vm779, %v1834, %v1836
        %v1844 = vsel %vm779, %v1836, %v1838
        %v1849 = vsel %vm1485, %v1822, 0
        %v1852 = vsel %vm1489, %v1842, 0
        %v1855 = vsel %vm1489, %v1843, 0
        %v1858 = vsel %vm1489, %v1844, 0
        %1860 = vmatprep.subr.bf16.mxu0 %v1840
        %1861 = vmatpush1.bf16.msra.mxu0 %v1839
        %1862 = vmatprep.subr.bf16.mxu0 %v1855
        %1863 = vmatpush1.bf16.msra.mxu0 %v1852
        %1864 = vmatprep.subr.bf16.mxu0 0
        %1865 = vmatpush1.bf16.msra.mxu0 0
        %1866 = vmatprep.subr.bf16.mxu0 0
        %1867 = vmatpush1.bf16.msra.mxu0 0
        %1868 = vmatprep.subr.bf16.mxu0 0
        %1869 = vmatpush1.bf16.msra.mxu0 0
        %1870 = vmatprep.subr.bf16.mxu0 0
        %1871 = vmatpush1.bf16.msra.mxu0 0
        %1872 = vmatprep.subr.bf16.mxu0 0
        %1873 = vmatpush1.bf16.msra.mxu0 0
        %1874 = vmatprep.subr.bf16.mxu0 0
        %1875 = vmatpush1.bf16.msra.mxu0 0
        %1876 = vmatprep.subr.bf16.mxu0 0
        %1877 = vmatpush1.bf16.msra.mxu0 0
        %1878 = vmatprep.subr.bf16.mxu0 0
        %1879 = vmatpush1.bf16.msra.mxu0 0
        %1880 = vmatprep.subr.bf16.mxu0 0
        %1881 = vmatpush1.bf16.msra.mxu0 0
        %1882 = vmatprep.subr.bf16.mxu0 0
        %1883 = vmatpush1.bf16.msra.mxu0 0
        %1884 = vmatprep.subr.bf16.mxu0 0
        %1885 = vmatpush1.bf16.msra.mxu0 0
        %1886 = vmatprep.subr.bf16.mxu0 0
        %1887 = vmatpush1.bf16.msra.mxu0 0
        %1888 = vmatprep.subr.bf16.mxu0 0
        %1889 = vmatpush1.bf16.msra.mxu0 0
        %1890 = vmatprep.subr.bf16.mxu0 0
        %1891 = vmatpush1.bf16.msra.mxu0 0
        %1892 = vmatprep.mubr.bf16.mxu0 0
        %1893 = vmatmul.mubr.bf16.gmra.mrb[0].mxu0 %v1849
        %v1894 = vpop.f32.mrb[0].mxu0
        %v1895 = vadd.f32 0.0, %v1894
        %v1896 = vpop.f32.mrb[0].mxu0
        %v1897 = vadd.f32 0.0, %v1896
        %v1898 = vpop.f32.mrb[0].mxu0
        %v1899 = vpop.f32.mrb[0].mxu0
        %1900 = vdwg.mxu0
        %1901 = vmatprep.subr.bf16.mxu0 0
        %1902 = vmatpush1.bf16.msra.mxu0 %v1841
        %1903 = vmatprep.subr.bf16.mxu0 0
        %1904 = vmatpush1.bf16.msra.mxu0 %v1858
        %1905 = vmatprep.subr.bf16.mxu0 0
        %1906 = vmatpush1.bf16.msra.mxu0 0
        %1907 = vmatprep.subr.bf16.mxu0 0
        %1908 = vmatpush1.bf16.msra.mxu0 0
        %1909 = vmatprep.subr.bf16.mxu0 0
        %1910 = vmatpush1.bf16.msra.mxu0 0
        %1911 = vmatprep.subr.bf16.mxu0 0
        %1912 = vmatpush1.bf16.msra.mxu0 0
        %1913 = vmatprep.subr.bf16.mxu0 0
        %1914 = vmatpush1.bf16.msra.mxu0 0
        %1915 = vmatprep.subr.bf16.mxu0 0
        %1916 = vmatpush1.bf16.msra.mxu0 0
        %1917 = vmatprep.subr.bf16.mxu0 0
        %1918 = vmatpush1.bf16.msra.mxu0 0
        %1919 = vmatprep.subr.bf16.mxu0 0
        %1920 = vmatpush1.bf16.msra.mxu0 0
        %1921 = vmatprep.subr.bf16.mxu0 0
        %1922 = vmatpush1.bf16.msra.mxu0 0
        %1923 = vmatprep.subr.bf16.mxu0 0
        %1924 = vmatpush1.bf16.msra.mxu0 0
        %1925 = vmatprep.subr.bf16.mxu0 0
        %1926 = vmatpush1.bf16.msra.mxu0 0
        %1927 = vmatprep.subr.bf16.mxu0 0
        %1928 = vmatpush1.bf16.msra.mxu0 0
        %1929 = vmatprep.subr.bf16.mxu0 0
        %1930 = vmatpush1.bf16.msra.mxu0 0
        %1931 = vmatprep.subr.bf16.mxu0 0
        %1932 = vmatpush1.bf16.msra.mxu0 0
        %1933 = vmatprep.mubr.bf16.mxu0 0
        %1934 = vmatmul.mubr.bf16.gmra.mrb[0].mxu0 %v1849
        %v1935 = vpop.f32.mrb[0].mxu0
        %v1936 = vadd.f32 0.0, %v1935
        %v1937 = vpop.f32.mrb[0].mxu0
        %v1938 = vpop.f32.mrb[0].mxu0
        %v1939 = vpop.f32.mrb[0].mxu0
        %1940 = vdwg.mxu0
        %v1941 = vadd.f32 %v1818, %v1895
        %v1942 = vadd.f32 %v1819, %v1897
        %v1943 = vadd.f32 %v1820, %v1936
        %1944 = vrot.lane.b32.xlu0 %v1449, 32
        %v1945 = vpop.permute.xlu0 %1944
        %v1947 = vsel %vm1485, %v1945, 0
        %v1950 = vsel %vm1489, %v1444, 0
        %v1953 = vsel %vm1489, %v1445, 0
        %v1956 = vsel %vm1489, %v1446, 0
        %1958 = vmatprep.subr.bf16.mxu0 %v1441
        %1959 = vmatpush1.bf16.msra.mxu0 %v1440
        %1960 = vmatprep.subr.bf16.mxu0 %v1953
        %1961 = vmatpush1.bf16.msra.mxu0 %v1950
        %1962 = vmatprep.subr.bf16.mxu0 0
        %1963 = vmatpush1.bf16.msra.mxu0 0
        %1964 = vmatprep.subr.bf16.mxu0 0
        %1965 = vmatpush1.bf16.msra.mxu0 0
        %1966 = vmatprep.subr.bf16.mxu0 0
        %1967 = vmatpush1.bf16.msra.mxu0 0
        %1968 = vmatprep.subr.bf16.mxu0 0
        %1969 = vmatpush1.bf16.msra.mxu0 0
        %1970 = vmatprep.subr.bf16.mxu0 0
        %1971 = vmatpush1.bf16.msra.mxu0 0
        %1972 = vmatprep.subr.bf16.mxu0 0
        %1973 = vmatpush1.bf16.msra.mxu0 0
        %1974 = vmatprep.subr.bf16.mxu0 0
        %1975 = vmatpush1.bf16.msra.mxu0 0
        %1976 = vmatprep.subr.bf16.mxu0 0
        %1977 = vmatpush1.bf16.msra.mxu0 0
        %1978 = vmatprep.subr.bf16.mxu0 0
        %1979 = vmatpush1.bf16.msra.mxu0 0
        %1980 = vmatprep.subr.bf16.mxu0 0
        %1981 = vmatpush1.bf16.msra.mxu0 0
        %1982 = vmatprep.subr.bf16.mxu0 0
        %1983 = vmatpush1.bf16.msra.mxu0 0
        %1984 = vmatprep.subr.bf16.mxu0 0
        %1985 = vmatpush1.bf16.msra.mxu0 0
        %1986 = vmatprep.subr.bf16.mxu0 0
        %1987 = vmatpush1.bf16.msra.mxu0 0
        %1988 = vmatprep.subr.bf16.mxu0 0
        %1989 = vmatpush1.bf16.msra.mxu0 0
        %1990 = vmatprep.mubr.bf16.mxu0 0
        %1991 = vmatmul.mubr.bf16.gmra.mrb[0].mxu0 %v1947
        %v1992 = vpop.f32.mrb[0].mxu0
        %v1993 = vadd.f32 0.0, %v1992
        %v1994 = vpop.f32.mrb[0].mxu0
        %v1995 = vadd.f32 0.0, %v1994
        %v1996 = vpop.f32.mrb[0].mxu0
        %v1997 = vpop.f32.mrb[0].mxu0
        %1998 = vdwg.mxu0
        %1999 = vmatprep.subr.bf16.mxu0 0
        %2000 = vmatpush1.bf16.msra.mxu0 %v1442
        %2001 = vmatprep.subr.bf16.mxu0 0
        %2002 = vmatpush1.bf16.msra.mxu0 %v1956
        %2003 = vmatprep.subr.bf16.mxu0 0
        %2004 = vmatpush1.bf16.msra.mxu0 0
        %2005 = vmatprep.subr.bf16.mxu0 0
        %2006 = vmatpush1.bf16.msra.mxu0 0
        %2007 = vmatprep.subr.bf16.mxu0 0
        %2008 = vmatpush1.bf16.msra.mxu0 0
        %2009 = vmatprep.subr.bf16.mxu0 0
        %2010 = vmatpush1.bf16.msra.mxu0 0
        %2011 = vmatprep.subr.bf16.mxu0 0
        %2012 = vmatpush1.bf16.msra.mxu0 0
        %2013 = vmatprep.subr.bf16.mxu0 0
        %2014 = vmatpush1.bf16.msra.mxu0 0
        %2015 = vmatprep.subr.bf16.mxu0 0
        %2016 = vmatpush1.bf16.msra.mxu0 0
        %2017 = vmatprep.subr.bf16.mxu0 0
        %2018 = vmatpush1.bf16.msra.mxu0 0
        %2019 = vmatprep.subr.bf16.mxu0 0
        %2020 = vmatpush1.bf16.msra.mxu0 0
        %2021 = vmatprep.subr.bf16.mxu0 0
        %2022 = vmatpush1.bf16.msra.mxu0 0
        %2023 = vmatprep.subr.bf16.mxu0 0
        %2024 = vmatpush1.bf16.msra.mxu0 0
        %2025 = vmatprep.subr.bf16.mxu0 0
        %2026 = vmatpush1.bf16.msra.mxu0 0
        %2027 = vmatprep.subr.bf16.mxu0 0
        %2028 = vmatpush1.bf16.msra.mxu0 0
        %2029 = vmatprep.subr.bf16.mxu0 0
        %2030 = vmatpush1.bf16.msra.mxu0 0
        %2031 = vmatprep.mubr.bf16.mxu0 0
        %2032 = vmatmul.mubr.bf16.gmra.mrb[0].mxu0 %v1947
        %v2033 = vpop.f32.mrb[0].mxu0
        %v2034 = vadd.f32 0.0, %v2033
        %v2035 = vpop.f32.mrb[0].mxu0
        %v2036 = vpop.f32.mrb[0].mxu0
        %v2037 = vpop.f32.mrb[0].mxu0
        %2038 = vdwg.mxu0
        %v2039 = vadd.f32 %v1941, %v1993
        %v2040 = vadd.f32 %v1942, %v1995
        %v2041 = vadd.f32 %v1943, %v2034
        %v2042 = vld [vmem:[#allocation2 + $0x8] sm:$0xff]
        %v2043 = vld [vmem:[#allocation2 + $0x10] sm:$0xff]
        %v2044 = vld [vmem:[#allocation2 + $0x18] sm:$0xff]
        %v2045 = vld [vmem:[#allocation2 + $0x20] sm:$0xff]
        %v2046 = vld [vmem:[#allocation2 + $0x30] sm:$0xf]
        %v2047 = vld [vmem:[#allocation2 + $0x38] sm:$0xf]
        %v2048 = vld [vmem:[#allocation2 + $0x40] sm:$0xf]
        %v2049 = vld [vmem:[#allocation2 + $0x48] sm:$0xf]
        %v2050 = vunpack.c.h.b16 %v1436
        %v2051 = vpack.c.b16 %v2050, %v2050
        %2052 = vrot.lane.b32.xlu0 %v1449, 8
        %v2053 = vpop.permute.xlu0 %2052
        %2054 = vrot.lane.b32.xlu0 %v2051, 8
        %v2055 = vpop.permute.xlu0 %2054
        %vm2056 = vcmask 64512
        %v2057 = vsel %vm2056, %v2053, %v2055
        %2066 = vrot.lane.b32.xlu0 %v2042, 127
        %v2067 = vpop.permute.xlu0 %2066
        %2068 = vrot.lane.b32.xlu0 %v2043, 127
        %v2069 = vpop.permute.xlu0 %2068
        %2070 = vrot.lane.b32.xlu0 %v2044, 127
        %v2071 = vpop.permute.xlu0 %2070
        %2072 = vrot.lane.b32.xlu0 %v2045, 127
        %v2073 = vpop.permute.xlu0 %2072
        %2074 = vrot.lane.b32.xlu0 %v2046, 127
        %v2075 = vpop.permute.xlu0 %2074
        %2076 = vrot.lane.b32.xlu0 %v2047, 127
        %v2077 = vpop.permute.xlu0 %2076
        %2078 = vrot.lane.b32.xlu0 %v2048, 127
        %v2079 = vpop.permute.xlu0 %2078
        %2080 = vrot.lane.b32.xlu0 %v2049, 127
        %v2081 = vpop.permute.xlu0 %2080
        %v2082 = vsel %vm980, %v2067, %v2069
        %v2083 = vsel %vm980, %v2069, %v2071
        %v2084 = vsel %vm980, %v2071, %v2073
        %v2085 = vsel %vm980, %v2075, %v2077
        %v2086 = vsel %vm980, %v2077, %v2079
        %v2087 = vsel %vm980, %v2079, %v2081
        %v2092 = vsel %vm1485, %v2057, 0
        %v2095 = vsel %vm1489, %v2085, 0
        %v2098 = vsel %vm1489, %v2086, 0
        %v2101 = vsel %vm1489, %v2087, 0
        %2103 = vmatprep.subr.bf16.mxu0 %v2083
        %2104 = vmatpush1.bf16.msra.mxu0 %v2082
        %2105 = vmatprep.subr.bf16.mxu0 %v2098
        %2106 = vmatpush1.bf16.msra.mxu0 %v2095
        %2107 = vmatprep.subr.bf16.mxu0 0
        %2108 = vmatpush1.bf16.msra.mxu0 0
        %2109 = vmatprep.subr.bf16.mxu0 0
        %2110 = vmatpush1.bf16.msra.mxu0 0
        %2111 = vmatprep.subr.bf16.mxu0 0
        %2112 = vmatpush1.bf16.msra.mxu0 0
        %2113 = vmatprep.subr.bf16.mxu0 0
        %2114 = vmatpush1.bf16.msra.mxu0 0
        %2115 = vmatprep.subr.bf16.mxu0 0
        %2116 = vmatpush1.bf16.msra.mxu0 0
        %2117 = vmatprep.subr.bf16.mxu0 0
        %2118 = vmatpush1.bf16.msra.mxu0 0
        %2119 = vmatprep.subr.bf16.mxu0 0
        %2120 = vmatpush1.bf16.msra.mxu0 0
        %2121 = vmatprep.subr.bf16.mxu0 0
        %2122 = vmatpush1.bf16.msra.mxu0 0
        %2123 = vmatprep.subr.bf16.mxu0 0
        %2124 = vmatpush1.bf16.msra.mxu0 0
        %2125 = vmatprep.subr.bf16.mxu0 0
        %2126 = vmatpush1.bf16.msra.mxu0 0
        %2127 = vmatprep.subr.bf16.mxu0 0
        %2128 = vmatpush1.bf16.msra.mxu0 0
        %2129 = vmatprep.subr.bf16.mxu0 0
        %2130 = vmatpush1.bf16.msra.mxu0 0
        %2131 = vmatprep.subr.bf16.mxu0 0
        %2132 = vmatpush1.bf16.msra.mxu0 0
        %2133 = vmatprep.subr.bf16.mxu0 0
        %2134 = vmatpush1.bf16.msra.mxu0 0
        %2135 = vmatprep.mubr.bf16.mxu0 0
        %2136 = vmatmul.mubr.bf16.gmra.mrb[0].mxu0 %v2092
        %v2137 = vpop.f32.mrb[0].mxu0
        %v2138 = vadd.f32 0.0, %v2137
        %v2139 = vpop.f32.mrb[0].mxu0
        %v2140 = vadd.f32 0.0, %v2139
        %v2141 = vpop.f32.mrb[0].mxu0
        %v2142 = vpop.f32.mrb[0].mxu0
        %2143 = vdwg.mxu0
        %2144 = vmatprep.subr.bf16.mxu0 0
        %2145 = vmatpush1.bf16.msra.mxu0 %v2084
        %2146 = vmatprep.subr.bf16.mxu0 0
        %2147 = vmatpush1.bf16.msra.mxu0 %v2101
        %2148 = vmatprep.subr.bf16.mxu0 0
        %2149 = vmatpush1.bf16.msra.mxu0 0
        %2150 = vmatprep.subr.bf16.mxu0 0
        %2151 = vmatpush1.bf16.msra.mxu0 0
        %2152 = vmatprep.subr.bf16.mxu0 0
        %2153 = vmatpush1.bf16.msra.mxu0 0
        %2154 = vmatprep.subr.bf16.mxu0 0
        %2155 = vmatpush1.bf16.msra.mxu0 0
        %2156 = vmatprep.subr.bf16.mxu0 0
        %2157 = vmatpush1.bf16.msra.mxu0 0
        %2158 = vmatprep.subr.bf16.mxu0 0
        %2159 = vmatpush1.bf16.msra.mxu0 0
        %2160 = vmatprep.subr.bf16.mxu0 0
        %2161 = vmatpush1.bf16.msra.mxu0 0
        %2162 = vmatprep.subr.bf16.mxu0 0
        %2163 = vmatpush1.bf16.msra.mxu0 0
        %2164 = vmatprep.subr.bf16.mxu0 0
        %2165 = vmatpush1.bf16.msra.mxu0 0
        %2166 = vmatprep.subr.bf16.mxu0 0
        %2167 = vmatpush1.bf16.msra.mxu0 0
        %2168 = vmatprep.subr.bf16.mxu0 0
        %2169 = vmatpush1.bf16.msra.mxu0 0
        %2170 = vmatprep.subr.bf16.mxu0 0
        %2171 = vmatpush1.bf16.msra.mxu0 0
        %2172 = vmatprep.subr.bf16.mxu0 0
        %2173 = vmatpush1.bf16.msra.mxu0 0
        %2174 = vmatprep.subr.bf16.mxu0 0
        %2175 = vmatpush1.bf16.msra.mxu0 0
        %2176 = vmatprep.mubr.bf16.mxu0 0
        %2177 = vmatmul.mubr.bf16.gmra.mrb[0].mxu0 %v2092
        %v2178 = vpop.f32.mrb[0].mxu0
        %v2179 = vadd.f32 0.0, %v2178
        %v2180 = vpop.f32.mrb[0].mxu0
        %v2181 = vpop.f32.mrb[0].mxu0
        %v2182 = vpop.f32.mrb[0].mxu0
        %2183 = vdwg.mxu0
        %v2184 = vadd.f32 %v2039, %v2138
        %v2185 = vadd.f32 %v2040, %v2140
        %v2186 = vadd.f32 %v2041, %v2179
        %2187 = vrot.lane.b32.xlu0 %v2051, 112
        %v2188 = vpop.permute.xlu0 %2187
        %2189 = vrot.lane.b32.xlu0 %v2042, 111
        %v2190 = vpop.permute.xlu0 %2189
        %2191 = vrot.lane.b32.xlu0 %v2043, 111
        %v2192 = vpop.permute.xlu0 %2191
        %2193 = vrot.lane.b32.xlu0 %v2044, 111
        %v2194 = vpop.permute.xlu0 %2193
        %2195 = vrot.lane.b32.xlu0 %v2045, 111
        %v2196 = vpop.permute.xlu0 %2195
        %2197 = vrot.lane.b32.xlu0 %v2046, 111
        %v2198 = vpop.permute.xlu0 %2197
        %2199 = vrot.lane.b32.xlu0 %v2047, 111
        %v2200 = vpop.permute.xlu0 %2199
        %2201 = vrot.lane.b32.xlu0 %v2048, 111
        %v2202 = vpop.permute.xlu0 %2201
        %2203 = vrot.lane.b32.xlu0 %v2049, 111
        %v2204 = vpop.permute.xlu0 %2203
        %v2205 = vsel %vm1084, %v2190, %v2192
        %v2206 = vsel %vm1084, %v2192, %v2194
        %v2207 = vsel %vm1084, %v2194, %v2196
        %v2208 = vsel %vm1084, %v2198, %v2200
        %v2209 = vsel %vm1084, %v2200, %v2202
        %v2210 = vsel %vm1084, %v2202, %v2204
        %v2215 = vsel %vm1485, %v2188, 0
        %v2218 = vsel %vm1489, %v2208, 0
        %v2221 = vsel %vm1489, %v2209, 0
        %v2224 = vsel %vm1489, %v2210, 0
        %2226 = vmatprep.subr.bf16.mxu0 %v2206
        %2227 = vmatpush1.bf16.msra.mxu0 %v2205
        %2228 = vmatprep.subr.bf16.mxu0 %v2221
        %2229 = vmatpush1.bf16.msra.mxu0 %v2218
        %2230 = vmatprep.subr.bf16.mxu0 0
        %2231 = vmatpush1.bf16.msra.mxu0 0
        %2232 = vmatprep.subr.bf16.mxu0 0
        %2233 = vmatpush1.bf16.msra.mxu0 0
        %2234 = vmatprep.subr.bf16.mxu0 0
        %2235 = vmatpush1.bf16.msra.mxu0 0
        %2236 = vmatprep.subr.bf16.mxu0 0
        %2237 = vmatpush1.bf16.msra.mxu0 0
        %2238 = vmatprep.subr.bf16.mxu0 0
        %2239 = vmatpush1.bf16.msra.mxu0 0
        %2240 = vmatprep.subr.bf16.mxu0 0
        %2241 = vmatpush1.bf16.msra.mxu0 0
        %2242 = vmatprep.subr.bf16.mxu0 0
        %2243 = vmatpush1.bf16.msra.mxu0 0
        %2244 = vmatprep.subr.bf16.mxu0 0
        %2245 = vmatpush1.bf16.msra.mxu0 0
        %2246 = vmatprep.subr.bf16.mxu0 0
        %2247 = vmatpush1.bf16.msra.mxu0 0
        %2248 = vmatprep.subr.bf16.mxu0 0
        %2249 = vmatpush1.bf16.msra.mxu0 0
        %2250 = vmatprep.subr.bf16.mxu0 0
        %2251 = vmatpush1.bf16.msra.mxu0 0
        %2252 = vmatprep.subr.bf16.mxu0 0
        %2253 = vmatpush1.bf16.msra.mxu0 0
        %2254 = vmatprep.subr.bf16.mxu0 0
        %2255 = vmatpush1.bf16.msra.mxu0 0
        %2256 = vmatprep.subr.bf16.mxu0 0
        %2257 = vmatpush1.bf16.msra.mxu0 0
        %2258 = vmatprep.mubr.bf16.mxu0 0
        %2259 = vmatmul.mubr.bf16.gmra.mrb[0].mxu0 %v2215
        %v2260 = vpop.f32.mrb[0].mxu0
        %v2261 = vadd.f32 0.0, %v2260
        %v2262 = vpop.f32.mrb[0].mxu0
        %v2263 = vadd.f32 0.0, %v2262
        %v2264 = vpop.f32.mrb[0].mxu0
        %v2265 = vpop.f32.mrb[0].mxu0
        %2266 = vdwg.mxu0
        %2267 = vmatprep.subr.bf16.mxu0 0
        %2268 = vmatpush1.bf16.msra.mxu0 %v2207
        %2269 = vmatprep.subr.bf16.mxu0 0
        %2270 = vmatpush1.bf16.msra.mxu0 %v2224
        %2271 = vmatprep.subr.bf16.mxu0 0
        %2272 = vmatpush1.bf16.msra.mxu0 0
        %2273 = vmatprep.subr.bf16.mxu0 0
        %2274 = vmatpush1.bf16.msra.mxu0 0
        %2275 = vmatprep.subr.bf16.mxu0 0
        %2276 = vmatpush1.bf16.msra.mxu0 0
        %2277 = vmatprep.subr.bf16.mxu0 0
        %2278 = vmatpush1.bf16.msra.mxu0 0
        %2279 = vmatprep.subr.bf16.mxu0 0
        %2280 = vmatpush1.bf16.msra.mxu0 0
        %2281 = vmatprep.subr.bf16.mxu0 0
        %2282 = vmatpush1.bf16.msra.mxu0 0
        %2283 = vmatprep.subr.bf16.mxu0 0
        %2284 = vmatpush1.bf16.msra.mxu0 0
        %2285 = vmatprep.subr.bf16.mxu0 0
        %2286 = vmatpush1.bf16.msra.mxu0 0
        %2287 = vmatprep.subr.bf16.mxu0 0
        %2288 = vmatpush1.bf16.msra.mxu0 0
        %2289 = vmatprep.subr.bf16.mxu0 0
        %2290 = vmatpush1.bf16.msra.mxu0 0
        %2291 = vmatprep.subr.bf16.mxu0 0
        %2292 = vmatpush1.bf16.msra.mxu0 0
        %2293 = vmatprep.subr.bf16.mxu0 0
        %2294 = vmatpush1.bf16.msra.mxu0 0
        %2295 = vmatprep.subr.bf16.mxu0 0
        %2296 = vmatpush1.bf16.msra.mxu0 0
        %2297 = vmatprep.subr.bf16.mxu0 0
        %2298 = vmatpush1.bf16.msra.mxu0 0
        %2299 = vmatprep.mubr.bf16.mxu0 0
        %2300 = vmatmul.mubr.bf16.gmra.mrb[0].mxu0 %v2215
        %v2301 = vpop.f32.mrb[0].mxu0
        %v2302 = vadd.f32 0.0, %v2301
        %v2303 = vpop.f32.mrb[0].mxu0
        %v2304 = vpop.f32.mrb[0].mxu0
        %v2305 = vpop.f32.mrb[0].mxu0
        %2306 = vdwg.mxu0
        %v2307 = vadd.f32 %v2184, %v2261
        %v2308 = vadd.f32 %v2185, %v2263
        %v2309 = vadd.f32 %v2186, %v2302
        %2310 = vrot.lane.b32.xlu0 %v2051, 88
        %v2311 = vpop.permute.xlu0 %2310
        %2312 = vrot.lane.b32.xlu0 %v2042, 110
        %v2313 = vpop.permute.xlu0 %2312
        %2314 = vrot.lane.b32.xlu0 %v2043, 110
        %v2315 = vpop.permute.xlu0 %2314
        %2316 = vrot.lane.b32.xlu0 %v2044, 110
        %v2317 = vpop.permute.xlu0 %2316
        %2318 = vrot.lane.b32.xlu0 %v2045, 110
        %v2319 = vpop.permute.xlu0 %2318
        %2320 = vrot.lane.b32.xlu0 %v2046, 110
        %v2321 = vpop.permute.xlu0 %2320
        %2322 = vrot.lane.b32.xlu0 %v2047, 110
        %v2323 = vpop.permute.xlu0 %2322
        %2324 = vrot.lane.b32.xlu0 %v2048, 110
        %v2325 = vpop.permute.xlu0 %2324
        %2326 = vrot.lane.b32.xlu0 %v2049, 110
        %v2327 = vpop.permute.xlu0 %2326
        %v2328 = vsel %vm1188, %v2313, %v2315
        %v2329 = vsel %vm1188, %v2315, %v2317
        %v2330 = vsel %vm1188, %v2317, %v2319
        %v2331 = vsel %vm1188, %v2321, %v2323
        %v2332 = vsel %vm1188, %v2323, %v2325
        %v2333 = vsel %vm1188, %v2325, %v2327
        %v2338 = vsel %vm1485, %v2311, 0
        %v2341 = vsel %vm1489, %v2331, 0
        %v2344 = vsel %vm1489, %v2332, 0
        %v2347 = vsel %vm1489, %v2333, 0
        %2349 = vmatprep.subr.bf16.mxu0 %v2329
        %2350 = vmatpush1.bf16.msra.mxu0 %v2328
        %2351 = vmatprep.subr.bf16.mxu0 %v2344
        %2352 = vmatpush1.bf16.msra.mxu0 %v2341
        %2353 = vmatprep.subr.bf16.mxu0 0
        %2354 = vmatpush1.bf16.msra.mxu0 0
        %2355 = vmatprep.subr.bf16.mxu0 0
        %2356 = vmatpush1.bf16.msra.mxu0 0
        %2357 = vmatprep.subr.bf16.mxu0 0
        %2358 = vmatpush1.bf16.msra.mxu0 0
        %2359 = vmatprep.subr.bf16.mxu0 0
        %2360 = vmatpush1.bf16.msra.mxu0 0
        %2361 = vmatprep.subr.bf16.mxu0 0
        %2362 = vmatpush1.bf16.msra.mxu0 0
        %2363 = vmatprep.subr.bf16.mxu0 0
        %2364 = vmatpush1.bf16.msra.mxu0 0
        %2365 = vmatprep.subr.bf16.mxu0 0
        %2366 = vmatpush1.bf16.msra.mxu0 0
        %2367 = vmatprep.subr.bf16.mxu0 0
        %2368 = vmatpush1.bf16.msra.mxu0 0
        %2369 = vmatprep.subr.bf16.mxu0 0
        %2370 = vmatpush1.bf16.msra.mxu0 0
        %2371 = vmatprep.subr.bf16.mxu0 0
        %2372 = vmatpush1.bf16.msra.mxu0 0
        %2373 = vmatprep.subr.bf16.mxu0 0
        %2374 = vmatpush1.bf16.msra.mxu0 0
        %2375 = vmatprep.subr.bf16.mxu0 0
        %2376 = vmatpush1.bf16.msra.mxu0 0
        %2377 = vmatprep.subr.bf16.mxu0 0
        %2378 = vmatpush1.bf16.msra.mxu0 0
        %2379 = vmatprep.subr.bf16.mxu0 0
        %2380 = vmatpush1.bf16.msra.mxu0 0
        %2381 = vmatprep.mubr.bf16.mxu0 0
        %2382 = vmatmul.mubr.bf16.gmra.mrb[0].mxu0 %v2338
        %v2383 = vpop.f32.mrb[0].mxu0
        %v2384 = vadd.f32 0.0, %v2383
        %v2385 = vpop.f32.mrb[0].mxu0
        %v2386 = vadd.f32 0.0, %v2385
        %v2387 = vpop.f32.mrb[0].mxu0
        %v2388 = vpop.f32.mrb[0].mxu0
        %2389 = vdwg.mxu0
        %2390 = vmatprep.subr.bf16.mxu0 0
        %2391 = vmatpush1.bf16.msra.mxu0 %v2330
        %2392 = vmatprep.subr.bf16.mxu0 0
        %2393 = vmatpush1.bf16.msra.mxu0 %v2347
        %2394 = vmatprep.subr.bf16.mxu0 0
        %2395 = vmatpush1.bf16.msra.mxu0 0
        %2396 = vmatprep.subr.bf16.mxu0 0
        %2397 = vmatpush1.bf16.msra.mxu0 0
        %2398 = vmatprep.subr.bf16.mxu0 0
        %2399 = vmatpush1.bf16.msra.mxu0 0
        %2400 = vmatprep.subr.bf16.mxu0 0
        %2401 = vmatpush1.bf16.msra.mxu0 0
        %2402 = vmatprep.subr.bf16.mxu0 0
        %2403 = vmatpush1.bf16.msra.mxu0 0
        %2404 = vmatprep.subr.bf16.mxu0 0
        %2405 = vmatpush1.bf16.msra.mxu0 0
        %2406 = vmatprep.subr.bf16.mxu0 0
        %2407 = vmatpush1.bf16.msra.mxu0 0
        %2408 = vmatprep.subr.bf16.mxu0 0
        %2409 = vmatpush1.bf16.msra.mxu0 0
        %2410 = vmatprep.subr.bf16.mxu0 0
        %2411 = vmatpush1.bf16.msra.mxu0 0
        %2412 = vmatprep.subr.bf16.mxu0 0
        %2413 = vmatpush1.bf16.msra.mxu0 0
        %2414 = vmatprep.subr.bf16.mxu0 0
        %2415 = vmatpush1.bf16.msra.mxu0 0
        %2416 = vmatprep.subr.bf16.mxu0 0
        %2417 = vmatpush1.bf16.msra.mxu0 0
        %2418 = vmatprep.subr.bf16.mxu0 0
        %2419 = vmatpush1.bf16.msra.mxu0 0
        %2420 = vmatprep.subr.bf16.mxu0 0
        %2421 = vmatpush1.bf16.msra.mxu0 0
        %2422 = vmatprep.mubr.bf16.mxu0 0
        %2423 = vmatmul.mubr.bf16.gmra.mrb[0].mxu0 %v2338
        %v2424 = vpop.f32.mrb[0].mxu0
        %v2425 = vadd.f32 0.0, %v2424
        %v2426 = vpop.f32.mrb[0].mxu0
        %v2427 = vpop.f32.mrb[0].mxu0
        %v2428 = vpop.f32.mrb[0].mxu0
        %2429 = vdwg.mxu0
        %v2430 = vadd.f32 %v2307, %v2384
        %v2431 = vadd.f32 %v2308, %v2386
        %v2432 = vadd.f32 %v2309, %v2425
        %2433 = vrot.lane.b32.xlu0 %v2051, 64
        %v2434 = vpop.permute.xlu0 %2433
        %2435 = vrot.lane.b32.xlu0 %v2042, 109
        %v2436 = vpop.permute.xlu0 %2435
        %2437 = vrot.lane.b32.xlu0 %v2043, 109
        %v2438 = vpop.permute.xlu0 %2437
        %2439 = vrot.lane.b32.xlu0 %v2044, 109
        %v2440 = vpop.permute.xlu0 %2439
        %2441 = vrot.lane.b32.xlu0 %v2045, 109
        %v2442 = vpop.permute.xlu0 %2441
        %2443 = vrot.lane.b32.xlu0 %v2046, 109
        %v2444 = vpop.permute.xlu0 %2443
        %2445 = vrot.lane.b32.xlu0 %v2047, 109
        %v2446 = vpop.permute.xlu0 %2445
        %2447 = vrot.lane.b32.xlu0 %v2048, 109
        %v2448 = vpop.permute.xlu0 %2447
        %2449 = vrot.lane.b32.xlu0 %v2049, 109
        %v2450 = vpop.permute.xlu0 %2449
        %v2451 = vsel %vm1292, %v2436, %v2438
        %v2452 = vsel %vm1292, %v2438, %v2440
        %v2453 = vsel %vm1292, %v2440, %v2442
        %v2454 = vsel %vm1292, %v2444, %v2446
        %v2455 = vsel %vm1292, %v2446, %v2448
        %v2456 = vsel %vm1292, %v2448, %v2450
        %v2461 = vsel %vm1485, %v2434, 0
        %v2464 = vsel %vm1489, %v2454, 0
        %v2467 = vsel %vm1489, %v2455, 0
        %v2470 = vsel %vm1489, %v2456, 0
        %2472 = vmatprep.subr.bf16.mxu0 %v2452
        %2473 = vmatpush1.bf16.msra.mxu0 %v2451
        %2474 = vmatprep.subr.bf16.mxu0 %v2467
        %2475 = vmatpush1.bf16.msra.mxu0 %v2464
        %2476 = vmatprep.subr.bf16.mxu0 0
        %2477 = vmatpush1.bf16.msra.mxu0 0
        %2478 = vmatprep.subr.bf16.mxu0 0
        %2479 = vmatpush1.bf16.msra.mxu0 0
        %2480 = vmatprep.subr.bf16.mxu0 0
        %2481 = vmatpush1.bf16.msra.mxu0 0
        %2482 = vmatprep.subr.bf16.mxu0 0
        %2483 = vmatpush1.bf16.msra.mxu0 0
        %2484 = vmatprep.subr.bf16.mxu0 0
        %2485 = vmatpush1.bf16.msra.mxu0 0
        %2486 = vmatprep.subr.bf16.mxu0 0
        %2487 = vmatpush1.bf16.msra.mxu0 0
        %2488 = vmatprep.subr.bf16.mxu0 0
        %2489 = vmatpush1.bf16.msra.mxu0 0
        %2490 = vmatprep.subr.bf16.mxu0 0
        %2491 = vmatpush1.bf16.msra.mxu0 0
        %2492 = vmatprep.subr.bf16.mxu0 0
        %2493 = vmatpush1.bf16.msra.mxu0 0
        %2494 = vmatprep.subr.bf16.mxu0 0
        %2495 = vmatpush1.bf16.msra.mxu0 0
        %2496 = vmatprep.subr.bf16.mxu0 0
        %2497 = vmatpush1.bf16.msra.mxu0 0
        %2498 = vmatprep.subr.bf16.mxu0 0
        %2499 = vmatpush1.bf16.msra.mxu0 0
        %2500 = vmatprep.subr.bf16.mxu0 0
        %2501 = vmatpush1.bf16.msra.mxu0 0
        %2502 = vmatprep.subr.bf16.mxu0 0
        %2503 = vmatpush1.bf16.msra.mxu0 0
        %2504 = vmatprep.mubr.bf16.mxu0 0
        %2505 = vmatmul.mubr.bf16.gmra.mrb[0].mxu0 %v2461
        %v2506 = vpop.f32.mrb[0].mxu0
        %v2507 = vadd.f32 0.0, %v2506
        %v2508 = vpop.f32.mrb[0].mxu0
        %v2509 = vadd.f32 0.0, %v2508
        %v2510 = vpop.f32.mrb[0].mxu0
        %v2511 = vpop.f32.mrb[0].mxu0
        %2512 = vdwg.mxu0
        %2513 = vmatprep.subr.bf16.mxu0 0
        %2514 = vmatpush1.bf16.msra.mxu0 %v2453
        %2515 = vmatprep.subr.bf16.mxu0 0
        %2516 = vmatpush1.bf16.msra.mxu0 %v2470
        %2517 = vmatprep.subr.bf16.mxu0 0
        %2518 = vmatpush1.bf16.msra.mxu0 0
        %2519 = vmatprep.subr.bf16.mxu0 0
        %2520 = vmatpush1.bf16.msra.mxu0 0
        %2521 = vmatprep.subr.bf16.mxu0 0
        %2522 = vmatpush1.bf16.msra.mxu0 0
        %2523 = vmatprep.subr.bf16.mxu0 0
        %2524 = vmatpush1.bf16.msra.mxu0 0
        %2525 = vmatprep.subr.bf16.mxu0 0
        %2526 = vmatpush1.bf16.msra.mxu0 0
        %2527 = vmatprep.subr.bf16.mxu0 0
        %2528 = vmatpush1.bf16.msra.mxu0 0
        %2529 = vmatprep.subr.bf16.mxu0 0
        %2530 = vmatpush1.bf16.msra.mxu0 0
        %2531 = vmatprep.subr.bf16.mxu0 0
        %2532 = vmatpush1.bf16.msra.mxu0 0
        %2533 = vmatprep.subr.bf16.mxu0 0
        %2534 = vmatpush1.bf16.msra.mxu0 0
        %2535 = vmatprep.subr.bf16.mxu0 0
        %2536 = vmatpush1.bf16.msra.mxu0 0
        %2537 = vmatprep.subr.bf16.mxu0 0
        %2538 = vmatpush1.bf16.msra.mxu0 0
        %2539 = vmatprep.subr.bf16.mxu0 0
        %2540 = vmatpush1.bf16.msra.mxu0 0
        %2541 = vmatprep.subr.bf16.mxu0 0
        %2542 = vmatpush1.bf16.msra.mxu0 0
        %2543 = vmatprep.subr.bf16.mxu0 0
        %2544 = vmatpush1.bf16.msra.mxu0 0
        %2545 = vmatprep.mubr.bf16.mxu0 0
        %2546 = vmatmul.mubr.bf16.gmra.mrb[0].mxu0 %v2461
        %v2547 = vpop.f32.mrb[0].mxu0
        %v2548 = vadd.f32 0.0, %v2547
        %v2549 = vpop.f32.mrb[0].mxu0
        %v2550 = vpop.f32.mrb[0].mxu0
        %v2551 = vpop.f32.mrb[0].mxu0
        %2552 = vdwg.mxu0
        %v2553 = vadd.f32 %v2430, %v2507
        %v2554 = vadd.f32 %v2431, %v2509
        %v2555 = vadd.f32 %v2432, %v2548
        %2557 = vset.pattern.permute.xlu0 0
        %2558 = vperm.xlu0 %2557, %v1438
        %v2559 = vpop.permute.xlu0 %2558
        %v2561 = vadd.f32 %v2553, %v2559
        %v2562 = vadd.f32 %v2554, %v2559
        %v2563 = vadd.f32 %v2555, %v2559
        %v2564 = vadd.f32 %v2561, 3.0
        %v2565 = vadd.f32 %v2562, 3.0
        %v2566 = vadd.f32 %v2563, 3.0
        %v2567 = vmax.f32 %v2564, 0.0
        %v2568 = vmax.f32 %v2565, 0.0
        %v2569 = vmax.f32 %v2566, 0.0
        %v2570 = vmin.f32 %v2567, 6.0
        %v2571 = vmin.f32 %v2568, 6.0
        %v2572 = vmin.f32 %v2569, 6.0
        %v2573 = vmul.f32 %v2561, %v2570
        %v2574 = vmul.f32 %v2562, %v2571
        %v2575 = vmul.f32 %v2563, %v2572
        %v2576 = vmul.f32 %v2573, 0.16666667
        %v2577 = vmul.f32 %v2574, 0.16666667
        %v2578 = vmul.f32 %v2575, 0.16666667
        %v2579 = vmul.f32 %v2576, %v1413
        %v2580 = vmul.f32 %v2577, %v1417
        %v2581 = vmul.f32 %v2578, %v1421
        %v2582 = vpack.c.bf16 %v2579, %v2579
        %v2583 = vpack.c.bf16 %v2580, %v2580
        %v2584 = vpack.c.bf16 %v2581, %v2581
        %v2588 = vrot.slane %v2582, 4
        %v2589 = vrot.slane %v2583, 4
        %v2590 = vrot.slane %v2584, 4
        %2594 = vst [vmem:[#allocation2 + $0x30] sm:$0xf0] %v2588
        %2595 = vst [vmem:[#allocation2 + $0x38] sm:$0xf0] %v2589
        %2596 = vst [vmem:[#allocation2 + $0x40] sm:$0xf0] %v2590
        %s2597 = smul.u32 %s441, 3
        %s2598 = smul.addr %s2597, 4
        %s2599 = scalar_lea.vmem %s4, %s2598
        %v2600 = vld [vmem:[%s2599] sm:$0xff]
        %v2601 = vld [vmem:[%s2599 + $0x8] sm:$0xf]
        %s2602 = scalar_lea.vmem %s9, %s450
        %v2603 = vld [vmem:[%s2602] sm:$0xff]
        %v2604 = vld [vmem:[#allocation2] sm:$0xff]
        %v2605 = vld [vmem:[#allocation2 + $0x8] sm:$0xff]
        %v2606 = vld [vmem:[#allocation2 + $0x10] sm:$0xff]
        %v2607 = vld [vmem:[#allocation2 + $0x18] sm:$0xff]
        %v2608 = vld [vmem:[#allocation2 + $0x28] sm:$0xff]
        %v2609 = vld [vmem:[#allocation2 + $0x30] sm:$0xff]
        %v2610 = vld [vmem:[#allocation2 + $0x38] sm:$0xff]
        %v2611 = vld [vmem:[#allocation2 + $0x40] sm:$0xff]
        %v2613 = vunpack.c.l.b16 %v2600
        %v2614 = vpack.c.b16 %v2613, %v2613
        %2615 = vrot.lane.b32.xlu0 %v2614, 96
        %v2616 = vpop.permute.xlu0 %2615
        %2625 = vrot.lane.b32.xlu0 %v2604, 18
        %v2626 = vpop.permute.xlu0 %2625
        %2627 = vrot.lane.b32.xlu0 %v2605, 18
        %v2628 = vpop.permute.xlu0 %2627
        %2629 = vrot.lane.b32.xlu0 %v2606, 18
        %v2630 = vpop.permute.xlu0 %2629
        %2631 = vrot.lane.b32.xlu0 %v2607, 18
        %v2632 = vpop.permute.xlu0 %2631
        %2633 = vrot.lane.b32.xlu0 %v2608, 18
        %v2634 = vpop.permute.xlu0 %2633
        %2635 = vrot.lane.b32.xlu0 %v2609, 18
        %v2636 = vpop.permute.xlu0 %2635
        %2637 = vrot.lane.b32.xlu0 %v2610, 18
        %v2638 = vpop.permute.xlu0 %2637
        %2639 = vrot.lane.b32.xlu0 %v2611, 18
        %v2640 = vpop.permute.xlu0 %2639
        %v2641 = vsel %vm474, %v2626, %v2628
        %v2642 = vsel %vm474, %v2628, %v2630
        %v2643 = vsel %vm474, %v2630, %v2632
        %v2644 = vsel %vm474, %v2634, %v2636
        %v2645 = vsel %vm474, %v2636, %v2638
        %v2646 = vsel %vm474, %v2638, %v2640
        %vm2653 = vcmask 261120
        %v2655 = vsel %vm2653, %v2616, 0
        %2657 = vmatprep.subr.bf16.mxu0 %v2642
        %2658 = vmatpush1.bf16.msra.mxu0 %v2641
        %2659 = vmatprep.subr.bf16.mxu0 %v2645
        %2660 = vmatpush1.bf16.msra.mxu0 %v2644
        %2661 = vmatprep.subr.bf16.mxu0 0
        %2662 = vmatpush1.bf16.msra.mxu0 0
        %2663 = vmatprep.subr.bf16.mxu0 0
        %2664 = vmatpush1.bf16.msra.mxu0 0
        %2665 = vmatprep.subr.bf16.mxu0 0
        %2666 = vmatpush1.bf16.msra.mxu0 0
        %2667 = vmatprep.subr.bf16.mxu0 0
        %2668 = vmatpush1.bf16.msra.mxu0 0
        %2669 = vmatprep.subr.bf16.mxu0 0
        %2670 = vmatpush1.bf16.msra.mxu0 0
        %2671 = vmatprep.subr.bf16.mxu0 0
        %2672 = vmatpush1.bf16.msra.mxu0 0
        %2673 = vmatprep.subr.bf16.mxu0 0
        %2674 = vmatpush1.bf16.msra.mxu0 0
        %2675 = vmatprep.subr.bf16.mxu0 0
        %2676 = vmatpush1.bf16.msra.mxu0 0
        %2677 = vmatprep.subr.bf16.mxu0 0
        %2678 = vmatpush1.bf16.msra.mxu0 0
        %2679 = vmatprep.subr.bf16.mxu0 0
        %2680 = vmatpush1.bf16.msra.mxu0 0
        %2681 = vmatprep.subr.bf16.mxu0 0
        %2682 = vmatpush1.bf16.msra.mxu0 0
        %2683 = vmatprep.subr.bf16.mxu0 0
        %2684 = vmatpush1.bf16.msra.mxu0 0
        %2685 = vmatprep.subr.bf16.mxu0 0
        %2686 = vmatpush1.bf16.msra.mxu0 0
        %2687 = vmatprep.subr.bf16.mxu0 0
        %2688 = vmatpush1.bf16.msra.mxu0 0
        %2689 = vmatprep.mubr.bf16.mxu0 0
        %2690 = vmatmul.mubr.bf16.gmra.mrb[0].mxu0 %v2655
        %v2691 = vpop.f32.mrb[0].mxu0
        %v2692 = vadd.f32 0.0, %v2691
        %v2693 = vpop.f32.mrb[0].mxu0
        %v2694 = vadd.f32 0.0, %v2693
        %v2695 = vpop.f32.mrb[0].mxu0
        %v2696 = vpop.f32.mrb[0].mxu0
        %2697 = vdwg.mxu0
        %2698 = vmatprep.subr.bf16.mxu0 0
        %2699 = vmatpush1.bf16.msra.mxu0 %v2643
        %2700 = vmatprep.subr.bf16.mxu0 0
        %2701 = vmatpush1.bf16.msra.mxu0 %v2646
        %2702 = vmatprep.subr.bf16.mxu0 0
        %2703 = vmatpush1.bf16.msra.mxu0 0
        %2704 = vmatprep.subr.bf16.mxu0 0
        %2705 = vmatpush1.bf16.msra.mxu0 0
        %2706 = vmatprep.subr.bf16.mxu0 0
        %2707 = vmatpush1.bf16.msra.mxu0 0
        %2708 = vmatprep.subr.bf16.mxu0 0
        %2709 = vmatpush1.bf16.msra.mxu0 0
        %2710 = vmatprep.subr.bf16.mxu0 0
        %2711 = vmatpush1.bf16.msra.mxu0 0
        %2712 = vmatprep.subr.bf16.mxu0 0
        %2713 = vmatpush1.bf16.msra.mxu0 0
        %2714 = vmatprep.subr.bf16.mxu0 0
        %2715 = vmatpush1.bf16.msra.mxu0 0
        %2716 = vmatprep.subr.bf16.mxu0 0
        %2717 = vmatpush1.bf16.msra.mxu0 0
        %2718 = vmatprep.subr.bf16.mxu0 0
        %2719 = vmatpush1.bf16.msra.mxu0 0
        %2720 = vmatprep.subr.bf16.mxu0 0
        %2721 = vmatpush1.bf16.msra.mxu0 0
        %2722 = vmatprep.subr.bf16.mxu0 0
        %2723 = vmatpush1.bf16.msra.mxu0 0
        %2724 = vmatprep.subr.bf16.mxu0 0
        %2725 = vmatpush1.bf16.msra.mxu0 0
        %2726 = vmatprep.subr.bf16.mxu0 0
        %2727 = vmatpush1.bf16.msra.mxu0 0
        %2728 = vmatprep.subr.bf16.mxu0 0
        %2729 = vmatpush1.bf16.msra.mxu0 0
        %2730 = vmatprep.mubr.bf16.mxu0 0
        %2731 = vmatmul.mubr.bf16.gmra.mrb[0].mxu0 %v2655
        %v2732 = vpop.f32.mrb[0].mxu0
        %v2733 = vadd.f32 0.0, %v2732
        %v2734 = vpop.f32.mrb[0].mxu0
        %v2735 = vpop.f32.mrb[0].mxu0
        %v2736 = vpop.f32.mrb[0].mxu0
        %2737 = vdwg.mxu0
        %2738 = vrot.lane.b32.xlu0 %v2604, 19
        %v2739 = vpop.permute.xlu0 %2738
        %2740 = vrot.lane.b32.xlu0 %v2605, 19
        %v2741 = vpop.permute.xlu0 %2740
        %2742 = vrot.lane.b32.xlu0 %v2606, 19
        %v2743 = vpop.permute.xlu0 %2742
        %2744 = vrot.lane.b32.xlu0 %v2607, 19
        %v2745 = vpop.permute.xlu0 %2744
        %2746 = vrot.lane.b32.xlu0 %v2608, 19
        %v2747 = vpop.permute.xlu0 %2746
        %2748 = vrot.lane.b32.xlu0 %v2609, 19
        %v2749 = vpop.permute.xlu0 %2748
        %2750 = vrot.lane.b32.xlu0 %v2610, 19
        %v2751 = vpop.permute.xlu0 %2750
        %2752 = vrot.lane.b32.xlu0 %v2611, 19
        %v2753 = vpop.permute.xlu0 %2752
        %v2754 = vsel %vm574, %v2739, %v2741
        %v2755 = vsel %vm574, %v2741, %v2743
        %v2756 = vsel %vm574, %v2743, %v2745
        %v2757 = vsel %vm574, %v2747, %v2749
        %v2758 = vsel %vm574, %v2749, %v2751
        %v2759 = vsel %vm574, %v2751, %v2753
        %v2767 = vsel %vm2653, %v2600, 0
        %2769 = vmatprep.subr.bf16.mxu0 %v2755
        %2770 = vmatpush1.bf16.msra.mxu0 %v2754
        %2771 = vmatprep.subr.bf16.mxu0 %v2758
        %2772 = vmatpush1.bf16.msra.mxu0 %v2757
        %2773 = vmatprep.subr.bf16.mxu0 0
        %2774 = vmatpush1.bf16.msra.mxu0 0
        %2775 = vmatprep.subr.bf16.mxu0 0
        %2776 = vmatpush1.bf16.msra.mxu0 0
        %2777 = vmatprep.subr.bf16.mxu0 0
        %2778 = vmatpush1.bf16.msra.mxu0 0
        %2779 = vmatprep.subr.bf16.mxu0 0
        %2780 = vmatpush1.bf16.msra.mxu0 0
        %2781 = vmatprep.subr.bf16.mxu0 0
        %2782 = vmatpush1.bf16.msra.mxu0 0
        %2783 = vmatprep.subr.bf16.mxu0 0
        %2784 = vmatpush1.bf16.msra.mxu0 0
        %2785 = vmatprep.subr.bf16.mxu0 0
        %2786 = vmatpush1.bf16.msra.mxu0 0
        %2787 = vmatprep.subr.bf16.mxu0 0
        %2788 = vmatpush1.bf16.msra.mxu0 0
        %2789 = vmatprep.subr.bf16.mxu0 0
        %2790 = vmatpush1.bf16.msra.mxu0 0
        %2791 = vmatprep.subr.bf16.mxu0 0
        %2792 = vmatpush1.bf16.msra.mxu0 0
        %2793 = vmatprep.subr.bf16.mxu0 0
        %2794 = vmatpush1.bf16.msra.mxu0 0
        %2795 = vmatprep.subr.bf16.mxu0 0
        %2796 = vmatpush1.bf16.msra.mxu0 0
        %2797 = vmatprep.subr.bf16.mxu0 0
        %2798 = vmatpush1.bf16.msra.mxu0 0
        %2799 = vmatprep.subr.bf16.mxu0 0
        %2800 = vmatpush1.bf16.msra.mxu0 0
        %2801 = vmatprep.mubr.bf16.mxu0 0
        %2802 = vmatmul.mubr.bf16.gmra.mrb[0].mxu0 %v2767
        %v2803 = vpop.f32.mrb[0].mxu0
        %v2804 = vadd.f32 %v2692, %v2803
        %v2805 = vpop.f32.mrb[0].mxu0
        %v2806 = vadd.f32 %v2694, %v2805
        %v2807 = vpop.f32.mrb[0].mxu0
        %v2808 = vpop.f32.mrb[0].mxu0
        %2809 = vdwg.mxu0
        %2810 = vmatprep.subr.bf16.mxu0 0
        %2811 = vmatpush1.bf16.msra.mxu0 %v2756
        %2812 = vmatprep.subr.bf16.mxu0 0
        %2813 = vmatpush1.bf16.msra.mxu0 %v2759
        %2814 = vmatprep.subr.bf16.mxu0 0
        %2815 = vmatpush1.bf16.msra.mxu0 0
        %2816 = vmatprep.subr.bf16.mxu0 0
        %2817 = vmatpush1.bf16.msra.mxu0 0
        %2818 = vmatprep.subr.bf16.mxu0 0
        %2819 = vmatpush1.bf16.msra.mxu0 0
        %2820 = vmatprep.subr.bf16.mxu0 0
        %2821 = vmatpush1.bf16.msra.mxu0 0
        %2822 = vmatprep.subr.bf16.mxu0 0
        %2823 = vmatpush1.bf16.msra.mxu0 0
        %2824 = vmatprep.subr.bf16.mxu0 0
        %2825 = vmatpush1.bf16.msra.mxu0 0
        %2826 = vmatprep.subr.bf16.mxu0 0
        %2827 = vmatpush1.bf16.msra.mxu0 0
        %2828 = vmatprep.subr.bf16.mxu0 0
        %2829 = vmatpush1.bf16.msra.mxu0 0
        %2830 = vmatprep.subr.bf16.mxu0 0
        %2831 = vmatpush1.bf16.msra.mxu0 0
        %2832 = vmatprep.subr.bf16.mxu0 0
        %2833 = vmatpush1.bf16.msra.mxu0 0
        %2834 = vmatprep.subr.bf16.mxu0 0
        %2835 = vmatpush1.bf16.msra.mxu0 0
        %2836 = vmatprep.subr.bf16.mxu0 0
        %2837 = vmatpush1.bf16.msra.mxu0 0
        %2838 = vmatprep.subr.bf16.mxu0 0
        %2839 = vmatpush1.bf16.msra.mxu0 0
        %2840 = vmatprep.subr.bf16.mxu0 0
        %2841 = vmatpush1.bf16.msra.mxu0 0
        %2842 = vmatprep.mubr.bf16.mxu0 0
        %2843 = vmatmul.mubr.bf16.gmra.mrb[0].mxu0 %v2767
        %v2844 = vpop.f32.mrb[0].mxu0
        %v2845 = vadd.f32 %v2733, %v2844
        %v2846 = vpop.f32.mrb[0].mxu0
        %v2847 = vpop.f32.mrb[0].mxu0
        %v2848 = vpop.f32.mrb[0].mxu0
        %2849 = vdwg.mxu0
        %2850 = vrot.lane.b32.xlu0 %v2614, 64
        %v2851 = vpop.permute.xlu0 %2850
        %2852 = vrot.lane.b32.xlu0 %v2604, 17
        %v2853 = vpop.permute.xlu0 %2852
        %2854 = vrot.lane.b32.xlu0 %v2605, 17
        %v2855 = vpop.permute.xlu0 %2854
        %2856 = vrot.lane.b32.xlu0 %v2606, 17
        %v2857 = vpop.permute.xlu0 %2856
        %2858 = vrot.lane.b32.xlu0 %v2607, 17
        %v2859 = vpop.permute.xlu0 %2858
        %2860 = vrot.lane.b32.xlu0 %v2608, 17
        %v2861 = vpop.permute.xlu0 %2860
        %2862 = vrot.lane.b32.xlu0 %v2609, 17
        %v2863 = vpop.permute.xlu0 %2862
        %2864 = vrot.lane.b32.xlu0 %v2610, 17
        %v2865 = vpop.permute.xlu0 %2864
        %2866 = vrot.lane.b32.xlu0 %v2611, 17
        %v2867 = vpop.permute.xlu0 %2866
        %v2868 = vsel %vm675, %v2853, %v2855
        %v2869 = vsel %vm675, %v2855, %v2857
        %v2870 = vsel %vm675, %v2857, %v2859
        %v2871 = vsel %vm675, %v2861, %v2863
        %v2872 = vsel %vm675, %v2863, %v2865
        %v2873 = vsel %vm675, %v2865, %v2867
        %v2881 = vsel %vm2653, %v2851, 0
        %2883 = vmatprep.subr.bf16.mxu0 %v2869
        %2884 = vmatpush1.bf16.msra.mxu0 %v2868
        %2885 = vmatprep.subr.bf16.mxu0 %v2872
        %2886 = vmatpush1.bf16.msra.mxu0 %v2871
        %2887 = vmatprep.subr.bf16.mxu0 0
        %2888 = vmatpush1.bf16.msra.mxu0 0
        %2889 = vmatprep.subr.bf16.mxu0 0
        %2890 = vmatpush1.bf16.msra.mxu0 0
        %2891 = vmatprep.subr.bf16.mxu0 0
        %2892 = vmatpush1.bf16.msra.mxu0 0
        %2893 = vmatprep.subr.bf16.mxu0 0
        %2894 = vmatpush1.bf16.msra.mxu0 0
        %2895 = vmatprep.subr.bf16.mxu0 0
        %2896 = vmatpush1.bf16.msra.mxu0 0
        %2897 = vmatprep.subr.bf16.mxu0 0
        %2898 = vmatpush1.bf16.msra.mxu0 0
        %2899 = vmatprep.subr.bf16.mxu0 0
        %2900 = vmatpush1.bf16.msra.mxu0 0
        %2901 = vmatprep.subr.bf16.mxu0 0
        %2902 = vmatpush1.bf16.msra.mxu0 0
        %2903 = vmatprep.subr.bf16.mxu0 0
        %2904 = vmatpush1.bf16.msra.mxu0 0
        %2905 = vmatprep.subr.bf16.mxu0 0
        %2906 = vmatpush1.bf16.msra.mxu0 0
        %2907 = vmatprep.subr.bf16.mxu0 0
        %2908 = vmatpush1.bf16.msra.mxu0 0
        %2909 = vmatprep.subr.bf16.mxu0 0
        %2910 = vmatpush1.bf16.msra.mxu0 0
        %2911 = vmatprep.subr.bf16.mxu0 0
        %2912 = vmatpush1.bf16.msra.mxu0 0
        %2913 = vmatprep.subr.bf16.mxu0 0
        %2914 = vmatpush1.bf16.msra.mxu0 0
        %2915 = vmatprep.mubr.bf16.mxu0 0
        %2916 = vmatmul.mubr.bf16.gmra.mrb[0].mxu0 %v2881
        %v2917 = vpop.f32.mrb[0].mxu0
        %v2918 = vadd.f32 0.0, %v2917
        %v2919 = vpop.f32.mrb[0].mxu0
        %v2920 = vadd.f32 0.0, %v2919
        %v2921 = vpop.f32.mrb[0].mxu0
        %v2922 = vpop.f32.mrb[0].mxu0
        %2923 = vdwg.mxu0
        %2924 = vmatprep.subr.bf16.mxu0 0
        %2925 = vmatpush1.bf16.msra.mxu0 %v2870
        %2926 = vmatprep.subr.bf16.mxu0 0
        %2927 = vmatpush1.bf16.msra.mxu0 %v2873
        %2928 = vmatprep.subr.bf16.mxu0 0
        %2929 = vmatpush1.bf16.msra.mxu0 0
        %2930 = vmatprep.subr.bf16.mxu0 0
        %2931 = vmatpush1.bf16.msra.mxu0 0
        %2932 = vmatprep.subr.bf16.mxu0 0
        %2933 = vmatpush1.bf16.msra.mxu0 0
        %2934 = vmatprep.subr.bf16.mxu0 0
        %2935 = vmatpush1.bf16.msra.mxu0 0
        %2936 = vmatprep.subr.bf16.mxu0 0
        %2937 = vmatpush1.bf16.msra.mxu0 0
        %2938 = vmatprep.subr.bf16.mxu0 0
        %2939 = vmatpush1.bf16.msra.mxu0 0
        %2940 = vmatprep.subr.bf16.mxu0 0
        %2941 = vmatpush1.bf16.msra.mxu0 0
        %2942 = vmatprep.subr.bf16.mxu0 0
        %2943 = vmatpush1.bf16.msra.mxu0 0
        %2944 = vmatprep.subr.bf16.mxu0 0
        %2945 = vmatpush1.bf16.msra.mxu0 0
        %2946 = vmatprep.subr.bf16.mxu0 0
        %2947 = vmatpush1.bf16.msra.mxu0 0
        %2948 = vmatprep.subr.bf16.mxu0 0
        %2949 = vmatpush1.bf16.msra.mxu0 0
        %2950 = vmatprep.subr.bf16.mxu0 0
        %2951 = vmatpush1.bf16.msra.mxu0 0
        %2952 = vmatprep.subr.bf16.mxu0 0
        %2953 = vmatpush1.bf16.msra.mxu0 0
        %2954 = vmatprep.subr.bf16.mxu0 0
        %2955 = vmatpush1.bf16.msra.mxu0 0
        %2956 = vmatprep.mubr.bf16.mxu0 0
        %2957 = vmatmul.mubr.bf16.gmra.mrb[0].mxu0 %v2881
        %v2958 = vpop.f32.mrb[0].mxu0
        %v2959 = vadd.f32 0.0, %v2958
        %v2960 = vpop.f32.mrb[0].mxu0
        %v2961 = vpop.f32.mrb[0].mxu0
        %v2962 = vpop.f32.mrb[0].mxu0
        %2963 = vdwg.mxu0
        %v2964 = vadd.f32 %v2804, %v2918
        %v2965 = vadd.f32 %v2806, %v2920
        %v2966 = vadd.f32 %v2845, %v2959
        %2967 = vrot.lane.b32.xlu0 %v2614, 32
        %v2968 = vpop.permute.xlu0 %2967
        %2969 = vrot.lane.b32.xlu0 %v2604, 1
        %v2970 = vpop.permute.xlu0 %2969
        %2971 = vrot.lane.b32.xlu0 %v2605, 1
        %v2972 = vpop.permute.xlu0 %2971
        %2973 = vrot.lane.b32.xlu0 %v2606, 1
        %v2974 = vpop.permute.xlu0 %2973
        %2975 = vrot.lane.b32.xlu0 %v2607, 1
        %v2976 = vpop.permute.xlu0 %2975
        %2977 = vrot.lane.b32.xlu0 %v2608, 1
        %v2978 = vpop.permute.xlu0 %2977
        %2979 = vrot.lane.b32.xlu0 %v2609, 1
        %v2980 = vpop.permute.xlu0 %2979
        %2981 = vrot.lane.b32.xlu0 %v2610, 1
        %v2982 = vpop.permute.xlu0 %2981
        %2983 = vrot.lane.b32.xlu0 %v2611, 1
        %v2984 = vpop.permute.xlu0 %2983
        %v2985 = vsel %vm779, %v2970, %v2972
        %v2986 = vsel %vm779, %v2972, %v2974
        %v2987 = vsel %vm779, %v2974, %v2976
        %v2988 = vsel %vm779, %v2978, %v2980
        %v2989 = vsel %vm779, %v2980, %v2982
        %v2990 = vsel %vm779, %v2982, %v2984
        %v2998 = vsel %vm2653, %v2968, 0
        %3000 = vmatprep.subr.bf16.mxu0 %v2986
        %3001 = vmatpush1.bf16.msra.mxu0 %v2985
        %3002 = vmatprep.subr.bf16.mxu0 %v2989
        %3003 = vmatpush1.bf16.msra.mxu0 %v2988
        %3004 = vmatprep.subr.bf16.mxu0 0
        %3005 = vmatpush1.bf16.msra.mxu0 0
        %3006 = vmatprep.subr.bf16.mxu0 0
        %3007 = vmatpush1.bf16.msra.mxu0 0
        %3008 = vmatprep.subr.bf16.mxu0 0
        %3009 = vmatpush1.bf16.msra.mxu0 0
        %3010 = vmatprep.subr.bf16.mxu0 0
        %3011 = vmatpush1.bf16.msra.mxu0 0
        %3012 = vmatprep.subr.bf16.mxu0 0
        %3013 = vmatpush1.bf16.msra.mxu0 0
        %3014 = vmatprep.subr.bf16.mxu0 0
        %3015 = vmatpush1.bf16.msra.mxu0 0
        %3016 = vmatprep.subr.bf16.mxu0 0
        %3017 = vmatpush1.bf16.msra.mxu0 0
        %3018 = vmatprep.subr.bf16.mxu0 0
        %3019 = vmatpush1.bf16.msra.mxu0 0
        %3020 = vmatprep.subr.bf16.mxu0 0
        %3021 = vmatpush1.bf16.msra.mxu0 0
        %3022 = vmatprep.subr.bf16.mxu0 0
        %3023 = vmatpush1.bf16.msra.mxu0 0
        %3024 = vmatprep.subr.bf16.mxu0 0
        %3025 = vmatpush1.bf16.msra.mxu0 0
        %3026 = vmatprep.subr.bf16.mxu0 0
        %3027 = vmatpush1.bf16.msra.mxu0 0
        %3028 = vmatprep.subr.bf16.mxu0 0
        %3029 = vmatpush1.bf16.msra.mxu0 0
        %3030 = vmatprep.subr.bf16.mxu0 0
        %3031 = vmatpush1.bf16.msra.mxu0 0
        %3032 = vmatprep.mubr.bf16.mxu0 0
        %3033 = vmatmul.mubr.bf16.gmra.mrb[0].mxu0 %v2998
        %v3034 = vpop.f32.mrb[0].mxu0
        %v3035 = vadd.f32 0.0, %v3034
        %v3036 = vpop.f32.mrb[0].mxu0
        %v3037 = vadd.f32 0.0, %v3036
        %v3038 = vpop.f32.mrb[0].mxu0
        %v3039 = vpop.f32.mrb[0].mxu0
        %3040 = vdwg.mxu0
        %3041 = vmatprep.subr.bf16.mxu0 0
        %3042 = vmatpush1.bf16.msra.mxu0 %v2987
        %3043 = vmatprep.subr.bf16.mxu0 0
        %3044 = vmatpush1.bf16.msra.mxu0 %v2990
        %3045 = vmatprep.subr.bf16.mxu0 0
        %3046 = vmatpush1.bf16.msra.mxu0 0
        %3047 = vmatprep.subr.bf16.mxu0 0
        %3048 = vmatpush1.bf16.msra.mxu0 0
        %3049 = vmatprep.subr.bf16.mxu0 0
        %3050 = vmatpush1.bf16.msra.mxu0 0
        %3051 = vmatprep.subr.bf16.mxu0 0
        %3052 = vmatpush1.bf16.msra.mxu0 0
        %3053 = vmatprep.subr.bf16.mxu0 0
        %3054 = vmatpush1.bf16.msra.mxu0 0
        %3055 = vmatprep.subr.bf16.mxu0 0
        %3056 = vmatpush1.bf16.msra.mxu0 0
        %3057 = vmatprep.subr.bf16.mxu0 0
        %3058 = vmatpush1.bf16.msra.mxu0 0
        %3059 = vmatprep.subr.bf16.mxu0 0
        %3060 = vmatpush1.bf16.msra.mxu0 0
        %3061 = vmatprep.subr.bf16.mxu0 0
        %3062 = vmatpush1.bf16.msra.mxu0 0
        %3063 = vmatprep.subr.bf16.mxu0 0
        %3064 = vmatpush1.bf16.msra.mxu0 0
        %3065 = vmatprep.subr.bf16.mxu0 0
        %3066 = vmatpush1.bf16.msra.mxu0 0
        %3067 = vmatprep.subr.bf16.mxu0 0
        %3068 = vmatpush1.bf16.msra.mxu0 0
        %3069 = vmatprep.subr.bf16.mxu0 0
        %3070 = vmatpush1.bf16.msra.mxu0 0
        %3071 = vmatprep.subr.bf16.mxu0 0
        %3072 = vmatpush1.bf16.msra.mxu0 0
        %3073 = vmatprep.mubr.bf16.mxu0 0
        %3074 = vmatmul.mubr.bf16.gmra.mrb[0].mxu0 %v2998
        %v3075 = vpop.f32.mrb[0].mxu0
        %v3076 = vadd.f32 0.0, %v3075
        %v3077 = vpop.f32.mrb[0].mxu0
        %v3078 = vpop.f32.mrb[0].mxu0
        %v3079 = vpop.f32.mrb[0].mxu0
        %3080 = vdwg.mxu0
        %v3081 = vadd.f32 %v2964, %v3035
        %v3082 = vadd.f32 %v2965, %v3037
        %v3083 = vadd.f32 %v2966, %v3076
        %v3084 = vunpack.c.h.b16 %v2600
        %v3085 = vpack.c.b16 %v3084, %v3084
        %v3087 = vsel %vm2653, %v3085, 0
        %3089 = vmatprep.subr.bf16.mxu0 %v2606
        %3090 = vmatpush1.bf16.msra.mxu0 %v2605
        %3091 = vmatprep.subr.bf16.mxu0 %v2610
        %3092 = vmatpush1.bf16.msra.mxu0 %v2609
        %3093 = vmatprep.subr.bf16.mxu0 0
        %3094 = vmatpush1.bf16.msra.mxu0 0
        %3095 = vmatprep.subr.bf16.mxu0 0
        %3096 = vmatpush1.bf16.msra.mxu0 0
        %3097 = vmatprep.subr.bf16.mxu0 0
        %3098 = vmatpush1.bf16.msra.mxu0 0
        %3099 = vmatprep.subr.bf16.mxu0 0
        %3100 = vmatpush1.bf16.msra.mxu0 0
        %3101 = vmatprep.subr.bf16.mxu0 0
        %3102 = vmatpush1.bf16.msra.mxu0 0
        %3103 = vmatprep.subr.bf16.mxu0 0
        %3104 = vmatpush1.bf16.msra.mxu0 0
        %3105 = vmatprep.subr.bf16.mxu0 0
        %3106 = vmatpush1.bf16.msra.mxu0 0
        %3107 = vmatprep.subr.bf16.mxu0 0
        %3108 = vmatpush1.bf16.msra.mxu0 0
        %3109 = vmatprep.subr.bf16.mxu0 0
        %3110 = vmatpush1.bf16.msra.mxu0 0
        %3111 = vmatprep.subr.bf16.mxu0 0
        %3112 = vmatpush1.bf16.msra.mxu0 0
        %3113 = vmatprep.subr.bf16.mxu0 0
        %3114 = vmatpush1.bf16.msra.mxu0 0
        %3115 = vmatprep.subr.bf16.mxu0 0
        %3116 = vmatpush1.bf16.msra.mxu0 0
        %3117 = vmatprep.subr.bf16.mxu0 0
        %3118 = vmatpush1.bf16.msra.mxu0 0
        %3119 = vmatprep.subr.bf16.mxu0 0
        %3120 = vmatpush1.bf16.msra.mxu0 0
        %3121 = vmatprep.mubr.bf16.mxu0 0
        %3122 = vmatmul.mubr.bf16.gmra.mrb[0].mxu0 %v3087
        %v3123 = vpop.f32.mrb[0].mxu0
        %v3124 = vadd.f32 0.0, %v3123
        %v3125 = vpop.f32.mrb[0].mxu0
        %v3126 = vadd.f32 0.0, %v3125
        %v3127 = vpop.f32.mrb[0].mxu0
        %v3128 = vpop.f32.mrb[0].mxu0
        %3129 = vdwg.mxu0
        %3130 = vmatprep.subr.bf16.mxu0 0
        %3131 = vmatpush1.bf16.msra.mxu0 %v2607
        %3132 = vmatprep.subr.bf16.mxu0 0
        %3133 = vmatpush1.bf16.msra.mxu0 %v2611
        %3134 = vmatprep.subr.bf16.mxu0 0
        %3135 = vmatpush1.bf16.msra.mxu0 0
        %3136 = vmatprep.subr.bf16.mxu0 0
        %3137 = vmatpush1.bf16.msra.mxu0 0
        %3138 = vmatprep.subr.bf16.mxu0 0
        %3139 = vmatpush1.bf16.msra.mxu0 0
        %3140 = vmatprep.subr.bf16.mxu0 0
        %3141 = vmatpush1.bf16.msra.mxu0 0
        %3142 = vmatprep.subr.bf16.mxu0 0
        %3143 = vmatpush1.bf16.msra.mxu0 0
        %3144 = vmatprep.subr.bf16.mxu0 0
        %3145 = vmatpush1.bf16.msra.mxu0 0
        %3146 = vmatprep.subr.bf16.mxu0 0
        %3147 = vmatpush1.bf16.msra.mxu0 0
        %3148 = vmatprep.subr.bf16.mxu0 0
        %3149 = vmatpush1.bf16.msra.mxu0 0
        %3150 = vmatprep.subr.bf16.mxu0 0
        %3151 = vmatpush1.bf16.msra.mxu0 0
        %3152 = vmatprep.subr.bf16.mxu0 0
        %3153 = vmatpush1.bf16.msra.mxu0 0
        %3154 = vmatprep.subr.bf16.mxu0 0
        %3155 = vmatpush1.bf16.msra.mxu0 0
        %3156 = vmatprep.subr.bf16.mxu0 0
        %3157 = vmatpush1.bf16.msra.mxu0 0
        %3158 = vmatprep.subr.bf16.mxu0 0
        %3159 = vmatpush1.bf16.msra.mxu0 0
        %3160 = vmatprep.subr.bf16.mxu0 0
        %3161 = vmatpush1.bf16.msra.mxu0 0
        %3162 = vmatprep.mubr.bf16.mxu0 0
        %3163 = vmatmul.mubr.bf16.gmra.mrb[0].mxu0 %v3087
        %v3164 = vpop.f32.mrb[0].mxu0
        %v3165 = vadd.f32 0.0, %v3164
        %v3166 = vpop.f32.mrb[0].mxu0
        %v3167 = vpop.f32.mrb[0].mxu0
        %v3168 = vpop.f32.mrb[0].mxu0
        %3169 = vdwg.mxu0
        %v3170 = vadd.f32 %v3081, %v3124
        %v3171 = vadd.f32 %v3082, %v3126
        %v3172 = vadd.f32 %v3083, %v3165
        %v3173 = vld [vmem:[#allocation2 + $0x8] sm:$0xff]
        %v3174 = vld [vmem:[#allocation2 + $0x10] sm:$0xff]
        %v3175 = vld [vmem:[#allocation2 + $0x18] sm:$0xff]
        %v3176 = vld [vmem:[#allocation2 + $0x20] sm:$0xff]
        %v3177 = vld [vmem:[#allocation2 + $0x30] sm:$0xff]
        %v3178 = vld [vmem:[#allocation2 + $0x38] sm:$0xff]
        %v3179 = vld [vmem:[#allocation2 + $0x40] sm:$0xff]
        %v3180 = vld [vmem:[#allocation2 + $0x48] sm:$0xff]
        %3181 = vrot.lane.b32.xlu0 %v3085, 96
        %v3182 = vpop.permute.xlu0 %3181
        %3191 = vrot.lane.b32.xlu0 %v3173, 127
        %v3192 = vpop.permute.xlu0 %3191
        %3193 = vrot.lane.b32.xlu0 %v3174, 127
        %v3194 = vpop.permute.xlu0 %3193
        %3195 = vrot.lane.b32.xlu0 %v3175, 127
        %v3196 = vpop.permute.xlu0 %3195
        %3197 = vrot.lane.b32.xlu0 %v3176, 127
        %v3198 = vpop.permute.xlu0 %3197
        %3199 = vrot.lane.b32.xlu0 %v3177, 127
        %v3200 = vpop.permute.xlu0 %3199
        %3201 = vrot.lane.b32.xlu0 %v3178, 127
        %v3202 = vpop.permute.xlu0 %3201
        %3203 = vrot.lane.b32.xlu0 %v3179, 127
        %v3204 = vpop.permute.xlu0 %3203
        %3205 = vrot.lane.b32.xlu0 %v3180, 127
        %v3206 = vpop.permute.xlu0 %3205
        %v3207 = vsel %vm980, %v3192, %v3194
        %v3208 = vsel %vm980, %v3194, %v3196
        %v3209 = vsel %vm980, %v3196, %v3198
        %v3210 = vsel %vm980, %v3200, %v3202
        %v3211 = vsel %vm980, %v3202, %v3204
        %v3212 = vsel %vm980, %v3204, %v3206
        %v3220 = vsel %vm2653, %v3182, 0
        %3222 = vmatprep.subr.bf16.mxu0 %v3208
        %3223 = vmatpush1.bf16.msra.mxu0 %v3207
        %3224 = vmatprep.subr.bf16.mxu0 %v3211
        %3225 = vmatpush1.bf16.msra.mxu0 %v3210
        %3226 = vmatprep.subr.bf16.mxu0 0
        %3227 = vmatpush1.bf16.msra.mxu0 0
        %3228 = vmatprep.subr.bf16.mxu0 0
        %3229 = vmatpush1.bf16.msra.mxu0 0
        %3230 = vmatprep.subr.bf16.mxu0 0
        %3231 = vmatpush1.bf16.msra.mxu0 0
        %3232 = vmatprep.subr.bf16.mxu0 0
        %3233 = vmatpush1.bf16.msra.mxu0 0
        %3234 = vmatprep.subr.bf16.mxu0 0
        %3235 = vmatpush1.bf16.msra.mxu0 0
        %3236 = vmatprep.subr.bf16.mxu0 0
        %3237 = vmatpush1.bf16.msra.mxu0 0
        %3238 = vmatprep.subr.bf16.mxu0 0
        %3239 = vmatpush1.bf16.msra.mxu0 0
        %3240 = vmatprep.subr.bf16.mxu0 0
        %3241 = vmatpush1.bf16.msra.mxu0 0
        %3242 = vmatprep.subr.bf16.mxu0 0
        %3243 = vmatpush1.bf16.msra.mxu0 0
        %3244 = vmatprep.subr.bf16.mxu0 0
        %3245 = vmatpush1.bf16.msra.mxu0 0
        %3246 = vmatprep.subr.bf16.mxu0 0
        %3247 = vmatpush1.bf16.msra.mxu0 0
        %3248 = vmatprep.subr.bf16.mxu0 0
        %3249 = vmatpush1.bf16.msra.mxu0 0
        %3250 = vmatprep.subr.bf16.mxu0 0
        %3251 = vmatpush1.bf16.msra.mxu0 0
        %3252 = vmatprep.subr.bf16.mxu0 0
        %3253 = vmatpush1.bf16.msra.mxu0 0
        %3254 = vmatprep.mubr.bf16.mxu0 0
        %3255 = vmatmul.mubr.bf16.gmra.mrb[0].mxu0 %v3220
        %v3256 = vpop.f32.mrb[0].mxu0
        %v3257 = vadd.f32 0.0, %v3256
        %v3258 = vpop.f32.mrb[0].mxu0
        %v3259 = vadd.f32 0.0, %v3258
        %v3260 = vpop.f32.mrb[0].mxu0
        %v3261 = vpop.f32.mrb[0].mxu0
        %3262 = vdwg.mxu0
        %3263 = vmatprep.subr.bf16.mxu0 0
        %3264 = vmatpush1.bf16.msra.mxu0 %v3209
        %3265 = vmatprep.subr.bf16.mxu0 0
        %3266 = vmatpush1.bf16.msra.mxu0 %v3212
        %3267 = vmatprep.subr.bf16.mxu0 0
        %3268 = vmatpush1.bf16.msra.mxu0 0
        %3269 = vmatprep.subr.bf16.mxu0 0
        %3270 = vmatpush1.bf16.msra.mxu0 0
        %3271 = vmatprep.subr.bf16.mxu0 0
        %3272 = vmatpush1.bf16.msra.mxu0 0
        %3273 = vmatprep.subr.bf16.mxu0 0
        %3274 = vmatpush1.bf16.msra.mxu0 0
        %3275 = vmatprep.subr.bf16.mxu0 0
        %3276 = vmatpush1.bf16.msra.mxu0 0
        %3277 = vmatprep.subr.bf16.mxu0 0
        %3278 = vmatpush1.bf16.msra.mxu0 0
        %3279 = vmatprep.subr.bf16.mxu0 0
        %3280 = vmatpush1.bf16.msra.mxu0 0
        %3281 = vmatprep.subr.bf16.mxu0 0
        %3282 = vmatpush1.bf16.msra.mxu0 0
        %3283 = vmatprep.subr.bf16.mxu0 0
        %3284 = vmatpush1.bf16.msra.mxu0 0
        %3285 = vmatprep.subr.bf16.mxu0 0
        %3286 = vmatpush1.bf16.msra.mxu0 0
        %3287 = vmatprep.subr.bf16.mxu0 0
        %3288 = vmatpush1.bf16.msra.mxu0 0
        %3289 = vmatprep.subr.bf16.mxu0 0
        %3290 = vmatpush1.bf16.msra.mxu0 0
        %3291 = vmatprep.subr.bf16.mxu0 0
        %3292 = vmatpush1.bf16.msra.mxu0 0
        %3293 = vmatprep.subr.bf16.mxu0 0
        %3294 = vmatpush1.bf16.msra.mxu0 0
        %3295 = vmatprep.mubr.bf16.mxu0 0
        %3296 = vmatmul.mubr.bf16.gmra.mrb[0].mxu0 %v3220
        %v3297 = vpop.f32.mrb[0].mxu0
        %v3298 = vadd.f32 0.0, %v3297
        %v3299 = vpop.f32.mrb[0].mxu0
        %v3300 = vpop.f32.mrb[0].mxu0
        %v3301 = vpop.f32.mrb[0].mxu0
        %3302 = vdwg.mxu0
        %v3303 = vadd.f32 %v3170, %v3257
        %v3304 = vadd.f32 %v3171, %v3259
        %v3305 = vadd.f32 %v3172, %v3298
        %3306 = vrot.lane.b32.xlu0 %v3085, 64
        %v3307 = vpop.permute.xlu0 %3306
        %3308 = vrot.lane.b32.xlu0 %v3173, 111
        %v3309 = vpop.permute.xlu0 %3308
        %3310 = vrot.lane.b32.xlu0 %v3174, 111
        %v3311 = vpop.permute.xlu0 %3310
        %3312 = vrot.lane.b32.xlu0 %v3175, 111
        %v3313 = vpop.permute.xlu0 %3312
        %3314 = vrot.lane.b32.xlu0 %v3176, 111
        %v3315 = vpop.permute.xlu0 %3314
        %3316 = vrot.lane.b32.xlu0 %v3177, 111
        %v3317 = vpop.permute.xlu0 %3316
        %3318 = vrot.lane.b32.xlu0 %v3178, 111
        %v3319 = vpop.permute.xlu0 %3318
        %3320 = vrot.lane.b32.xlu0 %v3179, 111
        %v3321 = vpop.permute.xlu0 %3320
        %3322 = vrot.lane.b32.xlu0 %v3180, 111
        %v3323 = vpop.permute.xlu0 %3322
        %v3324 = vsel %vm1084, %v3309, %v3311
        %v3325 = vsel %vm1084, %v3311, %v3313
        %v3326 = vsel %vm1084, %v3313, %v3315
        %v3327 = vsel %vm1084, %v3317, %v3319
        %v3328 = vsel %vm1084, %v3319, %v3321
        %v3329 = vsel %vm1084, %v3321, %v3323
        %v3337 = vsel %vm2653, %v3307, 0
        %3339 = vmatprep.subr.bf16.mxu0 %v3325
        %3340 = vmatpush1.bf16.msra.mxu0 %v3324
        %3341 = vmatprep.subr.bf16.mxu0 %v3328
        %3342 = vmatpush1.bf16.msra.mxu0 %v3327
        %3343 = vmatprep.subr.bf16.mxu0 0
        %3344 = vmatpush1.bf16.msra.mxu0 0
        %3345 = vmatprep.subr.bf16.mxu0 0
        %3346 = vmatpush1.bf16.msra.mxu0 0
        %3347 = vmatprep.subr.bf16.mxu0 0
        %3348 = vmatpush1.bf16.msra.mxu0 0
        %3349 = vmatprep.subr.bf16.mxu0 0
        %3350 = vmatpush1.bf16.msra.mxu0 0
        %3351 = vmatprep.subr.bf16.mxu0 0
        %3352 = vmatpush1.bf16.msra.mxu0 0
        %3353 = vmatprep.subr.bf16.mxu0 0
        %3354 = vmatpush1.bf16.msra.mxu0 0
        %3355 = vmatprep.subr.bf16.mxu0 0
        %3356 = vmatpush1.bf16.msra.mxu0 0
        %3357 = vmatprep.subr.bf16.mxu0 0
        %3358 = vmatpush1.bf16.msra.mxu0 0
        %3359 = vmatprep.subr.bf16.mxu0 0
        %3360 = vmatpush1.bf16.msra.mxu0 0
        %3361 = vmatprep.subr.bf16.mxu0 0
        %3362 = vmatpush1.bf16.msra.mxu0 0
        %3363 = vmatprep.subr.bf16.mxu0 0
        %3364 = vmatpush1.bf16.msra.mxu0 0
        %3365 = vmatprep.subr.bf16.mxu0 0
        %3366 = vmatpush1.bf16.msra.mxu0 0
        %3367 = vmatprep.subr.bf16.mxu0 0
        %3368 = vmatpush1.bf16.msra.mxu0 0
        %3369 = vmatprep.subr.bf16.mxu0 0
        %3370 = vmatpush1.bf16.msra.mxu0 0
        %3371 = vmatprep.mubr.bf16.mxu0 0
        %3372 = vmatmul.mubr.bf16.gmra.mrb[0].mxu0 %v3337
        %v3373 = vpop.f32.mrb[0].mxu0
        %v3374 = vadd.f32 0.0, %v3373
        %v3375 = vpop.f32.mrb[0].mxu0
        %v3376 = vadd.f32 0.0, %v3375
        %v3377 = vpop.f32.mrb[0].mxu0
        %v3378 = vpop.f32.mrb[0].mxu0
        %3379 = vdwg.mxu0
        %3380 = vmatprep.subr.bf16.mxu0 0
        %3381 = vmatpush1.bf16.msra.mxu0 %v3326
        %3382 = vmatprep.subr.bf16.mxu0 0
        %3383 = vmatpush1.bf16.msra.mxu0 %v3329
        %3384 = vmatprep.subr.bf16.mxu0 0
        %3385 = vmatpush1.bf16.msra.mxu0 0
        %3386 = vmatprep.subr.bf16.mxu0 0
        %3387 = vmatpush1.bf16.msra.mxu0 0
        %3388 = vmatprep.subr.bf16.mxu0 0
        %3389 = vmatpush1.bf16.msra.mxu0 0
        %3390 = vmatprep.subr.bf16.mxu0 0
        %3391 = vmatpush1.bf16.msra.mxu0 0
        %3392 = vmatprep.subr.bf16.mxu0 0
        %3393 = vmatpush1.bf16.msra.mxu0 0
        %3394 = vmatprep.subr.bf16.mxu0 0
        %3395 = vmatpush1.bf16.msra.mxu0 0
        %3396 = vmatprep.subr.bf16.mxu0 0
        %3397 = vmatpush1.bf16.msra.mxu0 0
        %3398 = vmatprep.subr.bf16.mxu0 0
        %3399 = vmatpush1.bf16.msra.mxu0 0
        %3400 = vmatprep.subr.bf16.mxu0 0
        %3401 = vmatpush1.bf16.msra.mxu0 0
        %3402 = vmatprep.subr.bf16.mxu0 0
        %3403 = vmatpush1.bf16.msra.mxu0 0
        %3404 = vmatprep.subr.bf16.mxu0 0
        %3405 = vmatpush1.bf16.msra.mxu0 0
        %3406 = vmatprep.subr.bf16.mxu0 0
        %3407 = vmatpush1.bf16.msra.mxu0 0
        %3408 = vmatprep.subr.bf16.mxu0 0
        %3409 = vmatpush1.bf16.msra.mxu0 0
        %3410 = vmatprep.subr.bf16.mxu0 0
        %3411 = vmatpush1.bf16.msra.mxu0 0
        %3412 = vmatprep.mubr.bf16.mxu0 0
        %3413 = vmatmul.mubr.bf16.gmra.mrb[0].mxu0 %v3337
        %v3414 = vpop.f32.mrb[0].mxu0
        %v3415 = vadd.f32 0.0, %v3414
        %v3416 = vpop.f32.mrb[0].mxu0
        %v3417 = vpop.f32.mrb[0].mxu0
        %v3418 = vpop.f32.mrb[0].mxu0
        %3419 = vdwg.mxu0
        %v3420 = vadd.f32 %v3303, %v3374
        %v3421 = vadd.f32 %v3304, %v3376
        %v3422 = vadd.f32 %v3305, %v3415
        %3423 = vrot.lane.b32.xlu0 %v3085, 32
        %v3424 = vpop.permute.xlu0 %3423
        %3425 = vrot.lane.b32.xlu0 %v3173, 110
        %v3426 = vpop.permute.xlu0 %3425
        %3427 = vrot.lane.b32.xlu0 %v3174, 110
        %v3428 = vpop.permute.xlu0 %3427
        %3429 = vrot.lane.b32.xlu0 %v3175, 110
        %v3430 = vpop.permute.xlu0 %3429
        %3431 = vrot.lane.b32.xlu0 %v3176, 110
        %v3432 = vpop.permute.xlu0 %3431
        %3433 = vrot.lane.b32.xlu0 %v3177, 110
        %v3434 = vpop.permute.xlu0 %3433
        %3435 = vrot.lane.b32.xlu0 %v3178, 110
        %v3436 = vpop.permute.xlu0 %3435
        %3437 = vrot.lane.b32.xlu0 %v3179, 110
        %v3438 = vpop.permute.xlu0 %3437
        %3439 = vrot.lane.b32.xlu0 %v3180, 110
        %v3440 = vpop.permute.xlu0 %3439
        %v3441 = vsel %vm1188, %v3426, %v3428
        %v3442 = vsel %vm1188, %v3428, %v3430
        %v3443 = vsel %vm1188, %v3430, %v3432
        %v3444 = vsel %vm1188, %v3434, %v3436
        %v3445 = vsel %vm1188, %v3436, %v3438
        %v3446 = vsel %vm1188, %v3438, %v3440
        %v3454 = vsel %vm2653, %v3424, 0
        %3456 = vmatprep.subr.bf16.mxu0 %v3442
        %3457 = vmatpush1.bf16.msra.mxu0 %v3441
        %3458 = vmatprep.subr.bf16.mxu0 %v3445
        %3459 = vmatpush1.bf16.msra.mxu0 %v3444
        %3460 = vmatprep.subr.bf16.mxu0 0
        %3461 = vmatpush1.bf16.msra.mxu0 0
        %3462 = vmatprep.subr.bf16.mxu0 0
        %3463 = vmatpush1.bf16.msra.mxu0 0
        %3464 = vmatprep.subr.bf16.mxu0 0
        %3465 = vmatpush1.bf16.msra.mxu0 0
        %3466 = vmatprep.subr.bf16.mxu0 0
        %3467 = vmatpush1.bf16.msra.mxu0 0
        %3468 = vmatprep.subr.bf16.mxu0 0
        %3469 = vmatpush1.bf16.msra.mxu0 0
        %3470 = vmatprep.subr.bf16.mxu0 0
        %3471 = vmatpush1.bf16.msra.mxu0 0
        %3472 = vmatprep.subr.bf16.mxu0 0
        %3473 = vmatpush1.bf16.msra.mxu0 0
        %3474 = vmatprep.subr.bf16.mxu0 0
        %3475 = vmatpush1.bf16.msra.mxu0 0
        %3476 = vmatprep.subr.bf16.mxu0 0
        %3477 = vmatpush1.bf16.msra.mxu0 0
        %3478 = vmatprep.subr.bf16.mxu0 0
        %3479 = vmatpush1.bf16.msra.mxu0 0
        %3480 = vmatprep.subr.bf16.mxu0 0
        %3481 = vmatpush1.bf16.msra.mxu0 0
        %3482 = vmatprep.subr.bf16.mxu0 0
        %3483 = vmatpush1.bf16.msra.mxu0 0
        %3484 = vmatprep.subr.bf16.mxu0 0
        %3485 = vmatpush1.bf16.msra.mxu0 0
        %3486 = vmatprep.subr.bf16.mxu0 0
        %3487 = vmatpush1.bf16.msra.mxu0 0
        %3488 = vmatprep.mubr.bf16.mxu0 0
        %3489 = vmatmul.mubr.bf16.gmra.mrb[0].mxu0 %v3454
        %v3490 = vpop.f32.mrb[0].mxu0
        %v3491 = vadd.f32 0.0, %v3490
        %v3492 = vpop.f32.mrb[0].mxu0
        %v3493 = vadd.f32 0.0, %v3492
        %v3494 = vpop.f32.mrb[0].mxu0
        %v3495 = vpop.f32.mrb[0].mxu0
        %3496 = vdwg.mxu0
        %3497 = vmatprep.subr.bf16.mxu0 0
        %3498 = vmatpush1.bf16.msra.mxu0 %v3443
        %3499 = vmatprep.subr.bf16.mxu0 0
        %3500 = vmatpush1.bf16.msra.mxu0 %v3446
        %3501 = vmatprep.subr.bf16.mxu0 0
        %3502 = vmatpush1.bf16.msra.mxu0 0
        %3503 = vmatprep.subr.bf16.mxu0 0
        %3504 = vmatpush1.bf16.msra.mxu0 0
        %3505 = vmatprep.subr.bf16.mxu0 0
        %3506 = vmatpush1.bf16.msra.mxu0 0
        %3507 = vmatprep.subr.bf16.mxu0 0
        %3508 = vmatpush1.bf16.msra.mxu0 0
        %3509 = vmatprep.subr.bf16.mxu0 0
        %3510 = vmatpush1.bf16.msra.mxu0 0
        %3511 = vmatprep.subr.bf16.mxu0 0
        %3512 = vmatpush1.bf16.msra.mxu0 0
        %3513 = vmatprep.subr.bf16.mxu0 0
        %3514 = vmatpush1.bf16.msra.mxu0 0
        %3515 = vmatprep.subr.bf16.mxu0 0
        %3516 = vmatpush1.bf16.msra.mxu0 0
        %3517 = vmatprep.subr.bf16.mxu0 0
        %3518 = vmatpush1.bf16.msra.mxu0 0
        %3519 = vmatprep.subr.bf16.mxu0 0
        %3520 = vmatpush1.bf16.msra.mxu0 0
        %3521 = vmatprep.subr.bf16.mxu0 0
        %3522 = vmatpush1.bf16.msra.mxu0 0
        %3523 = vmatprep.subr.bf16.mxu0 0
        %3524 = vmatpush1.bf16.msra.mxu0 0
        %3525 = vmatprep.subr.bf16.mxu0 0
        %3526 = vmatpush1.bf16.msra.mxu0 0
        %3527 = vmatprep.subr.bf16.mxu0 0
        %3528 = vmatpush1.bf16.msra.mxu0 0
        %3529 = vmatprep.mubr.bf16.mxu0 0
        %3530 = vmatmul.mubr.bf16.gmra.mrb[0].mxu0 %v3454
        %v3531 = vpop.f32.mrb[0].mxu0
        %v3532 = vadd.f32 0.0, %v3531
        %v3533 = vpop.f32.mrb[0].mxu0
        %v3534 = vpop.f32.mrb[0].mxu0
        %v3535 = vpop.f32.mrb[0].mxu0
        %3536 = vdwg.mxu0
        %v3537 = vadd.f32 %v3420, %v3491
        %v3538 = vadd.f32 %v3421, %v3493
        %v3539 = vadd.f32 %v3422, %v3532
        %3540 = vrot.lane.b32.xlu0 %v3173, 109
        %v3541 = vpop.permute.xlu0 %3540
        %3542 = vrot.lane.b32.xlu0 %v3174, 109
        %v3543 = vpop.permute.xlu0 %3542
        %3544 = vrot.lane.b32.xlu0 %v3175, 109
        %v3545 = vpop.permute.xlu0 %3544
        %3546 = vrot.lane.b32.xlu0 %v3176, 109
        %v3547 = vpop.permute.xlu0 %3546
        %3548 = vrot.lane.b32.xlu0 %v3177, 109
        %v3549 = vpop.permute.xlu0 %3548
        %3550 = vrot.lane.b32.xlu0 %v3178, 109
        %v3551 = vpop.permute.xlu0 %3550
        %3552 = vrot.lane.b32.xlu0 %v3179, 109
        %v3553 = vpop.permute.xlu0 %3552
        %3554 = vrot.lane.b32.xlu0 %v3180, 109
        %v3555 = vpop.permute.xlu0 %3554
        %v3556 = vsel %vm1292, %v3541, %v3543
        %v3557 = vsel %vm1292, %v3543, %v3545
        %v3558 = vsel %vm1292, %v3545, %v3547
        %v3559 = vsel %vm1292, %v3549, %v3551
        %v3560 = vsel %vm1292, %v3551, %v3553
        %v3561 = vsel %vm1292, %v3553, %v3555
        %v3569 = vsel %vm2653, %v2601, 0
        %3571 = vmatprep.subr.bf16.mxu0 %v3557
        %3572 = vmatpush1.bf16.msra.mxu0 %v3556
        %3573 = vmatprep.subr.bf16.mxu0 %v3560
        %3574 = vmatpush1.bf16.msra.mxu0 %v3559
        %3575 = vmatprep.subr.bf16.mxu0 0
        %3576 = vmatpush1.bf16.msra.mxu0 0
        %3577 = vmatprep.subr.bf16.mxu0 0
        %3578 = vmatpush1.bf16.msra.mxu0 0
        %3579 = vmatprep.subr.bf16.mxu0 0
        %3580 = vmatpush1.bf16.msra.mxu0 0
        %3581 = vmatprep.subr.bf16.mxu0 0
        %3582 = vmatpush1.bf16.msra.mxu0 0
        %3583 = vmatprep.subr.bf16.mxu0 0
        %3584 = vmatpush1.bf16.msra.mxu0 0
        %3585 = vmatprep.subr.bf16.mxu0 0
        %3586 = vmatpush1.bf16.msra.mxu0 0
        %3587 = vmatprep.subr.bf16.mxu0 0
        %3588 = vmatpush1.bf16.msra.mxu0 0
        %3589 = vmatprep.subr.bf16.mxu0 0
        %3590 = vmatpush1.bf16.msra.mxu0 0
        %3591 = vmatprep.subr.bf16.mxu0 0
        %3592 = vmatpush1.bf16.msra.mxu0 0
        %3593 = vmatprep.subr.bf16.mxu0 0
        %3594 = vmatpush1.bf16.msra.mxu0 0
        %3595 = vmatprep.subr.bf16.mxu0 0
        %3596 = vmatpush1.bf16.msra.mxu0 0
        %3597 = vmatprep.subr.bf16.mxu0 0
        %3598 = vmatpush1.bf16.msra.mxu0 0
        %3599 = vmatprep.subr.bf16.mxu0 0
        %3600 = vmatpush1.bf16.msra.mxu0 0
        %3601 = vmatprep.subr.bf16.mxu0 0
        %3602 = vmatpush1.bf16.msra.mxu0 0
        %3603 = vmatprep.mubr.bf16.mxu0 0
        %3604 = vmatmul.mubr.bf16.gmra.mrb[0].mxu0 %v3569
        %v3605 = vpop.f32.mrb[0].mxu0
        %v3606 = vadd.f32 0.0, %v3605
        %v3607 = vpop.f32.mrb[0].mxu0
        %v3608 = vadd.f32 0.0, %v3607
        %v3609 = vpop.f32.mrb[0].mxu0
        %v3610 = vpop.f32.mrb[0].mxu0
        %3611 = vdwg.mxu0
        %3612 = vmatprep.subr.bf16.mxu0 0
        %3613 = vmatpush1.bf16.msra.mxu0 %v3558
        %3614 = vmatprep.subr.bf16.mxu0 0
        %3615 = vmatpush1.bf16.msra.mxu0 %v3561
        %3616 = vmatprep.subr.bf16.mxu0 0
        %3617 = vmatpush1.bf16.msra.mxu0 0
        %3618 = vmatprep.subr.bf16.mxu0 0
        %3619 = vmatpush1.bf16.msra.mxu0 0
        %3620 = vmatprep.subr.bf16.mxu0 0
        %3621 = vmatpush1.bf16.msra.mxu0 0
        %3622 = vmatprep.subr.bf16.mxu0 0
        %3623 = vmatpush1.bf16.msra.mxu0 0
        %3624 = vmatprep.subr.bf16.mxu0 0
        %3625 = vmatpush1.bf16.msra.mxu0 0
        %3626 = vmatprep.subr.bf16.mxu0 0
        %3627 = vmatpush1.bf16.msra.mxu0 0
        %3628 = vmatprep.subr.bf16.mxu0 0
        %3629 = vmatpush1.bf16.msra.mxu0 0
        %3630 = vmatprep.subr.bf16.mxu0 0
        %3631 = vmatpush1.bf16.msra.mxu0 0
        %3632 = vmatprep.subr.bf16.mxu0 0
        %3633 = vmatpush1.bf16.msra.mxu0 0
        %3634 = vmatprep.subr.bf16.mxu0 0
        %3635 = vmatpush1.bf16.msra.mxu0 0
        %3636 = vmatprep.subr.bf16.mxu0 0
        %3637 = vmatpush1.bf16.msra.mxu0 0
        %3638 = vmatprep.subr.bf16.mxu0 0
        %3639 = vmatpush1.bf16.msra.mxu0 0
        %3640 = vmatprep.subr.bf16.mxu0 0
        %3641 = vmatpush1.bf16.msra.mxu0 0
        %3642 = vmatprep.subr.bf16.mxu0 0
        %3643 = vmatpush1.bf16.msra.mxu0 0
        %3644 = vmatprep.mubr.bf16.mxu0 0
        %3645 = vmatmul.mubr.bf16.gmra.mrb[0].mxu0 %v3569
        %v3646 = vpop.f32.mrb[0].mxu0
        %v3647 = vadd.f32 0.0, %v3646
        %v3648 = vpop.f32.mrb[0].mxu0
        %v3649 = vpop.f32.mrb[0].mxu0
        %v3650 = vpop.f32.mrb[0].mxu0
        %3651 = vdwg.mxu0
        %v3652 = vadd.f32 %v3537, %v3606
        %v3653 = vadd.f32 %v3538, %v3608
        %v3654 = vadd.f32 %v3539, %v3647
        %3656 = vset.pattern.permute.xlu0 0
        %3657 = vperm.xlu0 %3656, %v2603
        %v3658 = vpop.permute.xlu0 %3657
        %v3660 = vadd.f32 %v3652, %v3658
        %v3661 = vadd.f32 %v3653, %v3658
        %v3662 = vadd.f32 %v3654, %v3658
        %v3663 = vadd.f32 %v3660, 3.0
        %v3664 = vadd.f32 %v3661, 3.0
        %v3665 = vadd.f32 %v3662, 3.0
        %v3666 = vmax.f32 %v3663, 0.0
        %v3667 = vmax.f32 %v3664, 0.0
        %v3668 = vmax.f32 %v3665, 0.0
        %v3669 = vmin.f32 %v3666, 6.0
        %v3670 = vmin.f32 %v3667, 6.0
        %v3671 = vmin.f32 %v3668, 6.0
        %v3672 = vmul.f32 %v3660, %v3669
        %v3673 = vmul.f32 %v3661, %v3670
        %v3674 = vmul.f32 %v3662, %v3671
        %v3675 = vmul.f32 %v3672, 0.16666667
        %v3676 = vmul.f32 %v3673, 0.16666667
        %v3677 = vmul.f32 %v3674, 0.16666667
        %v3678 = vmul.f32 %v3675, %v1413
        %v3679 = vmul.f32 %v3676, %v1417
        %v3680 = vmul.f32 %v3677, %v1421
        %v3681 = vpack.c.bf16 %v3678, %v3678
        %v3682 = vpack.c.bf16 %v3679, %v3679
        %v3683 = vpack.c.bf16 %v3680, %v3680
        %3684 = vst [vmem:[#allocation2 + $0x58] sm:$0xf] %v3681
        %3685 = vst [vmem:[#allocation2 + $0x60] sm:$0xf] %v3682
        %3686 = vst [vmem:[#allocation2 + $0x68] sm:$0xf] %v3683
        %s3687 = smul.addr %s2597, 4
        %s3688 = scalar_lea.vmem %s5, %s3687
        %v3689 = vld [vmem:[%s3688] sm:$0xff]
        %v3690 = vld [vmem:[%s3688 + $0x8] sm:$0xf]
        %s3691 = scalar_lea.vmem %s10, %s450
        %v3692 = vld [vmem:[%s3691] sm:$0xff]
        %v3693 = vld [vmem:[#allocation2] sm:$0xff]
        %v3694 = vld [vmem:[#allocation2 + $0x8] sm:$0xff]
        %v3695 = vld [vmem:[#allocation2 + $0x10] sm:$0xff]
        %v3696 = vld [vmem:[#allocation2 + $0x18] sm:$0xff]
        %v3697 = vld [vmem:[#allocation2 + $0x28] sm:$0xff]
        %v3698 = vld [vmem:[#allocation2 + $0x30] sm:$0xff]
        %v3699 = vld [vmem:[#allocation2 + $0x38] sm:$0xff]
        %v3700 = vld [vmem:[#allocation2 + $0x40] sm:$0xff]
        %v3701 = vld [vmem:[#allocation2 + $0x50] sm:$0xf]
        %v3702 = vld [vmem:[#allocation2 + $0x58] sm:$0xf]
        %v3703 = vld [vmem:[#allocation2 + $0x60] sm:$0xf]
        %v3704 = vld [vmem:[#allocation2 + $0x68] sm:$0xf]
        %v3706 = vunpack.c.l.b16 %v3689
        %v3707 = vpack.c.b16 %v3706, %v3706
        %3708 = vrot.lane.b32.xlu0 %v3707, 88
        %v3709 = vpop.permute.xlu0 %3708
        %3722 = vrot.lane.b32.xlu0 %v3693, 18
        %v3723 = vpop.permute.xlu0 %3722
        %3724 = vrot.lane.b32.xlu0 %v3694, 18
        %v3725 = vpop.permute.xlu0 %3724
        %3726 = vrot.lane.b32.xlu0 %v3695, 18
        %v3727 = vpop.permute.xlu0 %3726
        %3728 = vrot.lane.b32.xlu0 %v3696, 18
        %v3729 = vpop.permute.xlu0 %3728
        %3730 = vrot.lane.b32.xlu0 %v3697, 18
        %v3731 = vpop.permute.xlu0 %3730
        %3732 = vrot.lane.b32.xlu0 %v3698, 18
        %v3733 = vpop.permute.xlu0 %3732
        %3734 = vrot.lane.b32.xlu0 %v3699, 18
        %v3735 = vpop.permute.xlu0 %3734
        %3736 = vrot.lane.b32.xlu0 %v3700, 18
        %v3737 = vpop.permute.xlu0 %3736
        %3738 = vrot.lane.b32.xlu0 %v3701, 18
        %v3739 = vpop.permute.xlu0 %3738
        %3740 = vrot.lane.b32.xlu0 %v3702, 18
        %v3741 = vpop.permute.xlu0 %3740
        %3742 = vrot.lane.b32.xlu0 %v3703, 18
        %v3743 = vpop.permute.xlu0 %3742
        %3744 = vrot.lane.b32.xlu0 %v3704, 18
        %v3745 = vpop.permute.xlu0 %3744
        %v3746 = vsel %vm474, %v3723, %v3725
        %v3747 = vsel %vm474, %v3725, %v3727
        %v3748 = vsel %vm474, %v3727, %v3729
        %v3749 = vsel %vm474, %v3731, %v3733
        %v3750 = vsel %vm474, %v3733, %v3735
        %v3751 = vsel %vm474, %v3735, %v3737
        %v3752 = vsel %vm474, %v3739, %v3741
        %v3753 = vsel %vm474, %v3741, %v3743
        %v3754 = vsel %vm474, %v3743, %v3745
        %vm3761 = vcmask 326656
        %v3763 = vsel %vm3761, %v3709, 0
        %v3766 = vsel %vm1489, %v3752, 0
        %v3769 = vsel %vm1489, %v3753, 0
        %v3772 = vsel %vm1489, %v3754, 0
        %3774 = vmatprep.subr.bf16.mxu0 %v3747
        %3775 = vmatpush1.bf16.msra.mxu0 %v3746
        %3776 = vmatprep.subr.bf16.mxu0 %v3750
        %3777 = vmatpush1.bf16.msra.mxu0 %v3749
        %3778 = vmatprep.subr.bf16.mxu0 %v3769
        %3779 = vmatpush1.bf16.msra.mxu0 %v3766
        %3780 = vmatprep.subr.bf16.mxu0 0
        %3781 = vmatpush1.bf16.msra.mxu0 0
        %3782 = vmatprep.subr.bf16.mxu0 0
        %3783 = vmatpush1.bf16.msra.mxu0 0
        %3784 = vmatprep.subr.bf16.mxu0 0
        %3785 = vmatpush1.bf16.msra.mxu0 0
        %3786 = vmatprep.subr.bf16.mxu0 0
        %3787 = vmatpush1.bf16.msra.mxu0 0
        %3788 = vmatprep.subr.bf16.mxu0 0
        %3789 = vmatpush1.bf16.msra.mxu0 0
        %3790 = vmatprep.subr.bf16.mxu0 0
        %3791 = vmatpush1.bf16.msra.mxu0 0
        %3792 = vmatprep.subr.bf16.mxu0 0
        %3793 = vmatpush1.bf16.msra.mxu0 0
        %3794 = vmatprep.subr.bf16.mxu0 0
        %3795 = vmatpush1.bf16.msra.mxu0 0
        %3796 = vmatprep.subr.bf16.mxu0 0
        %3797 = vmatpush1.bf16.msra.mxu0 0
        %3798 = vmatprep.subr.bf16.mxu0 0
        %3799 = vmatpush1.bf16.msra.mxu0 0
        %3800 = vmatprep.subr.bf16.mxu0 0
        %3801 = vmatpush1.bf16.msra.mxu0 0
        %3802 = vmatprep.subr.bf16.mxu0 0
        %3803 = vmatpush1.bf16.msra.mxu0 0
        %3804 = vmatprep.subr.bf16.mxu0 0
        %3805 = vmatpush1.bf16.msra.mxu0 0
        %3806 = vmatprep.mubr.bf16.mxu0 0
        %3807 = vmatmul.mubr.bf16.gmra.mrb[0].mxu0 %v3763
        %v3808 = vpop.f32.mrb[0].mxu0
        %v3809 = vadd.f32 0.0, %v3808
        %v3810 = vpop.f32.mrb[0].mxu0
        %v3811 = vadd.f32 0.0, %v3810
        %v3812 = vpop.f32.mrb[0].mxu0
        %v3813 = vpop.f32.mrb[0].mxu0
        %3814 = vdwg.mxu0
        %3815 = vmatprep.subr.bf16.mxu0 0
        %3816 = vmatpush1.bf16.msra.mxu0 %v3748
        %3817 = vmatprep.subr.bf16.mxu0 0
        %3818 = vmatpush1.bf16.msra.mxu0 %v3751
        %3819 = vmatprep.subr.bf16.mxu0 0
        %3820 = vmatpush1.bf16.msra.mxu0 %v3772
        %3821 = vmatprep.subr.bf16.mxu0 0
        %3822 = vmatpush1.bf16.msra.mxu0 0
        %3823 = vmatprep.subr.bf16.mxu0 0
        %3824 = vmatpush1.bf16.msra.mxu0 0
        %3825 = vmatprep.subr.bf16.mxu0 0
        %3826 = vmatpush1.bf16.msra.mxu0 0
        %3827 = vmatprep.subr.bf16.mxu0 0
        %3828 = vmatpush1.bf16.msra.mxu0 0
        %3829 = vmatprep.subr.bf16.mxu0 0
        %3830 = vmatpush1.bf16.msra.mxu0 0
        %3831 = vmatprep.subr.bf16.mxu0 0
        %3832 = vmatpush1.bf16.msra.mxu0 0
        %3833 = vmatprep.subr.bf16.mxu0 0
        %3834 = vmatpush1.bf16.msra.mxu0 0
        %3835 = vmatprep.subr.bf16.mxu0 0
        %3836 = vmatpush1.bf16.msra.mxu0 0
        %3837 = vmatprep.subr.bf16.mxu0 0
        %3838 = vmatpush1.bf16.msra.mxu0 0
        %3839 = vmatprep.subr.bf16.mxu0 0
        %3840 = vmatpush1.bf16.msra.mxu0 0
        %3841 = vmatprep.subr.bf16.mxu0 0
        %3842 = vmatpush1.bf16.msra.mxu0 0
        %3843 = vmatprep.subr.bf16.mxu0 0
        %3844 = vmatpush1.bf16.msra.mxu0 0
        %3845 = vmatprep.subr.bf16.mxu0 0
        %3846 = vmatpush1.bf16.msra.mxu0 0
        %3847 = vmatprep.mubr.bf16.mxu0 0
        %3848 = vmatmul.mubr.bf16.gmra.mrb[0].mxu0 %v3763
        %v3849 = vpop.f32.mrb[0].mxu0
        %v3850 = vadd.f32 0.0, %v3849
        %v3851 = vpop.f32.mrb[0].mxu0
        %v3852 = vpop.f32.mrb[0].mxu0
        %v3853 = vpop.f32.mrb[0].mxu0
        %3854 = vdwg.mxu0
        %3855 = vrot.lane.b32.xlu0 %v3693, 19
        %v3856 = vpop.permute.xlu0 %3855
        %3857 = vrot.lane.b32.xlu0 %v3694, 19
        %v3858 = vpop.permute.xlu0 %3857
        %3859 = vrot.lane.b32.xlu0 %v3695, 19
        %v3860 = vpop.permute.xlu0 %3859
        %3861 = vrot.lane.b32.xlu0 %v3696, 19
        %v3862 = vpop.permute.xlu0 %3861
        %3863 = vrot.lane.b32.xlu0 %v3697, 19
        %v3864 = vpop.permute.xlu0 %3863
        %3865 = vrot.lane.b32.xlu0 %v3698, 19
        %v3866 = vpop.permute.xlu0 %3865
        %3867 = vrot.lane.b32.xlu0 %v3699, 19
        %v3868 = vpop.permute.xlu0 %3867
        %3869 = vrot.lane.b32.xlu0 %v3700, 19
        %v3870 = vpop.permute.xlu0 %3869
        %3871 = vrot.lane.b32.xlu0 %v3701, 19
        %v3872 = vpop.permute.xlu0 %3871
        %3873 = vrot.lane.b32.xlu0 %v3702, 19
        %v3874 = vpop.permute.xlu0 %3873
        %3875 = vrot.lane.b32.xlu0 %v3703, 19
        %v3876 = vpop.permute.xlu0 %3875
        %3877 = vrot.lane.b32.xlu0 %v3704, 19
        %v3878 = vpop.permute.xlu0 %3877
        %v3879 = vsel %vm574, %v3856, %v3858
        %v3880 = vsel %vm574, %v3858, %v3860
        %v3881 = vsel %vm574, %v3860, %v3862
        %v3882 = vsel %vm574, %v3864, %v3866
        %v3883 = vsel %vm574, %v3866, %v3868
        %v3884 = vsel %vm574, %v3868, %v3870
        %v3885 = vsel %vm574, %v3872, %v3874
        %v3886 = vsel %vm574, %v3874, %v3876
        %v3887 = vsel %vm574, %v3876, %v3878
        %v3895 = vsel %vm3761, %v3689, 0
        %v3898 = vsel %vm1489, %v3885, 0
        %v3901 = vsel %vm1489, %v3886, 0
        %v3904 = vsel %vm1489, %v3887, 0
        %3906 = vmatprep.subr.bf16.mxu0 %v3880
        %3907 = vmatpush1.bf16.msra.mxu0 %v3879
        %3908 = vmatprep.subr.bf16.mxu0 %v3883
        %3909 = vmatpush1.bf16.msra.mxu0 %v3882
        %3910 = vmatprep.subr.bf16.mxu0 %v3901
        %3911 = vmatpush1.bf16.msra.mxu0 %v3898
        %3912 = vmatprep.subr.bf16.mxu0 0
        %3913 = vmatpush1.bf16.msra.mxu0 0
        %3914 = vmatprep.subr.bf16.mxu0 0
        %3915 = vmatpush1.bf16.msra.mxu0 0
        %3916 = vmatprep.subr.bf16.mxu0 0
        %3917 = vmatpush1.bf16.msra.mxu0 0
        %3918 = vmatprep.subr.bf16.mxu0 0
        %3919 = vmatpush1.bf16.msra.mxu0 0
        %3920 = vmatprep.subr.bf16.mxu0 0
        %3921 = vmatpush1.bf16.msra.mxu0 0
        %3922 = vmatprep.subr.bf16.mxu0 0
        %3923 = vmatpush1.bf16.msra.mxu0 0
        %3924 = vmatprep.subr.bf16.mxu0 0
        %3925 = vmatpush1.bf16.msra.mxu0 0
        %3926 = vmatprep.subr.bf16.mxu0 0
        %3927 = vmatpush1.bf16.msra.mxu0 0
        %3928 = vmatprep.subr.bf16.mxu0 0
        %3929 = vmatpush1.bf16.msra.mxu0 0
        %3930 = vmatprep.subr.bf16.mxu0 0
        %3931 = vmatpush1.bf16.msra.mxu0 0
        %3932 = vmatprep.subr.bf16.mxu0 0
        %3933 = vmatpush1.bf16.msra.mxu0 0
        %3934 = vmatprep.subr.bf16.mxu0 0
        %3935 = vmatpush1.bf16.msra.mxu0 0
        %3936 = vmatprep.subr.bf16.mxu0 0
        %3937 = vmatpush1.bf16.msra.mxu0 0
        %3938 = vmatprep.mubr.bf16.mxu0 0
        %3939 = vmatmul.mubr.bf16.gmra.mrb[0].mxu0 %v3895
        %v3940 = vpop.f32.mrb[0].mxu0
        %v3941 = vadd.f32 %v3809, %v3940
        %v3942 = vpop.f32.mrb[0].mxu0
        %v3943 = vadd.f32 %v3811, %v3942
        %v3944 = vpop.f32.mrb[0].mxu0
        %v3945 = vpop.f32.mrb[0].mxu0
        %3946 = vdwg.mxu0
        %3947 = vmatprep.subr.bf16.mxu0 0
        %3948 = vmatpush1.bf16.msra.mxu0 %v3881
        %3949 = vmatprep.subr.bf16.mxu0 0
        %3950 = vmatpush1.bf16.msra.mxu0 %v3884
        %3951 = vmatprep.subr.bf16.mxu0 0
        %3952 = vmatpush1.bf16.msra.mxu0 %v3904
        %3953 = vmatprep.subr.bf16.mxu0 0
        %3954 = vmatpush1.bf16.msra.mxu0 0
        %3955 = vmatprep.subr.bf16.mxu0 0
        %3956 = vmatpush1.bf16.msra.mxu0 0
        %3957 = vmatprep.subr.bf16.mxu0 0
        %3958 = vmatpush1.bf16.msra.mxu0 0
        %3959 = vmatprep.subr.bf16.mxu0 0
        %3960 = vmatpush1.bf16.msra.mxu0 0
        %3961 = vmatprep.subr.bf16.mxu0 0
        %3962 = vmatpush1.bf16.msra.mxu0 0
        %3963 = vmatprep.subr.bf16.mxu0 0
        %3964 = vmatpush1.bf16.msra.mxu0 0
        %3965 = vmatprep.subr.bf16.mxu0 0
        %3966 = vmatpush1.bf16.msra.mxu0 0
        %3967 = vmatprep.subr.bf16.mxu0 0
        %3968 = vmatpush1.bf16.msra.mxu0 0
        %3969 = vmatprep.subr.bf16.mxu0 0
        %3970 = vmatpush1.bf16.msra.mxu0 0
        %3971 = vmatprep.subr.bf16.mxu0 0
        %3972 = vmatpush1.bf16.msra.mxu0 0
        %3973 = vmatprep.subr.bf16.mxu0 0
        %3974 = vmatpush1.bf16.msra.mxu0 0
        %3975 = vmatprep.subr.bf16.mxu0 0
        %3976 = vmatpush1.bf16.msra.mxu0 0
        %3977 = vmatprep.subr.bf16.mxu0 0
        %3978 = vmatpush1.bf16.msra.mxu0 0
        %3979 = vmatprep.mubr.bf16.mxu0 0
        %3980 = vmatmul.mubr.bf16.gmra.mrb[0].mxu0 %v3895
        %v3981 = vpop.f32.mrb[0].mxu0
        %v3982 = vadd.f32 %v3850, %v3981
        %v3983 = vpop.f32.mrb[0].mxu0
        %v3984 = vpop.f32.mrb[0].mxu0
        %v3985 = vpop.f32.mrb[0].mxu0
        %3986 = vdwg.mxu0
        %3987 = vrot.lane.b32.xlu0 %v3707, 48
        %v3988 = vpop.permute.xlu0 %3987
        %3989 = vrot.lane.b32.xlu0 %v3693, 17
        %v3990 = vpop.permute.xlu0 %3989
        %3991 = vrot.lane.b32.xlu0 %v3694, 17
        %v3992 = vpop.permute.xlu0 %3991
        %3993 = vrot.lane.b32.xlu0 %v3695, 17
        %v3994 = vpop.permute.xlu0 %3993
        %3995 = vrot.lane.b32.xlu0 %v3696, 17
        %v3996 = vpop.permute.xlu0 %3995
        %3997 = vrot.lane.b32.xlu0 %v3697, 17
        %v3998 = vpop.permute.xlu0 %3997
        %3999 = vrot.lane.b32.xlu0 %v3698, 17
        %v4000 = vpop.permute.xlu0 %3999
        %4001 = vrot.lane.b32.xlu0 %v3699, 17
        %v4002 = vpop.permute.xlu0 %4001
        %4003 = vrot.lane.b32.xlu0 %v3700, 17
        %v4004 = vpop.permute.xlu0 %4003
        %4005 = vrot.lane.b32.xlu0 %v3701, 17
        %v4006 = vpop.permute.xlu0 %4005
        %4007 = vrot.lane.b32.xlu0 %v3702, 17
        %v4008 = vpop.permute.xlu0 %4007
        %4009 = vrot.lane.b32.xlu0 %v3703, 17
        %v4010 = vpop.permute.xlu0 %4009
        %4011 = vrot.lane.b32.xlu0 %v3704, 17
        %v4012 = vpop.permute.xlu0 %4011
        %v4013 = vsel %vm675, %v3990, %v3992
        %v4014 = vsel %vm675, %v3992, %v3994
        %v4015 = vsel %vm675, %v3994, %v3996
        %v4016 = vsel %vm675, %v3998, %v4000
        %v4017 = vsel %vm675, %v4000, %v4002
        %v4018 = vsel %vm675, %v4002, %v4004
        %v4019 = vsel %vm675, %v4006, %v4008
        %v4020 = vsel %vm675, %v4008, %v4010
        %v4021 = vsel %vm675, %v4010, %v4012
        %v4029 = vsel %vm3761, %v3988, 0
        %v4032 = vsel %vm1489, %v4019, 0
        %v4035 = vsel %vm1489, %v4020, 0
        %v4038 = vsel %vm1489, %v4021, 0
        %4040 = vmatprep.subr.bf16.mxu0 %v4014
        %4041 = vmatpush1.bf16.msra.mxu0 %v4013
        %4042 = vmatprep.subr.bf16.mxu0 %v4017
        %4043 = vmatpush1.bf16.msra.mxu0 %v4016
        %4044 = vmatprep.subr.bf16.mxu0 %v4035
        %4045 = vmatpush1.bf16.msra.mxu0 %v4032
        %4046 = vmatprep.subr.bf16.mxu0 0
        %4047 = vmatpush1.bf16.msra.mxu0 0
        %4048 = vmatprep.subr.bf16.mxu0 0
        %4049 = vmatpush1.bf16.msra.mxu0 0
        %4050 = vmatprep.subr.bf16.mxu0 0
        %4051 = vmatpush1.bf16.msra.mxu0 0
        %4052 = vmatprep.subr.bf16.mxu0 0
        %4053 = vmatpush1.bf16.msra.mxu0 0
        %4054 = vmatprep.subr.bf16.mxu0 0
        %4055 = vmatpush1.bf16.msra.mxu0 0
        %4056 = vmatprep.subr.bf16.mxu0 0
        %4057 = vmatpush1.bf16.msra.mxu0 0
        %4058 = vmatprep.subr.bf16.mxu0 0
        %4059 = vmatpush1.bf16.msra.mxu0 0
        %4060 = vmatprep.subr.bf16.mxu0 0
        %4061 = vmatpush1.bf16.msra.mxu0 0
        %4062 = vmatprep.subr.bf16.mxu0 0
        %4063 = vmatpush1.bf16.msra.mxu0 0
        %4064 = vmatprep.subr.bf16.mxu0 0
        %4065 = vmatpush1.bf16.msra.mxu0 0
        %4066 = vmatprep.subr.bf16.mxu0 0
        %4067 = vmatpush1.bf16.msra.mxu0 0
        %4068 = vmatprep.subr.bf16.mxu0 0
        %4069 = vmatpush1.bf16.msra.mxu0 0
        %4070 = vmatprep.subr.bf16.mxu0 0
        %4071 = vmatpush1.bf16.msra.mxu0 0
        %4072 = vmatprep.mubr.bf16.mxu0 0
        %4073 = vmatmul.mubr.bf16.gmra.mrb[0].mxu0 %v4029
        %v4074 = vpop.f32.mrb[0].mxu0
        %v4075 = vadd.f32 0.0, %v4074
        %v4076 = vpop.f32.mrb[0].mxu0
        %v4077 = vadd.f32 0.0, %v4076
        %v4078 = vpop.f32.mrb[0].mxu0
        %v4079 = vpop.f32.mrb[0].mxu0
        %4080 = vdwg.mxu0
        %4081 = vmatprep.subr.bf16.mxu0 0
        %4082 = vmatpush1.bf16.msra.mxu0 %v4015
        %4083 = vmatprep.subr.bf16.mxu0 0
        %4084 = vmatpush1.bf16.msra.mxu0 %v4018
        %4085 = vmatprep.subr.bf16.mxu0 0
        %4086 = vmatpush1.bf16.msra.mxu0 %v4038
        %4087 = vmatprep.subr.bf16.mxu0 0
        %4088 = vmatpush1.bf16.msra.mxu0 0
        %4089 = vmatprep.subr.bf16.mxu0 0
        %4090 = vmatpush1.bf16.msra.mxu0 0
        %4091 = vmatprep.subr.bf16.mxu0 0
        %4092 = vmatpush1.bf16.msra.mxu0 0
        %4093 = vmatprep.subr.bf16.mxu0 0
        %4094 = vmatpush1.bf16.msra.mxu0 0
        %4095 = vmatprep.subr.bf16.mxu0 0
        %4096 = vmatpush1.bf16.msra.mxu0 0
        %4097 = vmatprep.subr.bf16.mxu0 0
        %4098 = vmatpush1.bf16.msra.mxu0 0
        %4099 = vmatprep.subr.bf16.mxu0 0
        %4100 = vmatpush1.bf16.msra.mxu0 0
        %4101 = vmatprep.subr.bf16.mxu0 0
        %4102 = vmatpush1.bf16.msra.mxu0 0
        %4103 = vmatprep.subr.bf16.mxu0 0
        %4104 = vmatpush1.bf16.msra.mxu0 0
        %4105 = vmatprep.subr.bf16.mxu0 0
        %4106 = vmatpush1.bf16.msra.mxu0 0
        %4107 = vmatprep.subr.bf16.mxu0 0
        %4108 = vmatpush1.bf16.msra.mxu0 0
        %4109 = vmatprep.subr.bf16.mxu0 0
        %4110 = vmatpush1.bf16.msra.mxu0 0
        %4111 = vmatprep.subr.bf16.mxu0 0
        %4112 = vmatpush1.bf16.msra.mxu0 0
        %4113 = vmatprep.mubr.bf16.mxu0 0
        %4114 = vmatmul.mubr.bf16.gmra.mrb[0].mxu0 %v4029
        %v4115 = vpop.f32.mrb[0].mxu0
        %v4116 = vadd.f32 0.0, %v4115
        %v4117 = vpop.f32.mrb[0].mxu0
        %v4118 = vpop.f32.mrb[0].mxu0
        %v4119 = vpop.f32.mrb[0].mxu0
        %4120 = vdwg.mxu0
        %v4121 = vadd.f32 %v3941, %v4075
        %v4122 = vadd.f32 %v3943, %v4077
        %v4123 = vadd.f32 %v3982, %v4116
        %v4124 = vunpack.c.h.b16 %v3689
        %v4125 = vpack.c.b16 %v4124, %v4124
        %4126 = vrot.lane.b32.xlu0 %v3707, 8
        %v4127 = vpop.permute.xlu0 %4126
        %4128 = vrot.lane.b32.xlu0 %v4125, 8
        %v4129 = vpop.permute.xlu0 %4128
        %v4130 = vsel %vm2056, %v4127, %v4129
        %4131 = vrot.lane.b32.xlu0 %v3693, 1
        %v4132 = vpop.permute.xlu0 %4131
        %4133 = vrot.lane.b32.xlu0 %v3694, 1
        %v4134 = vpop.permute.xlu0 %4133
        %4135 = vrot.lane.b32.xlu0 %v3695, 1
        %v4136 = vpop.permute.xlu0 %4135
        %4137 = vrot.lane.b32.xlu0 %v3696, 1
        %v4138 = vpop.permute.xlu0 %4137
        %4139 = vrot.lane.b32.xlu0 %v3697, 1
        %v4140 = vpop.permute.xlu0 %4139
        %4141 = vrot.lane.b32.xlu0 %v3698, 1
        %v4142 = vpop.permute.xlu0 %4141
        %4143 = vrot.lane.b32.xlu0 %v3699, 1
        %v4144 = vpop.permute.xlu0 %4143
        %4145 = vrot.lane.b32.xlu0 %v3700, 1
        %v4146 = vpop.permute.xlu0 %4145
        %4147 = vrot.lane.b32.xlu0 %v3701, 1
        %v4148 = vpop.permute.xlu0 %4147
        %4149 = vrot.lane.b32.xlu0 %v3702, 1
        %v4150 = vpop.permute.xlu0 %4149
        %4151 = vrot.lane.b32.xlu0 %v3703, 1
        %v4152 = vpop.permute.xlu0 %4151
        %4153 = vrot.lane.b32.xlu0 %v3704, 1
        %v4154 = vpop.permute.xlu0 %4153
        %v4155 = vsel %vm779, %v4132, %v4134
        %v4156 = vsel %vm779, %v4134, %v4136
        %v4157 = vsel %vm779, %v4136, %v4138
        %v4158 = vsel %vm779, %v4140, %v4142
        %v4159 = vsel %vm779, %v4142, %v4144
        %v4160 = vsel %vm779, %v4144, %v4146
        %v4161 = vsel %vm779, %v4148, %v4150
        %v4162 = vsel %vm779, %v4150, %v4152
        %v4163 = vsel %vm779, %v4152, %v4154
        %v4171 = vsel %vm3761, %v4130, 0
        %v4174 = vsel %vm1489, %v4161, 0
        %v4177 = vsel %vm1489, %v4162, 0
        %v4180 = vsel %vm1489, %v4163, 0
        %4182 = vmatprep.subr.bf16.mxu0 %v4156
        %4183 = vmatpush1.bf16.msra.mxu0 %v4155
        %4184 = vmatprep.subr.bf16.mxu0 %v4159
        %4185 = vmatpush1.bf16.msra.mxu0 %v4158
        %4186 = vmatprep.subr.bf16.mxu0 %v4177
        %4187 = vmatpush1.bf16.msra.mxu0 %v4174
        %4188 = vmatprep.subr.bf16.mxu0 0
        %4189 = vmatpush1.bf16.msra.mxu0 0
        %4190 = vmatprep.subr.bf16.mxu0 0
        %4191 = vmatpush1.bf16.msra.mxu0 0
        %4192 = vmatprep.subr.bf16.mxu0 0
        %4193 = vmatpush1.bf16.msra.mxu0 0
        %4194 = vmatprep.subr.bf16.mxu0 0
        %4195 = vmatpush1.bf16.msra.mxu0 0
        %4196 = vmatprep.subr.bf16.mxu0 0
        %4197 = vmatpush1.bf16.msra.mxu0 0
        %4198 = vmatprep.subr.bf16.mxu0 0
        %4199 = vmatpush1.bf16.msra.mxu0 0
        %4200 = vmatprep.subr.bf16.mxu0 0
        %4201 = vmatpush1.bf16.msra.mxu0 0
        %4202 = vmatprep.subr.bf16.mxu0 0
        %4203 = vmatpush1.bf16.msra.mxu0 0
        %4204 = vmatprep.subr.bf16.mxu0 0
        %4205 = vmatpush1.bf16.msra.mxu0 0
        %4206 = vmatprep.subr.bf16.mxu0 0
        %4207 = vmatpush1.bf16.msra.mxu0 0
        %4208 = vmatprep.subr.bf16.mxu0 0
        %4209 = vmatpush1.bf16.msra.mxu0 0
        %4210 = vmatprep.subr.bf16.mxu0 0
        %4211 = vmatpush1.bf16.msra.mxu0 0
        %4212 = vmatprep.subr.bf16.mxu0 0
        %4213 = vmatpush1.bf16.msra.mxu0 0
        %4214 = vmatprep.mubr.bf16.mxu0 0
        %4215 = vmatmul.mubr.bf16.gmra.mrb[0].mxu0 %v4171
        %v4216 = vpop.f32.mrb[0].mxu0
        %v4217 = vadd.f32 0.0, %v4216
        %v4218 = vpop.f32.mrb[0].mxu0
        %v4219 = vadd.f32 0.0, %v4218
        %v4220 = vpop.f32.mrb[0].mxu0
        %v4221 = vpop.f32.mrb[0].mxu0
        %4222 = vdwg.mxu0
        %4223 = vmatprep.subr.bf16.mxu0 0
        %4224 = vmatpush1.bf16.msra.mxu0 %v4157
        %4225 = vmatprep.subr.bf16.mxu0 0
        %4226 = vmatpush1.bf16.msra.mxu0 %v4160
        %4227 = vmatprep.subr.bf16.mxu0 0
        %4228 = vmatpush1.bf16.msra.mxu0 %v4180
        %4229 = vmatprep.subr.bf16.mxu0 0
        %4230 = vmatpush1.bf16.msra.mxu0 0
        %4231 = vmatprep.subr.bf16.mxu0 0
        %4232 = vmatpush1.bf16.msra.mxu0 0
        %4233 = vmatprep.subr.bf16.mxu0 0
        %4234 = vmatpush1.bf16.msra.mxu0 0
        %4235 = vmatprep.subr.bf16.mxu0 0
        %4236 = vmatpush1.bf16.msra.mxu0 0
        %4237 = vmatprep.subr.bf16.mxu0 0
        %4238 = vmatpush1.bf16.msra.mxu0 0
        %4239 = vmatprep.subr.bf16.mxu0 0
        %4240 = vmatpush1.bf16.msra.mxu0 0
        %4241 = vmatprep.subr.bf16.mxu0 0
        %4242 = vmatpush1.bf16.msra.mxu0 0
        %4243 = vmatprep.subr.bf16.mxu0 0
        %4244 = vmatpush1.bf16.msra.mxu0 0
        %4245 = vmatprep.subr.bf16.mxu0 0
        %4246 = vmatpush1.bf16.msra.mxu0 0
        %4247 = vmatprep.subr.bf16.mxu0 0
        %4248 = vmatpush1.bf16.msra.mxu0 0
        %4249 = vmatprep.subr.bf16.mxu0 0
        %4250 = vmatpush1.bf16.msra.mxu0 0
        %4251 = vmatprep.subr.bf16.mxu0 0
        %4252 = vmatpush1.bf16.msra.mxu0 0
        %4253 = vmatprep.subr.bf16.mxu0 0
        %4254 = vmatpush1.bf16.msra.mxu0 0
        %4255 = vmatprep.mubr.bf16.mxu0 0
        %4256 = vmatmul.mubr.bf16.gmra.mrb[0].mxu0 %v4171
        %v4257 = vpop.f32.mrb[0].mxu0
        %v4258 = vadd.f32 0.0, %v4257
        %v4259 = vpop.f32.mrb[0].mxu0
        %v4260 = vpop.f32.mrb[0].mxu0
        %v4261 = vpop.f32.mrb[0].mxu0
        %4262 = vdwg.mxu0
        %v4263 = vadd.f32 %v4121, %v4217
        %v4264 = vadd.f32 %v4122, %v4219
        %v4265 = vadd.f32 %v4123, %v4258
        %4266 = vrot.lane.b32.xlu0 %v4125, 96
        %v4267 = vpop.permute.xlu0 %4266
        %v4269 = vsel %vm3761, %v4267, 0
        %v4272 = vsel %vm1489, %v3702, 0
        %v4275 = vsel %vm1489, %v3703, 0
        %v4278 = vsel %vm1489, %v3704, 0
        %4280 = vmatprep.subr.bf16.mxu0 %v3695
        %4281 = vmatpush1.bf16.msra.mxu0 %v3694
        %4282 = vmatprep.subr.bf16.mxu0 %v3699
        %4283 = vmatpush1.bf16.msra.mxu0 %v3698
        %4284 = vmatprep.subr.bf16.mxu0 %v4275
        %4285 = vmatpush1.bf16.msra.mxu0 %v4272
        %4286 = vmatprep.subr.bf16.mxu0 0
        %4287 = vmatpush1.bf16.msra.mxu0 0
        %4288 = vmatprep.subr.bf16.mxu0 0
        %4289 = vmatpush1.bf16.msra.mxu0 0
        %4290 = vmatprep.subr.bf16.mxu0 0
        %4291 = vmatpush1.bf16.msra.mxu0 0
        %4292 = vmatprep.subr.bf16.mxu0 0
        %4293 = vmatpush1.bf16.msra.mxu0 0
        %4294 = vmatprep.subr.bf16.mxu0 0
        %4295 = vmatpush1.bf16.msra.mxu0 0
        %4296 = vmatprep.subr.bf16.mxu0 0
        %4297 = vmatpush1.bf16.msra.mxu0 0
        %4298 = vmatprep.subr.bf16.mxu0 0
        %4299 = vmatpush1.bf16.msra.mxu0 0
        %4300 = vmatprep.subr.bf16.mxu0 0
        %4301 = vmatpush1.bf16.msra.mxu0 0
        %4302 = vmatprep.subr.bf16.mxu0 0
        %4303 = vmatpush1.bf16.msra.mxu0 0
        %4304 = vmatprep.subr.bf16.mxu0 0
        %4305 = vmatpush1.bf16.msra.mxu0 0
        %4306 = vmatprep.subr.bf16.mxu0 0
        %4307 = vmatpush1.bf16.msra.mxu0 0
        %4308 = vmatprep.subr.bf16.mxu0 0
        %4309 = vmatpush1.bf16.msra.mxu0 0
        %4310 = vmatprep.subr.bf16.mxu0 0
        %4311 = vmatpush1.bf16.msra.mxu0 0
        %4312 = vmatprep.mubr.bf16.mxu0 0
        %4313 = vmatmul.mubr.bf16.gmra.mrb[0].mxu0 %v4269
        %v4314 = vpop.f32.mrb[0].mxu0
        %v4315 = vadd.f32 0.0, %v4314
        %v4316 = vpop.f32.mrb[0].mxu0
        %v4317 = vadd.f32 0.0, %v4316
        %v4318 = vpop.f32.mrb[0].mxu0
        %v4319 = vpop.f32.mrb[0].mxu0
        %4320 = vdwg.mxu0
        %4321 = vmatprep.subr.bf16.mxu0 0
        %4322 = vmatpush1.bf16.msra.mxu0 %v3696
        %4323 = vmatprep.subr.bf16.mxu0 0
        %4324 = vmatpush1.bf16.msra.mxu0 %v3700
        %4325 = vmatprep.subr.bf16.mxu0 0
        %4326 = vmatpush1.bf16.msra.mxu0 %v4278
        %4327 = vmatprep.subr.bf16.mxu0 0
        %4328 = vmatpush1.bf16.msra.mxu0 0
        %4329 = vmatprep.subr.bf16.mxu0 0
        %4330 = vmatpush1.bf16.msra.mxu0 0
        %4331 = vmatprep.subr.bf16.mxu0 0
        %4332 = vmatpush1.bf16.msra.mxu0 0
        %4333 = vmatprep.subr.bf16.mxu0 0
        %4334 = vmatpush1.bf16.msra.mxu0 0
        %4335 = vmatprep.subr.bf16.mxu0 0
        %4336 = vmatpush1.bf16.msra.mxu0 0
        %4337 = vmatprep.subr.bf16.mxu0 0
        %4338 = vmatpush1.bf16.msra.mxu0 0
        %4339 = vmatprep.subr.bf16.mxu0 0
        %4340 = vmatpush1.bf16.msra.mxu0 0
        %4341 = vmatprep.subr.bf16.mxu0 0
        %4342 = vmatpush1.bf16.msra.mxu0 0
        %4343 = vmatprep.subr.bf16.mxu0 0
        %4344 = vmatpush1.bf16.msra.mxu0 0
        %4345 = vmatprep.subr.bf16.mxu0 0
        %4346 = vmatpush1.bf16.msra.mxu0 0
        %4347 = vmatprep.subr.bf16.mxu0 0
        %4348 = vmatpush1.bf16.msra.mxu0 0
        %4349 = vmatprep.subr.bf16.mxu0 0
        %4350 = vmatpush1.bf16.msra.mxu0 0
        %4351 = vmatprep.subr.bf16.mxu0 0
        %4352 = vmatpush1.bf16.msra.mxu0 0
        %4353 = vmatprep.mubr.bf16.mxu0 0
        %4354 = vmatmul.mubr.bf16.gmra.mrb[0].mxu0 %v4269
        %v4355 = vpop.f32.mrb[0].mxu0
        %v4356 = vadd.f32 0.0, %v4355
        %v4357 = vpop.f32.mrb[0].mxu0
        %v4358 = vpop.f32.mrb[0].mxu0
        %v4359 = vpop.f32.mrb[0].mxu0
        %4360 = vdwg.mxu0
        %v4361 = vadd.f32 %v4263, %v4315
        %v4362 = vadd.f32 %v4264, %v4317
        %v4363 = vadd.f32 %v4265, %v4356
        %v4364 = vld [vmem:[#allocation2 + $0x8] sm:$0xff]
        %v4365 = vld [vmem:[#allocation2 + $0x10] sm:$0xff]
        %v4366 = vld [vmem:[#allocation2 + $0x18] sm:$0xff]
        %v4367 = vld [vmem:[#allocation2 + $0x20] sm:$0xff]
        %v4368 = vld [vmem:[#allocation2 + $0x30] sm:$0xff]
        %v4369 = vld [vmem:[#allocation2 + $0x38] sm:$0xff]
        %v4370 = vld [vmem:[#allocation2 + $0x40] sm:$0xff]
        %v4371 = vld [vmem:[#allocation2 + $0x48] sm:$0xff]
        %v4372 = vld [vmem:[#allocation2 + $0x58] sm:$0xf]
        %v4373 = vld [vmem:[#allocation2 + $0x60] sm:$0xf]
        %v4374 = vld [vmem:[#allocation2 + $0x68] sm:$0xf]
        %v4375 = vld [vmem:[#allocation2 + $0x70] sm:$0xf]
        %4376 = vrot.lane.b32.xlu0 %v4125, 56
        %v4377 = vpop.permute.xlu0 %4376
        %4390 = vrot.lane.b32.xlu0 %v4364, 127
        %v4391 = vpop.permute.xlu0 %4390
        %4392 = vrot.lane.b32.xlu0 %v4365, 127
        %v4393 = vpop.permute.xlu0 %4392
        %4394 = vrot.lane.b32.xlu0 %v4366, 127
        %v4395 = vpop.permute.xlu0 %4394
        %4396 = vrot.lane.b32.xlu0 %v4367, 127
        %v4397 = vpop.permute.xlu0 %4396
        %4398 = vrot.lane.b32.xlu0 %v4368, 127
        %v4399 = vpop.permute.xlu0 %4398
        %4400 = vrot.lane.b32.xlu0 %v4369, 127
        %v4401 = vpop.permute.xlu0 %4400
        %4402 = vrot.lane.b32.xlu0 %v4370, 127
        %v4403 = vpop.permute.xlu0 %4402
        %4404 = vrot.lane.b32.xlu0 %v4371, 127
        %v4405 = vpop.permute.xlu0 %4404
        %4406 = vrot.lane.b32.xlu0 %v4372, 127
        %v4407 = vpop.permute.xlu0 %4406
        %4408 = vrot.lane.b32.xlu0 %v4373, 127
        %v4409 = vpop.permute.xlu0 %4408
        %4410 = vrot.lane.b32.xlu0 %v4374, 127
        %v4411 = vpop.permute.xlu0 %4410
        %4412 = vrot.lane.b32.xlu0 %v4375, 127
        %v4413 = vpop.permute.xlu0 %4412
        %v4414 = vsel %vm980, %v4391, %v4393
        %v4415 = vsel %vm980, %v4393, %v4395
        %v4416 = vsel %vm980, %v4395, %v4397
        %v4417 = vsel %vm980, %v4399, %v4401
        %v4418 = vsel %vm980, %v4401, %v4403
        %v4419 = vsel %vm980, %v4403, %v4405
        %v4420 = vsel %vm980, %v4407, %v4409
        %v4421 = vsel %vm980, %v4409, %v4411
        %v4422 = vsel %vm980, %v4411, %v4413
        %v4430 = vsel %vm3761, %v4377, 0
        %v4433 = vsel %vm1489, %v4420, 0
        %v4436 = vsel %vm1489, %v4421, 0
        %v4439 = vsel %vm1489, %v4422, 0
        %4441 = vmatprep.subr.bf16.mxu0 %v4415
        %4442 = vmatpush1.bf16.msra.mxu0 %v4414
        %4443 = vmatprep.subr.bf16.mxu0 %v4418
        %4444 = vmatpush1.bf16.msra.mxu0 %v4417
        %4445 = vmatprep.subr.bf16.mxu0 %v4436
        %4446 = vmatpush1.bf16.msra.mxu0 %v4433
        %4447 = vmatprep.subr.bf16.mxu0 0
        %4448 = vmatpush1.bf16.msra.mxu0 0
        %4449 = vmatprep.subr.bf16.mxu0 0
        %4450 = vmatpush1.bf16.msra.mxu0 0
        %4451 = vmatprep.subr.bf16.mxu0 0
        %4452 = vmatpush1.bf16.msra.mxu0 0
        %4453 = vmatprep.subr.bf16.mxu0 0
        %4454 = vmatpush1.bf16.msra.mxu0 0
        %4455 = vmatprep.subr.bf16.mxu0 0
        %4456 = vmatpush1.bf16.msra.mxu0 0
        %4457 = vmatprep.subr.bf16.mxu0 0
        %4458 = vmatpush1.bf16.msra.mxu0 0
        %4459 = vmatprep.subr.bf16.mxu0 0
        %4460 = vmatpush1.bf16.msra.mxu0 0
        %4461 = vmatprep.subr.bf16.mxu0 0
        %4462 = vmatpush1.bf16.msra.mxu0 0
        %4463 = vmatprep.subr.bf16.mxu0 0
        %4464 = vmatpush1.bf16.msra.mxu0 0
        %4465 = vmatprep.subr.bf16.mxu0 0
        %4466 = vmatpush1.bf16.msra.mxu0 0
        %4467 = vmatprep.subr.bf16.mxu0 0
        %4468 = vmatpush1.bf16.msra.mxu0 0
        %4469 = vmatprep.subr.bf16.mxu0 0
        %4470 = vmatpush1.bf16.msra.mxu0 0
        %4471 = vmatprep.subr.bf16.mxu0 0
        %4472 = vmatpush1.bf16.msra.mxu0 0
        %4473 = vmatprep.mubr.bf16.mxu0 0
        %4474 = vmatmul.mubr.bf16.gmra.mrb[0].mxu0 %v4430
        %v4475 = vpop.f32.mrb[0].mxu0
        %v4476 = vadd.f32 0.0, %v4475
        %v4477 = vpop.f32.mrb[0].mxu0
        %v4478 = vadd.f32 0.0, %v4477
        %v4479 = vpop.f32.mrb[0].mxu0
        %v4480 = vpop.f32.mrb[0].mxu0
        %4481 = vdwg.mxu0
        %4482 = vmatprep.subr.bf16.mxu0 0
        %4483 = vmatpush1.bf16.msra.mxu0 %v4416
        %4484 = vmatprep.subr.bf16.mxu0 0
        %4485 = vmatpush1.bf16.msra.mxu0 %v4419
        %4486 = vmatprep.subr.bf16.mxu0 0
        %4487 = vmatpush1.bf16.msra.mxu0 %v4439
        %4488 = vmatprep.subr.bf16.mxu0 0
        %4489 = vmatpush1.bf16.msra.mxu0 0
        %4490 = vmatprep.subr.bf16.mxu0 0
        %4491 = vmatpush1.bf16.msra.mxu0 0
        %4492 = vmatprep.subr.bf16.mxu0 0
        %4493 = vmatpush1.bf16.msra.mxu0 0
        %4494 = vmatprep.subr.bf16.mxu0 0
        %4495 = vmatpush1.bf16.msra.mxu0 0
        %4496 = vmatprep.subr.bf16.mxu0 0
        %4497 = vmatpush1.bf16.msra.mxu0 0
        %4498 = vmatprep.subr.bf16.mxu0 0
        %4499 = vmatpush1.bf16.msra.mxu0 0
        %4500 = vmatprep.subr.bf16.mxu0 0
        %4501 = vmatpush1.bf16.msra.mxu0 0
        %4502 = vmatprep.subr.bf16.mxu0 0
        %4503 = vmatpush1.bf16.msra.mxu0 0
        %4504 = vmatprep.subr.bf16.mxu0 0
        %4505 = vmatpush1.bf16.msra.mxu0 0
        %4506 = vmatprep.subr.bf16.mxu0 0
        %4507 = vmatpush1.bf16.msra.mxu0 0
        %4508 = vmatprep.subr.bf16.mxu0 0
        %4509 = vmatpush1.bf16.msra.mxu0 0
        %4510 = vmatprep.subr.bf16.mxu0 0
        %4511 = vmatpush1.bf16.msra.mxu0 0
        %4512 = vmatprep.subr.bf16.mxu0 0
        %4513 = vmatpush1.bf16.msra.mxu0 0
        %4514 = vmatprep.mubr.bf16.mxu0 0
        %4515 = vmatmul.mubr.bf16.gmra.mrb[0].mxu0 %v4430
        %v4516 = vpop.f32.mrb[0].mxu0
        %v4517 = vadd.f32 0.0, %v4516
        %v4518 = vpop.f32.mrb[0].mxu0
        %v4519 = vpop.f32.mrb[0].mxu0
        %v4520 = vpop.f32.mrb[0].mxu0
        %4521 = vdwg.mxu0
        %v4522 = vadd.f32 %v4361, %v4476
        %v4523 = vadd.f32 %v4362, %v4478
        %v4524 = vadd.f32 %v4363, %v4517
        %v4526 = vunpack.c.l.b16 %v3690
        %v4527 = vpack.c.b16 %v4526, %v4526
        %4528 = vrot.lane.b32.xlu0 %v4125, 16
        %v4529 = vpop.permute.xlu0 %4528
        %4530 = vrot.lane.b32.xlu0 %v4527, 16
        %v4531 = vpop.permute.xlu0 %4530
        %vm4532 = vcmask 130048
        %v4533 = vsel %vm4532, %v4529, %v4531
        %4534 = vrot.lane.b32.xlu0 %v4364, 111
        %v4535 = vpop.permute.xlu0 %4534
        %4536 = vrot.lane.b32.xlu0 %v4365, 111
        %v4537 = vpop.permute.xlu0 %4536
        %4538 = vrot.lane.b32.xlu0 %v4366, 111
        %v4539 = vpop.permute.xlu0 %4538
        %4540 = vrot.lane.b32.xlu0 %v4367, 111
        %v4541 = vpop.permute.xlu0 %4540
        %4542 = vrot.lane.b32.xlu0 %v4368, 111
        %v4543 = vpop.permute.xlu0 %4542
        %4544 = vrot.lane.b32.xlu0 %v4369, 111
        %v4545 = vpop.permute.xlu0 %4544
        %4546 = vrot.lane.b32.xlu0 %v4370, 111
        %v4547 = vpop.permute.xlu0 %4546
        %4548 = vrot.lane.b32.xlu0 %v4371, 111
        %v4549 = vpop.permute.xlu0 %4548
        %4550 = vrot.lane.b32.xlu0 %v4372, 111
        %v4551 = vpop.permute.xlu0 %4550
        %4552 = vrot.lane.b32.xlu0 %v4373, 111
        %v4553 = vpop.permute.xlu0 %4552
        %4554 = vrot.lane.b32.xlu0 %v4374, 111
        %v4555 = vpop.permute.xlu0 %4554
        %4556 = vrot.lane.b32.xlu0 %v4375, 111
        %v4557 = vpop.permute.xlu0 %4556
        %v4558 = vsel %vm1084, %v4535, %v4537
        %v4559 = vsel %vm1084, %v4537, %v4539
        %v4560 = vsel %vm1084, %v4539, %v4541
        %v4561 = vsel %vm1084, %v4543, %v4545
        %v4562 = vsel %vm1084, %v4545, %v4547
        %v4563 = vsel %vm1084, %v4547, %v4549
        %v4564 = vsel %vm1084, %v4551, %v4553
        %v4565 = vsel %vm1084, %v4553, %v4555
        %v4566 = vsel %vm1084, %v4555, %v4557
        %v4574 = vsel %vm3761, %v4533, 0
        %v4577 = vsel %vm1489, %v4564, 0
        %v4580 = vsel %vm1489, %v4565, 0
        %v4583 = vsel %vm1489, %v4566, 0
        %4585 = vmatprep.subr.bf16.mxu0 %v4559
        %4586 = vmatpush1.bf16.msra.mxu0 %v4558
        %4587 = vmatprep.subr.bf16.mxu0 %v4562
        %4588 = vmatpush1.bf16.msra.mxu0 %v4561
        %4589 = vmatprep.subr.bf16.mxu0 %v4580
        %4590 = vmatpush1.bf16.msra.mxu0 %v4577
        %4591 = vmatprep.subr.bf16.mxu0 0
        %4592 = vmatpush1.bf16.msra.mxu0 0
        %4593 = vmatprep.subr.bf16.mxu0 0
        %4594 = vmatpush1.bf16.msra.mxu0 0
        %4595 = vmatprep.subr.bf16.mxu0 0
        %4596 = vmatpush1.bf16.msra.mxu0 0
        %4597 = vmatprep.subr.bf16.mxu0 0
        %4598 = vmatpush1.bf16.msra.mxu0 0
        %4599 = vmatprep.subr.bf16.mxu0 0
        %4600 = vmatpush1.bf16.msra.mxu0 0
        %4601 = vmatprep.subr.bf16.mxu0 0
        %4602 = vmatpush1.bf16.msra.mxu0 0
        %4603 = vmatprep.subr.bf16.mxu0 0
        %4604 = vmatpush1.bf16.msra.mxu0 0
        %4605 = vmatprep.subr.bf16.mxu0 0
        %4606 = vmatpush1.bf16.msra.mxu0 0
        %4607 = vmatprep.subr.bf16.mxu0 0
        %4608 = vmatpush1.bf16.msra.mxu0 0
        %4609 = vmatprep.subr.bf16.mxu0 0
        %4610 = vmatpush1.bf16.msra.mxu0 0
        %4611 = vmatprep.subr.bf16.mxu0 0
        %4612 = vmatpush1.bf16.msra.mxu0 0
        %4613 = vmatprep.subr.bf16.mxu0 0
        %4614 = vmatpush1.bf16.msra.mxu0 0
        %4615 = vmatprep.subr.bf16.mxu0 0
        %4616 = vmatpush1.bf16.msra.mxu0 0
        %4617 = vmatprep.mubr.bf16.mxu0 0
        %4618 = vmatmul.mubr.bf16.gmra.mrb[0].mxu0 %v4574
        %v4619 = vpop.f32.mrb[0].mxu0
        %v4620 = vadd.f32 0.0, %v4619
        %v4621 = vpop.f32.mrb[0].mxu0
        %v4622 = vadd.f32 0.0, %v4621
        %v4623 = vpop.f32.mrb[0].mxu0
        %v4624 = vpop.f32.mrb[0].mxu0
        %4625 = vdwg.mxu0
        %4626 = vmatprep.subr.bf16.mxu0 0
        %4627 = vmatpush1.bf16.msra.mxu0 %v4560
        %4628 = vmatprep.subr.bf16.mxu0 0
        %4629 = vmatpush1.bf16.msra.mxu0 %v4563
        %4630 = vmatprep.subr.bf16.mxu0 0
        %4631 = vmatpush1.bf16.msra.mxu0 %v4583
        %4632 = vmatprep.subr.bf16.mxu0 0
        %4633 = vmatpush1.bf16.msra.mxu0 0
        %4634 = vmatprep.subr.bf16.mxu0 0
        %4635 = vmatpush1.bf16.msra.mxu0 0
        %4636 = vmatprep.subr.bf16.mxu0 0
        %4637 = vmatpush1.bf16.msra.mxu0 0
        %4638 = vmatprep.subr.bf16.mxu0 0
        %4639 = vmatpush1.bf16.msra.mxu0 0
        %4640 = vmatprep.subr.bf16.mxu0 0
        %4641 = vmatpush1.bf16.msra.mxu0 0
        %4642 = vmatprep.subr.bf16.mxu0 0
        %4643 = vmatpush1.bf16.msra.mxu0 0
        %4644 = vmatprep.subr.bf16.mxu0 0
        %4645 = vmatpush1.bf16.msra.mxu0 0
        %4646 = vmatprep.subr.bf16.mxu0 0
        %4647 = vmatpush1.bf16.msra.mxu0 0
        %4648 = vmatprep.subr.bf16.mxu0 0
        %4649 = vmatpush1.bf16.msra.mxu0 0
        %4650 = vmatprep.subr.bf16.mxu0 0
        %4651 = vmatpush1.bf16.msra.mxu0 0
        %4652 = vmatprep.subr.bf16.mxu0 0
        %4653 = vmatpush1.bf16.msra.mxu0 0
        %4654 = vmatprep.subr.bf16.mxu0 0
        %4655 = vmatpush1.bf16.msra.mxu0 0
        %4656 = vmatprep.subr.bf16.mxu0 0
        %4657 = vmatpush1.bf16.msra.mxu0 0
        %4658 = vmatprep.mubr.bf16.mxu0 0
        %4659 = vmatmul.mubr.bf16.gmra.mrb[0].mxu0 %v4574
        %v4660 = vpop.f32.mrb[0].mxu0
        %v4661 = vadd.f32 0.0, %v4660
        %v4662 = vpop.f32.mrb[0].mxu0
        %v4663 = vpop.f32.mrb[0].mxu0
        %v4664 = vpop.f32.mrb[0].mxu0
        %4665 = vdwg.mxu0
        %v4666 = vadd.f32 %v4522, %v4620
        %v4667 = vadd.f32 %v4523, %v4622
        %v4668 = vadd.f32 %v4524, %v4661
        %4669 = vrot.lane.b32.xlu0 %v4527, 104
        %v4670 = vpop.permute.xlu0 %4669
        %4671 = vrot.lane.b32.xlu0 %v4364, 110
        %v4672 = vpop.permute.xlu0 %4671
        %4673 = vrot.lane.b32.xlu0 %v4365, 110
        %v4674 = vpop.permute.xlu0 %4673
        %4675 = vrot.lane.b32.xlu0 %v4366, 110
        %v4676 = vpop.permute.xlu0 %4675
        %4677 = vrot.lane.b32.xlu0 %v4367, 110
        %v4678 = vpop.permute.xlu0 %4677
        %4679 = vrot.lane.b32.xlu0 %v4368, 110
        %v4680 = vpop.permute.xlu0 %4679
        %4681 = vrot.lane.b32.xlu0 %v4369, 110
        %v4682 = vpop.permute.xlu0 %4681
        %4683 = vrot.lane.b32.xlu0 %v4370, 110
        %v4684 = vpop.permute.xlu0 %4683
        %4685 = vrot.lane.b32.xlu0 %v4371, 110
        %v4686 = vpop.permute.xlu0 %4685
        %4687 = vrot.lane.b32.xlu0 %v4372, 110
        %v4688 = vpop.permute.xlu0 %4687
        %4689 = vrot.lane.b32.xlu0 %v4373, 110
        %v4690 = vpop.permute.xlu0 %4689
        %4691 = vrot.lane.b32.xlu0 %v4374, 110
        %v4692 = vpop.permute.xlu0 %4691
        %4693 = vrot.lane.b32.xlu0 %v4375, 110
        %v4694 = vpop.permute.xlu0 %4693
        %v4695 = vsel %vm1188, %v4672, %v4674
        %v4696 = vsel %vm1188, %v4674, %v4676
        %v4697 = vsel %vm1188, %v4676, %v4678
        %v4698 = vsel %vm1188, %v4680, %v4682
        %v4699 = vsel %vm1188, %v4682, %v4684
        %v4700 = vsel %vm1188, %v4684, %v4686
        %v4701 = vsel %vm1188, %v4688, %v4690
        %v4702 = vsel %vm1188, %v4690, %v4692
        %v4703 = vsel %vm1188, %v4692, %v4694
        %v4711 = vsel %vm3761, %v4670, 0
        %v4714 = vsel %vm1489, %v4701, 0
        %v4717 = vsel %vm1489, %v4702, 0
        %v4720 = vsel %vm1489, %v4703, 0
        %4722 = vmatprep.subr.bf16.mxu0 %v4696
        %4723 = vmatpush1.bf16.msra.mxu0 %v4695
        %4724 = vmatprep.subr.bf16.mxu0 %v4699
        %4725 = vmatpush1.bf16.msra.mxu0 %v4698
        %4726 = vmatprep.subr.bf16.mxu0 %v4717
        %4727 = vmatpush1.bf16.msra.mxu0 %v4714
        %4728 = vmatprep.subr.bf16.mxu0 0
        %4729 = vmatpush1.bf16.msra.mxu0 0
        %4730 = vmatprep.subr.bf16.mxu0 0
        %4731 = vmatpush1.bf16.msra.mxu0 0
        %4732 = vmatprep.subr.bf16.mxu0 0
        %4733 = vmatpush1.bf16.msra.mxu0 0
        %4734 = vmatprep.subr.bf16.mxu0 0
        %4735 = vmatpush1.bf16.msra.mxu0 0
        %4736 = vmatprep.subr.bf16.mxu0 0
        %4737 = vmatpush1.bf16.msra.mxu0 0
        %4738 = vmatprep.subr.bf16.mxu0 0
        %4739 = vmatpush1.bf16.msra.mxu0 0
        %4740 = vmatprep.subr.bf16.mxu0 0
        %4741 = vmatpush1.bf16.msra.mxu0 0
        %4742 = vmatprep.subr.bf16.mxu0 0
        %4743 = vmatpush1.bf16.msra.mxu0 0
        %4744 = vmatprep.subr.bf16.mxu0 0
        %4745 = vmatpush1.bf16.msra.mxu0 0
        %4746 = vmatprep.subr.bf16.mxu0 0
        %4747 = vmatpush1.bf16.msra.mxu0 0
        %4748 = vmatprep.subr.bf16.mxu0 0
        %4749 = vmatpush1.bf16.msra.mxu0 0
        %4750 = vmatprep.subr.bf16.mxu0 0
        %4751 = vmatpush1.bf16.msra.mxu0 0
        %4752 = vmatprep.subr.bf16.mxu0 0
        %4753 = vmatpush1.bf16.msra.mxu0 0
        %4754 = vmatprep.mubr.bf16.mxu0 0
        %4755 = vmatmul.mubr.bf16.gmra.mrb[0].mxu0 %v4711
        %v4756 = vpop.f32.mrb[0].mxu0
        %v4757 = vadd.f32 0.0, %v4756
        %v4758 = vpop.f32.mrb[0].mxu0
        %v4759 = vadd.f32 0.0, %v4758
        %v4760 = vpop.f32.mrb[0].mxu0
        %v4761 = vpop.f32.mrb[0].mxu0
        %4762 = vdwg.mxu0
        %4763 = vmatprep.subr.bf16.mxu0 0
        %4764 = vmatpush1.bf16.msra.mxu0 %v4697
        %4765 = vmatprep.subr.bf16.mxu0 0
        %4766 = vmatpush1.bf16.msra.mxu0 %v4700
        %4767 = vmatprep.subr.bf16.mxu0 0
        %4768 = vmatpush1.bf16.msra.mxu0 %v4720
        %4769 = vmatprep.subr.bf16.mxu0 0
        %4770 = vmatpush1.bf16.msra.mxu0 0
        %4771 = vmatprep.subr.bf16.mxu0 0
        %4772 = vmatpush1.bf16.msra.mxu0 0
        %4773 = vmatprep.subr.bf16.mxu0 0
        %4774 = vmatpush1.bf16.msra.mxu0 0
        %4775 = vmatprep.subr.bf16.mxu0 0
        %4776 = vmatpush1.bf16.msra.mxu0 0
        %4777 = vmatprep.subr.bf16.mxu0 0
        %4778 = vmatpush1.bf16.msra.mxu0 0
        %4779 = vmatprep.subr.bf16.mxu0 0
        %4780 = vmatpush1.bf16.msra.mxu0 0
        %4781 = vmatprep.subr.bf16.mxu0 0
        %4782 = vmatpush1.bf16.msra.mxu0 0
        %4783 = vmatprep.subr.bf16.mxu0 0
        %4784 = vmatpush1.bf16.msra.mxu0 0
        %4785 = vmatprep.subr.bf16.mxu0 0
        %4786 = vmatpush1.bf16.msra.mxu0 0
        %4787 = vmatprep.subr.bf16.mxu0 0
        %4788 = vmatpush1.bf16.msra.mxu0 0
        %4789 = vmatprep.subr.bf16.mxu0 0
        %4790 = vmatpush1.bf16.msra.mxu0 0
        %4791 = vmatprep.subr.bf16.mxu0 0
        %4792 = vmatpush1.bf16.msra.mxu0 0
        %4793 = vmatprep.subr.bf16.mxu0 0
        %4794 = vmatpush1.bf16.msra.mxu0 0
        %4795 = vmatprep.mubr.bf16.mxu0 0
        %4796 = vmatmul.mubr.bf16.gmra.mrb[0].mxu0 %v4711
        %v4797 = vpop.f32.mrb[0].mxu0
        %v4798 = vadd.f32 0.0, %v4797
        %v4799 = vpop.f32.mrb[0].mxu0
        %v4800 = vpop.f32.mrb[0].mxu0
        %v4801 = vpop.f32.mrb[0].mxu0
        %4802 = vdwg.mxu0
        %v4803 = vadd.f32 %v4666, %v4757
        %v4804 = vadd.f32 %v4667, %v4759
        %v4805 = vadd.f32 %v4668, %v4798
        %4806 = vrot.lane.b32.xlu0 %v4527, 64
        %v4807 = vpop.permute.xlu0 %4806
        %4808 = vrot.lane.b32.xlu0 %v4364, 109
        %v4809 = vpop.permute.xlu0 %4808
        %4810 = vrot.lane.b32.xlu0 %v4365, 109
        %v4811 = vpop.permute.xlu0 %4810
        %4812 = vrot.lane.b32.xlu0 %v4366, 109
        %v4813 = vpop.permute.xlu0 %4812
        %4814 = vrot.lane.b32.xlu0 %v4367, 109
        %v4815 = vpop.permute.xlu0 %4814
        %4816 = vrot.lane.b32.xlu0 %v4368, 109
        %v4817 = vpop.permute.xlu0 %4816
        %4818 = vrot.lane.b32.xlu0 %v4369, 109
        %v4819 = vpop.permute.xlu0 %4818
        %4820 = vrot.lane.b32.xlu0 %v4370, 109
        %v4821 = vpop.permute.xlu0 %4820
        %4822 = vrot.lane.b32.xlu0 %v4371, 109
        %v4823 = vpop.permute.xlu0 %4822
        %4824 = vrot.lane.b32.xlu0 %v4372, 109
        %v4825 = vpop.permute.xlu0 %4824
        %4826 = vrot.lane.b32.xlu0 %v4373, 109
        %v4827 = vpop.permute.xlu0 %4826
        %4828 = vrot.lane.b32.xlu0 %v4374, 109
        %v4829 = vpop.permute.xlu0 %4828
        %4830 = vrot.lane.b32.xlu0 %v4375, 109
        %v4831 = vpop.permute.xlu0 %4830
        %v4832 = vsel %vm1292, %v4809, %v4811
        %v4833 = vsel %vm1292, %v4811, %v4813
        %v4834 = vsel %vm1292, %v4813, %v4815
        %v4835 = vsel %vm1292, %v4817, %v4819
        %v4836 = vsel %vm1292, %v4819, %v4821
        %v4837 = vsel %vm1292, %v4821, %v4823
        %v4838 = vsel %vm1292, %v4825, %v4827
        %v4839 = vsel %vm1292, %v4827, %v4829
        %v4840 = vsel %vm1292, %v4829, %v4831
        %v4848 = vsel %vm3761, %v4807, 0
        %v4851 = vsel %vm1489, %v4838, 0
        %v4854 = vsel %vm1489, %v4839, 0
        %v4857 = vsel %vm1489, %v4840, 0
        %4859 = vmatprep.subr.bf16.mxu0 %v4833
        %4860 = vmatpush1.bf16.msra.mxu0 %v4832
        %4861 = vmatprep.subr.bf16.mxu0 %v4836
        %4862 = vmatpush1.bf16.msra.mxu0 %v4835
        %4863 = vmatprep.subr.bf16.mxu0 %v4854
        %4864 = vmatpush1.bf16.msra.mxu0 %v4851
        %4865 = vmatprep.subr.bf16.mxu0 0
        %4866 = vmatpush1.bf16.msra.mxu0 0
        %4867 = vmatprep.subr.bf16.mxu0 0
        %4868 = vmatpush1.bf16.msra.mxu0 0
        %4869 = vmatprep.subr.bf16.mxu0 0
        %4870 = vmatpush1.bf16.msra.mxu0 0
        %4871 = vmatprep.subr.bf16.mxu0 0
        %4872 = vmatpush1.bf16.msra.mxu0 0
        %4873 = vmatprep.subr.bf16.mxu0 0
        %4874 = vmatpush1.bf16.msra.mxu0 0
        %4875 = vmatprep.subr.bf16.mxu0 0
        %4876 = vmatpush1.bf16.msra.mxu0 0
        %4877 = vmatprep.subr.bf16.mxu0 0
        %4878 = vmatpush1.bf16.msra.mxu0 0
        %4879 = vmatprep.subr.bf16.mxu0 0
        %4880 = vmatpush1.bf16.msra.mxu0 0
        %4881 = vmatprep.subr.bf16.mxu0 0
        %4882 = vmatpush1.bf16.msra.mxu0 0
        %4883 = vmatprep.subr.bf16.mxu0 0
        %4884 = vmatpush1.bf16.msra.mxu0 0
        %4885 = vmatprep.subr.bf16.mxu0 0
        %4886 = vmatpush1.bf16.msra.mxu0 0
        %4887 = vmatprep.subr.bf16.mxu0 0
        %4888 = vmatpush1.bf16.msra.mxu0 0
        %4889 = vmatprep.subr.bf16.mxu0 0
        %4890 = vmatpush1.bf16.msra.mxu0 0
        %4891 = vmatprep.mubr.bf16.mxu0 0
        %4892 = vmatmul.mubr.bf16.gmra.mrb[0].mxu0 %v4848
        %v4893 = vpop.f32.mrb[0].mxu0
        %v4894 = vadd.f32 0.0, %v4893
        %v4895 = vpop.f32.mrb[0].mxu0
        %v4896 = vadd.f32 0.0, %v4895
        %v4897 = vpop.f32.mrb[0].mxu0
        %v4898 = vpop.f32.mrb[0].mxu0
        %4899 = vdwg.mxu0
        %4900 = vmatprep.subr.bf16.mxu0 0
        %4901 = vmatpush1.bf16.msra.mxu0 %v4834
        %4902 = vmatprep.subr.bf16.mxu0 0
        %4903 = vmatpush1.bf16.msra.mxu0 %v4837
        %4904 = vmatprep.subr.bf16.mxu0 0
        %4905 = vmatpush1.bf16.msra.mxu0 %v4857
        %4906 = vmatprep.subr.bf16.mxu0 0
        %4907 = vmatpush1.bf16.msra.mxu0 0
        %4908 = vmatprep.subr.bf16.mxu0 0
        %4909 = vmatpush1.bf16.msra.mxu0 0
        %4910 = vmatprep.subr.bf16.mxu0 0
        %4911 = vmatpush1.bf16.msra.mxu0 0
        %4912 = vmatprep.subr.bf16.mxu0 0
        %4913 = vmatpush1.bf16.msra.mxu0 0
        %4914 = vmatprep.subr.bf16.mxu0 0
        %4915 = vmatpush1.bf16.msra.mxu0 0
        %4916 = vmatprep.subr.bf16.mxu0 0
        %4917 = vmatpush1.bf16.msra.mxu0 0
        %4918 = vmatprep.subr.bf16.mxu0 0
        %4919 = vmatpush1.bf16.msra.mxu0 0
        %4920 = vmatprep.subr.bf16.mxu0 0
        %4921 = vmatpush1.bf16.msra.mxu0 0
        %4922 = vmatprep.subr.bf16.mxu0 0
        %4923 = vmatpush1.bf16.msra.mxu0 0
        %4924 = vmatprep.subr.bf16.mxu0 0
        %4925 = vmatpush1.bf16.msra.mxu0 0
        %4926 = vmatprep.subr.bf16.mxu0 0
        %4927 = vmatpush1.bf16.msra.mxu0 0
        %4928 = vmatprep.subr.bf16.mxu0 0
        %4929 = vmatpush1.bf16.msra.mxu0 0
        %4930 = vmatprep.subr.bf16.mxu0 0
        %4931 = vmatpush1.bf16.msra.mxu0 0
        %4932 = vmatprep.mubr.bf16.mxu0 0
        %4933 = vmatmul.mubr.bf16.gmra.mrb[0].mxu0 %v4848
        %v4934 = vpop.f32.mrb[0].mxu0
        %v4935 = vadd.f32 0.0, %v4934
        %v4936 = vpop.f32.mrb[0].mxu0
        %v4937 = vpop.f32.mrb[0].mxu0
        %v4938 = vpop.f32.mrb[0].mxu0
        %4939 = vdwg.mxu0
        %v4940 = vadd.f32 %v4803, %v4894
        %v4941 = vadd.f32 %v4804, %v4896
        %v4942 = vadd.f32 %v4805, %v4935
        %4944 = vset.pattern.permute.xlu0 0
        %4945 = vperm.xlu0 %4944, %v3692
        %v4946 = vpop.permute.xlu0 %4945
        %v4948 = vadd.f32 %v4940, %v4946
        %v4949 = vadd.f32 %v4941, %v4946
        %v4950 = vadd.f32 %v4942, %v4946
        %v4951 = vadd.f32 %v4948, 3.0
        %v4952 = vadd.f32 %v4949, 3.0
        %v4953 = vadd.f32 %v4950, 3.0
        %v4954 = vmax.f32 %v4951, 0.0
        %v4955 = vmax.f32 %v4952, 0.0
        %v4956 = vmax.f32 %v4953, 0.0
        %v4957 = vmin.f32 %v4954, 6.0
        %v4958 = vmin.f32 %v4955, 6.0
        %v4959 = vmin.f32 %v4956, 6.0
        %v4960 = vmul.f32 %v4948, %v4957
        %v4961 = vmul.f32 %v4949, %v4958
        %v4962 = vmul.f32 %v4950, %v4959
        %v4963 = vmul.f32 %v4960, 0.16666667
        %v4964 = vmul.f32 %v4961, 0.16666667
        %v4965 = vmul.f32 %v4962, 0.16666667
        %v4966 = vmul.f32 %v4963, %v1413
        %v4967 = vmul.f32 %v4964, %v1417
        %v4968 = vmul.f32 %v4965, %v1421
        %v4969 = vpack.c.bf16 %v4966, %v4966
        %v4970 = vpack.c.bf16 %v4967, %v4967
        %v4971 = vpack.c.bf16 %v4968, %v4968
        %v4975 = vrot.slane %v4969, 4
        %v4976 = vrot.slane %v4970, 4
        %v4977 = vrot.slane %v4971, 4
        %4981 = vst [vmem:[#allocation2 + $0x58] sm:$0xf0] %v4975
        %4982 = vst [vmem:[#allocation2 + $0x60] sm:$0xf0] %v4976
        %4983 = vst [vmem:[#allocation2 + $0x68] sm:$0xf0] %v4977
        %s4984 = smul.addr %s450, 4
        %s4985 = scalar_lea.vmem %s6, %s4984
        %v4986 = vld [vmem:[%s4985] sm:$0xff]
        %v4987 = vld [vmem:[%s4985 + $0x8] sm:$0xff]
        %v4988 = vld [vmem:[%s4985 + $0x10] sm:$0xff]
        %v4989 = vld [vmem:[%s4985 + $0x18] sm:$0xff]
        %s4990 = smul.u32 %s441, 16
        %s4991 = scalar_lea.vmem %s11, %s4990
        %v4992 = vld [vmem:[%s4991] sm:$0xff]
        %v4993 = vld [vmem:[%s4991 + $0x8] sm:$0xff]
        %v4994 = vld [vmem:[#allocation2] sm:$0xff]
        %v4995 = vld [vmem:[#allocation2 + $0x8] sm:$0xff]
        %v4996 = vld [vmem:[#allocation2 + $0x10] sm:$0xff]
        %v4997 = vld [vmem:[#allocation2 + $0x18] sm:$0xff]
        %v4998 = vld [vmem:[#allocation2 + $0x28] sm:$0xff]
        %v4999 = vld [vmem:[#allocation2 + $0x30] sm:$0xff]
        %v5000 = vld [vmem:[#allocation2 + $0x38] sm:$0xff]
        %v5001 = vld [vmem:[#allocation2 + $0x40] sm:$0xff]
        %v5002 = vld [vmem:[#allocation2 + $0x50] sm:$0xff]
        %v5003 = vld [vmem:[#allocation2 + $0x58] sm:$0xff]
        %v5004 = vld [vmem:[#allocation2 + $0x60] sm:$0xff]
        %v5005 = vld [vmem:[#allocation2 + $0x68] sm:$0xff]
        %v5008 = vunpack.c.l.b16 %v4986
        %v5009 = vunpack.c.l.b16 %v4988
        %v5010 = vpack.c.b16 %v5009, %v5008
        %5011 = vrot.lane.b32.xlu0 %v5010, 80
        %v5012 = vpop.permute.xlu0 %5011
        %5025 = vrot.lane.b32.xlu0 %v4994, 18
        %v5026 = vpop.permute.xlu0 %5025
        %5027 = vrot.lane.b32.xlu0 %v4995, 18
        %v5028 = vpop.permute.xlu0 %5027
        %5029 = vrot.lane.b32.xlu0 %v4996, 18
        %v5030 = vpop.permute.xlu0 %5029
        %5031 = vrot.lane.b32.xlu0 %v4997, 18
        %v5032 = vpop.permute.xlu0 %5031
        %5033 = vrot.lane.b32.xlu0 %v4998, 18
        %v5034 = vpop.permute.xlu0 %5033
        %5035 = vrot.lane.b32.xlu0 %v4999, 18
        %v5036 = vpop.permute.xlu0 %5035
        %5037 = vrot.lane.b32.xlu0 %v5000, 18
        %v5038 = vpop.permute.xlu0 %5037
        %5039 = vrot.lane.b32.xlu0 %v5001, 18
        %v5040 = vpop.permute.xlu0 %5039
        %5041 = vrot.lane.b32.xlu0 %v5002, 18
        %v5042 = vpop.permute.xlu0 %5041
        %5043 = vrot.lane.b32.xlu0 %v5003, 18
        %v5044 = vpop.permute.xlu0 %5043
        %5045 = vrot.lane.b32.xlu0 %v5004, 18
        %v5046 = vpop.permute.xlu0 %5045
        %5047 = vrot.lane.b32.xlu0 %v5005, 18
        %v5048 = vpop.permute.xlu0 %5047
        %v5049 = vsel %vm474, %v5026, %v5028
        %v5050 = vsel %vm474, %v5028, %v5030
        %v5051 = vsel %vm474, %v5030, %v5032
        %v5052 = vsel %vm474, %v5034, %v5036
        %v5053 = vsel %vm474, %v5036, %v5038
        %v5054 = vsel %vm474, %v5038, %v5040
        %v5055 = vsel %vm474, %v5042, %v5044
        %v5056 = vsel %vm474, %v5044, %v5046
        %v5057 = vsel %vm474, %v5046, %v5048
        %vm5067 = vcmask 392192
        %v5069 = vsel %vm5067, %v5012, 0
        %5071 = vmatprep.subr.bf16.mxu0 %v5050
        %5072 = vmatpush1.bf16.msra.mxu0 %v5049
        %5073 = vmatprep.subr.bf16.mxu0 %v5053
        %5074 = vmatpush1.bf16.msra.mxu0 %v5052
        %5075 = vmatprep.subr.bf16.mxu0 %v5056
        %5076 = vmatpush1.bf16.msra.mxu0 %v5055
        %5077 = vmatprep.subr.bf16.mxu0 0
        %5078 = vmatpush1.bf16.msra.mxu0 0
        %5079 = vmatprep.subr.bf16.mxu0 0
        %5080 = vmatpush1.bf16.msra.mxu0 0
        %5081 = vmatprep.subr.bf16.mxu0 0
        %5082 = vmatpush1.bf16.msra.mxu0 0
        %5083 = vmatprep.subr.bf16.mxu0 0
        %5084 = vmatpush1.bf16.msra.mxu0 0
        %5085 = vmatprep.subr.bf16.mxu0 0
        %5086 = vmatpush1.bf16.msra.mxu0 0
        %5087 = vmatprep.subr.bf16.mxu0 0
        %5088 = vmatpush1.bf16.msra.mxu0 0
        %5089 = vmatprep.subr.bf16.mxu0 0
        %5090 = vmatpush1.bf16.msra.mxu0 0
        %5091 = vmatprep.subr.bf16.mxu0 0
        %5092 = vmatpush1.bf16.msra.mxu0 0
        %5093 = vmatprep.subr.bf16.mxu0 0
        %5094 = vmatpush1.bf16.msra.mxu0 0
        %5095 = vmatprep.subr.bf16.mxu0 0
        %5096 = vmatpush1.bf16.msra.mxu0 0
        %5097 = vmatprep.subr.bf16.mxu0 0
        %5098 = vmatpush1.bf16.msra.mxu0 0
        %5099 = vmatprep.subr.bf16.mxu0 0
        %5100 = vmatpush1.bf16.msra.mxu0 0
        %5101 = vmatprep.subr.bf16.mxu0 0
        %5102 = vmatpush1.bf16.msra.mxu0 0
        %5103 = vmatprep.mubr.bf16.mxu0 0
        %5104 = vmatmul.mubr.bf16.gmra.mrb[0].mxu0 %v5069
        %v5105 = vpop.f32.mrb[0].mxu0
        %v5106 = vadd.f32 0.0, %v5105
        %v5107 = vpop.f32.mrb[0].mxu0
        %v5108 = vadd.f32 0.0, %v5107
        %v5109 = vpop.f32.mrb[0].mxu0
        %v5110 = vadd.f32 0.0, %v5109
        %v5111 = vpop.f32.mrb[0].mxu0
        %v5112 = vadd.f32 0.0, %v5111
        %5113 = vdwg.mxu0
        %5114 = vmatprep.subr.bf16.mxu0 0
        %5115 = vmatpush1.bf16.msra.mxu0 %v5051
        %5116 = vmatprep.subr.bf16.mxu0 0
        %5117 = vmatpush1.bf16.msra.mxu0 %v5054
        %5118 = vmatprep.subr.bf16.mxu0 0
        %5119 = vmatpush1.bf16.msra.mxu0 %v5057
        %5120 = vmatprep.subr.bf16.mxu0 0
        %5121 = vmatpush1.bf16.msra.mxu0 0
        %5122 = vmatprep.subr.bf16.mxu0 0
        %5123 = vmatpush1.bf16.msra.mxu0 0
        %5124 = vmatprep.subr.bf16.mxu0 0
        %5125 = vmatpush1.bf16.msra.mxu0 0
        %5126 = vmatprep.subr.bf16.mxu0 0
        %5127 = vmatpush1.bf16.msra.mxu0 0
        %5128 = vmatprep.subr.bf16.mxu0 0
        %5129 = vmatpush1.bf16.msra.mxu0 0
        %5130 = vmatprep.subr.bf16.mxu0 0
        %5131 = vmatpush1.bf16.msra.mxu0 0
        %5132 = vmatprep.subr.bf16.mxu0 0
        %5133 = vmatpush1.bf16.msra.mxu0 0
        %5134 = vmatprep.subr.bf16.mxu0 0
        %5135 = vmatpush1.bf16.msra.mxu0 0
        %5136 = vmatprep.subr.bf16.mxu0 0
        %5137 = vmatpush1.bf16.msra.mxu0 0
        %5138 = vmatprep.subr.bf16.mxu0 0
        %5139 = vmatpush1.bf16.msra.mxu0 0
        %5140 = vmatprep.subr.bf16.mxu0 0
        %5141 = vmatpush1.bf16.msra.mxu0 0
        %5142 = vmatprep.subr.bf16.mxu0 0
        %5143 = vmatpush1.bf16.msra.mxu0 0
        %5144 = vmatprep.subr.bf16.mxu0 0
        %5145 = vmatpush1.bf16.msra.mxu0 0
        %5146 = vmatprep.mubr.bf16.mxu0 0
        %5147 = vmatmul.mubr.bf16.gmra.mrb[0].mxu0 %v5069
        %v5148 = vpop.f32.mrb[0].mxu0
        %v5149 = vadd.f32 0.0, %v5148
        %v5150 = vpop.f32.mrb[0].mxu0
        %v5151 = vpop.f32.mrb[0].mxu0
        %v5152 = vadd.f32 0.0, %v5151
        %v5153 = vpop.f32.mrb[0].mxu0
        %5154 = vdwg.mxu0
        %5155 = vrot.lane.b32.xlu0 %v4994, 19
        %v5156 = vpop.permute.xlu0 %5155
        %5157 = vrot.lane.b32.xlu0 %v4995, 19
        %v5158 = vpop.permute.xlu0 %5157
        %5159 = vrot.lane.b32.xlu0 %v4996, 19
        %v5160 = vpop.permute.xlu0 %5159
        %5161 = vrot.lane.b32.xlu0 %v4997, 19
        %v5162 = vpop.permute.xlu0 %5161
        %5163 = vrot.lane.b32.xlu0 %v4998, 19
        %v5164 = vpop.permute.xlu0 %5163
        %5165 = vrot.lane.b32.xlu0 %v4999, 19
        %v5166 = vpop.permute.xlu0 %5165
        %5167 = vrot.lane.b32.xlu0 %v5000, 19
        %v5168 = vpop.permute.xlu0 %5167
        %5169 = vrot.lane.b32.xlu0 %v5001, 19
        %v5170 = vpop.permute.xlu0 %5169
        %5171 = vrot.lane.b32.xlu0 %v5002, 19
        %v5172 = vpop.permute.xlu0 %5171
        %5173 = vrot.lane.b32.xlu0 %v5003, 19
        %v5174 = vpop.permute.xlu0 %5173
        %5175 = vrot.lane.b32.xlu0 %v5004, 19
        %v5176 = vpop.permute.xlu0 %5175
        %5177 = vrot.lane.b32.xlu0 %v5005, 19
        %v5178 = vpop.permute.xlu0 %5177
        %v5179 = vsel %vm574, %v5156, %v5158
        %v5180 = vsel %vm574, %v5158, %v5160
        %v5181 = vsel %vm574, %v5160, %v5162
        %v5182 = vsel %vm574, %v5164, %v5166
        %v5183 = vsel %vm574, %v5166, %v5168
        %v5184 = vsel %vm574, %v5168, %v5170
        %v5185 = vsel %vm574, %v5172, %v5174
        %v5186 = vsel %vm574, %v5174, %v5176
        %v5187 = vsel %vm574, %v5176, %v5178
        %v5198 = vsel %vm5067, %v5010, 0
        %5200 = vmatprep.subr.bf16.mxu0 %v5180
        %5201 = vmatpush1.bf16.msra.mxu0 %v5179
        %5202 = vmatprep.subr.bf16.mxu0 %v5183
        %5203 = vmatpush1.bf16.msra.mxu0 %v5182
        %5204 = vmatprep.subr.bf16.mxu0 %v5186
        %5205 = vmatpush1.bf16.msra.mxu0 %v5185
        %5206 = vmatprep.subr.bf16.mxu0 0
        %5207 = vmatpush1.bf16.msra.mxu0 0
        %5208 = vmatprep.subr.bf16.mxu0 0
        %5209 = vmatpush1.bf16.msra.mxu0 0
        %5210 = vmatprep.subr.bf16.mxu0 0
        %5211 = vmatpush1.bf16.msra.mxu0 0
        %5212 = vmatprep.subr.bf16.mxu0 0
        %5213 = vmatpush1.bf16.msra.mxu0 0
        %5214 = vmatprep.subr.bf16.mxu0 0
        %5215 = vmatpush1.bf16.msra.mxu0 0
        %5216 = vmatprep.subr.bf16.mxu0 0
        %5217 = vmatpush1.bf16.msra.mxu0 0
        %5218 = vmatprep.subr.bf16.mxu0 0
        %5219 = vmatpush1.bf16.msra.mxu0 0
        %5220 = vmatprep.subr.bf16.mxu0 0
        %5221 = vmatpush1.bf16.msra.mxu0 0
        %5222 = vmatprep.subr.bf16.mxu0 0
        %5223 = vmatpush1.bf16.msra.mxu0 0
        %5224 = vmatprep.subr.bf16.mxu0 0
        %5225 = vmatpush1.bf16.msra.mxu0 0
        %5226 = vmatprep.subr.bf16.mxu0 0
        %5227 = vmatpush1.bf16.msra.mxu0 0
        %5228 = vmatprep.subr.bf16.mxu0 0
        %5229 = vmatpush1.bf16.msra.mxu0 0
        %5230 = vmatprep.subr.bf16.mxu0 0
        %5231 = vmatpush1.bf16.msra.mxu0 0
        %5232 = vmatprep.mubr.bf16.mxu0 0
        %5233 = vmatmul.mubr.bf16.gmra.mrb[0].mxu0 %v5198
        %v5234 = vpop.f32.mrb[0].mxu0
        %v5235 = vadd.f32 %v5106, %v5234
        %v5236 = vpop.f32.mrb[0].mxu0
        %v5237 = vadd.f32 %v5108, %v5236
        %v5238 = vpop.f32.mrb[0].mxu0
        %v5239 = vadd.f32 %v5110, %v5238
        %v5240 = vpop.f32.mrb[0].mxu0
        %v5241 = vadd.f32 %v5112, %v5240
        %5242 = vdwg.mxu0
        %5243 = vmatprep.subr.bf16.mxu0 0
        %5244 = vmatpush1.bf16.msra.mxu0 %v5181
        %5245 = vmatprep.subr.bf16.mxu0 0
        %5246 = vmatpush1.bf16.msra.mxu0 %v5184
        %5247 = vmatprep.subr.bf16.mxu0 0
        %5248 = vmatpush1.bf16.msra.mxu0 %v5187
        %5249 = vmatprep.subr.bf16.mxu0 0
        %5250 = vmatpush1.bf16.msra.mxu0 0
        %5251 = vmatprep.subr.bf16.mxu0 0
        %5252 = vmatpush1.bf16.msra.mxu0 0
        %5253 = vmatprep.subr.bf16.mxu0 0
        %5254 = vmatpush1.bf16.msra.mxu0 0
        %5255 = vmatprep.subr.bf16.mxu0 0
        %5256 = vmatpush1.bf16.msra.mxu0 0
        %5257 = vmatprep.subr.bf16.mxu0 0
        %5258 = vmatpush1.bf16.msra.mxu0 0
        %5259 = vmatprep.subr.bf16.mxu0 0
        %5260 = vmatpush1.bf16.msra.mxu0 0
        %5261 = vmatprep.subr.bf16.mxu0 0
        %5262 = vmatpush1.bf16.msra.mxu0 0
        %5263 = vmatprep.subr.bf16.mxu0 0
        %5264 = vmatpush1.bf16.msra.mxu0 0
        %5265 = vmatprep.subr.bf16.mxu0 0
        %5266 = vmatpush1.bf16.msra.mxu0 0
        %5267 = vmatprep.subr.bf16.mxu0 0
        %5268 = vmatpush1.bf16.msra.mxu0 0
        %5269 = vmatprep.subr.bf16.mxu0 0
        %5270 = vmatpush1.bf16.msra.mxu0 0
        %5271 = vmatprep.subr.bf16.mxu0 0
        %5272 = vmatpush1.bf16.msra.mxu0 0
        %5273 = vmatprep.subr.bf16.mxu0 0
        %5274 = vmatpush1.bf16.msra.mxu0 0
        %5275 = vmatprep.mubr.bf16.mxu0 0
        %5276 = vmatmul.mubr.bf16.gmra.mrb[0].mxu0 %v5198
        %v5277 = vpop.f32.mrb[0].mxu0
        %v5278 = vadd.f32 %v5149, %v5277
        %v5279 = vpop.f32.mrb[0].mxu0
        %v5280 = vpop.f32.mrb[0].mxu0
        %v5281 = vadd.f32 %v5152, %v5280
        %v5282 = vpop.f32.mrb[0].mxu0
        %5283 = vdwg.mxu0
        %v5284 = vunpack.c.h.b16 %v4986
        %v5285 = vunpack.c.h.b16 %v4988
        %v5286 = vpack.c.b16 %v5285, %v5284
        %5287 = vrot.lane.b32.xlu0 %v5010, 32
        %v5288 = vpop.permute.xlu0 %5287
        %5289 = vrot.lane.b32.xlu0 %v5286, 32
        %v5290 = vpop.permute.xlu0 %5289
        %vm5291 = vcmask 261120
        %v5292 = vsel %vm5291, %v5288, %v5290
        %5293 = vrot.lane.b32.xlu0 %v4994, 17
        %v5294 = vpop.permute.xlu0 %5293
        %5295 = vrot.lane.b32.xlu0 %v4995, 17
        %v5296 = vpop.permute.xlu0 %5295
        %5297 = vrot.lane.b32.xlu0 %v4996, 17
        %v5298 = vpop.permute.xlu0 %5297
        %5299 = vrot.lane.b32.xlu0 %v4997, 17
        %v5300 = vpop.permute.xlu0 %5299
        %5301 = vrot.lane.b32.xlu0 %v4998, 17
        %v5302 = vpop.permute.xlu0 %5301
        %5303 = vrot.lane.b32.xlu0 %v4999, 17
        %v5304 = vpop.permute.xlu0 %5303
        %5305 = vrot.lane.b32.xlu0 %v5000, 17
        %v5306 = vpop.permute.xlu0 %5305
        %5307 = vrot.lane.b32.xlu0 %v5001, 17
        %v5308 = vpop.permute.xlu0 %5307
        %5309 = vrot.lane.b32.xlu0 %v5002, 17
        %v5310 = vpop.permute.xlu0 %5309
        %5311 = vrot.lane.b32.xlu0 %v5003, 17
        %v5312 = vpop.permute.xlu0 %5311
        %5313 = vrot.lane.b32.xlu0 %v5004, 17
        %v5314 = vpop.permute.xlu0 %5313
        %5315 = vrot.lane.b32.xlu0 %v5005, 17
        %v5316 = vpop.permute.xlu0 %5315
        %v5317 = vsel %vm675, %v5294, %v5296
        %v5318 = vsel %vm675, %v5296, %v5298
        %v5319 = vsel %vm675, %v5298, %v5300
        %v5320 = vsel %vm675, %v5302, %v5304
        %v5321 = vsel %vm675, %v5304, %v5306
        %v5322 = vsel %vm675, %v5306, %v5308
        %v5323 = vsel %vm675, %v5310, %v5312
        %v5324 = vsel %vm675, %v5312, %v5314
        %v5325 = vsel %vm675, %v5314, %v5316
        %v5336 = vsel %vm5067, %v5292, 0
        %5338 = vmatprep.subr.bf16.mxu0 %v5318
        %5339 = vmatpush1.bf16.msra.mxu0 %v5317
        %5340 = vmatprep.subr.bf16.mxu0 %v5321
        %5341 = vmatpush1.bf16.msra.mxu0 %v5320
        %5342 = vmatprep.subr.bf16.mxu0 %v5324
        %5343 = vmatpush1.bf16.msra.mxu0 %v5323
        %5344 = vmatprep.subr.bf16.mxu0 0
        %5345 = vmatpush1.bf16.msra.mxu0 0
        %5346 = vmatprep.subr.bf16.mxu0 0
        %5347 = vmatpush1.bf16.msra.mxu0 0
        %5348 = vmatprep.subr.bf16.mxu0 0
        %5349 = vmatpush1.bf16.msra.mxu0 0
        %5350 = vmatprep.subr.bf16.mxu0 0
        %5351 = vmatpush1.bf16.msra.mxu0 0
        %5352 = vmatprep.subr.bf16.mxu0 0
        %5353 = vmatpush1.bf16.msra.mxu0 0
        %5354 = vmatprep.subr.bf16.mxu0 0
        %5355 = vmatpush1.bf16.msra.mxu0 0
        %5356 = vmatprep.subr.bf16.mxu0 0
        %5357 = vmatpush1.bf16.msra.mxu0 0
        %5358 = vmatprep.subr.bf16.mxu0 0
        %5359 = vmatpush1.bf16.msra.mxu0 0
        %5360 = vmatprep.subr.bf16.mxu0 0
        %5361 = vmatpush1.bf16.msra.mxu0 0
        %5362 = vmatprep.subr.bf16.mxu0 0
        %5363 = vmatpush1.bf16.msra.mxu0 0
        %5364 = vmatprep.subr.bf16.mxu0 0
        %5365 = vmatpush1.bf16.msra.mxu0 0
        %5366 = vmatprep.subr.bf16.mxu0 0
        %5367 = vmatpush1.bf16.msra.mxu0 0
        %5368 = vmatprep.subr.bf16.mxu0 0
        %5369 = vmatpush1.bf16.msra.mxu0 0
        %5370 = vmatprep.mubr.bf16.mxu0 0
        %5371 = vmatmul.mubr.bf16.gmra.mrb[0].mxu0 %v5336
        %v5372 = vpop.f32.mrb[0].mxu0
        %v5373 = vadd.f32 0.0, %v5372
        %v5374 = vpop.f32.mrb[0].mxu0
        %v5375 = vadd.f32 0.0, %v5374
        %v5376 = vpop.f32.mrb[0].mxu0
        %v5377 = vadd.f32 0.0, %v5376
        %v5378 = vpop.f32.mrb[0].mxu0
        %v5379 = vadd.f32 0.0, %v5378
        %5380 = vdwg.mxu0
        %5381 = vmatprep.subr.bf16.mxu0 0
        %5382 = vmatpush1.bf16.msra.mxu0 %v5319
        %5383 = vmatprep.subr.bf16.mxu0 0
        %5384 = vmatpush1.bf16.msra.mxu0 %v5322
        %5385 = vmatprep.subr.bf16.mxu0 0
        %5386 = vmatpush1.bf16.msra.mxu0 %v5325
        %5387 = vmatprep.subr.bf16.mxu0 0
        %5388 = vmatpush1.bf16.msra.mxu0 0
        %5389 = vmatprep.subr.bf16.mxu0 0
        %5390 = vmatpush1.bf16.msra.mxu0 0
        %5391 = vmatprep.subr.bf16.mxu0 0
        %5392 = vmatpush1.bf16.msra.mxu0 0
        %5393 = vmatprep.subr.bf16.mxu0 0
        %5394 = vmatpush1.bf16.msra.mxu0 0
        %5395 = vmatprep.subr.bf16.mxu0 0
        %5396 = vmatpush1.bf16.msra.mxu0 0
        %5397 = vmatprep.subr.bf16.mxu0 0
        %5398 = vmatpush1.bf16.msra.mxu0 0
        %5399 = vmatprep.subr.bf16.mxu0 0
        %5400 = vmatpush1.bf16.msra.mxu0 0
        %5401 = vmatprep.subr.bf16.mxu0 0
        %5402 = vmatpush1.bf16.msra.mxu0 0
        %5403 = vmatprep.subr.bf16.mxu0 0
        %5404 = vmatpush1.bf16.msra.mxu0 0
        %5405 = vmatprep.subr.bf16.mxu0 0
        %5406 = vmatpush1.bf16.msra.mxu0 0
        %5407 = vmatprep.subr.bf16.mxu0 0
        %5408 = vmatpush1.bf16.msra.mxu0 0
        %5409 = vmatprep.subr.bf16.mxu0 0
        %5410 = vmatpush1.bf16.msra.mxu0 0
        %5411 = vmatprep.subr.bf16.mxu0 0
        %5412 = vmatpush1.bf16.msra.mxu0 0
        %5413 = vmatprep.mubr.bf16.mxu0 0
        %5414 = vmatmul.mubr.bf16.gmra.mrb[0].mxu0 %v5336
        %v5415 = vpop.f32.mrb[0].mxu0
        %v5416 = vadd.f32 0.0, %v5415
        %v5417 = vpop.f32.mrb[0].mxu0
        %v5418 = vpop.f32.mrb[0].mxu0
        %v5419 = vadd.f32 0.0, %v5418
        %v5420 = vpop.f32.mrb[0].mxu0
        %5421 = vdwg.mxu0
        %v5422 = vadd.f32 %v5235, %v5373
        %v5423 = vadd.f32 %v5237, %v5375
        %v5424 = vadd.f32 %v5278, %v5416
        %v5425 = vadd.f32 %v5239, %v5377
        %v5426 = vadd.f32 %v5241, %v5379
        %v5427 = vadd.f32 %v5281, %v5419
        %5428 = vrot.lane.b32.xlu0 %v5286, 112
        %v5429 = vpop.permute.xlu0 %5428
        %5430 = vrot.lane.b32.xlu0 %v4994, 1
        %v5431 = vpop.permute.xlu0 %5430
        %5432 = vrot.lane.b32.xlu0 %v4995, 1
        %v5433 = vpop.permute.xlu0 %5432
        %5434 = vrot.lane.b32.xlu0 %v4996, 1
        %v5435 = vpop.permute.xlu0 %5434
        %5436 = vrot.lane.b32.xlu0 %v4997, 1
        %v5437 = vpop.permute.xlu0 %5436
        %5438 = vrot.lane.b32.xlu0 %v4998, 1
        %v5439 = vpop.permute.xlu0 %5438
        %5440 = vrot.lane.b32.xlu0 %v4999, 1
        %v5441 = vpop.permute.xlu0 %5440
        %5442 = vrot.lane.b32.xlu0 %v5000, 1
        %v5443 = vpop.permute.xlu0 %5442
        %5444 = vrot.lane.b32.xlu0 %v5001, 1
        %v5445 = vpop.permute.xlu0 %5444
        %5446 = vrot.lane.b32.xlu0 %v5002, 1
        %v5447 = vpop.permute.xlu0 %5446
        %5448 = vrot.lane.b32.xlu0 %v5003, 1
        %v5449 = vpop.permute.xlu0 %5448
        %5450 = vrot.lane.b32.xlu0 %v5004, 1
        %v5451 = vpop.permute.xlu0 %5450
        %5452 = vrot.lane.b32.xlu0 %v5005, 1
        %v5453 = vpop.permute.xlu0 %5452
        %v5454 = vsel %vm779, %v5431, %v5433
        %v5455 = vsel %vm779, %v5433, %v5435
        %v5456 = vsel %vm779, %v5435, %v5437
        %v5457 = vsel %vm779, %v5439, %v5441
        %v5458 = vsel %vm779, %v5441, %v5443
        %v5459 = vsel %vm779, %v5443, %v5445
        %v5460 = vsel %vm779, %v5447, %v5449
        %v5461 = vsel %vm779, %v5449, %v5451
        %v5462 = vsel %vm779, %v5451, %v5453
        %v5473 = vsel %vm5067, %v5429, 0
        %5475 = vmatprep.subr.bf16.mxu0 %v5455
        %5476 = vmatpush1.bf16.msra.mxu0 %v5454
        %5477 = vmatprep.subr.bf16.mxu0 %v5458
        %5478 = vmatpush1.bf16.msra.mxu0 %v5457
        %5479 = vmatprep.subr.bf16.mxu0 %v5461
        %5480 = vmatpush1.bf16.msra.mxu0 %v5460
        %5481 = vmatprep.subr.bf16.mxu0 0
        %5482 = vmatpush1.bf16.msra.mxu0 0
        %5483 = vmatprep.subr.bf16.mxu0 0
        %5484 = vmatpush1.bf16.msra.mxu0 0
        %5485 = vmatprep.subr.bf16.mxu0 0
        %5486 = vmatpush1.bf16.msra.mxu0 0
        %5487 = vmatprep.subr.bf16.mxu0 0
        %5488 = vmatpush1.bf16.msra.mxu0 0
        %5489 = vmatprep.subr.bf16.mxu0 0
        %5490 = vmatpush1.bf16.msra.mxu0 0
        %5491 = vmatprep.subr.bf16.mxu0 0
        %5492 = vmatpush1.bf16.msra.mxu0 0
        %5493 = vmatprep.subr.bf16.mxu0 0
        %5494 = vmatpush1.bf16.msra.mxu0 0
        %5495 = vmatprep.subr.bf16.mxu0 0
        %5496 = vmatpush1.bf16.msra.mxu0 0
        %5497 = vmatprep.subr.bf16.mxu0 0
        %5498 = vmatpush1.bf16.msra.mxu0 0
        %5499 = vmatprep.subr.bf16.mxu0 0
        %5500 = vmatpush1.bf16.msra.mxu0 0
        %5501 = vmatprep.subr.bf16.mxu0 0
        %5502 = vmatpush1.bf16.msra.mxu0 0
        %5503 = vmatprep.subr.bf16.mxu0 0
        %5504 = vmatpush1.bf16.msra.mxu0 0
        %5505 = vmatprep.subr.bf16.mxu0 0
        %5506 = vmatpush1.bf16.msra.mxu0 0
        %5507 = vmatprep.mubr.bf16.mxu0 0
        %5508 = vmatmul.mubr.bf16.gmra.mrb[0].mxu0 %v5473
        %v5509 = vpop.f32.mrb[0].mxu0
        %v5510 = vadd.f32 0.0, %v5509
        %v5511 = vpop.f32.mrb[0].mxu0
        %v5512 = vadd.f32 0.0, %v5511
        %v5513 = vpop.f32.mrb[0].mxu0
        %v5514 = vadd.f32 0.0, %v5513
        %v5515 = vpop.f32.mrb[0].mxu0
        %v5516 = vadd.f32 0.0, %v5515
        %5517 = vdwg.mxu0
        %5518 = vmatprep.subr.bf16.mxu0 0
        %5519 = vmatpush1.bf16.msra.mxu0 %v5456
        %5520 = vmatprep.subr.bf16.mxu0 0
        %5521 = vmatpush1.bf16.msra.mxu0 %v5459
        %5522 = vmatprep.subr.bf16.mxu0 0
        %5523 = vmatpush1.bf16.msra.mxu0 %v5462
        %5524 = vmatprep.subr.bf16.mxu0 0
        %5525 = vmatpush1.bf16.msra.mxu0 0
        %5526 = vmatprep.subr.bf16.mxu0 0
        %5527 = vmatpush1.bf16.msra.mxu0 0
        %5528 = vmatprep.subr.bf16.mxu0 0
        %5529 = vmatpush1.bf16.msra.mxu0 0
        %5530 = vmatprep.subr.bf16.mxu0 0
        %5531 = vmatpush1.bf16.msra.mxu0 0
        %5532 = vmatprep.subr.bf16.mxu0 0
        %5533 = vmatpush1.bf16.msra.mxu0 0
        %5534 = vmatprep.subr.bf16.mxu0 0
        %5535 = vmatpush1.bf16.msra.mxu0 0
        %5536 = vmatprep.subr.bf16.mxu0 0
        %5537 = vmatpush1.bf16.msra.mxu0 0
        %5538 = vmatprep.subr.bf16.mxu0 0
        %5539 = vmatpush1.bf16.msra.mxu0 0
        %5540 = vmatprep.subr.bf16.mxu0 0
        %5541 = vmatpush1.bf16.msra.mxu0 0
        %5542 = vmatprep.subr.bf16.mxu0 0
        %5543 = vmatpush1.bf16.msra.mxu0 0
        %5544 = vmatprep.subr.bf16.mxu0 0
        %5545 = vmatpush1.bf16.msra.mxu0 0
        %5546 = vmatprep.subr.bf16.mxu0 0
        %5547 = vmatpush1.bf16.msra.mxu0 0
        %5548 = vmatprep.subr.bf16.mxu0 0
        %5549 = vmatpush1.bf16.msra.mxu0 0
        %5550 = vmatprep.mubr.bf16.mxu0 0
        %5551 = vmatmul.mubr.bf16.gmra.mrb[0].mxu0 %v5473
        %v5552 = vpop.f32.mrb[0].mxu0
        %v5553 = vadd.f32 0.0, %v5552
        %v5554 = vpop.f32.mrb[0].mxu0
        %v5555 = vpop.f32.mrb[0].mxu0
        %v5556 = vadd.f32 0.0, %v5555
        %v5557 = vpop.f32.mrb[0].mxu0
        %5558 = vdwg.mxu0
        %v5559 = vadd.f32 %v5422, %v5510
        %v5560 = vadd.f32 %v5423, %v5512
        %v5561 = vadd.f32 %v5424, %v5553
        %v5562 = vadd.f32 %v5425, %v5514
        %v5563 = vadd.f32 %v5426, %v5516
        %v5564 = vadd.f32 %v5427, %v5556
        %5565 = vrot.lane.b32.xlu0 %v5286, 64
        %v5566 = vpop.permute.xlu0 %5565
        %v5568 = vsel %vm5067, %v5566, 0
        %5570 = vmatprep.subr.bf16.mxu0 %v4996
        %5571 = vmatpush1.bf16.msra.mxu0 %v4995
        %5572 = vmatprep.subr.bf16.mxu0 %v5000
        %5573 = vmatpush1.bf16.msra.mxu0 %v4999
        %5574 = vmatprep.subr.bf16.mxu0 %v5004
        %5575 = vmatpush1.bf16.msra.mxu0 %v5003
        %5576 = vmatprep.subr.bf16.mxu0 0
        %5577 = vmatpush1.bf16.msra.mxu0 0
        %5578 = vmatprep.subr.bf16.mxu0 0
        %5579 = vmatpush1.bf16.msra.mxu0 0
        %5580 = vmatprep.subr.bf16.mxu0 0
        %5581 = vmatpush1.bf16.msra.mxu0 0
        %5582 = vmatprep.subr.bf16.mxu0 0
        %5583 = vmatpush1.bf16.msra.mxu0 0
        %5584 = vmatprep.subr.bf16.mxu0 0
        %5585 = vmatpush1.bf16.msra.mxu0 0
        %5586 = vmatprep.subr.bf16.mxu0 0
        %5587 = vmatpush1.bf16.msra.mxu0 0
        %5588 = vmatprep.subr.bf16.mxu0 0
        %5589 = vmatpush1.bf16.msra.mxu0 0
        %5590 = vmatprep.subr.bf16.mxu0 0
        %5591 = vmatpush1.bf16.msra.mxu0 0
        %5592 = vmatprep.subr.bf16.mxu0 0
        %5593 = vmatpush1.bf16.msra.mxu0 0
        %5594 = vmatprep.subr.bf16.mxu0 0
        %5595 = vmatpush1.bf16.msra.mxu0 0
        %5596 = vmatprep.subr.bf16.mxu0 0
        %5597 = vmatpush1.bf16.msra.mxu0 0
        %5598 = vmatprep.subr.bf16.mxu0 0
        %5599 = vmatpush1.bf16.msra.mxu0 0
        %5600 = vmatprep.subr.bf16.mxu0 0
        %5601 = vmatpush1.bf16.msra.mxu0 0
        %5602 = vmatprep.mubr.bf16.mxu0 0
        %5603 = vmatmul.mubr.bf16.gmra.mrb[0].mxu0 %v5568
        %v5604 = vpop.f32.mrb[0].mxu0
        %v5605 = vadd.f32 0.0, %v5604
        %v5606 = vpop.f32.mrb[0].mxu0
        %v5607 = vadd.f32 0.0, %v5606
        %v5608 = vpop.f32.mrb[0].mxu0
        %v5609 = vadd.f32 0.0, %v5608
        %v5610 = vpop.f32.mrb[0].mxu0
        %v5611 = vadd.f32 0.0, %v5610
        %5612 = vdwg.mxu0
        %5613 = vmatprep.subr.bf16.mxu0 0
        %5614 = vmatpush1.bf16.msra.mxu0 %v4997
        %5615 = vmatprep.subr.bf16.mxu0 0
        %5616 = vmatpush1.bf16.msra.mxu0 %v5001
        %5617 = vmatprep.subr.bf16.mxu0 0
        %5618 = vmatpush1.bf16.msra.mxu0 %v5005
        %5619 = vmatprep.subr.bf16.mxu0 0
        %5620 = vmatpush1.bf16.msra.mxu0 0
        %5621 = vmatprep.subr.bf16.mxu0 0
        %5622 = vmatpush1.bf16.msra.mxu0 0
        %5623 = vmatprep.subr.bf16.mxu0 0
        %5624 = vmatpush1.bf16.msra.mxu0 0
        %5625 = vmatprep.subr.bf16.mxu0 0
        %5626 = vmatpush1.bf16.msra.mxu0 0
        %5627 = vmatprep.subr.bf16.mxu0 0
        %5628 = vmatpush1.bf16.msra.mxu0 0
        %5629 = vmatprep.subr.bf16.mxu0 0
        %5630 = vmatpush1.bf16.msra.mxu0 0
        %5631 = vmatprep.subr.bf16.mxu0 0
        %5632 = vmatpush1.bf16.msra.mxu0 0
        %5633 = vmatprep.subr.bf16.mxu0 0
        %5634 = vmatpush1.bf16.msra.mxu0 0
        %5635 = vmatprep.subr.bf16.mxu0 0
        %5636 = vmatpush1.bf16.msra.mxu0 0
        %5637 = vmatprep.subr.bf16.mxu0 0
        %5638 = vmatpush1.bf16.msra.mxu0 0
        %5639 = vmatprep.subr.bf16.mxu0 0
        %5640 = vmatpush1.bf16.msra.mxu0 0
        %5641 = vmatprep.subr.bf16.mxu0 0
        %5642 = vmatpush1.bf16.msra.mxu0 0
        %5643 = vmatprep.subr.bf16.mxu0 0
        %5644 = vmatpush1.bf16.msra.mxu0 0
        %5645 = vmatprep.mubr.bf16.mxu0 0
        %5646 = vmatmul.mubr.bf16.gmra.mrb[0].mxu0 %v5568
        %v5647 = vpop.f32.mrb[0].mxu0
        %v5648 = vadd.f32 0.0, %v5647
        %v5649 = vpop.f32.mrb[0].mxu0
        %v5650 = vpop.f32.mrb[0].mxu0
        %v5651 = vadd.f32 0.0, %v5650
        %v5652 = vpop.f32.mrb[0].mxu0
        %5653 = vdwg.mxu0
        %v5654 = vadd.f32 %v5559, %v5605
        %v5655 = vadd.f32 %v5560, %v5607
        %v5656 = vadd.f32 %v5561, %v5648
        %v5657 = vadd.f32 %v5562, %v5609
        %v5658 = vadd.f32 %v5563, %v5611
        %v5659 = vadd.f32 %v5564, %v5651
        %v5660 = vld [vmem:[#allocation2 + $0x8] sm:$0xff]
        %v5661 = vld [vmem:[#allocation2 + $0x10] sm:$0xff]
        %v5662 = vld [vmem:[#allocation2 + $0x18] sm:$0xff]
        %v5663 = vld [vmem:[#allocation2 + $0x20] sm:$0xff]
        %v5664 = vld [vmem:[#allocation2 + $0x30] sm:$0xff]
        %v5665 = vld [vmem:[#allocation2 + $0x38] sm:$0xff]
        %v5666 = vld [vmem:[#allocation2 + $0x40] sm:$0xff]
        %v5667 = vld [vmem:[#allocation2 + $0x48] sm:$0xff]
        %v5668 = vld [vmem:[#allocation2 + $0x58] sm:$0xff]
        %v5669 = vld [vmem:[#allocation2 + $0x60] sm:$0xff]
        %v5670 = vld [vmem:[#allocation2 + $0x68] sm:$0xff]
        %v5671 = vld [vmem:[#allocation2 + $0x70] sm:$0xff]
        %v5674 = vunpack.c.l.b16 %v4987
        %v5675 = vunpack.c.l.b16 %v4989
        %v5676 = vpack.c.b16 %v5675, %v5674
        %5677 = vrot.lane.b32.xlu0 %v5286, 16
        %v5678 = vpop.permute.xlu0 %5677
        %5679 = vrot.lane.b32.xlu0 %v5676, 16
        %v5680 = vpop.permute.xlu0 %5679
        %v5681 = vsel %vm4532, %v5678, %v5680
        %5694 = vrot.lane.b32.xlu0 %v5660, 127
        %v5695 = vpop.permute.xlu0 %5694
        %5696 = vrot.lane.b32.xlu0 %v5661, 127
        %v5697 = vpop.permute.xlu0 %5696
        %5698 = vrot.lane.b32.xlu0 %v5662, 127
        %v5699 = vpop.permute.xlu0 %5698
        %5700 = vrot.lane.b32.xlu0 %v5663, 127
        %v5701 = vpop.permute.xlu0 %5700
        %5702 = vrot.lane.b32.xlu0 %v5664, 127
        %v5703 = vpop.permute.xlu0 %5702
        %5704 = vrot.lane.b32.xlu0 %v5665, 127
        %v5705 = vpop.permute.xlu0 %5704
        %5706 = vrot.lane.b32.xlu0 %v5666, 127
        %v5707 = vpop.permute.xlu0 %5706
        %5708 = vrot.lane.b32.xlu0 %v5667, 127
        %v5709 = vpop.permute.xlu0 %5708
        %5710 = vrot.lane.b32.xlu0 %v5668, 127
        %v5711 = vpop.permute.xlu0 %5710
        %5712 = vrot.lane.b32.xlu0 %v5669, 127
        %v5713 = vpop.permute.xlu0 %5712
        %5714 = vrot.lane.b32.xlu0 %v5670, 127
        %v5715 = vpop.permute.xlu0 %5714
        %5716 = vrot.lane.b32.xlu0 %v5671, 127
        %v5717 = vpop.permute.xlu0 %5716
        %v5718 = vsel %vm980, %v5695, %v5697
        %v5719 = vsel %vm980, %v5697, %v5699
        %v5720 = vsel %vm980, %v5699, %v5701
        %v5721 = vsel %vm980, %v5703, %v5705
        %v5722 = vsel %vm980, %v5705, %v5707
        %v5723 = vsel %vm980, %v5707, %v5709
        %v5724 = vsel %vm980, %v5711, %v5713
        %v5725 = vsel %vm980, %v5713, %v5715
        %v5726 = vsel %vm980, %v5715, %v5717
        %v5737 = vsel %vm5067, %v5681, 0
        %5739 = vmatprep.subr.bf16.mxu0 %v5719
        %5740 = vmatpush1.bf16.msra.mxu0 %v5718
        %5741 = vmatprep.subr.bf16.mxu0 %v5722
        %5742 = vmatpush1.bf16.msra.mxu0 %v5721
        %5743 = vmatprep.subr.bf16.mxu0 %v5725
        %5744 = vmatpush1.bf16.msra.mxu0 %v5724
        %5745 = vmatprep.subr.bf16.mxu0 0
        %5746 = vmatpush1.bf16.msra.mxu0 0
        %5747 = vmatprep.subr.bf16.mxu0 0
        %5748 = vmatpush1.bf16.msra.mxu0 0
        %5749 = vmatprep.subr.bf16.mxu0 0
        %5750 = vmatpush1.bf16.msra.mxu0 0
        %5751 = vmatprep.subr.bf16.mxu0 0
        %5752 = vmatpush1.bf16.msra.mxu0 0
        %5753 = vmatprep.subr.bf16.mxu0 0
        %5754 = vmatpush1.bf16.msra.mxu0 0
        %5755 = vmatprep.subr.bf16.mxu0 0
        %5756 = vmatpush1.bf16.msra.mxu0 0
        %5757 = vmatprep.subr.bf16.mxu0 0
        %5758 = vmatpush1.bf16.msra.mxu0 0
        %5759 = vmatprep.subr.bf16.mxu0 0
        %5760 = vmatpush1.bf16.msra.mxu0 0
        %5761 = vmatprep.subr.bf16.mxu0 0
        %5762 = vmatpush1.bf16.msra.mxu0 0
        %5763 = vmatprep.subr.bf16.mxu0 0
        %5764 = vmatpush1.bf16.msra.mxu0 0
        %5765 = vmatprep.subr.bf16.mxu0 0
        %5766 = vmatpush1.bf16.msra.mxu0 0
        %5767 = vmatprep.subr.bf16.mxu0 0
        %5768 = vmatpush1.bf16.msra.mxu0 0
        %5769 = vmatprep.subr.bf16.mxu0 0
        %5770 = vmatpush1.bf16.msra.mxu0 0
        %5771 = vmatprep.mubr.bf16.mxu0 0
        %5772 = vmatmul.mubr.bf16.gmra.mrb[0].mxu0 %v5737
        %v5773 = vpop.f32.mrb[0].mxu0
        %v5774 = vadd.f32 0.0, %v5773
        %v5775 = vpop.f32.mrb[0].mxu0
        %v5776 = vadd.f32 0.0, %v5775
        %v5777 = vpop.f32.mrb[0].mxu0
        %v5778 = vadd.f32 0.0, %v5777
        %v5779 = vpop.f32.mrb[0].mxu0
        %v5780 = vadd.f32 0.0, %v5779
        %5781 = vdwg.mxu0
        %5782 = vmatprep.subr.bf16.mxu0 0
        %5783 = vmatpush1.bf16.msra.mxu0 %v5720
        %5784 = vmatprep.subr.bf16.mxu0 0
        %5785 = vmatpush1.bf16.msra.mxu0 %v5723
        %5786 = vmatprep.subr.bf16.mxu0 0
        %5787 = vmatpush1.bf16.msra.mxu0 %v5726
        %5788 = vmatprep.subr.bf16.mxu0 0
        %5789 = vmatpush1.bf16.msra.mxu0 0
        %5790 = vmatprep.subr.bf16.mxu0 0
        %5791 = vmatpush1.bf16.msra.mxu0 0
        %5792 = vmatprep.subr.bf16.mxu0 0
        %5793 = vmatpush1.bf16.msra.mxu0 0
        %5794 = vmatprep.subr.bf16.mxu0 0
        %5795 = vmatpush1.bf16.msra.mxu0 0
        %5796 = vmatprep.subr.bf16.mxu0 0
        %5797 = vmatpush1.bf16.msra.mxu0 0
        %5798 = vmatprep.subr.bf16.mxu0 0
        %5799 = vmatpush1.bf16.msra.mxu0 0
        %5800 = vmatprep.subr.bf16.mxu0 0
        %5801 = vmatpush1.bf16.msra.mxu0 0
        %5802 = vmatprep.subr.bf16.mxu0 0
        %5803 = vmatpush1.bf16.msra.mxu0 0
        %5804 = vmatprep.subr.bf16.mxu0 0
        %5805 = vmatpush1.bf16.msra.mxu0 0
        %5806 = vmatprep.subr.bf16.mxu0 0
        %5807 = vmatpush1.bf16.msra.mxu0 0
        %5808 = vmatprep.subr.bf16.mxu0 0
        %5809 = vmatpush1.bf16.msra.mxu0 0
        %5810 = vmatprep.subr.bf16.mxu0 0
        %5811 = vmatpush1.bf16.msra.mxu0 0
        %5812 = vmatprep.subr.bf16.mxu0 0
        %5813 = vmatpush1.bf16.msra.mxu0 0
        %5814 = vmatprep.mubr.bf16.mxu0 0
        %5815 = vmatmul.mubr.bf16.gmra.mrb[0].mxu0 %v5737
        %v5816 = vpop.f32.mrb[0].mxu0
        %v5817 = vadd.f32 0.0, %v5816
        %v5818 = vpop.f32.mrb[0].mxu0
        %v5819 = vpop.f32.mrb[0].mxu0
        %v5820 = vadd.f32 0.0, %v5819
        %v5821 = vpop.f32.mrb[0].mxu0
        %5822 = vdwg.mxu0
        %v5823 = vadd.f32 %v5654, %v5774
        %v5824 = vadd.f32 %v5655, %v5776
        %v5825 = vadd.f32 %v5656, %v5817
        %v5826 = vadd.f32 %v5657, %v5778
        %v5827 = vadd.f32 %v5658, %v5780
        %v5828 = vadd.f32 %v5659, %v5820
        %5829 = vrot.lane.b32.xlu0 %v5676, 96
        %v5830 = vpop.permute.xlu0 %5829
        %5831 = vrot.lane.b32.xlu0 %v5660, 111
        %v5832 = vpop.permute.xlu0 %5831
        %5833 = vrot.lane.b32.xlu0 %v5661, 111
        %v5834 = vpop.permute.xlu0 %5833
        %5835 = vrot.lane.b32.xlu0 %v5662, 111
        %v5836 = vpop.permute.xlu0 %5835
        %5837 = vrot.lane.b32.xlu0 %v5663, 111
        %v5838 = vpop.permute.xlu0 %5837
        %5839 = vrot.lane.b32.xlu0 %v5664, 111
        %v5840 = vpop.permute.xlu0 %5839
        %5841 = vrot.lane.b32.xlu0 %v5665, 111
        %v5842 = vpop.permute.xlu0 %5841
        %5843 = vrot.lane.b32.xlu0 %v5666, 111
        %v5844 = vpop.permute.xlu0 %5843
        %5845 = vrot.lane.b32.xlu0 %v5667, 111
        %v5846 = vpop.permute.xlu0 %5845
        %5847 = vrot.lane.b32.xlu0 %v5668, 111
        %v5848 = vpop.permute.xlu0 %5847
        %5849 = vrot.lane.b32.xlu0 %v5669, 111
        %v5850 = vpop.permute.xlu0 %5849
        %5851 = vrot.lane.b32.xlu0 %v5670, 111
        %v5852 = vpop.permute.xlu0 %5851
        %5853 = vrot.lane.b32.xlu0 %v5671, 111
        %v5854 = vpop.permute.xlu0 %5853
        %v5855 = vsel %vm1084, %v5832, %v5834
        %v5856 = vsel %vm1084, %v5834, %v5836
        %v5857 = vsel %vm1084, %v5836, %v5838
        %v5858 = vsel %vm1084, %v5840, %v5842
        %v5859 = vsel %vm1084, %v5842, %v5844
        %v5860 = vsel %vm1084, %v5844, %v5846
        %v5861 = vsel %vm1084, %v5848, %v5850
        %v5862 = vsel %vm1084, %v5850, %v5852
        %v5863 = vsel %vm1084, %v5852, %v5854
        %v5874 = vsel %vm5067, %v5830, 0
        %5876 = vmatprep.subr.bf16.mxu0 %v5856
        %5877 = vmatpush1.bf16.msra.mxu0 %v5855
        %5878 = vmatprep.subr.bf16.mxu0 %v5859
        %5879 = vmatpush1.bf16.msra.mxu0 %v5858
        %5880 = vmatprep.subr.bf16.mxu0 %v5862
        %5881 = vmatpush1.bf16.msra.mxu0 %v5861
        %5882 = vmatprep.subr.bf16.mxu0 0
        %5883 = vmatpush1.bf16.msra.mxu0 0
        %5884 = vmatprep.subr.bf16.mxu0 0
        %5885 = vmatpush1.bf16.msra.mxu0 0
        %5886 = vmatprep.subr.bf16.mxu0 0
        %5887 = vmatpush1.bf16.msra.mxu0 0
        %5888 = vmatprep.subr.bf16.mxu0 0
        %5889 = vmatpush1.bf16.msra.mxu0 0
        %5890 = vmatprep.subr.bf16.mxu0 0
        %5891 = vmatpush1.bf16.msra.mxu0 0
        %5892 = vmatprep.subr.bf16.mxu0 0
        %5893 = vmatpush1.bf16.msra.mxu0 0
        %5894 = vmatprep.subr.bf16.mxu0 0
        %5895 = vmatpush1.bf16.msra.mxu0 0
        %5896 = vmatprep.subr.bf16.mxu0 0
        %5897 = vmatpush1.bf16.msra.mxu0 0
        %5898 = vmatprep.subr.bf16.mxu0 0
        %5899 = vmatpush1.bf16.msra.mxu0 0
        %5900 = vmatprep.subr.bf16.mxu0 0
        %5901 = vmatpush1.bf16.msra.mxu0 0
        %5902 = vmatprep.subr.bf16.mxu0 0
        %5903 = vmatpush1.bf16.msra.mxu0 0
        %5904 = vmatprep.subr.bf16.mxu0 0
        %5905 = vmatpush1.bf16.msra.mxu0 0
        %5906 = vmatprep.subr.bf16.mxu0 0
        %5907 = vmatpush1.bf16.msra.mxu0 0
        %5908 = vmatprep.mubr.bf16.mxu0 0
        %5909 = vmatmul.mubr.bf16.gmra.mrb[0].mxu0 %v5874
        %v5910 = vpop.f32.mrb[0].mxu0
        %v5911 = vadd.f32 0.0, %v5910
        %v5912 = vpop.f32.mrb[0].mxu0
        %v5913 = vadd.f32 0.0, %v5912
        %v5914 = vpop.f32.mrb[0].mxu0
        %v5915 = vadd.f32 0.0, %v5914
        %v5916 = vpop.f32.mrb[0].mxu0
        %v5917 = vadd.f32 0.0, %v5916
        %5918 = vdwg.mxu0
        %5919 = vmatprep.subr.bf16.mxu0 0
        %5920 = vmatpush1.bf16.msra.mxu0 %v5857
        %5921 = vmatprep.subr.bf16.mxu0 0
        %5922 = vmatpush1.bf16.msra.mxu0 %v5860
        %5923 = vmatprep.subr.bf16.mxu0 0
        %5924 = vmatpush1.bf16.msra.mxu0 %v5863
        %5925 = vmatprep.subr.bf16.mxu0 0
        %5926 = vmatpush1.bf16.msra.mxu0 0
        %5927 = vmatprep.subr.bf16.mxu0 0
        %5928 = vmatpush1.bf16.msra.mxu0 0
        %5929 = vmatprep.subr.bf16.mxu0 0
        %5930 = vmatpush1.bf16.msra.mxu0 0
        %5931 = vmatprep.subr.bf16.mxu0 0
        %5932 = vmatpush1.bf16.msra.mxu0 0
        %5933 = vmatprep.subr.bf16.mxu0 0
        %5934 = vmatpush1.bf16.msra.mxu0 0
        %5935 = vmatprep.subr.bf16.mxu0 0
        %5936 = vmatpush1.bf16.msra.mxu0 0
        %5937 = vmatprep.subr.bf16.mxu0 0
        %5938 = vmatpush1.bf16.msra.mxu0 0
        %5939 = vmatprep.subr.bf16.mxu0 0
        %5940 = vmatpush1.bf16.msra.mxu0 0
        %5941 = vmatprep.subr.bf16.mxu0 0
        %5942 = vmatpush1.bf16.msra.mxu0 0
        %5943 = vmatprep.subr.bf16.mxu0 0
        %5944 = vmatpush1.bf16.msra.mxu0 0
        %5945 = vmatprep.subr.bf16.mxu0 0
        %5946 = vmatpush1.bf16.msra.mxu0 0
        %5947 = vmatprep.subr.bf16.mxu0 0
        %5948 = vmatpush1.bf16.msra.mxu0 0
        %5949 = vmatprep.subr.bf16.mxu0 0
        %5950 = vmatpush1.bf16.msra.mxu0 0
        %5951 = vmatprep.mubr.bf16.mxu0 0
        %5952 = vmatmul.mubr.bf16.gmra.mrb[0].mxu0 %v5874
        %v5953 = vpop.f32.mrb[0].mxu0
        %v5954 = vadd.f32 0.0, %v5953
        %v5955 = vpop.f32.mrb[0].mxu0
        %v5956 = vpop.f32.mrb[0].mxu0
        %v5957 = vadd.f32 0.0, %v5956
        %v5958 = vpop.f32.mrb[0].mxu0
        %5959 = vdwg.mxu0
        %v5960 = vadd.f32 %v5823, %v5911
        %v5961 = vadd.f32 %v5824, %v5913
        %v5962 = vadd.f32 %v5825, %v5954
        %v5963 = vadd.f32 %v5826, %v5915
        %v5964 = vadd.f32 %v5827, %v5917
        %v5965 = vadd.f32 %v5828, %v5957
        %5966 = vrot.lane.b32.xlu0 %v5676, 48
        %v5967 = vpop.permute.xlu0 %5966
        %5968 = vrot.lane.b32.xlu0 %v5660, 110
        %v5969 = vpop.permute.xlu0 %5968
        %5970 = vrot.lane.b32.xlu0 %v5661, 110
        %v5971 = vpop.permute.xlu0 %5970
        %5972 = vrot.lane.b32.xlu0 %v5662, 110
        %v5973 = vpop.permute.xlu0 %5972
        %5974 = vrot.lane.b32.xlu0 %v5663, 110
        %v5975 = vpop.permute.xlu0 %5974
        %5976 = vrot.lane.b32.xlu0 %v5664, 110
        %v5977 = vpop.permute.xlu0 %5976
        %5978 = vrot.lane.b32.xlu0 %v5665, 110
        %v5979 = vpop.permute.xlu0 %5978
        %5980 = vrot.lane.b32.xlu0 %v5666, 110
        %v5981 = vpop.permute.xlu0 %5980
        %5982 = vrot.lane.b32.xlu0 %v5667, 110
        %v5983 = vpop.permute.xlu0 %5982
        %5984 = vrot.lane.b32.xlu0 %v5668, 110
        %v5985 = vpop.permute.xlu0 %5984
        %5986 = vrot.lane.b32.xlu0 %v5669, 110
        %v5987 = vpop.permute.xlu0 %5986
        %5988 = vrot.lane.b32.xlu0 %v5670, 110
        %v5989 = vpop.permute.xlu0 %5988
        %5990 = vrot.lane.b32.xlu0 %v5671, 110
        %v5991 = vpop.permute.xlu0 %5990
        %v5992 = vsel %vm1188, %v5969, %v5971
        %v5993 = vsel %vm1188, %v5971, %v5973
        %v5994 = vsel %vm1188, %v5973, %v5975
        %v5995 = vsel %vm1188, %v5977, %v5979
        %v5996 = vsel %vm1188, %v5979, %v5981
        %v5997 = vsel %vm1188, %v5981, %v5983
        %v5998 = vsel %vm1188, %v5985, %v5987
        %v5999 = vsel %vm1188, %v5987, %v5989
        %v6000 = vsel %vm1188, %v5989, %v5991
        %v6011 = vsel %vm5067, %v5967, 0
        %6013 = vmatprep.subr.bf16.mxu0 %v5993
        %6014 = vmatpush1.bf16.msra.mxu0 %v5992
        %6015 = vmatprep.subr.bf16.mxu0 %v5996
        %6016 = vmatpush1.bf16.msra.mxu0 %v5995
        %6017 = vmatprep.subr.bf16.mxu0 %v5999
        %6018 = vmatpush1.bf16.msra.mxu0 %v5998
        %6019 = vmatprep.subr.bf16.mxu0 0
        %6020 = vmatpush1.bf16.msra.mxu0 0
        %6021 = vmatprep.subr.bf16.mxu0 0
        %6022 = vmatpush1.bf16.msra.mxu0 0
        %6023 = vmatprep.subr.bf16.mxu0 0
        %6024 = vmatpush1.bf16.msra.mxu0 0
        %6025 = vmatprep.subr.bf16.mxu0 0
        %6026 = vmatpush1.bf16.msra.mxu0 0
        %6027 = vmatprep.subr.bf16.mxu0 0
        %6028 = vmatpush1.bf16.msra.mxu0 0
        %6029 = vmatprep.subr.bf16.mxu0 0
        %6030 = vmatpush1.bf16.msra.mxu0 0
        %6031 = vmatprep.subr.bf16.mxu0 0
        %6032 = vmatpush1.bf16.msra.mxu0 0
        %6033 = vmatprep.subr.bf16.mxu0 0
        %6034 = vmatpush1.bf16.msra.mxu0 0
        %6035 = vmatprep.subr.bf16.mxu0 0
        %6036 = vmatpush1.bf16.msra.mxu0 0
        %6037 = vmatprep.subr.bf16.mxu0 0
        %6038 = vmatpush1.bf16.msra.mxu0 0
        %6039 = vmatprep.subr.bf16.mxu0 0
        %6040 = vmatpush1.bf16.msra.mxu0 0
        %6041 = vmatprep.subr.bf16.mxu0 0
        %6042 = vmatpush1.bf16.msra.mxu0 0
        %6043 = vmatprep.subr.bf16.mxu0 0
        %6044 = vmatpush1.bf16.msra.mxu0 0
        %6045 = vmatprep.mubr.bf16.mxu0 0
        %6046 = vmatmul.mubr.bf16.gmra.mrb[0].mxu0 %v6011
        %v6047 = vpop.f32.mrb[0].mxu0
        %v6048 = vadd.f32 0.0, %v6047
        %v6049 = vpop.f32.mrb[0].mxu0
        %v6050 = vadd.f32 0.0, %v6049
        %v6051 = vpop.f32.mrb[0].mxu0
        %v6052 = vadd.f32 0.0, %v6051
        %v6053 = vpop.f32.mrb[0].mxu0
        %v6054 = vadd.f32 0.0, %v6053
        %6055 = vdwg.mxu0
        %6056 = vmatprep.subr.bf16.mxu0 0
        %6057 = vmatpush1.bf16.msra.mxu0 %v5994
        %6058 = vmatprep.subr.bf16.mxu0 0
        %6059 = vmatpush1.bf16.msra.mxu0 %v5997
        %6060 = vmatprep.subr.bf16.mxu0 0
        %6061 = vmatpush1.bf16.msra.mxu0 %v6000
        %6062 = vmatprep.subr.bf16.mxu0 0
        %6063 = vmatpush1.bf16.msra.mxu0 0
        %6064 = vmatprep.subr.bf16.mxu0 0
        %6065 = vmatpush1.bf16.msra.mxu0 0
        %6066 = vmatprep.subr.bf16.mxu0 0
        %6067 = vmatpush1.bf16.msra.mxu0 0
        %6068 = vmatprep.subr.bf16.mxu0 0
        %6069 = vmatpush1.bf16.msra.mxu0 0
        %6070 = vmatprep.subr.bf16.mxu0 0
        %6071 = vmatpush1.bf16.msra.mxu0 0
        %6072 = vmatprep.subr.bf16.mxu0 0
        %6073 = vmatpush1.bf16.msra.mxu0 0
        %6074 = vmatprep.subr.bf16.mxu0 0
        %6075 = vmatpush1.bf16.msra.mxu0 0
        %6076 = vmatprep.subr.bf16.mxu0 0
        %6077 = vmatpush1.bf16.msra.mxu0 0
        %6078 = vmatprep.subr.bf16.mxu0 0
        %6079 = vmatpush1.bf16.msra.mxu0 0
        %6080 = vmatprep.subr.bf16.mxu0 0
        %6081 = vmatpush1.bf16.msra.mxu0 0
        %6082 = vmatprep.subr.bf16.mxu0 0
        %6083 = vmatpush1.bf16.msra.mxu0 0
        %6084 = vmatprep.subr.bf16.mxu0 0
        %6085 = vmatpush1.bf16.msra.mxu0 0
        %6086 = vmatprep.subr.bf16.mxu0 0
        %6087 = vmatpush1.bf16.msra.mxu0 0
        %6088 = vmatprep.mubr.bf16.mxu0 0
        %6089 = vmatmul.mubr.bf16.gmra.mrb[0].mxu0 %v6011
        %v6090 = vpop.f32.mrb[0].mxu0
        %v6091 = vadd.f32 0.0, %v6090
        %v6092 = vpop.f32.mrb[0].mxu0
        %v6093 = vpop.f32.mrb[0].mxu0
        %v6094 = vadd.f32 0.0, %v6093
        %v6095 = vpop.f32.mrb[0].mxu0
        %6096 = vdwg.mxu0
        %v6097 = vadd.f32 %v5960, %v6048
        %v6098 = vadd.f32 %v5961, %v6050
        %v6099 = vadd.f32 %v5962, %v6091
        %v6100 = vadd.f32 %v5963, %v6052
        %v6101 = vadd.f32 %v5964, %v6054
        %v6102 = vadd.f32 %v5965, %v6094
        %v6103 = vunpack.c.h.b16 %v4987
        %v6104 = vunpack.c.h.b16 %v4989
        %v6105 = vpack.c.b16 %v6104, %v6103
        %6106 = vrot.lane.b32.xlu0 %v5660, 109
        %v6107 = vpop.permute.xlu0 %6106
        %6108 = vrot.lane.b32.xlu0 %v5661, 109
        %v6109 = vpop.permute.xlu0 %6108
        %6110 = vrot.lane.b32.xlu0 %v5662, 109
        %v6111 = vpop.permute.xlu0 %6110
        %6112 = vrot.lane.b32.xlu0 %v5663, 109
        %v6113 = vpop.permute.xlu0 %6112
        %6114 = vrot.lane.b32.xlu0 %v5664, 109
        %v6115 = vpop.permute.xlu0 %6114
        %6116 = vrot.lane.b32.xlu0 %v5665, 109
        %v6117 = vpop.permute.xlu0 %6116
        %6118 = vrot.lane.b32.xlu0 %v5666, 109
        %v6119 = vpop.permute.xlu0 %6118
        %6120 = vrot.lane.b32.xlu0 %v5667, 109
        %v6121 = vpop.permute.xlu0 %6120
        %6122 = vrot.lane.b32.xlu0 %v5668, 109
        %v6123 = vpop.permute.xlu0 %6122
        %6124 = vrot.lane.b32.xlu0 %v5669, 109
        %v6125 = vpop.permute.xlu0 %6124
        %6126 = vrot.lane.b32.xlu0 %v5670, 109
        %v6127 = vpop.permute.xlu0 %6126
        %6128 = vrot.lane.b32.xlu0 %v5671, 109
        %v6129 = vpop.permute.xlu0 %6128
        %v6130 = vsel %vm1292, %v6107, %v6109
        %v6131 = vsel %vm1292, %v6109, %v6111
        %v6132 = vsel %vm1292, %v6111, %v6113
        %v6133 = vsel %vm1292, %v6115, %v6117
        %v6134 = vsel %vm1292, %v6117, %v6119
        %v6135 = vsel %vm1292, %v6119, %v6121
        %v6136 = vsel %vm1292, %v6123, %v6125
        %v6137 = vsel %vm1292, %v6125, %v6127
        %v6138 = vsel %vm1292, %v6127, %v6129
        %v6149 = vsel %vm5067, %v6105, 0
        %6151 = vmatprep.subr.bf16.mxu0 %v6131
        %6152 = vmatpush1.bf16.msra.mxu0 %v6130
        %6153 = vmatprep.subr.bf16.mxu0 %v6134
        %6154 = vmatpush1.bf16.msra.mxu0 %v6133
        %6155 = vmatprep.subr.bf16.mxu0 %v6137
        %6156 = vmatpush1.bf16.msra.mxu0 %v6136
        %6157 = vmatprep.subr.bf16.mxu0 0
        %6158 = vmatpush1.bf16.msra.mxu0 0
        %6159 = vmatprep.subr.bf16.mxu0 0
        %6160 = vmatpush1.bf16.msra.mxu0 0
        %6161 = vmatprep.subr.bf16.mxu0 0
        %6162 = vmatpush1.bf16.msra.mxu0 0
        %6163 = vmatprep.subr.bf16.mxu0 0
        %6164 = vmatpush1.bf16.msra.mxu0 0
        %6165 = vmatprep.subr.bf16.mxu0 0
        %6166 = vmatpush1.bf16.msra.mxu0 0
        %6167 = vmatprep.subr.bf16.mxu0 0
        %6168 = vmatpush1.bf16.msra.mxu0 0
        %6169 = vmatprep.subr.bf16.mxu0 0
        %6170 = vmatpush1.bf16.msra.mxu0 0
        %6171 = vmatprep.subr.bf16.mxu0 0
        %6172 = vmatpush1.bf16.msra.mxu0 0
        %6173 = vmatprep.subr.bf16.mxu0 0
        %6174 = vmatpush1.bf16.msra.mxu0 0
        %6175 = vmatprep.subr.bf16.mxu0 0
        %6176 = vmatpush1.bf16.msra.mxu0 0
        %6177 = vmatprep.subr.bf16.mxu0 0
        %6178 = vmatpush1.bf16.msra.mxu0 0
        %6179 = vmatprep.subr.bf16.mxu0 0
        %6180 = vmatpush1.bf16.msra.mxu0 0
        %6181 = vmatprep.subr.bf16.mxu0 0
        %6182 = vmatpush1.bf16.msra.mxu0 0
        %6183 = vmatprep.mubr.bf16.mxu0 0
        %6184 = vmatmul.mubr.bf16.gmra.mrb[0].mxu0 %v6149
        %v6185 = vpop.f32.mrb[0].mxu0
        %v6186 = vadd.f32 0.0, %v6185
        %v6187 = vpop.f32.mrb[0].mxu0
        %v6188 = vadd.f32 0.0, %v6187
        %v6189 = vpop.f32.mrb[0].mxu0
        %v6190 = vadd.f32 0.0, %v6189
        %v6191 = vpop.f32.mrb[0].mxu0
        %v6192 = vadd.f32 0.0, %v6191
        %6193 = vdwg.mxu0
        %6194 = vmatprep.subr.bf16.mxu0 0
        %6195 = vmatpush1.bf16.msra.mxu0 %v6132
        %6196 = vmatprep.subr.bf16.mxu0 0
        %6197 = vmatpush1.bf16.msra.mxu0 %v6135
        %6198 = vmatprep.subr.bf16.mxu0 0
        %6199 = vmatpush1.bf16.msra.mxu0 %v6138
        %6200 = vmatprep.subr.bf16.mxu0 0
        %6201 = vmatpush1.bf16.msra.mxu0 0
        %6202 = vmatprep.subr.bf16.mxu0 0
        %6203 = vmatpush1.bf16.msra.mxu0 0
        %6204 = vmatprep.subr.bf16.mxu0 0
        %6205 = vmatpush1.bf16.msra.mxu0 0
        %6206 = vmatprep.subr.bf16.mxu0 0
        %6207 = vmatpush1.bf16.msra.mxu0 0
        %6208 = vmatprep.subr.bf16.mxu0 0
        %6209 = vmatpush1.bf16.msra.mxu0 0
        %6210 = vmatprep.subr.bf16.mxu0 0
        %6211 = vmatpush1.bf16.msra.mxu0 0
        %6212 = vmatprep.subr.bf16.mxu0 0
        %6213 = vmatpush1.bf16.msra.mxu0 0
        %6214 = vmatprep.subr.bf16.mxu0 0
        %6215 = vmatpush1.bf16.msra.mxu0 0
        %6216 = vmatprep.subr.bf16.mxu0 0
        %6217 = vmatpush1.bf16.msra.mxu0 0
        %6218 = vmatprep.subr.bf16.mxu0 0
        %6219 = vmatpush1.bf16.msra.mxu0 0
        %6220 = vmatprep.subr.bf16.mxu0 0
        %6221 = vmatpush1.bf16.msra.mxu0 0
        %6222 = vmatprep.subr.bf16.mxu0 0
        %6223 = vmatpush1.bf16.msra.mxu0 0
        %6224 = vmatprep.subr.bf16.mxu0 0
        %6225 = vmatpush1.bf16.msra.mxu0 0
        %6226 = vmatprep.mubr.bf16.mxu0 0
        %6227 = vmatmul.mubr.bf16.gmra.mrb[0].mxu0 %v6149
        %v6228 = vpop.f32.mrb[0].mxu0
        %v6229 = vadd.f32 0.0, %v6228
        %v6230 = vpop.f32.mrb[0].mxu0
        %v6231 = vpop.f32.mrb[0].mxu0
        %v6232 = vadd.f32 0.0, %v6231
        %v6233 = vpop.f32.mrb[0].mxu0
        %6234 = vdwg.mxu0
        %v6235 = vadd.f32 %v6097, %v6186
        %v6236 = vadd.f32 %v6098, %v6188
        %v6237 = vadd.f32 %v6099, %v6229
        %v6238 = vadd.f32 %v6100, %v6190
        %v6239 = vadd.f32 %v6101, %v6192
        %v6240 = vadd.f32 %v6102, %v6232
        %6242 = vset.pattern.permute.xlu0 0
        %6243 = vperm.xlu0 %6242, %v4992
        %v6244 = vpop.permute.xlu0 %6243
        %6247 = vset.pattern.permute.xlu0 0
        %6248 = vperm.xlu0 %6247, %v4993
        %v6249 = vpop.permute.xlu0 %6248
        %v6251 = vadd.f32 %v6235, %v6244
        %v6252 = vadd.f32 %v6236, %v6244
        %v6253 = vadd.f32 %v6237, %v6244
        %v6254 = vadd.f32 %v6238, %v6249
        %v6255 = vadd.f32 %v6239, %v6249
        %v6256 = vadd.f32 %v6240, %v6249
        %v6257 = vld [vmem:[#allocation3] sm:$0xff]
        %v6258 = vld [vmem:[#allocation3 + $0x8] sm:$0xff]
        %v6259 = vld [vmem:[#allocation3 + $0x10] sm:$0xff]
        %v6260 = vld [vmem:[#allocation3 + $0x18] sm:$0xff]
        %v6261 = vld [vmem:[#allocation3 + $0x20] sm:$0xff]
        %v6262 = vld [vmem:[#allocation3 + $0x28] sm:$0xff]
        %v6263 = vmul.f32 %v6251, %v1413
        %v6264 = vmul.f32 %v6252, %v1417
        %v6265 = vmul.f32 %v6253, %v1421
        %v6266 = vmul.f32 %v6254, %v1413
        %v6267 = vmul.f32 %v6255, %v1417
        %v6268 = vmul.f32 %v6256, %v1421
        %v6269 = vmul.f32 %v6263, 0.2
        %v6270 = vmul.f32 %v6264, 0.2
        %v6271 = vmul.f32 %v6265, 0.2
        %v6272 = vmul.f32 %v6266, 0.2
        %v6273 = vmul.f32 %v6267, 0.2
        %v6274 = vmul.f32 %v6268, 0.2
        %v6275 = vadd.f32 %v6269, %v6257
        %v6276 = vadd.f32 %v6270, %v6258
        %v6277 = vadd.f32 %v6271, %v6259
        %v6278 = vadd.f32 %v6272, %v6260
        %v6279 = vadd.f32 %v6273, %v6261
        %v6280 = vadd.f32 %v6274, %v6262
        %v6281 = vmul.f32 %v6275, 0.2
        %v6282 = vmul.f32 %v6276, 0.2
        %v6283 = vmul.f32 %v6277, 0.2
        %v6284 = vmul.f32 %v6278, 0.2
        %v6285 = vmul.f32 %v6279, 0.2
        %v6286 = vmul.f32 %v6280, 0.2
        %v6287 = vadd.f32 %v6281, %v6257
        %v6288 = vadd.f32 %v6282, %v6258
        %v6289 = vadd.f32 %v6283, %v6259
        %v6290 = vadd.f32 %v6284, %v6260
        %v6291 = vadd.f32 %v6285, %v6261
        %v6292 = vadd.f32 %v6286, %v6262
        %6293 = vst [vmem:[#allocation3] sm:$0xff] %v6287
        %6294 = vst [vmem:[#allocation3 + $0x8] sm:$0xff] %v6288
        %6295 = vst [vmem:[#allocation3 + $0x10] sm:$0xff] %v6289
        %6296 = vst [vmem:[#allocation3 + $0x18] sm:$0xff] %v6290
        %6297 = vst [vmem:[#allocation3 + $0x20] sm:$0xff] %v6291
        %6298 = vst [vmem:[#allocation3 + $0x28] sm:$0xff] %v6292
        %v6299 = vpack.c.bf16 %v6290, %v6287
        %v6300 = vpack.c.bf16 %v6291, %v6288
        %v6301 = vpack.c.bf16 %v6292, %v6289
        %6302 = vst [vmem:[#allocation2 + $0x8] sm:$0xff] %v6299
        %6303 = vst [vmem:[#allocation2 + $0x10] sm:$0xff] %v6300
        %6304 = vst [vmem:[#allocation2 + $0x18] sm:$0xff] %v6301
      $region73: #{rrdb_forward.1} parent=67 // loop_footer
        %s445 = sadd.s32 1, %s441
      $region74: #{rrdb_forward.1} parent=67 // loop_footer_branch
        %440 = sbr.rel target = $region70
      $region75: #{rrdb_forward.1} parent=67 // loop_exit
        _
      %v6305 = vld [vmem:[#allocation3] sm:$0xff]
      %v6306 = vld [vmem:[#allocation3 + $0x8] sm:$0xff]
      %v6307 = vld [vmem:[#allocation3 + $0x10] sm:$0xff]
      %v6308 = vld [vmem:[#allocation3 + $0x18] sm:$0xff]
      %v6309 = vld [vmem:[#allocation3 + $0x20] sm:$0xff]
      %v6310 = vld [vmem:[#allocation3 + $0x28] sm:$0xff]
      %v6311 = vmul.f32 %v6305, 0.2
      %v6312 = vmul.f32 %v6306, 0.2
      %v6313 = vmul.f32 %v6307, 0.2
      %v6314 = vmul.f32 %v6308, 0.2
      %v6315 = vmul.f32 %v6309, 0.2
      %v6316 = vmul.f32 %v6310, 0.2
      %v6317 = vld [vmem:[%s408] sm:$0xff]
      %v6318 = vld [vmem:[%s408 + $0x8] sm:$0xff]
      %v6319 = vld [vmem:[%s408 + $0x10] sm:$0xff]
      %v6320 = vld [vmem:[%s408 + $0x18] sm:$0xff]
      %v6321 = vld [vmem:[%s408 + $0x20] sm:$0xff]
      %v6322 = vld [vmem:[%s408 + $0x28] sm:$0xff]
      %v6323 = vadd.f32 %v6311, %v6317
      %v6324 = vadd.f32 %v6312, %v6318
      %v6325 = vadd.f32 %v6313, %v6319
      %v6326 = vadd.f32 %v6314, %v6320
      %v6327 = vadd.f32 %v6315, %v6321
      %v6328 = vadd.f32 %v6316, %v6322
      %6329 = vst [vmem:[%s413] sm:$0xff] %v6323
      %6330 = vst [vmem:[%s413 + $0x8] sm:$0xff] %v6324
      %6331 = vst [vmem:[%s413 + $0x10] sm:$0xff] %v6325
      %6332 = vst [vmem:[%s413 + $0x18] sm:$0xff] %v6326
      %6333 = vst [vmem:[%s413 + $0x20] sm:$0xff] %v6327
      %6334 = vst [vmem:[%s413 + $0x28] sm:$0xff] %v6328
      %p6335 = scmp.lt.s32.totalorder %s23, 1
      %s6336 = scalar_select %p6335, %s23, 1
      %s6337 = smul.addr %s6336, 6
      %s6338 = smul.addr %s6337, 8
      %s6339 = scalar_lea.vmem %s12, %s6338
      // Predicated region
      $region76: #{rrdb_forward.1} parent=67 // pred_check
        %p6340 = pneg %p298
      $region77: #{rrdb_forward.1} parent=67 // pred_check_branch
        %6342 = sbr.rel (%p6340) target = $region79
      $region78: #{rrdb_forward.1} parent=67 // pred_region
        _
      $region79: #{rrdb_forward.1} parent=67 // pred_fallthru
        _
    $region68: #{rrdb_forward.1} parent=5 // pred_fallthru
      _
    %p6343 = scmp.le.s32.totalorder 2, %s18
    // Predicated region
    $region80: #{rrdb_forward.1} parent=5 // pred_check
      %p6344 = pneg %p6343
    $region81: #{rrdb_forward.1} parent=5 // pred_check_branch
      %6346 = sbr.rel (%p6344) target = $region83
    $region82: #{rrdb_forward.1} parent=5 // pred_region
      %s6347 = ssub.s32 %s18, 2
      // Predicated region
      $region84: #{rrdb_forward.1} parent=82 // pred_check
        %p6348 = pneg %p304
      $region85: #{rrdb_forward.1} parent=82 // pred_check_branch
        %6350 = sbr.rel (%p6348) target = $region87
      $region86: #{rrdb_forward.1} parent=82 // pred_region
        %p6351 = scmp.lt.s32.totalorder %s24, 1
        %s6352 = scalar_select %p6351, %s24, 1
        %s6353 = smul.addr %s6352, 6
        %s6354 = smul.addr %s6353, 8
        %s6355 = scalar_lea.vmem %s12, %s6354
      $region87: #{rrdb_forward.1} parent=82 // pred_fallthru
        _
    $region83: #{rrdb_forward.1} parent=5 // pred_fallthru
      _
  $region6: #{rrdb_forward.1} parent=0 // loop_footer
    %s22 = sadd.s32 1, %s18
  $region7: #{rrdb_forward.1} parent=0 // loop_footer_branch
    %17 = sbr.rel target = $region3
  $region8: #{rrdb_forward.1} parent=0 // loop_exit
    _

</llo_original>
